<compile_context>
chip_gen: v6e
topology: v6e:2x2x1
jax: 0.10.0
libtpu: 0.0.40
codegen_flags: <defaults>
</compile_context>

<pallas_src>
import functools
import math

import jax
import jax.numpy as jnp
from jax.experimental import pallas as pl
from jax.experimental.pallas import tpu as pltpu

D_MODEL = 32
NHEAD = 4
DIM_FF = 64
NUM_LAYERS = 5          # >= 4 and no_residual=False -> exercises the residual-sum branch
LN_EPS = 1e-5

PARAM_ORDER = ("wqkv", "wo", "w1", "b1", "w2", "b2", "g1", "be1", "g2", "be2")


# ------------------------------------------------------------------
# Fused Pallas kernel: all layers + residual sum, whole (S, B, D) batch
# ------------------------------------------------------------------
def _encoder_stack_kernel(src_ref, pos_ref,
                          wqkv_ref, wo_ref, w1_ref, b1_ref, w2_ref, b2_ref,
                          g1_ref, be1_ref, g2_ref, be2_ref,
                          out_ref, *, nhead, num_layers, no_residual):
    S, B, D = src_ref.shape
    F = w1_ref.shape[1]
    hd = D // nhead
    BS = B * S
    scale = 1.0 / math.sqrt(hd)

    # ---- hoisted parameter loads (shared by all layers / batch elements) ----
    wqkv = wqkv_ref[...]                         # (D, 3D)  [q | k | v]
    wo = wo_ref[...]                             # (D, D)
    w1 = w1_ref[...]                             # (D, F)
    w2 = w2_ref[...]                             # (F, D)
    # Pre-broadcast row vectors once (JAX does not CSE broadcast_in_dim, so
    # doing this inside the unrolled layer loop would repeat it per layer).
    b1 = jnp.broadcast_to(b1_ref[...], (BS, F))
    b2 = jnp.broadcast_to(b2_ref[...], (BS, D))
    g1 = jnp.broadcast_to(g1_ref[...], (BS, D))
    be1 = jnp.broadcast_to(be1_ref[...], (BS, D))
    g2 = jnp.broadcast_to(g2_ref[...], (BS, D))
    be2 = jnp.broadcast_to(be2_ref[...], (BS, D))

    src_all = src_ref[...].astype(jnp.float32)   # (S, B, D)
    pos_all = pos_ref[...].astype(jnp.float32)   # (S, B, D)

    # Row-stack the (tiny) batch along the sublane axis so every projection /
    # layer-norm / FFN runs ONCE over a (B*S, D) slab instead of per batch.
    x0 = jnp.concatenate([src_all[:, b, :] for b in range(B)], axis=0)   # (BS, D)
    pos = jnp.concatenate([pos_all[:, b, :] for b in range(B)], axis=0)  # (BS, D)

    # pos is layer-invariant: project it through the Q/K weights once; the Q
    # part is pre-scaled by 1/sqrt(head_dim). (There is no positional V term.)
    pos_qk = jnp.dot(pos, wqkv[:, :2 * D], preferred_element_type=jnp.float32)
    pos_q = pos_qk[:, :D] * scale
    pos_k = pos_qk[:, D:]

    def layer_norm(x, g, b):
        mu = jnp.mean(x, axis=-1, keepdims=True)
        var = jnp.mean(jnp.square(x - mu), axis=-1, keepdims=True)
        return (x - mu) * jax.lax.rsqrt(var + LN_EPS) * g + b

    def one_layer(x):
        # --- pre-norm multi-head self-attention (bias-free) ---
        xn = layer_norm(x, g1, be1)
        qkv = jnp.dot(xn, wqkv, preferred_element_type=jnp.float32)   # (BS, 3D)
        q = qkv[:, :D] * scale + pos_q
        k = qkv[:, D:2 * D] + pos_k
        v = qkv[:, 2 * D:]
        # Attention mixes rows only within one batch element; the per-batch,
        # per-head score/softmax/PV blocks are tiny (S x hd = 8 x 8), so both
        # loops are unrolled. Row slices are 8-sublane aligned.
        rows = []
        for b in range(B):
            rs = slice(b * S, (b + 1) * S)
            heads = []
            for h in range(nhead):
                cs = slice(h * hd, (h + 1) * hd)
                qh = q[rs, cs]
                kh = k[rs, cs]
                vh = v[rs, cs]
                s = jnp.dot(qh, kh.T, preferred_element_type=jnp.float32)
                p = jnp.exp(s - jnp.max(s, axis=-1, keepdims=True))
                p = p * pl.reciprocal(jnp.sum(p, axis=-1, keepdims=True),
                                      approx=True)
                heads.append(jnp.dot(p, vh, preferred_element_type=jnp.float32))
            rows.append(jnp.concatenate(heads, axis=-1))
        attn = jnp.dot(jnp.concatenate(rows, axis=0), wo,
                       preferred_element_type=jnp.float32)
        x = x + attn
        # --- pre-norm feed-forward (relu) ---
        xn2 = layer_norm(x, g2, be2)
        h1 = jnp.maximum(
            jnp.dot(xn2, w1, preferred_element_type=jnp.float32) + b1, 0.0)
        ff = jnp.dot(h1, w2, preferred_element_type=jnp.float32) + b2
        return x + ff

    if no_residual or num_layers < 4:
        y = x0
        for _ in range(num_layers):
            y = one_layer(y)
    else:
        o1 = one_layer(x0)
        o2 = one_layer(o1)
        o3 = one_layer(o2)
        o4 = one_layer(o3)
        y = x0 + o1 + o2 + o3 + o4
        for _ in range(num_layers - 4):
            y = one_layer(y)

    # Scatter the row-stacked result back into the (S, B, D) output layout.
    for b in range(B):
        out_ref[:, b, :] = y[b * S:(b + 1) * S, :].astype(out_ref.dtype)


# ------------------------------------------------------------------
# Wrapper: one pallas_call, everything resident in VMEM, no grid
# ------------------------------------------------------------------
def transformer_encoder(src_sbd, pos_sbd, params, num_layers=NUM_LAYERS,
                        no_residual=False):
    """Replicates TransformerEncoder.forward. src/pos: (S, B, D) like PyTorch."""
    S, B, D = src_sbd.shape
    param_list = [params[k] for k in PARAM_ORDER]
    vmem_spec = pl.BlockSpec(memory_space=pltpu.MemorySpace.VMEM)

    kernel = functools.partial(_encoder_stack_kernel, nhead=NHEAD,
                               num_layers=num_layers, no_residual=no_residual)
    return pl.pallas_call(
        kernel,
        out_shape=jax.ShapeDtypeStruct((S, B, D), src_sbd.dtype),
        in_specs=[vmem_spec] * (2 + len(param_list)),
        out_specs=vmem_spec,
    )(src_sbd, pos_sbd, *param_list)


# ------------------------------------------------------------------
# Pure-JAX reference (for a correctness self-check)
# ------------------------------------------------------------------
def encoder_reference(src_sbd, pos_sbd, params, num_layers, no_residual):
    S, B, D = src_sbd.shape
    hd = D // NHEAD
    scale = 1.0 / math.sqrt(hd)
    wqkv, wo = params["wqkv"], params["wo"]
    w1, b1, w2, b2 = params["w1"], params["b1"], params["w2"], params["b2"]
    g1, be1, g2, be2 = params["g1"], params["be1"], params["g2"], params["be2"]

    def ln(x, g, b):
        mu = jnp.mean(x, axis=-1, keepdims=True)
        var = jnp.mean((x - mu) ** 2, axis=-1, keepdims=True)
        return (x - mu) / jnp.sqrt(var + LN_EPS) * g + b

    def layer(x, pos):
        xn = ln(x, g1, be1)
        qk = xn + pos
        q = qk @ wqkv[:, :D]
        k = qk @ wqkv[:, D:2 * D]
        v = xn @ wqkv[:, 2 * D:]
        outs = []
        for h in range(NHEAD):
            sl = slice(h * hd, (h + 1) * hd)
            a = jax.nn.softmax((q[:, sl] * scale) @ k[:, sl].T, axis=-1)
            outs.append(a @ v[:, sl])
        x = x + jnp.concatenate(outs, axis=-1) @ wo
        xn2 = ln(x, g2, be2)
        return x + jnp.maximum(xn2 @ w1 + b1, 0.0) @ w2 + b2

    cols = []
    for b in range(B):
        x, p = src_sbd[:, b, :], pos_sbd[:, b, :]
        if no_residual or num_layers < 4:
            y = x
            for _ in range(num_layers):
                y = layer(y, p)
        else:
            o1 = layer(x, p); o2 = layer(o1, p); o3 = layer(o2, p); o4 = layer(o3, p)
            y = x + o1 + o2 + o3 + o4
            for _ in range(num_layers - 4):
                y = layer(y, p)
        cols.append(y)
    return jnp.stack(cols, axis=1)


# ------------------------------------------------------------------
# Deterministic parameter init (shapes match the PyTorch layer; attention
# is bias-free as in nn.MultiheadAttention(..., bias=False))
# ------------------------------------------------------------------
def init_params(key):
    ks = jax.random.split(key, 6)
    s = 0.05
    f32 = jnp.float32
    wq = jax.random.normal(ks[0], (D_MODEL, D_MODEL), f32) * s
    wk = jax.random.normal(ks[1], (D_MODEL, D_MODEL), f32) * s
    wv = jax.random.normal(ks[2], (D_MODEL, D_MODEL), f32) * s
    return {
        "wqkv": jnp.concatenate([wq, wk, wv], axis=1),                 # (D, 3D)
        "wo": jax.random.normal(ks[3], (D_MODEL, D_MODEL), f32) * s,   # (D, D)
        "w1": jax.random.normal(ks[4], (D_MODEL, DIM_FF), f32) * s,    # (D, F)
        "b1": jnp.zeros((1, DIM_FF), f32),
        "w2": jax.random.normal(ks[5], (DIM_FF, D_MODEL), f32) * s,    # (F, D)
        "b2": jnp.zeros((1, D_MODEL), f32),
        "g1": jnp.ones((1, D_MODEL), f32),
        "be1": jnp.zeros((1, D_MODEL), f32),
        "g2": jnp.ones((1, D_MODEL), f32),
        "be2": jnp.zeros((1, D_MODEL), f32),
    }


if __name__ == "__main__":
    key = jax.random.PRNGKey(0)
    k_src, k_pos, k_par = jax.random.split(key, 3)

    S, B = 8, 2
    src = jax.random.normal(k_src, (S, B, D_MODEL), jnp.float32)   # PyTorch (S, B, D)
    pos = jax.random.normal(k_pos, (S, B, D_MODEL), jnp.float32)
    params = init_params(k_par)

    out = transformer_encoder(src, pos, params, num_layers=NUM_LAYERS,
                              no_residual=False)
    out = jax.block_until_ready(out)
    assert out.shape == (S, B, D_MODEL)
    assert bool(jnp.all(jnp.isfinite(out)))

    # Correctness self-check against a pure-JAX reference (loose tolerance:
    # approx EUP reciprocal + matmul pass differences are << 1e-1).
    ref = encoder_reference(src, pos, params, NUM_LAYERS, False)
    max_err = float(jnp.max(jnp.abs(out - ref)))
    assert max_err < 1e-1, f"kernel/reference mismatch: max_err={max_err}"

    print("KERNEL_OK")
</pallas_src>

<mosaic_0001>
module attributes {stable_mosaic.version = 11 : i64} {
  func.func @_encoder_stack_kernel(%arg0: memref<8x2x32xf32, #tpu.memory_space<vmem>>, %arg1: memref<8x2x32xf32, #tpu.memory_space<vmem>>, %arg2: memref<32x96xf32, #tpu.memory_space<vmem>>, %arg3: memref<32x32xf32, #tpu.memory_space<vmem>>, %arg4: memref<32x64xf32, #tpu.memory_space<vmem>>, %arg5: memref<1x64xf32, #tpu.memory_space<vmem>>, %arg6: memref<64x32xf32, #tpu.memory_space<vmem>>, %arg7: memref<1x32xf32, #tpu.memory_space<vmem>>, %arg8: memref<1x32xf32, #tpu.memory_space<vmem>>, %arg9: memref<1x32xf32, #tpu.memory_space<vmem>>, %arg10: memref<1x32xf32, #tpu.memory_space<vmem>>, %arg11: memref<1x32xf32, #tpu.memory_space<vmem>>, %arg12: memref<8x2x32xf32, #tpu.memory_space<vmem>>) attributes {dimension_semantics = [], scalar_prefetch = 0 : i64, scratch_operands = 0 : i64, tpu.core_type = #tpu.core_type<tc>} {
    %c0 = arith.constant 0 : index
    %c0_0 = arith.constant 0 : index
    %0 = vector.load %arg2[%c0, %c0_0] : memref<32x96xf32, #tpu.memory_space<vmem>>, vector<32x96xf32>
    %c0_1 = arith.constant 0 : index
    %c0_2 = arith.constant 0 : index
    %1 = vector.load %arg3[%c0_1, %c0_2] : memref<32x32xf32, #tpu.memory_space<vmem>>, vector<32x32xf32>
    %c0_3 = arith.constant 0 : index
    %c0_4 = arith.constant 0 : index
    %2 = vector.load %arg4[%c0_3, %c0_4] : memref<32x64xf32, #tpu.memory_space<vmem>>, vector<32x64xf32>
    %c0_5 = arith.constant 0 : index
    %c0_6 = arith.constant 0 : index
    %3 = vector.load %arg6[%c0_5, %c0_6] : memref<64x32xf32, #tpu.memory_space<vmem>>, vector<64x32xf32>
    %c0_7 = arith.constant 0 : index
    %c0_8 = arith.constant 0 : index
    %4 = vector.load %arg5[%c0_7, %c0_8] : memref<1x64xf32, #tpu.memory_space<vmem>>, vector<1x64xf32>
    %5 = vector.shape_cast %4 : vector<1x64xf32> to vector<1x64xf32>
    %6 = vector.broadcast %5 : vector<1x64xf32> to vector<16x64xf32>
    %c0_9 = arith.constant 0 : index
    %c0_10 = arith.constant 0 : index
    %7 = vector.load %arg7[%c0_9, %c0_10] : memref<1x32xf32, #tpu.memory_space<vmem>>, vector<1x32xf32>
    %8 = vector.shape_cast %7 : vector<1x32xf32> to vector<1x32xf32>
    %9 = vector.broadcast %8 : vector<1x32xf32> to vector<16x32xf32>
    %c0_11 = arith.constant 0 : index
    %c0_12 = arith.constant 0 : index
    %10 = vector.load %arg8[%c0_11, %c0_12] : memref<1x32xf32, #tpu.memory_space<vmem>>, vector<1x32xf32>
    %11 = vector.shape_cast %10 : vector<1x32xf32> to vector<1x32xf32>
    %12 = vector.broadcast %11 : vector<1x32xf32> to vector<16x32xf32>
    %c0_13 = arith.constant 0 : index
    %c0_14 = arith.constant 0 : index
    %13 = vector.load %arg9[%c0_13, %c0_14] : memref<1x32xf32, #tpu.memory_space<vmem>>, vector<1x32xf32>
    %14 = vector.shape_cast %13 : vector<1x32xf32> to vector<1x32xf32>
    %15 = vector.broadcast %14 : vector<1x32xf32> to vector<16x32xf32>
    %c0_15 = arith.constant 0 : index
    %c0_16 = arith.constant 0 : index
    %16 = vector.load %arg10[%c0_15, %c0_16] : memref<1x32xf32, #tpu.memory_space<vmem>>, vector<1x32xf32>
    %17 = vector.shape_cast %16 : vector<1x32xf32> to vector<1x32xf32>
    %18 = vector.broadcast %17 : vector<1x32xf32> to vector<16x32xf32>
    %c0_17 = arith.constant 0 : index
    %c0_18 = arith.constant 0 : index
    %19 = vector.load %arg11[%c0_17, %c0_18] : memref<1x32xf32, #tpu.memory_space<vmem>>, vector<1x32xf32>
    %20 = vector.shape_cast %19 : vector<1x32xf32> to vector<1x32xf32>
    %21 = vector.broadcast %20 : vector<1x32xf32> to vector<16x32xf32>
    %c0_19 = arith.constant 0 : index
    %c0_20 = arith.constant 0 : index
    %c0_21 = arith.constant 0 : index
    %22 = vector.load %arg0[%c0_19, %c0_20, %c0_21] : memref<8x2x32xf32, #tpu.memory_space<vmem>>, vector<8x2x32xf32>
    %c0_22 = arith.constant 0 : index
    %c0_23 = arith.constant 0 : index
    %c0_24 = arith.constant 0 : index
    %23 = vector.load %arg1[%c0_22, %c0_23, %c0_24] : memref<8x2x32xf32, #tpu.memory_space<vmem>>, vector<8x2x32xf32>
    %24 = vector.extract_strided_slice %22 {offsets = [0, 0, 0], sizes = [8, 1, 32], strides = [1, 1, 1]} : vector<8x2x32xf32> to vector<8x1x32xf32>
    %25 = vector.shape_cast %24 : vector<8x1x32xf32> to vector<8x32xf32>
    %26 = vector.extract_strided_slice %22 {offsets = [0, 1, 0], sizes = [8, 1, 32], strides = [1, 1, 1]} : vector<8x2x32xf32> to vector<8x1x32xf32>
    %27 = vector.shape_cast %26 : vector<8x1x32xf32> to vector<8x32xf32>
    %28 = tpu.concatenate %25, %27 in 0 : vector<8x32xf32>, vector<8x32xf32> -> vector<16x32xf32>
    %29 = vector.extract_strided_slice %23 {offsets = [0, 0, 0], sizes = [8, 1, 32], strides = [1, 1, 1]} : vector<8x2x32xf32> to vector<8x1x32xf32>
    %30 = vector.shape_cast %29 : vector<8x1x32xf32> to vector<8x32xf32>
    %31 = vector.extract_strided_slice %23 {offsets = [0, 1, 0], sizes = [8, 1, 32], strides = [1, 1, 1]} : vector<8x2x32xf32> to vector<8x1x32xf32>
    %32 = vector.shape_cast %31 : vector<8x1x32xf32> to vector<8x32xf32>
    %33 = tpu.concatenate %30, %32 in 0 : vector<8x32xf32>, vector<8x32xf32> -> vector<16x32xf32>
    %34 = vector.extract_strided_slice %0 {offsets = [0, 0], sizes = [32, 64], strides = [1, 1]} : vector<32x96xf32> to vector<32x64xf32>
    %cst = arith.constant dense<0.000000e+00> : vector<16x64xf32>
    %35 = tpu.matmul %33, %34, %cst {dimension_numbers = #tpu.dot_dimension_numbers<[1], [0], [0], [1], [0, 0, 1, 1], [], []>} : vector<16x32xf32>, vector<32x64xf32>, vector<16x64xf32> -> vector<16x64xf32>
    %36 = vector.extract_strided_slice %35 {offsets = [0, 0], sizes = [16, 32], strides = [1, 1]} : vector<16x64xf32> to vector<16x32xf32>
    %cst_25 = arith.constant 0.353553385 : f32
    %37 = vector.broadcast %cst_25 : f32 to vector<16x32xf32>
    %38 = arith.mulf %36, %37 : vector<16x32xf32>
    %39 = vector.extract_strided_slice %35 {offsets = [0, 32], sizes = [16, 32], strides = [1, 1]} : vector<16x64xf32> to vector<16x32xf32>
    %cst_26 = arith.constant dense<0.000000e+00> : vector<16xf32>
    %40 = vector.multi_reduction <add>, %28, %cst_26 [1] : vector<16x32xf32> to vector<16xf32>
    %41 = vector.shape_cast %40 : vector<16xf32> to vector<16x1xf32>
    %cst_27 = arith.constant 3.200000e+01 : f32
    %42 = vector.broadcast %cst_27 : f32 to vector<16x1xf32>
    %43 = arith.divf %41, %42 : vector<16x1xf32>
    %44 = vector.broadcast %43 : vector<16x1xf32> to vector<16x32xf32>
    %45 = arith.subf %28, %44 : vector<16x32xf32>
    %46 = arith.mulf %45, %45 : vector<16x32xf32>
    %cst_28 = arith.constant dense<0.000000e+00> : vector<16xf32>
    %47 = vector.multi_reduction <add>, %46, %cst_28 [1] : vector<16x32xf32> to vector<16xf32>
    %48 = vector.shape_cast %47 : vector<16xf32> to vector<16x1xf32>
    %cst_29 = arith.constant 3.200000e+01 : f32
    %49 = vector.broadcast %cst_29 : f32 to vector<16x1xf32>
    %50 = arith.divf %48, %49 : vector<16x1xf32>
    %51 = vector.broadcast %43 : vector<16x1xf32> to vector<16x32xf32>
    %52 = arith.subf %28, %51 : vector<16x32xf32>
    %cst_30 = arith.constant 9.99999974E-6 : f32
    %53 = vector.broadcast %cst_30 : f32 to vector<16x1xf32>
    %54 = arith.addf %50, %53 : vector<16x1xf32>
    %55 = math.rsqrt %54 : vector<16x1xf32>
    %56 = vector.broadcast %55 : vector<16x1xf32> to vector<16x32xf32>
    %57 = arith.mulf %52, %56 : vector<16x32xf32>
    %58 = arith.mulf %57, %12 : vector<16x32xf32>
    %59 = arith.addf %58, %15 : vector<16x32xf32>
    %cst_31 = arith.constant dense<0.000000e+00> : vector<16x96xf32>
    %60 = tpu.matmul %59, %0, %cst_31 {dimension_numbers = #tpu.dot_dimension_numbers<[1], [0], [0], [1], [0, 0, 1, 1], [], []>} : vector<16x32xf32>, vector<32x96xf32>, vector<16x96xf32> -> vector<16x96xf32>
    %61 = vector.extract_strided_slice %60 {offsets = [0, 0], sizes = [16, 32], strides = [1, 1]} : vector<16x96xf32> to vector<16x32xf32>
    %cst_32 = arith.constant 0.353553385 : f32
    %62 = vector.broadcast %cst_32 : f32 to vector<16x32xf32>
    %63 = arith.mulf %61, %62 : vector<16x32xf32>
    %64 = arith.addf %63, %38 : vector<16x32xf32>
    %65 = vector.extract_strided_slice %60 {offsets = [0, 32], sizes = [16, 32], strides = [1, 1]} : vector<16x96xf32> to vector<16x32xf32>
    %66 = arith.addf %65, %39 : vector<16x32xf32>
    %67 = vector.extract_strided_slice %60 {offsets = [0, 64], sizes = [16, 32], strides = [1, 1]} : vector<16x96xf32> to vector<16x32xf32>
    %68 = vector.extract_strided_slice %64 {offsets = [0, 0], sizes = [8, 8], strides = [1, 1]} : vector<16x32xf32> to vector<8x8xf32>
    %69 = vector.extract_strided_slice %66 {offsets = [0, 0], sizes = [8, 8], strides = [1, 1]} : vector<16x32xf32> to vector<8x8xf32>
    %70 = vector.extract_strided_slice %67 {offsets = [0, 0], sizes = [8, 8], strides = [1, 1]} : vector<16x32xf32> to vector<8x8xf32>
    %71 = tpu.transpose %69, [1, 0] : vector<8x8xf32> -> vector<8x8xf32>
    %cst_33 = arith.constant dense<0.000000e+00> : vector<8x8xf32>
    %72 = tpu.matmul %68, %71, %cst_33 {dimension_numbers = #tpu.dot_dimension_numbers<[1], [0], [0], [1], [0, 0, 1, 1], [], []>} : vector<8x8xf32>, vector<8x8xf32>, vector<8x8xf32> -> vector<8x8xf32>
    %cst_34 = arith.constant dense<0xFF800000> : vector<8xf32>
    %73 = vector.multi_reduction <maximumf>, %72, %cst_34 [1] : vector<8x8xf32> to vector<8xf32>
    %74 = vector.shape_cast %73 : vector<8xf32> to vector<8x1xf32>
    %75 = vector.broadcast %74 : vector<8x1xf32> to vector<8x8xf32>
    %76 = arith.subf %72, %75 : vector<8x8xf32>
    %77 = math.exp %76 : vector<8x8xf32>
    %cst_35 = arith.constant dense<0.000000e+00> : vector<8xf32>
    %78 = vector.multi_reduction <add>, %77, %cst_35 [1] : vector<8x8xf32> to vector<8xf32>
    %79 = vector.shape_cast %78 : vector<8xf32> to vector<8x1xf32>
    %80 = tpu.reciprocal %79 {approx = true} : vector<8x1xf32> -> vector<8x1xf32>
    %81 = vector.broadcast %80 : vector<8x1xf32> to vector<8x8xf32>
    %82 = arith.mulf %77, %81 : vector<8x8xf32>
    %cst_36 = arith.constant dense<0.000000e+00> : vector<8x8xf32>
    %83 = tpu.matmul %82, %70, %cst_36 {dimension_numbers = #tpu.dot_dimension_numbers<[1], [0], [0], [1], [0, 0, 1, 1], [], []>} : vector<8x8xf32>, vector<8x8xf32>, vector<8x8xf32> -> vector<8x8xf32>
    %84 = vector.extract_strided_slice %64 {offsets = [0, 8], sizes = [8, 8], strides = [1, 1]} : vector<16x32xf32> to vector<8x8xf32>
    %85 = vector.extract_strided_slice %66 {offsets = [0, 8], sizes = [8, 8], strides = [1, 1]} : vector<16x32xf32> to vector<8x8xf32>
    %86 = vector.extract_strided_slice %67 {offsets = [0, 8], sizes = [8, 8], strides = [1, 1]} : vector<16x32xf32> to vector<8x8xf32>
    %87 = tpu.transpose %85, [1, 0] : vector<8x8xf32> -> vector<8x8xf32>
    %cst_37 = arith.constant dense<0.000000e+00> : vector<8x8xf32>
    %88 = tpu.matmul %84, %87, %cst_37 {dimension_numbers = #tpu.dot_dimension_numbers<[1], [0], [0], [1], [0, 0, 1, 1], [], []>} : vector<8x8xf32>, vector<8x8xf32>, vector<8x8xf32> -> vector<8x8xf32>
    %cst_38 = arith.constant dense<0xFF800000> : vector<8xf32>
    %89 = vector.multi_reduction <maximumf>, %88, %cst_38 [1] : vector<8x8xf32> to vector<8xf32>
    %90 = vector.shape_cast %89 : vector<8xf32> to vector<8x1xf32>
    %91 = vector.broadcast %90 : vector<8x1xf32> to vector<8x8xf32>
    %92 = arith.subf %88, %91 : vector<8x8xf32>
    %93 = math.exp %92 : vector<8x8xf32>
    %cst_39 = arith.constant dense<0.000000e+00> : vector<8xf32>
    %94 = vector.multi_reduction <add>, %93, %cst_39 [1] : vector<8x8xf32> to vector<8xf32>
    %95 = vector.shape_cast %94 : vector<8xf32> to vector<8x1xf32>
    %96 = tpu.reciprocal %95 {approx = true} : vector<8x1xf32> -> vector<8x1xf32>
    %97 = vector.broadcast %96 : vector<8x1xf32> to vector<8x8xf32>
    %98 = arith.mulf %93, %97 : vector<8x8xf32>
    %cst_40 = arith.constant dense<0.000000e+00> : vector<8x8xf32>
    %99 = tpu.matmul %98, %86, %cst_40 {dimension_numbers = #tpu.dot_dimension_numbers<[1], [0], [0], [1], [0, 0, 1, 1], [], []>} : vector<8x8xf32>, vector<8x8xf32>, vector<8x8xf32> -> vector<8x8xf32>
    %100 = vector.extract_strided_slice %64 {offsets = [0, 16], sizes = [8, 8], strides = [1, 1]} : vector<16x32xf32> to vector<8x8xf32>
    %101 = vector.extract_strided_slice %66 {offsets = [0, 16], sizes = [8, 8], strides = [1, 1]} : vector<16x32xf32> to vector<8x8xf32>
    %102 = vector.extract_strided_slice %67 {offsets = [0, 16], sizes = [8, 8], strides = [1, 1]} : vector<16x32xf32> to vector<8x8xf32>
    %103 = tpu.transpose %101, [1, 0] : vector<8x8xf32> -> vector<8x8xf32>
    %cst_41 = arith.constant dense<0.000000e+00> : vector<8x8xf32>
    %104 = tpu.matmul %100, %103, %cst_41 {dimension_numbers = #tpu.dot_dimension_numbers<[1], [0], [0], [1], [0, 0, 1, 1], [], []>} : vector<8x8xf32>, vector<8x8xf32>, vector<8x8xf32> -> vector<8x8xf32>
    %cst_42 = arith.constant dense<0xFF800000> : vector<8xf32>
    %105 = vector.multi_reduction <maximumf>, %104, %cst_42 [1] : vector<8x8xf32> to vector<8xf32>
    %106 = vector.shape_cast %105 : vector<8xf32> to vector<8x1xf32>
    %107 = vector.broadcast %106 : vector<8x1xf32> to vector<8x8xf32>
    %108 = arith.subf %104, %107 : vector<8x8xf32>
    %109 = math.exp %108 : vector<8x8xf32>
    %cst_43 = arith.constant dense<0.000000e+00> : vector<8xf32>
    %110 = vector.multi_reduction <add>, %109, %cst_43 [1] : vector<8x8xf32> to vector<8xf32>
    %111 = vector.shape_cast %110 : vector<8xf32> to vector<8x1xf32>
    %112 = tpu.reciprocal %111 {approx = true} : vector<8x1xf32> -> vector<8x1xf32>
    %113 = vector.broadcast %112 : vector<8x1xf32> to vector<8x8xf32>
    %114 = arith.mulf %109, %113 : vector<8x8xf32>
    %cst_44 = arith.constant dense<0.000000e+00> : vector<8x8xf32>
    %115 = tpu.matmul %114, %102, %cst_44 {dimension_numbers = #tpu.dot_dimension_numbers<[1], [0], [0], [1], [0, 0, 1, 1], [], []>} : vector<8x8xf32>, vector<8x8xf32>, vector<8x8xf32> -> vector<8x8xf32>
    %116 = vector.extract_strided_slice %64 {offsets = [0, 24], sizes = [8, 8], strides = [1, 1]} : vector<16x32xf32> to vector<8x8xf32>
    %117 = vector.extract_strided_slice %66 {offsets = [0, 24], sizes = [8, 8], strides = [1, 1]} : vector<16x32xf32> to vector<8x8xf32>
    %118 = vector.extract_strided_slice %67 {offsets = [0, 24], sizes = [8, 8], strides = [1, 1]} : vector<16x32xf32> to vector<8x8xf32>
    %119 = tpu.transpose %117, [1, 0] : vector<8x8xf32> -> vector<8x8xf32>
    %cst_45 = arith.constant dense<0.000000e+00> : vector<8x8xf32>
    %120 = tpu.matmul %116, %119, %cst_45 {dimension_numbers = #tpu.dot_dimension_numbers<[1], [0], [0], [1], [0, 0, 1, 1], [], []>} : vector<8x8xf32>, vector<8x8xf32>, vector<8x8xf32> -> vector<8x8xf32>
    %cst_46 = arith.constant dense<0xFF800000> : vector<8xf32>
    %121 = vector.multi_reduction <maximumf>, %120, %cst_46 [1] : vector<8x8xf32> to vector<8xf32>
    %122 = vector.shape_cast %121 : vector<8xf32> to vector<8x1xf32>
    %123 = vector.broadcast %122 : vector<8x1xf32> to vector<8x8xf32>
    %124 = arith.subf %120, %123 : vector<8x8xf32>
    %125 = math.exp %124 : vector<8x8xf32>
    %cst_47 = arith.constant dense<0.000000e+00> : vector<8xf32>
    %126 = vector.multi_reduction <add>, %125, %cst_47 [1] : vector<8x8xf32> to vector<8xf32>
    %127 = vector.shape_cast %126 : vector<8xf32> to vector<8x1xf32>
    %128 = tpu.reciprocal %127 {approx = true} : vector<8x1xf32> -> vector<8x1xf32>
    %129 = vector.broadcast %128 : vector<8x1xf32> to vector<8x8xf32>
    %130 = arith.mulf %125, %129 : vector<8x8xf32>
    %cst_48 = arith.constant dense<0.000000e+00> : vector<8x8xf32>
    %131 = tpu.matmul %130, %118, %cst_48 {dimension_numbers = #tpu.dot_dimension_numbers<[1], [0], [0], [1], [0, 0, 1, 1], [], []>} : vector<8x8xf32>, vector<8x8xf32>, vector<8x8xf32> -> vector<8x8xf32>
    %132 = tpu.concatenate %83, %99, %115, %131 in 1 : vector<8x8xf32>, vector<8x8xf32>, vector<8x8xf32>, vector<8x8xf32> -> vector<8x32xf32>
    %133 = vector.extract_strided_slice %64 {offsets = [8, 0], sizes = [8, 8], strides = [1, 1]} : vector<16x32xf32> to vector<8x8xf32>
    %134 = vector.extract_strided_slice %66 {offsets = [8, 0], sizes = [8, 8], strides = [1, 1]} : vector<16x32xf32> to vector<8x8xf32>
    %135 = vector.extract_strided_slice %67 {offsets = [8, 0], sizes = [8, 8], strides = [1, 1]} : vector<16x32xf32> to vector<8x8xf32>
    %136 = tpu.transpose %134, [1, 0] : vector<8x8xf32> -> vector<8x8xf32>
    %cst_49 = arith.constant dense<0.000000e+00> : vector<8x8xf32>
    %137 = tpu.matmul %133, %136, %cst_49 {dimension_numbers = #tpu.dot_dimension_numbers<[1], [0], [0], [1], [0, 0, 1, 1], [], []>} : vector<8x8xf32>, vector<8x8xf32>, vector<8x8xf32> -> vector<8x8xf32>
    %cst_50 = arith.constant dense<0xFF800000> : vector<8xf32>
    %138 = vector.multi_reduction <maximumf>, %137, %cst_50 [1] : vector<8x8xf32> to vector<8xf32>
    %139 = vector.shape_cast %138 : vector<8xf32> to vector<8x1xf32>
    %140 = vector.broadcast %139 : vector<8x1xf32> to vector<8x8xf32>
    %141 = arith.subf %137, %140 : vector<8x8xf32>
    %142 = math.exp %141 : vector<8x8xf32>
    %cst_51 = arith.constant dense<0.000000e+00> : vector<8xf32>
    %143 = vector.multi_reduction <add>, %142, %cst_51 [1] : vector<8x8xf32> to vector<8xf32>
    %144 = vector.shape_cast %143 : vector<8xf32> to vector<8x1xf32>
    %145 = tpu.reciprocal %144 {approx = true} : vector<8x1xf32> -> vector<8x1xf32>
    %146 = vector.broadcast %145 : vector<8x1xf32> to vector<8x8xf32>
    %147 = arith.mulf %142, %146 : vector<8x8xf32>
    %cst_52 = arith.constant dense<0.000000e+00> : vector<8x8xf32>
    %148 = tpu.matmul %147, %135, %cst_52 {dimension_numbers = #tpu.dot_dimension_numbers<[1], [0], [0], [1], [0, 0, 1, 1], [], []>} : vector<8x8xf32>, vector<8x8xf32>, vector<8x8xf32> -> vector<8x8xf32>
    %149 = vector.extract_strided_slice %64 {offsets = [8, 8], sizes = [8, 8], strides = [1, 1]} : vector<16x32xf32> to vector<8x8xf32>
    %150 = vector.extract_strided_slice %66 {offsets = [8, 8], sizes = [8, 8], strides = [1, 1]} : vector<16x32xf32> to vector<8x8xf32>
    %151 = vector.extract_strided_slice %67 {offsets = [8, 8], sizes = [8, 8], strides = [1, 1]} : vector<16x32xf32> to vector<8x8xf32>
    %152 = tpu.transpose %150, [1, 0] : vector<8x8xf32> -> vector<8x8xf32>
    %cst_53 = arith.constant dense<0.000000e+00> : vector<8x8xf32>
    %153 = tpu.matmul %149, %152, %cst_53 {dimension_numbers = #tpu.dot_dimension_numbers<[1], [0], [0], [1], [0, 0, 1, 1], [], []>} : vector<8x8xf32>, vector<8x8xf32>, vector<8x8xf32> -> vector<8x8xf32>
    %cst_54 = arith.constant dense<0xFF800000> : vector<8xf32>
    %154 = vector.multi_reduction <maximumf>, %153, %cst_54 [1] : vector<8x8xf32> to vector<8xf32>
    %155 = vector.shape_cast %154 : vector<8xf32> to vector<8x1xf32>
    %156 = vector.broadcast %155 : vector<8x1xf32> to vector<8x8xf32>
    %157 = arith.subf %153, %156 : vector<8x8xf32>
    %158 = math.exp %157 : vector<8x8xf32>
    %cst_55 = arith.constant dense<0.000000e+00> : vector<8xf32>
    %159 = vector.multi_reduction <add>, %158, %cst_55 [1] : vector<8x8xf32> to vector<8xf32>
    %160 = vector.shape_cast %159 : vector<8xf32> to vector<8x1xf32>
    %161 = tpu.reciprocal %160 {approx = true} : vector<8x1xf32> -> vector<8x1xf32>
    %162 = vector.broadcast %161 : vector<8x1xf32> to vector<8x8xf32>
    %163 = arith.mulf %158, %162 : vector<8x8xf32>
    %cst_56 = arith.constant dense<0.000000e+00> : vector<8x8xf32>
    %164 = tpu.matmul %163, %151, %cst_56 {dimension_numbers = #tpu.dot_dimension_numbers<[1], [0], [0], [1], [0, 0, 1, 1], [], []>} : vector<8x8xf32>, vector<8x8xf32>, vector<8x8xf32> -> vector<8x8xf32>
    %165 = vector.extract_strided_slice %64 {offsets = [8, 16], sizes = [8, 8], strides = [1, 1]} : vector<16x32xf32> to vector<8x8xf32>
    %166 = vector.extract_strided_slice %66 {offsets = [8, 16], sizes = [8, 8], strides = [1, 1]} : vector<16x32xf32> to vector<8x8xf32>
    %167 = vector.extract_strided_slice %67 {offsets = [8, 16], sizes = [8, 8], strides = [1, 1]} : vector<16x32xf32> to vector<8x8xf32>
    %168 = tpu.transpose %166, [1, 0] : vector<8x8xf32> -> vector<8x8xf32>
    %cst_57 = arith.constant dense<0.000000e+00> : vector<8x8xf32>
    %169 = tpu.matmul %165, %168, %cst_57 {dimension_numbers = #tpu.dot_dimension_numbers<[1], [0], [0], [1], [0, 0, 1, 1], [], []>} : vector<8x8xf32>, vector<8x8xf32>, vector<8x8xf32> -> vector<8x8xf32>
    %cst_58 = arith.constant dense<0xFF800000> : vector<8xf32>
    %170 = vector.multi_reduction <maximumf>, %169, %cst_58 [1] : vector<8x8xf32> to vector<8xf32>
    %171 = vector.shape_cast %170 : vector<8xf32> to vector<8x1xf32>
    %172 = vector.broadcast %171 : vector<8x1xf32> to vector<8x8xf32>
    %173 = arith.subf %169, %172 : vector<8x8xf32>
    %174 = math.exp %173 : vector<8x8xf32>
    %cst_59 = arith.constant dense<0.000000e+00> : vector<8xf32>
    %175 = vector.multi_reduction <add>, %174, %cst_59 [1] : vector<8x8xf32> to vector<8xf32>
    %176 = vector.shape_cast %175 : vector<8xf32> to vector<8x1xf32>
    %177 = tpu.reciprocal %176 {approx = true} : vector<8x1xf32> -> vector<8x1xf32>
    %178 = vector.broadcast %177 : vector<8x1xf32> to vector<8x8xf32>
    %179 = arith.mulf %174, %178 : vector<8x8xf32>
    %cst_60 = arith.constant dense<0.000000e+00> : vector<8x8xf32>
    %180 = tpu.matmul %179, %167, %cst_60 {dimension_numbers = #tpu.dot_dimension_numbers<[1], [0], [0], [1], [0, 0, 1, 1], [], []>} : vector<8x8xf32>, vector<8x8xf32>, vector<8x8xf32> -> vector<8x8xf32>
    %181 = vector.extract_strided_slice %64 {offsets = [8, 24], sizes = [8, 8], strides = [1, 1]} : vector<16x32xf32> to vector<8x8xf32>
    %182 = vector.extract_strided_slice %66 {offsets = [8, 24], sizes = [8, 8], strides = [1, 1]} : vector<16x32xf32> to vector<8x8xf32>
    %183 = vector.extract_strided_slice %67 {offsets = [8, 24], sizes = [8, 8], strides = [1, 1]} : vector<16x32xf32> to vector<8x8xf32>
    %184 = tpu.transpose %182, [1, 0] : vector<8x8xf32> -> vector<8x8xf32>
    %cst_61 = arith.constant dense<0.000000e+00> : vector<8x8xf32>
    %185 = tpu.matmul %181, %184, %cst_61 {dimension_numbers = #tpu.dot_dimension_numbers<[1], [0], [0], [1], [0, 0, 1, 1], [], []>} : vector<8x8xf32>, vector<8x8xf32>, vector<8x8xf32> -> vector<8x8xf32>
    %cst_62 = arith.constant dense<0xFF800000> : vector<8xf32>
    %186 = vector.multi_reduction <maximumf>, %185, %cst_62 [1] : vector<8x8xf32> to vector<8xf32>
    %187 = vector.shape_cast %186 : vector<8xf32> to vector<8x1xf32>
    %188 = vector.broadcast %187 : vector<8x1xf32> to vector<8x8xf32>
    %189 = arith.subf %185, %188 : vector<8x8xf32>
    %190 = math.exp %189 : vector<8x8xf32>
    %cst_63 = arith.constant dense<0.000000e+00> : vector<8xf32>
    %191 = vector.multi_reduction <add>, %190, %cst_63 [1] : vector<8x8xf32> to vector<8xf32>
    %192 = vector.shape_cast %191 : vector<8xf32> to vector<8x1xf32>
    %193 = tpu.reciprocal %192 {approx = true} : vector<8x1xf32> -> vector<8x1xf32>
    %194 = vector.broadcast %193 : vector<8x1xf32> to vector<8x8xf32>
    %195 = arith.mulf %190, %194 : vector<8x8xf32>
    %cst_64 = arith.constant dense<0.000000e+00> : vector<8x8xf32>
    %196 = tpu.matmul %195, %183, %cst_64 {dimension_numbers = #tpu.dot_dimension_numbers<[1], [0], [0], [1], [0, 0, 1, 1], [], []>} : vector<8x8xf32>, vector<8x8xf32>, vector<8x8xf32> -> vector<8x8xf32>
    %197 = tpu.concatenate %148, %164, %180, %196 in 1 : vector<8x8xf32>, vector<8x8xf32>, vector<8x8xf32>, vector<8x8xf32> -> vector<8x32xf32>
    %198 = tpu.concatenate %132, %197 in 0 : vector<8x32xf32>, vector<8x32xf32> -> vector<16x32xf32>
    %cst_65 = arith.constant dense<0.000000e+00> : vector<16x32xf32>
    %199 = tpu.matmul %198, %1, %cst_65 {dimension_numbers = #tpu.dot_dimension_numbers<[1], [0], [0], [1], [0, 0, 1, 1], [], []>} : vector<16x32xf32>, vector<32x32xf32>, vector<16x32xf32> -> vector<16x32xf32>
    %200 = arith.addf %28, %199 : vector<16x32xf32>
    %cst_66 = arith.constant dense<0.000000e+00> : vector<16xf32>
    %201 = vector.multi_reduction <add>, %200, %cst_66 [1] : vector<16x32xf32> to vector<16xf32>
    %202 = vector.shape_cast %201 : vector<16xf32> to vector<16x1xf32>
    %cst_67 = arith.constant 3.200000e+01 : f32
    %203 = vector.broadcast %cst_67 : f32 to vector<16x1xf32>
    %204 = arith.divf %202, %203 : vector<16x1xf32>
    %205 = vector.broadcast %204 : vector<16x1xf32> to vector<16x32xf32>
    %206 = arith.subf %200, %205 : vector<16x32xf32>
    %207 = arith.mulf %206, %206 : vector<16x32xf32>
    %cst_68 = arith.constant dense<0.000000e+00> : vector<16xf32>
    %208 = vector.multi_reduction <add>, %207, %cst_68 [1] : vector<16x32xf32> to vector<16xf32>
    %209 = vector.shape_cast %208 : vector<16xf32> to vector<16x1xf32>
    %cst_69 = arith.constant 3.200000e+01 : f32
    %210 = vector.broadcast %cst_69 : f32 to vector<16x1xf32>
    %211 = arith.divf %209, %210 : vector<16x1xf32>
    %212 = vector.broadcast %204 : vector<16x1xf32> to vector<16x32xf32>
    %213 = arith.subf %200, %212 : vector<16x32xf32>
    %cst_70 = arith.constant 9.99999974E-6 : f32
    %214 = vector.broadcast %cst_70 : f32 to vector<16x1xf32>
    %215 = arith.addf %211, %214 : vector<16x1xf32>
    %216 = math.rsqrt %215 : vector<16x1xf32>
    %217 = vector.broadcast %216 : vector<16x1xf32> to vector<16x32xf32>
    %218 = arith.mulf %213, %217 : vector<16x32xf32>
    %219 = arith.mulf %218, %18 : vector<16x32xf32>
    %220 = arith.addf %219, %21 : vector<16x32xf32>
    %cst_71 = arith.constant dense<0.000000e+00> : vector<16x64xf32>
    %221 = tpu.matmul %220, %2, %cst_71 {dimension_numbers = #tpu.dot_dimension_numbers<[1], [0], [0], [1], [0, 0, 1, 1], [], []>} : vector<16x32xf32>, vector<32x64xf32>, vector<16x64xf32> -> vector<16x64xf32>
    %222 = arith.addf %221, %6 : vector<16x64xf32>
    %cst_72 = arith.constant 0.000000e+00 : f32
    %223 = vector.broadcast %cst_72 : f32 to vector<16x64xf32>
    %224 = arith.maximumf %222, %223 : vector<16x64xf32>
    %cst_73 = arith.constant dense<0.000000e+00> : vector<16x32xf32>
    %225 = tpu.matmul %224, %3, %cst_73 {dimension_numbers = #tpu.dot_dimension_numbers<[1], [0], [0], [1], [0, 0, 1, 1], [], []>} : vector<16x64xf32>, vector<64x32xf32>, vector<16x32xf32> -> vector<16x32xf32>
    %226 = arith.addf %225, %9 : vector<16x32xf32>
    %227 = arith.addf %200, %226 : vector<16x32xf32>
    %cst_74 = arith.constant dense<0.000000e+00> : vector<16xf32>
    %228 = vector.multi_reduction <add>, %227, %cst_74 [1] : vector<16x32xf32> to vector<16xf32>
    %229 = vector.shape_cast %228 : vector<16xf32> to vector<16x1xf32>
    %cst_75 = arith.constant 3.200000e+01 : f32
    %230 = vector.broadcast %cst_75 : f32 to vector<16x1xf32>
    %231 = arith.divf %229, %230 : vector<16x1xf32>
    %232 = vector.broadcast %231 : vector<16x1xf32> to vector<16x32xf32>
    %233 = arith.subf %227, %232 : vector<16x32xf32>
    %234 = arith.mulf %233, %233 : vector<16x32xf32>
    %cst_76 = arith.constant dense<0.000000e+00> : vector<16xf32>
    %235 = vector.multi_reduction <add>, %234, %cst_76 [1] : vector<16x32xf32> to vector<16xf32>
    %236 = vector.shape_cast %235 : vector<16xf32> to vector<16x1xf32>
    %cst_77 = arith.constant 3.200000e+01 : f32
    %237 = vector.broadcast %cst_77 : f32 to vector<16x1xf32>
    %238 = arith.divf %236, %237 : vector<16x1xf32>
    %239 = vector.broadcast %231 : vector<16x1xf32> to vector<16x32xf32>
    %240 = arith.subf %227, %239 : vector<16x32xf32>
    %cst_78 = arith.constant 9.99999974E-6 : f32
    %241 = vector.broadcast %cst_78 : f32 to vector<16x1xf32>
    %242 = arith.addf %238, %241 : vector<16x1xf32>
    %243 = math.rsqrt %242 : vector<16x1xf32>
    %244 = vector.broadcast %243 : vector<16x1xf32> to vector<16x32xf32>
    %245 = arith.mulf %240, %244 : vector<16x32xf32>
    %246 = arith.mulf %245, %12 : vector<16x32xf32>
    %247 = arith.addf %246, %15 : vector<16x32xf32>
    %cst_79 = arith.constant dense<0.000000e+00> : vector<16x96xf32>
    %248 = tpu.matmul %247, %0, %cst_79 {dimension_numbers = #tpu.dot_dimension_numbers<[1], [0], [0], [1], [0, 0, 1, 1], [], []>} : vector<16x32xf32>, vector<32x96xf32>, vector<16x96xf32> -> vector<16x96xf32>
    %249 = vector.extract_strided_slice %248 {offsets = [0, 0], sizes = [16, 32], strides = [1, 1]} : vector<16x96xf32> to vector<16x32xf32>
    %cst_80 = arith.constant 0.353553385 : f32
    %250 = vector.broadcast %cst_80 : f32 to vector<16x32xf32>
    %251 = arith.mulf %249, %250 : vector<16x32xf32>
    %252 = arith.addf %251, %38 : vector<16x32xf32>
    %253 = vector.extract_strided_slice %248 {offsets = [0, 32], sizes = [16, 32], strides = [1, 1]} : vector<16x96xf32> to vector<16x32xf32>
    %254 = arith.addf %253, %39 : vector<16x32xf32>
    %255 = vector.extract_strided_slice %248 {offsets = [0, 64], sizes = [16, 32], strides = [1, 1]} : vector<16x96xf32> to vector<16x32xf32>
    %256 = vector.extract_strided_slice %252 {offsets = [0, 0], sizes = [8, 8], strides = [1, 1]} : vector<16x32xf32> to vector<8x8xf32>
    %257 = vector.extract_strided_slice %254 {offsets = [0, 0], sizes = [8, 8], strides = [1, 1]} : vector<16x32xf32> to vector<8x8xf32>
    %258 = vector.extract_strided_slice %255 {offsets = [0, 0], sizes = [8, 8], strides = [1, 1]} : vector<16x32xf32> to vector<8x8xf32>
    %259 = tpu.transpose %257, [1, 0] : vector<8x8xf32> -> vector<8x8xf32>
    %cst_81 = arith.constant dense<0.000000e+00> : vector<8x8xf32>
    %260 = tpu.matmul %256, %259, %cst_81 {dimension_numbers = #tpu.dot_dimension_numbers<[1], [0], [0], [1], [0, 0, 1, 1], [], []>} : vector<8x8xf32>, vector<8x8xf32>, vector<8x8xf32> -> vector<8x8xf32>
    %cst_82 = arith.constant dense<0xFF800000> : vector<8xf32>
    %261 = vector.multi_reduction <maximumf>, %260, %cst_82 [1] : vector<8x8xf32> to vector<8xf32>
    %262 = vector.shape_cast %261 : vector<8xf32> to vector<8x1xf32>
    %263 = vector.broadcast %262 : vector<8x1xf32> to vector<8x8xf32>
    %264 = arith.subf %260, %263 : vector<8x8xf32>
    %265 = math.exp %264 : vector<8x8xf32>
    %cst_83 = arith.constant dense<0.000000e+00> : vector<8xf32>
    %266 = vector.multi_reduction <add>, %265, %cst_83 [1] : vector<8x8xf32> to vector<8xf32>
    %267 = vector.shape_cast %266 : vector<8xf32> to vector<8x1xf32>
    %268 = tpu.reciprocal %267 {approx = true} : vector<8x1xf32> -> vector<8x1xf32>
    %269 = vector.broadcast %268 : vector<8x1xf32> to vector<8x8xf32>
    %270 = arith.mulf %265, %269 : vector<8x8xf32>
    %cst_84 = arith.constant dense<0.000000e+00> : vector<8x8xf32>
    %271 = tpu.matmul %270, %258, %cst_84 {dimension_numbers = #tpu.dot_dimension_numbers<[1], [0], [0], [1], [0, 0, 1, 1], [], []>} : vector<8x8xf32>, vector<8x8xf32>, vector<8x8xf32> -> vector<8x8xf32>
    %272 = vector.extract_strided_slice %252 {offsets = [0, 8], sizes = [8, 8], strides = [1, 1]} : vector<16x32xf32> to vector<8x8xf32>
    %273 = vector.extract_strided_slice %254 {offsets = [0, 8], sizes = [8, 8], strides = [1, 1]} : vector<16x32xf32> to vector<8x8xf32>
    %274 = vector.extract_strided_slice %255 {offsets = [0, 8], sizes = [8, 8], strides = [1, 1]} : vector<16x32xf32> to vector<8x8xf32>
    %275 = tpu.transpose %273, [1, 0] : vector<8x8xf32> -> vector<8x8xf32>
    %cst_85 = arith.constant dense<0.000000e+00> : vector<8x8xf32>
    %276 = tpu.matmul %272, %275, %cst_85 {dimension_numbers = #tpu.dot_dimension_numbers<[1], [0], [0], [1], [0, 0, 1, 1], [], []>} : vector<8x8xf32>, vector<8x8xf32>, vector<8x8xf32> -> vector<8x8xf32>
    %cst_86 = arith.constant dense<0xFF800000> : vector<8xf32>
    %277 = vector.multi_reduction <maximumf>, %276, %cst_86 [1] : vector<8x8xf32> to vector<8xf32>
    %278 = vector.shape_cast %277 : vector<8xf32> to vector<8x1xf32>
    %279 = vector.broadcast %278 : vector<8x1xf32> to vector<8x8xf32>
    %280 = arith.subf %276, %279 : vector<8x8xf32>
    %281 = math.exp %280 : vector<8x8xf32>
    %cst_87 = arith.constant dense<0.000000e+00> : vector<8xf32>
    %282 = vector.multi_reduction <add>, %281, %cst_87 [1] : vector<8x8xf32> to vector<8xf32>
    %283 = vector.shape_cast %282 : vector<8xf32> to vector<8x1xf32>
    %284 = tpu.reciprocal %283 {approx = true} : vector<8x1xf32> -> vector<8x1xf32>
    %285 = vector.broadcast %284 : vector<8x1xf32> to vector<8x8xf32>
    %286 = arith.mulf %281, %285 : vector<8x8xf32>
    %cst_88 = arith.constant dense<0.000000e+00> : vector<8x8xf32>
    %287 = tpu.matmul %286, %274, %cst_88 {dimension_numbers = #tpu.dot_dimension_numbers<[1], [0], [0], [1], [0, 0, 1, 1], [], []>} : vector<8x8xf32>, vector<8x8xf32>, vector<8x8xf32> -> vector<8x8xf32>
    %288 = vector.extract_strided_slice %252 {offsets = [0, 16], sizes = [8, 8], strides = [1, 1]} : vector<16x32xf32> to vector<8x8xf32>
    %289 = vector.extract_strided_slice %254 {offsets = [0, 16], sizes = [8, 8], strides = [1, 1]} : vector<16x32xf32> to vector<8x8xf32>
    %290 = vector.extract_strided_slice %255 {offsets = [0, 16], sizes = [8, 8], strides = [1, 1]} : vector<16x32xf32> to vector<8x8xf32>
    %291 = tpu.transpose %289, [1, 0] : vector<8x8xf32> -> vector<8x8xf32>
    %cst_89 = arith.constant dense<0.000000e+00> : vector<8x8xf32>
    %292 = tpu.matmul %288, %291, %cst_89 {dimension_numbers = #tpu.dot_dimension_numbers<[1], [0], [0], [1], [0, 0, 1, 1], [], []>} : vector<8x8xf32>, vector<8x8xf32>, vector<8x8xf32> -> vector<8x8xf32>
    %cst_90 = arith.constant dense<0xFF800000> : vector<8xf32>
    %293 = vector.multi_reduction <maximumf>, %292, %cst_90 [1] : vector<8x8xf32> to vector<8xf32>
    %294 = vector.shape_cast %293 : vector<8xf32> to vector<8x1xf32>
    %295 = vector.broadcast %294 : vector<8x1xf32> to vector<8x8xf32>
    %296 = arith.subf %292, %295 : vector<8x8xf32>
    %297 = math.exp %296 : vector<8x8xf32>
    %cst_91 = arith.constant dense<0.000000e+00> : vector<8xf32>
    %298 = vector.multi_reduction <add>, %297, %cst_91 [1] : vector<8x8xf32> to vector<8xf32>
    %299 = vector.shape_cast %298 : vector<8xf32> to vector<8x1xf32>
    %300 = tpu.reciprocal %299 {approx = true} : vector<8x1xf32> -> vector<8x1xf32>
    %301 = vector.broadcast %300 : vector<8x1xf32> to vector<8x8xf32>
    %302 = arith.mulf %297, %301 : vector<8x8xf32>
    %cst_92 = arith.constant dense<0.000000e+00> : vector<8x8xf32>
    %303 = tpu.matmul %302, %290, %cst_92 {dimension_numbers = #tpu.dot_dimension_numbers<[1], [0], [0], [1], [0, 0, 1, 1], [], []>} : vector<8x8xf32>, vector<8x8xf32>, vector<8x8xf32> -> vector<8x8xf32>
    %304 = vector.extract_strided_slice %252 {offsets = [0, 24], sizes = [8, 8], strides = [1, 1]} : vector<16x32xf32> to vector<8x8xf32>
    %305 = vector.extract_strided_slice %254 {offsets = [0, 24], sizes = [8, 8], strides = [1, 1]} : vector<16x32xf32> to vector<8x8xf32>
    %306 = vector.extract_strided_slice %255 {offsets = [0, 24], sizes = [8, 8], strides = [1, 1]} : vector<16x32xf32> to vector<8x8xf32>
    %307 = tpu.transpose %305, [1, 0] : vector<8x8xf32> -> vector<8x8xf32>
    %cst_93 = arith.constant dense<0.000000e+00> : vector<8x8xf32>
    %308 = tpu.matmul %304, %307, %cst_93 {dimension_numbers = #tpu.dot_dimension_numbers<[1], [0], [0], [1], [0, 0, 1, 1], [], []>} : vector<8x8xf32>, vector<8x8xf32>, vector<8x8xf32> -> vector<8x8xf32>
    %cst_94 = arith.constant dense<0xFF800000> : vector<8xf32>
    %309 = vector.multi_reduction <maximumf>, %308, %cst_94 [1] : vector<8x8xf32> to vector<8xf32>
    %310 = vector.shape_cast %309 : vector<8xf32> to vector<8x1xf32>
    %311 = vector.broadcast %310 : vector<8x1xf32> to vector<8x8xf32>
    %312 = arith.subf %308, %311 : vector<8x8xf32>
    %313 = math.exp %312 : vector<8x8xf32>
    %cst_95 = arith.constant dense<0.000000e+00> : vector<8xf32>
    %314 = vector.multi_reduction <add>, %313, %cst_95 [1] : vector<8x8xf32> to vector<8xf32>
    %315 = vector.shape_cast %314 : vector<8xf32> to vector<8x1xf32>
    %316 = tpu.reciprocal %315 {approx = true} : vector<8x1xf32> -> vector<8x1xf32>
    %317 = vector.broadcast %316 : vector<8x1xf32> to vector<8x8xf32>
    %318 = arith.mulf %313, %317 : vector<8x8xf32>
    %cst_96 = arith.constant dense<0.000000e+00> : vector<8x8xf32>
    %319 = tpu.matmul %318, %306, %cst_96 {dimension_numbers = #tpu.dot_dimension_numbers<[1], [0], [0], [1], [0, 0, 1, 1], [], []>} : vector<8x8xf32>, vector<8x8xf32>, vector<8x8xf32> -> vector<8x8xf32>
    %320 = tpu.concatenate %271, %287, %303, %319 in 1 : vector<8x8xf32>, vector<8x8xf32>, vector<8x8xf32>, vector<8x8xf32> -> vector<8x32xf32>
    %321 = vector.extract_strided_slice %252 {offsets = [8, 0], sizes = [8, 8], strides = [1, 1]} : vector<16x32xf32> to vector<8x8xf32>
    %322 = vector.extract_strided_slice %254 {offsets = [8, 0], sizes = [8, 8], strides = [1, 1]} : vector<16x32xf32> to vector<8x8xf32>
    %323 = vector.extract_strided_slice %255 {offsets = [8, 0], sizes = [8, 8], strides = [1, 1]} : vector<16x32xf32> to vector<8x8xf32>
    %324 = tpu.transpose %322, [1, 0] : vector<8x8xf32> -> vector<8x8xf32>
    %cst_97 = arith.constant dense<0.000000e+00> : vector<8x8xf32>
    %325 = tpu.matmul %321, %324, %cst_97 {dimension_numbers = #tpu.dot_dimension_numbers<[1], [0], [0], [1], [0, 0, 1, 1], [], []>} : vector<8x8xf32>, vector<8x8xf32>, vector<8x8xf32> -> vector<8x8xf32>
    %cst_98 = arith.constant dense<0xFF800000> : vector<8xf32>
    %326 = vector.multi_reduction <maximumf>, %325, %cst_98 [1] : vector<8x8xf32> to vector<8xf32>
    %327 = vector.shape_cast %326 : vector<8xf32> to vector<8x1xf32>
    %328 = vector.broadcast %327 : vector<8x1xf32> to vector<8x8xf32>
    %329 = arith.subf %325, %328 : vector<8x8xf32>
    %330 = math.exp %329 : vector<8x8xf32>
    %cst_99 = arith.constant dense<0.000000e+00> : vector<8xf32>
    %331 = vector.multi_reduction <add>, %330, %cst_99 [1] : vector<8x8xf32> to vector<8xf32>
    %332 = vector.shape_cast %331 : vector<8xf32> to vector<8x1xf32>
    %333 = tpu.reciprocal %332 {approx = true} : vector<8x1xf32> -> vector<8x1xf32>
    %334 = vector.broadcast %333 : vector<8x1xf32> to vector<8x8xf32>
    %335 = arith.mulf %330, %334 : vector<8x8xf32>
    %cst_100 = arith.constant dense<0.000000e+00> : vector<8x8xf32>
    %336 = tpu.matmul %335, %323, %cst_100 {dimension_numbers = #tpu.dot_dimension_numbers<[1], [0], [0], [1], [0, 0, 1, 1], [], []>} : vector<8x8xf32>, vector<8x8xf32>, vector<8x8xf32> -> vector<8x8xf32>
    %337 = vector.extract_strided_slice %252 {offsets = [8, 8], sizes = [8, 8], strides = [1, 1]} : vector<16x32xf32> to vector<8x8xf32>
    %338 = vector.extract_strided_slice %254 {offsets = [8, 8], sizes = [8, 8], strides = [1, 1]} : vector<16x32xf32> to vector<8x8xf32>
    %339 = vector.extract_strided_slice %255 {offsets = [8, 8], sizes = [8, 8], strides = [1, 1]} : vector<16x32xf32> to vector<8x8xf32>
    %340 = tpu.transpose %338, [1, 0] : vector<8x8xf32> -> vector<8x8xf32>
    %cst_101 = arith.constant dense<0.000000e+00> : vector<8x8xf32>
    %341 = tpu.matmul %337, %340, %cst_101 {dimension_numbers = #tpu.dot_dimension_numbers<[1], [0], [0], [1], [0, 0, 1, 1], [], []>} : vector<8x8xf32>, vector<8x8xf32>, vector<8x8xf32> -> vector<8x8xf32>
    %cst_102 = arith.constant dense<0xFF800000> : vector<8xf32>
    %342 = vector.multi_reduction <maximumf>, %341, %cst_102 [1] : vector<8x8xf32> to vector<8xf32>
    %343 = vector.shape_cast %342 : vector<8xf32> to vector<8x1xf32>
    %344 = vector.broadcast %343 : vector<8x1xf32> to vector<8x8xf32>
    %345 = arith.subf %341, %344 : vector<8x8xf32>
    %346 = math.exp %345 : vector<8x8xf32>
    %cst_103 = arith.constant dense<0.000000e+00> : vector<8xf32>
    %347 = vector.multi_reduction <add>, %346, %cst_103 [1] : vector<8x8xf32> to vector<8xf32>
    %348 = vector.shape_cast %347 : vector<8xf32> to vector<8x1xf32>
    %349 = tpu.reciprocal %348 {approx = true} : vector<8x1xf32> -> vector<8x1xf32>
    %350 = vector.broadcast %349 : vector<8x1xf32> to vector<8x8xf32>
    %351 = arith.mulf %346, %350 : vector<8x8xf32>
    %cst_104 = arith.constant dense<0.000000e+00> : vector<8x8xf32>
    %352 = tpu.matmul %351, %339, %cst_104 {dimension_numbers = #tpu.dot_dimension_numbers<[1], [0], [0], [1], [0, 0, 1, 1], [], []>} : vector<8x8xf32>, vector<8x8xf32>, vector<8x8xf32> -> vector<8x8xf32>
    %353 = vector.extract_strided_slice %252 {offsets = [8, 16], sizes = [8, 8], strides = [1, 1]} : vector<16x32xf32> to vector<8x8xf32>
    %354 = vector.extract_strided_slice %254 {offsets = [8, 16], sizes = [8, 8], strides = [1, 1]} : vector<16x32xf32> to vector<8x8xf32>
    %355 = vector.extract_strided_slice %255 {offsets = [8, 16], sizes = [8, 8], strides = [1, 1]} : vector<16x32xf32> to vector<8x8xf32>
    %356 = tpu.transpose %354, [1, 0] : vector<8x8xf32> -> vector<8x8xf32>
    %cst_105 = arith.constant dense<0.000000e+00> : vector<8x8xf32>
    %357 = tpu.matmul %353, %356, %cst_105 {dimension_numbers = #tpu.dot_dimension_numbers<[1], [0], [0], [1], [0, 0, 1, 1], [], []>} : vector<8x8xf32>, vector<8x8xf32>, vector<8x8xf32> -> vector<8x8xf32>
    %cst_106 = arith.constant dense<0xFF800000> : vector<8xf32>
    %358 = vector.multi_reduction <maximumf>, %357, %cst_106 [1] : vector<8x8xf32> to vector<8xf32>
    %359 = vector.shape_cast %358 : vector<8xf32> to vector<8x1xf32>
    %360 = vector.broadcast %359 : vector<8x1xf32> to vector<8x8xf32>
    %361 = arith.subf %357, %360 : vector<8x8xf32>
    %362 = math.exp %361 : vector<8x8xf32>
    %cst_107 = arith.constant dense<0.000000e+00> : vector<8xf32>
    %363 = vector.multi_reduction <add>, %362, %cst_107 [1] : vector<8x8xf32> to vector<8xf32>
    %364 = vector.shape_cast %363 : vector<8xf32> to vector<8x1xf32>
    %365 = tpu.reciprocal %364 {approx = true} : vector<8x1xf32> -> vector<8x1xf32>
    %366 = vector.broadcast %365 : vector<8x1xf32> to vector<8x8xf32>
    %367 = arith.mulf %362, %366 : vector<8x8xf32>
    %cst_108 = arith.constant dense<0.000000e+00> : vector<8x8xf32>
    %368 = tpu.matmul %367, %355, %cst_108 {dimension_numbers = #tpu.dot_dimension_numbers<[1], [0], [0], [1], [0, 0, 1, 1], [], []>} : vector<8x8xf32>, vector<8x8xf32>, vector<8x8xf32> -> vector<8x8xf32>
    %369 = vector.extract_strided_slice %252 {offsets = [8, 24], sizes = [8, 8], strides = [1, 1]} : vector<16x32xf32> to vector<8x8xf32>
    %370 = vector.extract_strided_slice %254 {offsets = [8, 24], sizes = [8, 8], strides = [1, 1]} : vector<16x32xf32> to vector<8x8xf32>
    %371 = vector.extract_strided_slice %255 {offsets = [8, 24], sizes = [8, 8], strides = [1, 1]} : vector<16x32xf32> to vector<8x8xf32>
    %372 = tpu.transpose %370, [1, 0] : vector<8x8xf32> -> vector<8x8xf32>
    %cst_109 = arith.constant dense<0.000000e+00> : vector<8x8xf32>
    %373 = tpu.matmul %369, %372, %cst_109 {dimension_numbers = #tpu.dot_dimension_numbers<[1], [0], [0], [1], [0, 0, 1, 1], [], []>} : vector<8x8xf32>, vector<8x8xf32>, vector<8x8xf32> -> vector<8x8xf32>
    %cst_110 = arith.constant dense<0xFF800000> : vector<8xf32>
    %374 = vector.multi_reduction <maximumf>, %373, %cst_110 [1] : vector<8x8xf32> to vector<8xf32>
    %375 = vector.shape_cast %374 : vector<8xf32> to vector<8x1xf32>
    %376 = vector.broadcast %375 : vector<8x1xf32> to vector<8x8xf32>
    %377 = arith.subf %373, %376 : vector<8x8xf32>
    %378 = math.exp %377 : vector<8x8xf32>
    %cst_111 = arith.constant dense<0.000000e+00> : vector<8xf32>
    %379 = vector.multi_reduction <add>, %378, %cst_111 [1] : vector<8x8xf32> to vector<8xf32>
    %380 = vector.shape_cast %379 : vector<8xf32> to vector<8x1xf32>
    %381 = tpu.reciprocal %380 {approx = true} : vector<8x1xf32> -> vector<8x1xf32>
    %382 = vector.broadcast %381 : vector<8x1xf32> to vector<8x8xf32>
    %383 = arith.mulf %378, %382 : vector<8x8xf32>
    %cst_112 = arith.constant dense<0.000000e+00> : vector<8x8xf32>
    %384 = tpu.matmul %383, %371, %cst_112 {dimension_numbers = #tpu.dot_dimension_numbers<[1], [0], [0], [1], [0, 0, 1, 1], [], []>} : vector<8x8xf32>, vector<8x8xf32>, vector<8x8xf32> -> vector<8x8xf32>
    %385 = tpu.concatenate %336, %352, %368, %384 in 1 : vector<8x8xf32>, vector<8x8xf32>, vector<8x8xf32>, vector<8x8xf32> -> vector<8x32xf32>
    %386 = tpu.concatenate %320, %385 in 0 : vector<8x32xf32>, vector<8x32xf32> -> vector<16x32xf32>
    %cst_113 = arith.constant dense<0.000000e+00> : vector<16x32xf32>
    %387 = tpu.matmul %386, %1, %cst_113 {dimension_numbers = #tpu.dot_dimension_numbers<[1], [0], [0], [1], [0, 0, 1, 1], [], []>} : vector<16x32xf32>, vector<32x32xf32>, vector<16x32xf32> -> vector<16x32xf32>
    %388 = arith.addf %227, %387 : vector<16x32xf32>
    %cst_114 = arith.constant dense<0.000000e+00> : vector<16xf32>
    %389 = vector.multi_reduction <add>, %388, %cst_114 [1] : vector<16x32xf32> to vector<16xf32>
    %390 = vector.shape_cast %389 : vector<16xf32> to vector<16x1xf32>
    %cst_115 = arith.constant 3.200000e+01 : f32
    %391 = vector.broadcast %cst_115 : f32 to vector<16x1xf32>
    %392 = arith.divf %390, %391 : vector<16x1xf32>
    %393 = vector.broadcast %392 : vector<16x1xf32> to vector<16x32xf32>
    %394 = arith.subf %388, %393 : vector<16x32xf32>
    %395 = arith.mulf %394, %394 : vector<16x32xf32>
    %cst_116 = arith.constant dense<0.000000e+00> : vector<16xf32>
    %396 = vector.multi_reduction <add>, %395, %cst_116 [1] : vector<16x32xf32> to vector<16xf32>
    %397 = vector.shape_cast %396 : vector<16xf32> to vector<16x1xf32>
    %cst_117 = arith.constant 3.200000e+01 : f32
    %398 = vector.broadcast %cst_117 : f32 to vector<16x1xf32>
    %399 = arith.divf %397, %398 : vector<16x1xf32>
    %400 = vector.broadcast %392 : vector<16x1xf32> to vector<16x32xf32>
    %401 = arith.subf %388, %400 : vector<16x32xf32>
    %cst_118 = arith.constant 9.99999974E-6 : f32
    %402 = vector.broadcast %cst_118 : f32 to vector<16x1xf32>
    %403 = arith.addf %399, %402 : vector<16x1xf32>
    %404 = math.rsqrt %403 : vector<16x1xf32>
    %405 = vector.broadcast %404 : vector<16x1xf32> to vector<16x32xf32>
    %406 = arith.mulf %401, %405 : vector<16x32xf32>
    %407 = arith.mulf %406, %18 : vector<16x32xf32>
    %408 = arith.addf %407, %21 : vector<16x32xf32>
    %cst_119 = arith.constant dense<0.000000e+00> : vector<16x64xf32>
    %409 = tpu.matmul %408, %2, %cst_119 {dimension_numbers = #tpu.dot_dimension_numbers<[1], [0], [0], [1], [0, 0, 1, 1], [], []>} : vector<16x32xf32>, vector<32x64xf32>, vector<16x64xf32> -> vector<16x64xf32>
    %410 = arith.addf %409, %6 : vector<16x64xf32>
    %cst_120 = arith.constant 0.000000e+00 : f32
    %411 = vector.broadcast %cst_120 : f32 to vector<16x64xf32>
    %412 = arith.maximumf %410, %411 : vector<16x64xf32>
    %cst_121 = arith.constant dense<0.000000e+00> : vector<16x32xf32>
    %413 = tpu.matmul %412, %3, %cst_121 {dimension_numbers = #tpu.dot_dimension_numbers<[1], [0], [0], [1], [0, 0, 1, 1], [], []>} : vector<16x64xf32>, vector<64x32xf32>, vector<16x32xf32> -> vector<16x32xf32>
    %414 = arith.addf %413, %9 : vector<16x32xf32>
    %415 = arith.addf %388, %414 : vector<16x32xf32>
    %cst_122 = arith.constant dense<0.000000e+00> : vector<16xf32>
    %416 = vector.multi_reduction <add>, %415, %cst_122 [1] : vector<16x32xf32> to vector<16xf32>
    %417 = vector.shape_cast %416 : vector<16xf32> to vector<16x1xf32>
    %cst_123 = arith.constant 3.200000e+01 : f32
    %418 = vector.broadcast %cst_123 : f32 to vector<16x1xf32>
    %419 = arith.divf %417, %418 : vector<16x1xf32>
    %420 = vector.broadcast %419 : vector<16x1xf32> to vector<16x32xf32>
    %421 = arith.subf %415, %420 : vector<16x32xf32>
    %422 = arith.mulf %421, %421 : vector<16x32xf32>
    %cst_124 = arith.constant dense<0.000000e+00> : vector<16xf32>
    %423 = vector.multi_reduction <add>, %422, %cst_124 [1] : vector<16x32xf32> to vector<16xf32>
    %424 = vector.shape_cast %423 : vector<16xf32> to vector<16x1xf32>
    %cst_125 = arith.constant 3.200000e+01 : f32
    %425 = vector.broadcast %cst_125 : f32 to vector<16x1xf32>
    %426 = arith.divf %424, %425 : vector<16x1xf32>
    %427 = vector.broadcast %419 : vector<16x1xf32> to vector<16x32xf32>
    %428 = arith.subf %415, %427 : vector<16x32xf32>
    %cst_126 = arith.constant 9.99999974E-6 : f32
    %429 = vector.broadcast %cst_126 : f32 to vector<16x1xf32>
    %430 = arith.addf %426, %429 : vector<16x1xf32>
    %431 = math.rsqrt %430 : vector<16x1xf32>
    %432 = vector.broadcast %431 : vector<16x1xf32> to vector<16x32xf32>
    %433 = arith.mulf %428, %432 : vector<16x32xf32>
    %434 = arith.mulf %433, %12 : vector<16x32xf32>
    %435 = arith.addf %434, %15 : vector<16x32xf32>
    %cst_127 = arith.constant dense<0.000000e+00> : vector<16x96xf32>
    %436 = tpu.matmul %435, %0, %cst_127 {dimension_numbers = #tpu.dot_dimension_numbers<[1], [0], [0], [1], [0, 0, 1, 1], [], []>} : vector<16x32xf32>, vector<32x96xf32>, vector<16x96xf32> -> vector<16x96xf32>
    %437 = vector.extract_strided_slice %436 {offsets = [0, 0], sizes = [16, 32], strides = [1, 1]} : vector<16x96xf32> to vector<16x32xf32>
    %cst_128 = arith.constant 0.353553385 : f32
    %438 = vector.broadcast %cst_128 : f32 to vector<16x32xf32>
    %439 = arith.mulf %437, %438 : vector<16x32xf32>
    %440 = arith.addf %439, %38 : vector<16x32xf32>
    %441 = vector.extract_strided_slice %436 {offsets = [0, 32], sizes = [16, 32], strides = [1, 1]} : vector<16x96xf32> to vector<16x32xf32>
    %442 = arith.addf %441, %39 : vector<16x32xf32>
    %443 = vector.extract_strided_slice %436 {offsets = [0, 64], sizes = [16, 32], strides = [1, 1]} : vector<16x96xf32> to vector<16x32xf32>
    %444 = vector.extract_strided_slice %440 {offsets = [0, 0], sizes = [8, 8], strides = [1, 1]} : vector<16x32xf32> to vector<8x8xf32>
    %445 = vector.extract_strided_slice %442 {offsets = [0, 0], sizes = [8, 8], strides = [1, 1]} : vector<16x32xf32> to vector<8x8xf32>
    %446 = vector.extract_strided_slice %443 {offsets = [0, 0], sizes = [8, 8], strides = [1, 1]} : vector<16x32xf32> to vector<8x8xf32>
    %447 = tpu.transpose %445, [1, 0] : vector<8x8xf32> -> vector<8x8xf32>
    %cst_129 = arith.constant dense<0.000000e+00> : vector<8x8xf32>
    %448 = tpu.matmul %444, %447, %cst_129 {dimension_numbers = #tpu.dot_dimension_numbers<[1], [0], [0], [1], [0, 0, 1, 1], [], []>} : vector<8x8xf32>, vector<8x8xf32>, vector<8x8xf32> -> vector<8x8xf32>
    %cst_130 = arith.constant dense<0xFF800000> : vector<8xf32>
    %449 = vector.multi_reduction <maximumf>, %448, %cst_130 [1] : vector<8x8xf32> to vector<8xf32>
    %450 = vector.shape_cast %449 : vector<8xf32> to vector<8x1xf32>
    %451 = vector.broadcast %450 : vector<8x1xf32> to vector<8x8xf32>
    %452 = arith.subf %448, %451 : vector<8x8xf32>
    %453 = math.exp %452 : vector<8x8xf32>
    %cst_131 = arith.constant dense<0.000000e+00> : vector<8xf32>
    %454 = vector.multi_reduction <add>, %453, %cst_131 [1] : vector<8x8xf32> to vector<8xf32>
    %455 = vector.shape_cast %454 : vector<8xf32> to vector<8x1xf32>
    %456 = tpu.reciprocal %455 {approx = true} : vector<8x1xf32> -> vector<8x1xf32>
    %457 = vector.broadcast %456 : vector<8x1xf32> to vector<8x8xf32>
    %458 = arith.mulf %453, %457 : vector<8x8xf32>
    %cst_132 = arith.constant dense<0.000000e+00> : vector<8x8xf32>
    %459 = tpu.matmul %458, %446, %cst_132 {dimension_numbers = #tpu.dot_dimension_numbers<[1], [0], [0], [1], [0, 0, 1, 1], [], []>} : vector<8x8xf32>, vector<8x8xf32>, vector<8x8xf32> -> vector<8x8xf32>
    %460 = vector.extract_strided_slice %440 {offsets = [0, 8], sizes = [8, 8], strides = [1, 1]} : vector<16x32xf32> to vector<8x8xf32>
    %461 = vector.extract_strided_slice %442 {offsets = [0, 8], sizes = [8, 8], strides = [1, 1]} : vector<16x32xf32> to vector<8x8xf32>
    %462 = vector.extract_strided_slice %443 {offsets = [0, 8], sizes = [8, 8], strides = [1, 1]} : vector<16x32xf32> to vector<8x8xf32>
    %463 = tpu.transpose %461, [1, 0] : vector<8x8xf32> -> vector<8x8xf32>
    %cst_133 = arith.constant dense<0.000000e+00> : vector<8x8xf32>
    %464 = tpu.matmul %460, %463, %cst_133 {dimension_numbers = #tpu.dot_dimension_numbers<[1], [0], [0], [1], [0, 0, 1, 1], [], []>} : vector<8x8xf32>, vector<8x8xf32>, vector<8x8xf32> -> vector<8x8xf32>
    %cst_134 = arith.constant dense<0xFF800000> : vector<8xf32>
    %465 = vector.multi_reduction <maximumf>, %464, %cst_134 [1] : vector<8x8xf32> to vector<8xf32>
    %466 = vector.shape_cast %465 : vector<8xf32> to vector<8x1xf32>
    %467 = vector.broadcast %466 : vector<8x1xf32> to vector<8x8xf32>
    %468 = arith.subf %464, %467 : vector<8x8xf32>
    %469 = math.exp %468 : vector<8x8xf32>
    %cst_135 = arith.constant dense<0.000000e+00> : vector<8xf32>
    %470 = vector.multi_reduction <add>, %469, %cst_135 [1] : vector<8x8xf32> to vector<8xf32>
    %471 = vector.shape_cast %470 : vector<8xf32> to vector<8x1xf32>
    %472 = tpu.reciprocal %471 {approx = true} : vector<8x1xf32> -> vector<8x1xf32>
    %473 = vector.broadcast %472 : vector<8x1xf32> to vector<8x8xf32>
    %474 = arith.mulf %469, %473 : vector<8x8xf32>
    %cst_136 = arith.constant dense<0.000000e+00> : vector<8x8xf32>
    %475 = tpu.matmul %474, %462, %cst_136 {dimension_numbers = #tpu.dot_dimension_numbers<[1], [0], [0], [1], [0, 0, 1, 1], [], []>} : vector<8x8xf32>, vector<8x8xf32>, vector<8x8xf32> -> vector<8x8xf32>
    %476 = vector.extract_strided_slice %440 {offsets = [0, 16], sizes = [8, 8], strides = [1, 1]} : vector<16x32xf32> to vector<8x8xf32>
    %477 = vector.extract_strided_slice %442 {offsets = [0, 16], sizes = [8, 8], strides = [1, 1]} : vector<16x32xf32> to vector<8x8xf32>
    %478 = vector.extract_strided_slice %443 {offsets = [0, 16], sizes = [8, 8], strides = [1, 1]} : vector<16x32xf32> to vector<8x8xf32>
    %479 = tpu.transpose %477, [1, 0] : vector<8x8xf32> -> vector<8x8xf32>
    %cst_137 = arith.constant dense<0.000000e+00> : vector<8x8xf32>
    %480 = tpu.matmul %476, %479, %cst_137 {dimension_numbers = #tpu.dot_dimension_numbers<[1], [0], [0], [1], [0, 0, 1, 1], [], []>} : vector<8x8xf32>, vector<8x8xf32>, vector<8x8xf32> -> vector<8x8xf32>
    %cst_138 = arith.constant dense<0xFF800000> : vector<8xf32>
    %481 = vector.multi_reduction <maximumf>, %480, %cst_138 [1] : vector<8x8xf32> to vector<8xf32>
    %482 = vector.shape_cast %481 : vector<8xf32> to vector<8x1xf32>
    %483 = vector.broadcast %482 : vector<8x1xf32> to vector<8x8xf32>
    %484 = arith.subf %480, %483 : vector<8x8xf32>
    %485 = math.exp %484 : vector<8x8xf32>
    %cst_139 = arith.constant dense<0.000000e+00> : vector<8xf32>
    %486 = vector.multi_reduction <add>, %485, %cst_139 [1] : vector<8x8xf32> to vector<8xf32>
    %487 = vector.shape_cast %486 : vector<8xf32> to vector<8x1xf32>
    %488 = tpu.reciprocal %487 {approx = true} : vector<8x1xf32> -> vector<8x1xf32>
    %489 = vector.broadcast %488 : vector<8x1xf32> to vector<8x8xf32>
    %490 = arith.mulf %485, %489 : vector<8x8xf32>
    %cst_140 = arith.constant dense<0.000000e+00> : vector<8x8xf32>
    %491 = tpu.matmul %490, %478, %cst_140 {dimension_numbers = #tpu.dot_dimension_numbers<[1], [0], [0], [1], [0, 0, 1, 1], [], []>} : vector<8x8xf32>, vector<8x8xf32>, vector<8x8xf32> -> vector<8x8xf32>
    %492 = vector.extract_strided_slice %440 {offsets = [0, 24], sizes = [8, 8], strides = [1, 1]} : vector<16x32xf32> to vector<8x8xf32>
    %493 = vector.extract_strided_slice %442 {offsets = [0, 24], sizes = [8, 8], strides = [1, 1]} : vector<16x32xf32> to vector<8x8xf32>
    %494 = vector.extract_strided_slice %443 {offsets = [0, 24], sizes = [8, 8], strides = [1, 1]} : vector<16x32xf32> to vector<8x8xf32>
    %495 = tpu.transpose %493, [1, 0] : vector<8x8xf32> -> vector<8x8xf32>
    %cst_141 = arith.constant dense<0.000000e+00> : vector<8x8xf32>
    %496 = tpu.matmul %492, %495, %cst_141 {dimension_numbers = #tpu.dot_dimension_numbers<[1], [0], [0], [1], [0, 0, 1, 1], [], []>} : vector<8x8xf32>, vector<8x8xf32>, vector<8x8xf32> -> vector<8x8xf32>
    %cst_142 = arith.constant dense<0xFF800000> : vector<8xf32>
    %497 = vector.multi_reduction <maximumf>, %496, %cst_142 [1] : vector<8x8xf32> to vector<8xf32>
    %498 = vector.shape_cast %497 : vector<8xf32> to vector<8x1xf32>
    %499 = vector.broadcast %498 : vector<8x1xf32> to vector<8x8xf32>
    %500 = arith.subf %496, %499 : vector<8x8xf32>
    %501 = math.exp %500 : vector<8x8xf32>
    %cst_143 = arith.constant dense<0.000000e+00> : vector<8xf32>
    %502 = vector.multi_reduction <add>, %501, %cst_143 [1] : vector<8x8xf32> to vector<8xf32>
    %503 = vector.shape_cast %502 : vector<8xf32> to vector<8x1xf32>
    %504 = tpu.reciprocal %503 {approx = true} : vector<8x1xf32> -> vector<8x1xf32>
    %505 = vector.broadcast %504 : vector<8x1xf32> to vector<8x8xf32>
    %506 = arith.mulf %501, %505 : vector<8x8xf32>
    %cst_144 = arith.constant dense<0.000000e+00> : vector<8x8xf32>
    %507 = tpu.matmul %506, %494, %cst_144 {dimension_numbers = #tpu.dot_dimension_numbers<[1], [0], [0], [1], [0, 0, 1, 1], [], []>} : vector<8x8xf32>, vector<8x8xf32>, vector<8x8xf32> -> vector<8x8xf32>
    %508 = tpu.concatenate %459, %475, %491, %507 in 1 : vector<8x8xf32>, vector<8x8xf32>, vector<8x8xf32>, vector<8x8xf32> -> vector<8x32xf32>
    %509 = vector.extract_strided_slice %440 {offsets = [8, 0], sizes = [8, 8], strides = [1, 1]} : vector<16x32xf32> to vector<8x8xf32>
    %510 = vector.extract_strided_slice %442 {offsets = [8, 0], sizes = [8, 8], strides = [1, 1]} : vector<16x32xf32> to vector<8x8xf32>
    %511 = vector.extract_strided_slice %443 {offsets = [8, 0], sizes = [8, 8], strides = [1, 1]} : vector<16x32xf32> to vector<8x8xf32>
    %512 = tpu.transpose %510, [1, 0] : vector<8x8xf32> -> vector<8x8xf32>
    %cst_145 = arith.constant dense<0.000000e+00> : vector<8x8xf32>
    %513 = tpu.matmul %509, %512, %cst_145 {dimension_numbers = #tpu.dot_dimension_numbers<[1], [0], [0], [1], [0, 0, 1, 1], [], []>} : vector<8x8xf32>, vector<8x8xf32>, vector<8x8xf32> -> vector<8x8xf32>
    %cst_146 = arith.constant dense<0xFF800000> : vector<8xf32>
    %514 = vector.multi_reduction <maximumf>, %513, %cst_146 [1] : vector<8x8xf32> to vector<8xf32>
    %515 = vector.shape_cast %514 : vector<8xf32> to vector<8x1xf32>
    %516 = vector.broadcast %515 : vector<8x1xf32> to vector<8x8xf32>
    %517 = arith.subf %513, %516 : vector<8x8xf32>
    %518 = math.exp %517 : vector<8x8xf32>
    %cst_147 = arith.constant dense<0.000000e+00> : vector<8xf32>
    %519 = vector.multi_reduction <add>, %518, %cst_147 [1] : vector<8x8xf32> to vector<8xf32>
    %520 = vector.shape_cast %519 : vector<8xf32> to vector<8x1xf32>
    %521 = tpu.reciprocal %520 {approx = true} : vector<8x1xf32> -> vector<8x1xf32>
    %522 = vector.broadcast %521 : vector<8x1xf32> to vector<8x8xf32>
    %523 = arith.mulf %518, %522 : vector<8x8xf32>
    %cst_148 = arith.constant dense<0.000000e+00> : vector<8x8xf32>
    %524 = tpu.matmul %523, %511, %cst_148 {dimension_numbers = #tpu.dot_dimension_numbers<[1], [0], [0], [1], [0, 0, 1, 1], [], []>} : vector<8x8xf32>, vector<8x8xf32>, vector<8x8xf32> -> vector<8x8xf32>
    %525 = vector.extract_strided_slice %440 {offsets = [8, 8], sizes = [8, 8], strides = [1, 1]} : vector<16x32xf32> to vector<8x8xf32>
    %526 = vector.extract_strided_slice %442 {offsets = [8, 8], sizes = [8, 8], strides = [1, 1]} : vector<16x32xf32> to vector<8x8xf32>
    %527 = vector.extract_strided_slice %443 {offsets = [8, 8], sizes = [8, 8], strides = [1, 1]} : vector<16x32xf32> to vector<8x8xf32>
    %528 = tpu.transpose %526, [1, 0] : vector<8x8xf32> -> vector<8x8xf32>
    %cst_149 = arith.constant dense<0.000000e+00> : vector<8x8xf32>
    %529 = tpu.matmul %525, %528, %cst_149 {dimension_numbers = #tpu.dot_dimension_numbers<[1], [0], [0], [1], [0, 0, 1, 1], [], []>} : vector<8x8xf32>, vector<8x8xf32>, vector<8x8xf32> -> vector<8x8xf32>
    %cst_150 = arith.constant dense<0xFF800000> : vector<8xf32>
    %530 = vector.multi_reduction <maximumf>, %529, %cst_150 [1] : vector<8x8xf32> to vector<8xf32>
    %531 = vector.shape_cast %530 : vector<8xf32> to vector<8x1xf32>
    %532 = vector.broadcast %531 : vector<8x1xf32> to vector<8x8xf32>
    %533 = arith.subf %529, %532 : vector<8x8xf32>
    %534 = math.exp %533 : vector<8x8xf32>
    %cst_151 = arith.constant dense<0.000000e+00> : vector<8xf32>
    %535 = vector.multi_reduction <add>, %534, %cst_151 [1] : vector<8x8xf32> to vector<8xf32>
    %536 = vector.shape_cast %535 : vector<8xf32> to vector<8x1xf32>
    %537 = tpu.reciprocal %536 {approx = true} : vector<8x1xf32> -> vector<8x1xf32>
    %538 = vector.broadcast %537 : vector<8x1xf32> to vector<8x8xf32>
    %539 = arith.mulf %534, %538 : vector<8x8xf32>
    %cst_152 = arith.constant dense<0.000000e+00> : vector<8x8xf32>
    %540 = tpu.matmul %539, %527, %cst_152 {dimension_numbers = #tpu.dot_dimension_numbers<[1], [0], [0], [1], [0, 0, 1, 1], [], []>} : vector<8x8xf32>, vector<8x8xf32>, vector<8x8xf32> -> vector<8x8xf32>
    %541 = vector.extract_strided_slice %440 {offsets = [8, 16], sizes = [8, 8], strides = [1, 1]} : vector<16x32xf32> to vector<8x8xf32>
    %542 = vector.extract_strided_slice %442 {offsets = [8, 16], sizes = [8, 8], strides = [1, 1]} : vector<16x32xf32> to vector<8x8xf32>
    %543 = vector.extract_strided_slice %443 {offsets = [8, 16], sizes = [8, 8], strides = [1, 1]} : vector<16x32xf32> to vector<8x8xf32>
    %544 = tpu.transpose %542, [1, 0] : vector<8x8xf32> -> vector<8x8xf32>
    %cst_153 = arith.constant dense<0.000000e+00> : vector<8x8xf32>
    %545 = tpu.matmul %541, %544, %cst_153 {dimension_numbers = #tpu.dot_dimension_numbers<[1], [0], [0], [1], [0, 0, 1, 1], [], []>} : vector<8x8xf32>, vector<8x8xf32>, vector<8x8xf32> -> vector<8x8xf32>
    %cst_154 = arith.constant dense<0xFF800000> : vector<8xf32>
    %546 = vector.multi_reduction <maximumf>, %545, %cst_154 [1] : vector<8x8xf32> to vector<8xf32>
    %547 = vector.shape_cast %546 : vector<8xf32> to vector<8x1xf32>
    %548 = vector.broadcast %547 : vector<8x1xf32> to vector<8x8xf32>
    %549 = arith.subf %545, %548 : vector<8x8xf32>
    %550 = math.exp %549 : vector<8x8xf32>
    %cst_155 = arith.constant dense<0.000000e+00> : vector<8xf32>
    %551 = vector.multi_reduction <add>, %550, %cst_155 [1] : vector<8x8xf32> to vector<8xf32>
    %552 = vector.shape_cast %551 : vector<8xf32> to vector<8x1xf32>
    %553 = tpu.reciprocal %552 {approx = true} : vector<8x1xf32> -> vector<8x1xf32>
    %554 = vector.broadcast %553 : vector<8x1xf32> to vector<8x8xf32>
    %555 = arith.mulf %550, %554 : vector<8x8xf32>
    %cst_156 = arith.constant dense<0.000000e+00> : vector<8x8xf32>
    %556 = tpu.matmul %555, %543, %cst_156 {dimension_numbers = #tpu.dot_dimension_numbers<[1], [0], [0], [1], [0, 0, 1, 1], [], []>} : vector<8x8xf32>, vector<8x8xf32>, vector<8x8xf32> -> vector<8x8xf32>
    %557 = vector.extract_strided_slice %440 {offsets = [8, 24], sizes = [8, 8], strides = [1, 1]} : vector<16x32xf32> to vector<8x8xf32>
    %558 = vector.extract_strided_slice %442 {offsets = [8, 24], sizes = [8, 8], strides = [1, 1]} : vector<16x32xf32> to vector<8x8xf32>
    %559 = vector.extract_strided_slice %443 {offsets = [8, 24], sizes = [8, 8], strides = [1, 1]} : vector<16x32xf32> to vector<8x8xf32>
    %560 = tpu.transpose %558, [1, 0] : vector<8x8xf32> -> vector<8x8xf32>
    %cst_157 = arith.constant dense<0.000000e+00> : vector<8x8xf32>
    %561 = tpu.matmul %557, %560, %cst_157 {dimension_numbers = #tpu.dot_dimension_numbers<[1], [0], [0], [1], [0, 0, 1, 1], [], []>} : vector<8x8xf32>, vector<8x8xf32>, vector<8x8xf32> -> vector<8x8xf32>
    %cst_158 = arith.constant dense<0xFF800000> : vector<8xf32>
    %562 = vector.multi_reduction <maximumf>, %561, %cst_158 [1] : vector<8x8xf32> to vector<8xf32>
    %563 = vector.shape_cast %562 : vector<8xf32> to vector<8x1xf32>
    %564 = vector.broadcast %563 : vector<8x1xf32> to vector<8x8xf32>
    %565 = arith.subf %561, %564 : vector<8x8xf32>
    %566 = math.exp %565 : vector<8x8xf32>
    %cst_159 = arith.constant dense<0.000000e+00> : vector<8xf32>
    %567 = vector.multi_reduction <add>, %566, %cst_159 [1] : vector<8x8xf32> to vector<8xf32>
    %568 = vector.shape_cast %567 : vector<8xf32> to vector<8x1xf32>
    %569 = tpu.reciprocal %568 {approx = true} : vector<8x1xf32> -> vector<8x1xf32>
    %570 = vector.broadcast %569 : vector<8x1xf32> to vector<8x8xf32>
    %571 = arith.mulf %566, %570 : vector<8x8xf32>
    %cst_160 = arith.constant dense<0.000000e+00> : vector<8x8xf32>
    %572 = tpu.matmul %571, %559, %cst_160 {dimension_numbers = #tpu.dot_dimension_numbers<[1], [0], [0], [1], [0, 0, 1, 1], [], []>} : vector<8x8xf32>, vector<8x8xf32>, vector<8x8xf32> -> vector<8x8xf32>
    %573 = tpu.concatenate %524, %540, %556, %572 in 1 : vector<8x8xf32>, vector<8x8xf32>, vector<8x8xf32>, vector<8x8xf32> -> vector<8x32xf32>
    %574 = tpu.concatenate %508, %573 in 0 : vector<8x32xf32>, vector<8x32xf32> -> vector<16x32xf32>
    %cst_161 = arith.constant dense<0.000000e+00> : vector<16x32xf32>
    %575 = tpu.matmul %574, %1, %cst_161 {dimension_numbers = #tpu.dot_dimension_numbers<[1], [0], [0], [1], [0, 0, 1, 1], [], []>} : vector<16x32xf32>, vector<32x32xf32>, vector<16x32xf32> -> vector<16x32xf32>
    %576 = arith.addf %415, %575 : vector<16x32xf32>
    %cst_162 = arith.constant dense<0.000000e+00> : vector<16xf32>
    %577 = vector.multi_reduction <add>, %576, %cst_162 [1] : vector<16x32xf32> to vector<16xf32>
    %578 = vector.shape_cast %577 : vector<16xf32> to vector<16x1xf32>
    %cst_163 = arith.constant 3.200000e+01 : f32
    %579 = vector.broadcast %cst_163 : f32 to vector<16x1xf32>
    %580 = arith.divf %578, %579 : vector<16x1xf32>
    %581 = vector.broadcast %580 : vector<16x1xf32> to vector<16x32xf32>
    %582 = arith.subf %576, %581 : vector<16x32xf32>
    %583 = arith.mulf %582, %582 : vector<16x32xf32>
    %cst_164 = arith.constant dense<0.000000e+00> : vector<16xf32>
    %584 = vector.multi_reduction <add>, %583, %cst_164 [1] : vector<16x32xf32> to vector<16xf32>
    %585 = vector.shape_cast %584 : vector<16xf32> to vector<16x1xf32>
    %cst_165 = arith.constant 3.200000e+01 : f32
    %586 = vector.broadcast %cst_165 : f32 to vector<16x1xf32>
    %587 = arith.divf %585, %586 : vector<16x1xf32>
    %588 = vector.broadcast %580 : vector<16x1xf32> to vector<16x32xf32>
    %589 = arith.subf %576, %588 : vector<16x32xf32>
    %cst_166 = arith.constant 9.99999974E-6 : f32
    %590 = vector.broadcast %cst_166 : f32 to vector<16x1xf32>
    %591 = arith.addf %587, %590 : vector<16x1xf32>
    %592 = math.rsqrt %591 : vector<16x1xf32>
    %593 = vector.broadcast %592 : vector<16x1xf32> to vector<16x32xf32>
    %594 = arith.mulf %589, %593 : vector<16x32xf32>
    %595 = arith.mulf %594, %18 : vector<16x32xf32>
    %596 = arith.addf %595, %21 : vector<16x32xf32>
    %cst_167 = arith.constant dense<0.000000e+00> : vector<16x64xf32>
    %597 = tpu.matmul %596, %2, %cst_167 {dimension_numbers = #tpu.dot_dimension_numbers<[1], [0], [0], [1], [0, 0, 1, 1], [], []>} : vector<16x32xf32>, vector<32x64xf32>, vector<16x64xf32> -> vector<16x64xf32>
    %598 = arith.addf %597, %6 : vector<16x64xf32>
    %cst_168 = arith.constant 0.000000e+00 : f32
    %599 = vector.broadcast %cst_168 : f32 to vector<16x64xf32>
    %600 = arith.maximumf %598, %599 : vector<16x64xf32>
    %cst_169 = arith.constant dense<0.000000e+00> : vector<16x32xf32>
    %601 = tpu.matmul %600, %3, %cst_169 {dimension_numbers = #tpu.dot_dimension_numbers<[1], [0], [0], [1], [0, 0, 1, 1], [], []>} : vector<16x64xf32>, vector<64x32xf32>, vector<16x32xf32> -> vector<16x32xf32>
    %602 = arith.addf %601, %9 : vector<16x32xf32>
    %603 = arith.addf %576, %602 : vector<16x32xf32>
    %cst_170 = arith.constant dense<0.000000e+00> : vector<16xf32>
    %604 = vector.multi_reduction <add>, %603, %cst_170 [1] : vector<16x32xf32> to vector<16xf32>
    %605 = vector.shape_cast %604 : vector<16xf32> to vector<16x1xf32>
    %cst_171 = arith.constant 3.200000e+01 : f32
    %606 = vector.broadcast %cst_171 : f32 to vector<16x1xf32>
    %607 = arith.divf %605, %606 : vector<16x1xf32>
    %608 = vector.broadcast %607 : vector<16x1xf32> to vector<16x32xf32>
    %609 = arith.subf %603, %608 : vector<16x32xf32>
    %610 = arith.mulf %609, %609 : vector<16x32xf32>
    %cst_172 = arith.constant dense<0.000000e+00> : vector<16xf32>
    %611 = vector.multi_reduction <add>, %610, %cst_172 [1] : vector<16x32xf32> to vector<16xf32>
    %612 = vector.shape_cast %611 : vector<16xf32> to vector<16x1xf32>
    %cst_173 = arith.constant 3.200000e+01 : f32
    %613 = vector.broadcast %cst_173 : f32 to vector<16x1xf32>
    %614 = arith.divf %612, %613 : vector<16x1xf32>
    %615 = vector.broadcast %607 : vector<16x1xf32> to vector<16x32xf32>
    %616 = arith.subf %603, %615 : vector<16x32xf32>
    %cst_174 = arith.constant 9.99999974E-6 : f32
    %617 = vector.broadcast %cst_174 : f32 to vector<16x1xf32>
    %618 = arith.addf %614, %617 : vector<16x1xf32>
    %619 = math.rsqrt %618 : vector<16x1xf32>
    %620 = vector.broadcast %619 : vector<16x1xf32> to vector<16x32xf32>
    %621 = arith.mulf %616, %620 : vector<16x32xf32>
    %622 = arith.mulf %621, %12 : vector<16x32xf32>
    %623 = arith.addf %622, %15 : vector<16x32xf32>
    %cst_175 = arith.constant dense<0.000000e+00> : vector<16x96xf32>
    %624 = tpu.matmul %623, %0, %cst_175 {dimension_numbers = #tpu.dot_dimension_numbers<[1], [0], [0], [1], [0, 0, 1, 1], [], []>} : vector<16x32xf32>, vector<32x96xf32>, vector<16x96xf32> -> vector<16x96xf32>
    %625 = vector.extract_strided_slice %624 {offsets = [0, 0], sizes = [16, 32], strides = [1, 1]} : vector<16x96xf32> to vector<16x32xf32>
    %cst_176 = arith.constant 0.353553385 : f32
    %626 = vector.broadcast %cst_176 : f32 to vector<16x32xf32>
    %627 = arith.mulf %625, %626 : vector<16x32xf32>
    %628 = arith.addf %627, %38 : vector<16x32xf32>
    %629 = vector.extract_strided_slice %624 {offsets = [0, 32], sizes = [16, 32], strides = [1, 1]} : vector<16x96xf32> to vector<16x32xf32>
    %630 = arith.addf %629, %39 : vector<16x32xf32>
    %631 = vector.extract_strided_slice %624 {offsets = [0, 64], sizes = [16, 32], strides = [1, 1]} : vector<16x96xf32> to vector<16x32xf32>
    %632 = vector.extract_strided_slice %628 {offsets = [0, 0], sizes = [8, 8], strides = [1, 1]} : vector<16x32xf32> to vector<8x8xf32>
    %633 = vector.extract_strided_slice %630 {offsets = [0, 0], sizes = [8, 8], strides = [1, 1]} : vector<16x32xf32> to vector<8x8xf32>
    %634 = vector.extract_strided_slice %631 {offsets = [0, 0], sizes = [8, 8], strides = [1, 1]} : vector<16x32xf32> to vector<8x8xf32>
    %635 = tpu.transpose %633, [1, 0] : vector<8x8xf32> -> vector<8x8xf32>
    %cst_177 = arith.constant dense<0.000000e+00> : vector<8x8xf32>
    %636 = tpu.matmul %632, %635, %cst_177 {dimension_numbers = #tpu.dot_dimension_numbers<[1], [0], [0], [1], [0, 0, 1, 1], [], []>} : vector<8x8xf32>, vector<8x8xf32>, vector<8x8xf32> -> vector<8x8xf32>
    %cst_178 = arith.constant dense<0xFF800000> : vector<8xf32>
    %637 = vector.multi_reduction <maximumf>, %636, %cst_178 [1] : vector<8x8xf32> to vector<8xf32>
    %638 = vector.shape_cast %637 : vector<8xf32> to vector<8x1xf32>
    %639 = vector.broadcast %638 : vector<8x1xf32> to vector<8x8xf32>
    %640 = arith.subf %636, %639 : vector<8x8xf32>
    %641 = math.exp %640 : vector<8x8xf32>
    %cst_179 = arith.constant dense<0.000000e+00> : vector<8xf32>
    %642 = vector.multi_reduction <add>, %641, %cst_179 [1] : vector<8x8xf32> to vector<8xf32>
    %643 = vector.shape_cast %642 : vector<8xf32> to vector<8x1xf32>
    %644 = tpu.reciprocal %643 {approx = true} : vector<8x1xf32> -> vector<8x1xf32>
    %645 = vector.broadcast %644 : vector<8x1xf32> to vector<8x8xf32>
    %646 = arith.mulf %641, %645 : vector<8x8xf32>
    %cst_180 = arith.constant dense<0.000000e+00> : vector<8x8xf32>
    %647 = tpu.matmul %646, %634, %cst_180 {dimension_numbers = #tpu.dot_dimension_numbers<[1], [0], [0], [1], [0, 0, 1, 1], [], []>} : vector<8x8xf32>, vector<8x8xf32>, vector<8x8xf32> -> vector<8x8xf32>
    %648 = vector.extract_strided_slice %628 {offsets = [0, 8], sizes = [8, 8], strides = [1, 1]} : vector<16x32xf32> to vector<8x8xf32>
    %649 = vector.extract_strided_slice %630 {offsets = [0, 8], sizes = [8, 8], strides = [1, 1]} : vector<16x32xf32> to vector<8x8xf32>
    %650 = vector.extract_strided_slice %631 {offsets = [0, 8], sizes = [8, 8], strides = [1, 1]} : vector<16x32xf32> to vector<8x8xf32>
    %651 = tpu.transpose %649, [1, 0] : vector<8x8xf32> -> vector<8x8xf32>
    %cst_181 = arith.constant dense<0.000000e+00> : vector<8x8xf32>
    %652 = tpu.matmul %648, %651, %cst_181 {dimension_numbers = #tpu.dot_dimension_numbers<[1], [0], [0], [1], [0, 0, 1, 1], [], []>} : vector<8x8xf32>, vector<8x8xf32>, vector<8x8xf32> -> vector<8x8xf32>
    %cst_182 = arith.constant dense<0xFF800000> : vector<8xf32>
    %653 = vector.multi_reduction <maximumf>, %652, %cst_182 [1] : vector<8x8xf32> to vector<8xf32>
    %654 = vector.shape_cast %653 : vector<8xf32> to vector<8x1xf32>
    %655 = vector.broadcast %654 : vector<8x1xf32> to vector<8x8xf32>
    %656 = arith.subf %652, %655 : vector<8x8xf32>
    %657 = math.exp %656 : vector<8x8xf32>
    %cst_183 = arith.constant dense<0.000000e+00> : vector<8xf32>
    %658 = vector.multi_reduction <add>, %657, %cst_183 [1] : vector<8x8xf32> to vector<8xf32>
    %659 = vector.shape_cast %658 : vector<8xf32> to vector<8x1xf32>
    %660 = tpu.reciprocal %659 {approx = true} : vector<8x1xf32> -> vector<8x1xf32>
    %661 = vector.broadcast %660 : vector<8x1xf32> to vector<8x8xf32>
    %662 = arith.mulf %657, %661 : vector<8x8xf32>
    %cst_184 = arith.constant dense<0.000000e+00> : vector<8x8xf32>
    %663 = tpu.matmul %662, %650, %cst_184 {dimension_numbers = #tpu.dot_dimension_numbers<[1], [0], [0], [1], [0, 0, 1, 1], [], []>} : vector<8x8xf32>, vector<8x8xf32>, vector<8x8xf32> -> vector<8x8xf32>
    %664 = vector.extract_strided_slice %628 {offsets = [0, 16], sizes = [8, 8], strides = [1, 1]} : vector<16x32xf32> to vector<8x8xf32>
    %665 = vector.extract_strided_slice %630 {offsets = [0, 16], sizes = [8, 8], strides = [1, 1]} : vector<16x32xf32> to vector<8x8xf32>
    %666 = vector.extract_strided_slice %631 {offsets = [0, 16], sizes = [8, 8], strides = [1, 1]} : vector<16x32xf32> to vector<8x8xf32>
    %667 = tpu.transpose %665, [1, 0] : vector<8x8xf32> -> vector<8x8xf32>
    %cst_185 = arith.constant dense<0.000000e+00> : vector<8x8xf32>
    %668 = tpu.matmul %664, %667, %cst_185 {dimension_numbers = #tpu.dot_dimension_numbers<[1], [0], [0], [1], [0, 0, 1, 1], [], []>} : vector<8x8xf32>, vector<8x8xf32>, vector<8x8xf32> -> vector<8x8xf32>
    %cst_186 = arith.constant dense<0xFF800000> : vector<8xf32>
    %669 = vector.multi_reduction <maximumf>, %668, %cst_186 [1] : vector<8x8xf32> to vector<8xf32>
    %670 = vector.shape_cast %669 : vector<8xf32> to vector<8x1xf32>
    %671 = vector.broadcast %670 : vector<8x1xf32> to vector<8x8xf32>
    %672 = arith.subf %668, %671 : vector<8x8xf32>
    %673 = math.exp %672 : vector<8x8xf32>
    %cst_187 = arith.constant dense<0.000000e+00> : vector<8xf32>
    %674 = vector.multi_reduction <add>, %673, %cst_187 [1] : vector<8x8xf32> to vector<8xf32>
    %675 = vector.shape_cast %674 : vector<8xf32> to vector<8x1xf32>
    %676 = tpu.reciprocal %675 {approx = true} : vector<8x1xf32> -> vector<8x1xf32>
    %677 = vector.broadcast %676 : vector<8x1xf32> to vector<8x8xf32>
    %678 = arith.mulf %673, %677 : vector<8x8xf32>
    %cst_188 = arith.constant dense<0.000000e+00> : vector<8x8xf32>
    %679 = tpu.matmul %678, %666, %cst_188 {dimension_numbers = #tpu.dot_dimension_numbers<[1], [0], [0], [1], [0, 0, 1, 1], [], []>} : vector<8x8xf32>, vector<8x8xf32>, vector<8x8xf32> -> vector<8x8xf32>
    %680 = vector.extract_strided_slice %628 {offsets = [0, 24], sizes = [8, 8], strides = [1, 1]} : vector<16x32xf32> to vector<8x8xf32>
    %681 = vector.extract_strided_slice %630 {offsets = [0, 24], sizes = [8, 8], strides = [1, 1]} : vector<16x32xf32> to vector<8x8xf32>
    %682 = vector.extract_strided_slice %631 {offsets = [0, 24], sizes = [8, 8], strides = [1, 1]} : vector<16x32xf32> to vector<8x8xf32>
    %683 = tpu.transpose %681, [1, 0] : vector<8x8xf32> -> vector<8x8xf32>
    %cst_189 = arith.constant dense<0.000000e+00> : vector<8x8xf32>
    %684 = tpu.matmul %680, %683, %cst_189 {dimension_numbers = #tpu.dot_dimension_numbers<[1], [0], [0], [1], [0, 0, 1, 1], [], []>} : vector<8x8xf32>, vector<8x8xf32>, vector<8x8xf32> -> vector<8x8xf32>
    %cst_190 = arith.constant dense<0xFF800000> : vector<8xf32>
    %685 = vector.multi_reduction <maximumf>, %684, %cst_190 [1] : vector<8x8xf32> to vector<8xf32>
    %686 = vector.shape_cast %685 : vector<8xf32> to vector<8x1xf32>
    %687 = vector.broadcast %686 : vector<8x1xf32> to vector<8x8xf32>
    %688 = arith.subf %684, %687 : vector<8x8xf32>
    %689 = math.exp %688 : vector<8x8xf32>
    %cst_191 = arith.constant dense<0.000000e+00> : vector<8xf32>
    %690 = vector.multi_reduction <add>, %689, %cst_191 [1] : vector<8x8xf32> to vector<8xf32>
    %691 = vector.shape_cast %690 : vector<8xf32> to vector<8x1xf32>
    %692 = tpu.reciprocal %691 {approx = true} : vector<8x1xf32> -> vector<8x1xf32>
    %693 = vector.broadcast %692 : vector<8x1xf32> to vector<8x8xf32>
    %694 = arith.mulf %689, %693 : vector<8x8xf32>
    %cst_192 = arith.constant dense<0.000000e+00> : vector<8x8xf32>
    %695 = tpu.matmul %694, %682, %cst_192 {dimension_numbers = #tpu.dot_dimension_numbers<[1], [0], [0], [1], [0, 0, 1, 1], [], []>} : vector<8x8xf32>, vector<8x8xf32>, vector<8x8xf32> -> vector<8x8xf32>
    %696 = tpu.concatenate %647, %663, %679, %695 in 1 : vector<8x8xf32>, vector<8x8xf32>, vector<8x8xf32>, vector<8x8xf32> -> vector<8x32xf32>
    %697 = vector.extract_strided_slice %628 {offsets = [8, 0], sizes = [8, 8], strides = [1, 1]} : vector<16x32xf32> to vector<8x8xf32>
    %698 = vector.extract_strided_slice %630 {offsets = [8, 0], sizes = [8, 8], strides = [1, 1]} : vector<16x32xf32> to vector<8x8xf32>
    %699 = vector.extract_strided_slice %631 {offsets = [8, 0], sizes = [8, 8], strides = [1, 1]} : vector<16x32xf32> to vector<8x8xf32>
    %700 = tpu.transpose %698, [1, 0] : vector<8x8xf32> -> vector<8x8xf32>
    %cst_193 = arith.constant dense<0.000000e+00> : vector<8x8xf32>
    %701 = tpu.matmul %697, %700, %cst_193 {dimension_numbers = #tpu.dot_dimension_numbers<[1], [0], [0], [1], [0, 0, 1, 1], [], []>} : vector<8x8xf32>, vector<8x8xf32>, vector<8x8xf32> -> vector<8x8xf32>
    %cst_194 = arith.constant dense<0xFF800000> : vector<8xf32>
    %702 = vector.multi_reduction <maximumf>, %701, %cst_194 [1] : vector<8x8xf32> to vector<8xf32>
    %703 = vector.shape_cast %702 : vector<8xf32> to vector<8x1xf32>
    %704 = vector.broadcast %703 : vector<8x1xf32> to vector<8x8xf32>
    %705 = arith.subf %701, %704 : vector<8x8xf32>
    %706 = math.exp %705 : vector<8x8xf32>
    %cst_195 = arith.constant dense<0.000000e+00> : vector<8xf32>
    %707 = vector.multi_reduction <add>, %706, %cst_195 [1] : vector<8x8xf32> to vector<8xf32>
    %708 = vector.shape_cast %707 : vector<8xf32> to vector<8x1xf32>
    %709 = tpu.reciprocal %708 {approx = true} : vector<8x1xf32> -> vector<8x1xf32>
    %710 = vector.broadcast %709 : vector<8x1xf32> to vector<8x8xf32>
    %711 = arith.mulf %706, %710 : vector<8x8xf32>
    %cst_196 = arith.constant dense<0.000000e+00> : vector<8x8xf32>
    %712 = tpu.matmul %711, %699, %cst_196 {dimension_numbers = #tpu.dot_dimension_numbers<[1], [0], [0], [1], [0, 0, 1, 1], [], []>} : vector<8x8xf32>, vector<8x8xf32>, vector<8x8xf32> -> vector<8x8xf32>
    %713 = vector.extract_strided_slice %628 {offsets = [8, 8], sizes = [8, 8], strides = [1, 1]} : vector<16x32xf32> to vector<8x8xf32>
    %714 = vector.extract_strided_slice %630 {offsets = [8, 8], sizes = [8, 8], strides = [1, 1]} : vector<16x32xf32> to vector<8x8xf32>
    %715 = vector.extract_strided_slice %631 {offsets = [8, 8], sizes = [8, 8], strides = [1, 1]} : vector<16x32xf32> to vector<8x8xf32>
    %716 = tpu.transpose %714, [1, 0] : vector<8x8xf32> -> vector<8x8xf32>
    %cst_197 = arith.constant dense<0.000000e+00> : vector<8x8xf32>
    %717 = tpu.matmul %713, %716, %cst_197 {dimension_numbers = #tpu.dot_dimension_numbers<[1], [0], [0], [1], [0, 0, 1, 1], [], []>} : vector<8x8xf32>, vector<8x8xf32>, vector<8x8xf32> -> vector<8x8xf32>
    %cst_198 = arith.constant dense<0xFF800000> : vector<8xf32>
    %718 = vector.multi_reduction <maximumf>, %717, %cst_198 [1] : vector<8x8xf32> to vector<8xf32>
    %719 = vector.shape_cast %718 : vector<8xf32> to vector<8x1xf32>
    %720 = vector.broadcast %719 : vector<8x1xf32> to vector<8x8xf32>
    %721 = arith.subf %717, %720 : vector<8x8xf32>
    %722 = math.exp %721 : vector<8x8xf32>
    %cst_199 = arith.constant dense<0.000000e+00> : vector<8xf32>
    %723 = vector.multi_reduction <add>, %722, %cst_199 [1] : vector<8x8xf32> to vector<8xf32>
    %724 = vector.shape_cast %723 : vector<8xf32> to vector<8x1xf32>
    %725 = tpu.reciprocal %724 {approx = true} : vector<8x1xf32> -> vector<8x1xf32>
    %726 = vector.broadcast %725 : vector<8x1xf32> to vector<8x8xf32>
    %727 = arith.mulf %722, %726 : vector<8x8xf32>
    %cst_200 = arith.constant dense<0.000000e+00> : vector<8x8xf32>
    %728 = tpu.matmul %727, %715, %cst_200 {dimension_numbers = #tpu.dot_dimension_numbers<[1], [0], [0], [1], [0, 0, 1, 1], [], []>} : vector<8x8xf32>, vector<8x8xf32>, vector<8x8xf32> -> vector<8x8xf32>
    %729 = vector.extract_strided_slice %628 {offsets = [8, 16], sizes = [8, 8], strides = [1, 1]} : vector<16x32xf32> to vector<8x8xf32>
    %730 = vector.extract_strided_slice %630 {offsets = [8, 16], sizes = [8, 8], strides = [1, 1]} : vector<16x32xf32> to vector<8x8xf32>
    %731 = vector.extract_strided_slice %631 {offsets = [8, 16], sizes = [8, 8], strides = [1, 1]} : vector<16x32xf32> to vector<8x8xf32>
    %732 = tpu.transpose %730, [1, 0] : vector<8x8xf32> -> vector<8x8xf32>
    %cst_201 = arith.constant dense<0.000000e+00> : vector<8x8xf32>
    %733 = tpu.matmul %729, %732, %cst_201 {dimension_numbers = #tpu.dot_dimension_numbers<[1], [0], [0], [1], [0, 0, 1, 1], [], []>} : vector<8x8xf32>, vector<8x8xf32>, vector<8x8xf32> -> vector<8x8xf32>
    %cst_202 = arith.constant dense<0xFF800000> : vector<8xf32>
    %734 = vector.multi_reduction <maximumf>, %733, %cst_202 [1] : vector<8x8xf32> to vector<8xf32>
    %735 = vector.shape_cast %734 : vector<8xf32> to vector<8x1xf32>
    %736 = vector.broadcast %735 : vector<8x1xf32> to vector<8x8xf32>
    %737 = arith.subf %733, %736 : vector<8x8xf32>
    %738 = math.exp %737 : vector<8x8xf32>
    %cst_203 = arith.constant dense<0.000000e+00> : vector<8xf32>
    %739 = vector.multi_reduction <add>, %738, %cst_203 [1] : vector<8x8xf32> to vector<8xf32>
    %740 = vector.shape_cast %739 : vector<8xf32> to vector<8x1xf32>
    %741 = tpu.reciprocal %740 {approx = true} : vector<8x1xf32> -> vector<8x1xf32>
    %742 = vector.broadcast %741 : vector<8x1xf32> to vector<8x8xf32>
    %743 = arith.mulf %738, %742 : vector<8x8xf32>
    %cst_204 = arith.constant dense<0.000000e+00> : vector<8x8xf32>
    %744 = tpu.matmul %743, %731, %cst_204 {dimension_numbers = #tpu.dot_dimension_numbers<[1], [0], [0], [1], [0, 0, 1, 1], [], []>} : vector<8x8xf32>, vector<8x8xf32>, vector<8x8xf32> -> vector<8x8xf32>
    %745 = vector.extract_strided_slice %628 {offsets = [8, 24], sizes = [8, 8], strides = [1, 1]} : vector<16x32xf32> to vector<8x8xf32>
    %746 = vector.extract_strided_slice %630 {offsets = [8, 24], sizes = [8, 8], strides = [1, 1]} : vector<16x32xf32> to vector<8x8xf32>
    %747 = vector.extract_strided_slice %631 {offsets = [8, 24], sizes = [8, 8], strides = [1, 1]} : vector<16x32xf32> to vector<8x8xf32>
    %748 = tpu.transpose %746, [1, 0] : vector<8x8xf32> -> vector<8x8xf32>
    %cst_205 = arith.constant dense<0.000000e+00> : vector<8x8xf32>
    %749 = tpu.matmul %745, %748, %cst_205 {dimension_numbers = #tpu.dot_dimension_numbers<[1], [0], [0], [1], [0, 0, 1, 1], [], []>} : vector<8x8xf32>, vector<8x8xf32>, vector<8x8xf32> -> vector<8x8xf32>
    %cst_206 = arith.constant dense<0xFF800000> : vector<8xf32>
    %750 = vector.multi_reduction <maximumf>, %749, %cst_206 [1] : vector<8x8xf32> to vector<8xf32>
    %751 = vector.shape_cast %750 : vector<8xf32> to vector<8x1xf32>
    %752 = vector.broadcast %751 : vector<8x1xf32> to vector<8x8xf32>
    %753 = arith.subf %749, %752 : vector<8x8xf32>
    %754 = math.exp %753 : vector<8x8xf32>
    %cst_207 = arith.constant dense<0.000000e+00> : vector<8xf32>
    %755 = vector.multi_reduction <add>, %754, %cst_207 [1] : vector<8x8xf32> to vector<8xf32>
    %756 = vector.shape_cast %755 : vector<8xf32> to vector<8x1xf32>
    %757 = tpu.reciprocal %756 {approx = true} : vector<8x1xf32> -> vector<8x1xf32>
    %758 = vector.broadcast %757 : vector<8x1xf32> to vector<8x8xf32>
    %759 = arith.mulf %754, %758 : vector<8x8xf32>
    %cst_208 = arith.constant dense<0.000000e+00> : vector<8x8xf32>
    %760 = tpu.matmul %759, %747, %cst_208 {dimension_numbers = #tpu.dot_dimension_numbers<[1], [0], [0], [1], [0, 0, 1, 1], [], []>} : vector<8x8xf32>, vector<8x8xf32>, vector<8x8xf32> -> vector<8x8xf32>
    %761 = tpu.concatenate %712, %728, %744, %760 in 1 : vector<8x8xf32>, vector<8x8xf32>, vector<8x8xf32>, vector<8x8xf32> -> vector<8x32xf32>
    %762 = tpu.concatenate %696, %761 in 0 : vector<8x32xf32>, vector<8x32xf32> -> vector<16x32xf32>
    %cst_209 = arith.constant dense<0.000000e+00> : vector<16x32xf32>
    %763 = tpu.matmul %762, %1, %cst_209 {dimension_numbers = #tpu.dot_dimension_numbers<[1], [0], [0], [1], [0, 0, 1, 1], [], []>} : vector<16x32xf32>, vector<32x32xf32>, vector<16x32xf32> -> vector<16x32xf32>
    %764 = arith.addf %603, %763 : vector<16x32xf32>
    %cst_210 = arith.constant dense<0.000000e+00> : vector<16xf32>
    %765 = vector.multi_reduction <add>, %764, %cst_210 [1] : vector<16x32xf32> to vector<16xf32>
    %766 = vector.shape_cast %765 : vector<16xf32> to vector<16x1xf32>
    %cst_211 = arith.constant 3.200000e+01 : f32
    %767 = vector.broadcast %cst_211 : f32 to vector<16x1xf32>
    %768 = arith.divf %766, %767 : vector<16x1xf32>
    %769 = vector.broadcast %768 : vector<16x1xf32> to vector<16x32xf32>
    %770 = arith.subf %764, %769 : vector<16x32xf32>
    %771 = arith.mulf %770, %770 : vector<16x32xf32>
    %cst_212 = arith.constant dense<0.000000e+00> : vector<16xf32>
    %772 = vector.multi_reduction <add>, %771, %cst_212 [1] : vector<16x32xf32> to vector<16xf32>
    %773 = vector.shape_cast %772 : vector<16xf32> to vector<16x1xf32>
    %cst_213 = arith.constant 3.200000e+01 : f32
    %774 = vector.broadcast %cst_213 : f32 to vector<16x1xf32>
    %775 = arith.divf %773, %774 : vector<16x1xf32>
    %776 = vector.broadcast %768 : vector<16x1xf32> to vector<16x32xf32>
    %777 = arith.subf %764, %776 : vector<16x32xf32>
    %cst_214 = arith.constant 9.99999974E-6 : f32
    %778 = vector.broadcast %cst_214 : f32 to vector<16x1xf32>
    %779 = arith.addf %775, %778 : vector<16x1xf32>
    %780 = math.rsqrt %779 : vector<16x1xf32>
    %781 = vector.broadcast %780 : vector<16x1xf32> to vector<16x32xf32>
    %782 = arith.mulf %777, %781 : vector<16x32xf32>
    %783 = arith.mulf %782, %18 : vector<16x32xf32>
    %784 = arith.addf %783, %21 : vector<16x32xf32>
    %cst_215 = arith.constant dense<0.000000e+00> : vector<16x64xf32>
    %785 = tpu.matmul %784, %2, %cst_215 {dimension_numbers = #tpu.dot_dimension_numbers<[1], [0], [0], [1], [0, 0, 1, 1], [], []>} : vector<16x32xf32>, vector<32x64xf32>, vector<16x64xf32> -> vector<16x64xf32>
    %786 = arith.addf %785, %6 : vector<16x64xf32>
    %cst_216 = arith.constant 0.000000e+00 : f32
    %787 = vector.broadcast %cst_216 : f32 to vector<16x64xf32>
    %788 = arith.maximumf %786, %787 : vector<16x64xf32>
    %cst_217 = arith.constant dense<0.000000e+00> : vector<16x32xf32>
    %789 = tpu.matmul %788, %3, %cst_217 {dimension_numbers = #tpu.dot_dimension_numbers<[1], [0], [0], [1], [0, 0, 1, 1], [], []>} : vector<16x64xf32>, vector<64x32xf32>, vector<16x32xf32> -> vector<16x32xf32>
    %790 = arith.addf %789, %9 : vector<16x32xf32>
    %791 = arith.addf %764, %790 : vector<16x32xf32>
    %792 = arith.addf %28, %227 : vector<16x32xf32>
    %793 = arith.addf %792, %415 : vector<16x32xf32>
    %794 = arith.addf %793, %603 : vector<16x32xf32>
    %795 = arith.addf %794, %791 : vector<16x32xf32>
    %cst_218 = arith.constant dense<0.000000e+00> : vector<16xf32>
    %796 = vector.multi_reduction <add>, %795, %cst_218 [1] : vector<16x32xf32> to vector<16xf32>
    %797 = vector.shape_cast %796 : vector<16xf32> to vector<16x1xf32>
    %cst_219 = arith.constant 3.200000e+01 : f32
    %798 = vector.broadcast %cst_219 : f32 to vector<16x1xf32>
    %799 = arith.divf %797, %798 : vector<16x1xf32>
    %800 = vector.broadcast %799 : vector<16x1xf32> to vector<16x32xf32>
    %801 = arith.subf %795, %800 : vector<16x32xf32>
    %802 = arith.mulf %801, %801 : vector<16x32xf32>
    %cst_220 = arith.constant dense<0.000000e+00> : vector<16xf32>
    %803 = vector.multi_reduction <add>, %802, %cst_220 [1] : vector<16x32xf32> to vector<16xf32>
    %804 = vector.shape_cast %803 : vector<16xf32> to vector<16x1xf32>
    %cst_221 = arith.constant 3.200000e+01 : f32
    %805 = vector.broadcast %cst_221 : f32 to vector<16x1xf32>
    %806 = arith.divf %804, %805 : vector<16x1xf32>
    %807 = vector.broadcast %799 : vector<16x1xf32> to vector<16x32xf32>
    %808 = arith.subf %795, %807 : vector<16x32xf32>
    %cst_222 = arith.constant 9.99999974E-6 : f32
    %809 = vector.broadcast %cst_222 : f32 to vector<16x1xf32>
    %810 = arith.addf %806, %809 : vector<16x1xf32>
    %811 = math.rsqrt %810 : vector<16x1xf32>
    %812 = vector.broadcast %811 : vector<16x1xf32> to vector<16x32xf32>
    %813 = arith.mulf %808, %812 : vector<16x32xf32>
    %814 = arith.mulf %813, %12 : vector<16x32xf32>
    %815 = arith.addf %814, %15 : vector<16x32xf32>
    %cst_223 = arith.constant dense<0.000000e+00> : vector<16x96xf32>
    %816 = tpu.matmul %815, %0, %cst_223 {dimension_numbers = #tpu.dot_dimension_numbers<[1], [0], [0], [1], [0, 0, 1, 1], [], []>} : vector<16x32xf32>, vector<32x96xf32>, vector<16x96xf32> -> vector<16x96xf32>
    %817 = vector.extract_strided_slice %816 {offsets = [0, 0], sizes = [16, 32], strides = [1, 1]} : vector<16x96xf32> to vector<16x32xf32>
    %cst_224 = arith.constant 0.353553385 : f32
    %818 = vector.broadcast %cst_224 : f32 to vector<16x32xf32>
    %819 = arith.mulf %817, %818 : vector<16x32xf32>
    %820 = arith.addf %819, %38 : vector<16x32xf32>
    %821 = vector.extract_strided_slice %816 {offsets = [0, 32], sizes = [16, 32], strides = [1, 1]} : vector<16x96xf32> to vector<16x32xf32>
    %822 = arith.addf %821, %39 : vector<16x32xf32>
    %823 = vector.extract_strided_slice %816 {offsets = [0, 64], sizes = [16, 32], strides = [1, 1]} : vector<16x96xf32> to vector<16x32xf32>
    %824 = vector.extract_strided_slice %820 {offsets = [0, 0], sizes = [8, 8], strides = [1, 1]} : vector<16x32xf32> to vector<8x8xf32>
    %825 = vector.extract_strided_slice %822 {offsets = [0, 0], sizes = [8, 8], strides = [1, 1]} : vector<16x32xf32> to vector<8x8xf32>
    %826 = vector.extract_strided_slice %823 {offsets = [0, 0], sizes = [8, 8], strides = [1, 1]} : vector<16x32xf32> to vector<8x8xf32>
    %827 = tpu.transpose %825, [1, 0] : vector<8x8xf32> -> vector<8x8xf32>
    %cst_225 = arith.constant dense<0.000000e+00> : vector<8x8xf32>
    %828 = tpu.matmul %824, %827, %cst_225 {dimension_numbers = #tpu.dot_dimension_numbers<[1], [0], [0], [1], [0, 0, 1, 1], [], []>} : vector<8x8xf32>, vector<8x8xf32>, vector<8x8xf32> -> vector<8x8xf32>
    %cst_226 = arith.constant dense<0xFF800000> : vector<8xf32>
    %829 = vector.multi_reduction <maximumf>, %828, %cst_226 [1] : vector<8x8xf32> to vector<8xf32>
    %830 = vector.shape_cast %829 : vector<8xf32> to vector<8x1xf32>
    %831 = vector.broadcast %830 : vector<8x1xf32> to vector<8x8xf32>
    %832 = arith.subf %828, %831 : vector<8x8xf32>
    %833 = math.exp %832 : vector<8x8xf32>
    %cst_227 = arith.constant dense<0.000000e+00> : vector<8xf32>
    %834 = vector.multi_reduction <add>, %833, %cst_227 [1] : vector<8x8xf32> to vector<8xf32>
    %835 = vector.shape_cast %834 : vector<8xf32> to vector<8x1xf32>
    %836 = tpu.reciprocal %835 {approx = true} : vector<8x1xf32> -> vector<8x1xf32>
    %837 = vector.broadcast %836 : vector<8x1xf32> to vector<8x8xf32>
    %838 = arith.mulf %833, %837 : vector<8x8xf32>
    %cst_228 = arith.constant dense<0.000000e+00> : vector<8x8xf32>
    %839 = tpu.matmul %838, %826, %cst_228 {dimension_numbers = #tpu.dot_dimension_numbers<[1], [0], [0], [1], [0, 0, 1, 1], [], []>} : vector<8x8xf32>, vector<8x8xf32>, vector<8x8xf32> -> vector<8x8xf32>
    %840 = vector.extract_strided_slice %820 {offsets = [0, 8], sizes = [8, 8], strides = [1, 1]} : vector<16x32xf32> to vector<8x8xf32>
    %841 = vector.extract_strided_slice %822 {offsets = [0, 8], sizes = [8, 8], strides = [1, 1]} : vector<16x32xf32> to vector<8x8xf32>
    %842 = vector.extract_strided_slice %823 {offsets = [0, 8], sizes = [8, 8], strides = [1, 1]} : vector<16x32xf32> to vector<8x8xf32>
    %843 = tpu.transpose %841, [1, 0] : vector<8x8xf32> -> vector<8x8xf32>
    %cst_229 = arith.constant dense<0.000000e+00> : vector<8x8xf32>
    %844 = tpu.matmul %840, %843, %cst_229 {dimension_numbers = #tpu.dot_dimension_numbers<[1], [0], [0], [1], [0, 0, 1, 1], [], []>} : vector<8x8xf32>, vector<8x8xf32>, vector<8x8xf32> -> vector<8x8xf32>
    %cst_230 = arith.constant dense<0xFF800000> : vector<8xf32>
    %845 = vector.multi_reduction <maximumf>, %844, %cst_230 [1] : vector<8x8xf32> to vector<8xf32>
    %846 = vector.shape_cast %845 : vector<8xf32> to vector<8x1xf32>
    %847 = vector.broadcast %846 : vector<8x1xf32> to vector<8x8xf32>
    %848 = arith.subf %844, %847 : vector<8x8xf32>
    %849 = math.exp %848 : vector<8x8xf32>
    %cst_231 = arith.constant dense<0.000000e+00> : vector<8xf32>
    %850 = vector.multi_reduction <add>, %849, %cst_231 [1] : vector<8x8xf32> to vector<8xf32>
    %851 = vector.shape_cast %850 : vector<8xf32> to vector<8x1xf32>
    %852 = tpu.reciprocal %851 {approx = true} : vector<8x1xf32> -> vector<8x1xf32>
    %853 = vector.broadcast %852 : vector<8x1xf32> to vector<8x8xf32>
    %854 = arith.mulf %849, %853 : vector<8x8xf32>
    %cst_232 = arith.constant dense<0.000000e+00> : vector<8x8xf32>
    %855 = tpu.matmul %854, %842, %cst_232 {dimension_numbers = #tpu.dot_dimension_numbers<[1], [0], [0], [1], [0, 0, 1, 1], [], []>} : vector<8x8xf32>, vector<8x8xf32>, vector<8x8xf32> -> vector<8x8xf32>
    %856 = vector.extract_strided_slice %820 {offsets = [0, 16], sizes = [8, 8], strides = [1, 1]} : vector<16x32xf32> to vector<8x8xf32>
    %857 = vector.extract_strided_slice %822 {offsets = [0, 16], sizes = [8, 8], strides = [1, 1]} : vector<16x32xf32> to vector<8x8xf32>
    %858 = vector.extract_strided_slice %823 {offsets = [0, 16], sizes = [8, 8], strides = [1, 1]} : vector<16x32xf32> to vector<8x8xf32>
    %859 = tpu.transpose %857, [1, 0] : vector<8x8xf32> -> vector<8x8xf32>
    %cst_233 = arith.constant dense<0.000000e+00> : vector<8x8xf32>
    %860 = tpu.matmul %856, %859, %cst_233 {dimension_numbers = #tpu.dot_dimension_numbers<[1], [0], [0], [1], [0, 0, 1, 1], [], []>} : vector<8x8xf32>, vector<8x8xf32>, vector<8x8xf32> -> vector<8x8xf32>
    %cst_234 = arith.constant dense<0xFF800000> : vector<8xf32>
    %861 = vector.multi_reduction <maximumf>, %860, %cst_234 [1] : vector<8x8xf32> to vector<8xf32>
    %862 = vector.shape_cast %861 : vector<8xf32> to vector<8x1xf32>
    %863 = vector.broadcast %862 : vector<8x1xf32> to vector<8x8xf32>
    %864 = arith.subf %860, %863 : vector<8x8xf32>
    %865 = math.exp %864 : vector<8x8xf32>
    %cst_235 = arith.constant dense<0.000000e+00> : vector<8xf32>
    %866 = vector.multi_reduction <add>, %865, %cst_235 [1] : vector<8x8xf32> to vector<8xf32>
    %867 = vector.shape_cast %866 : vector<8xf32> to vector<8x1xf32>
    %868 = tpu.reciprocal %867 {approx = true} : vector<8x1xf32> -> vector<8x1xf32>
    %869 = vector.broadcast %868 : vector<8x1xf32> to vector<8x8xf32>
    %870 = arith.mulf %865, %869 : vector<8x8xf32>
    %cst_236 = arith.constant dense<0.000000e+00> : vector<8x8xf32>
    %871 = tpu.matmul %870, %858, %cst_236 {dimension_numbers = #tpu.dot_dimension_numbers<[1], [0], [0], [1], [0, 0, 1, 1], [], []>} : vector<8x8xf32>, vector<8x8xf32>, vector<8x8xf32> -> vector<8x8xf32>
    %872 = vector.extract_strided_slice %820 {offsets = [0, 24], sizes = [8, 8], strides = [1, 1]} : vector<16x32xf32> to vector<8x8xf32>
    %873 = vector.extract_strided_slice %822 {offsets = [0, 24], sizes = [8, 8], strides = [1, 1]} : vector<16x32xf32> to vector<8x8xf32>
    %874 = vector.extract_strided_slice %823 {offsets = [0, 24], sizes = [8, 8], strides = [1, 1]} : vector<16x32xf32> to vector<8x8xf32>
    %875 = tpu.transpose %873, [1, 0] : vector<8x8xf32> -> vector<8x8xf32>
    %cst_237 = arith.constant dense<0.000000e+00> : vector<8x8xf32>
    %876 = tpu.matmul %872, %875, %cst_237 {dimension_numbers = #tpu.dot_dimension_numbers<[1], [0], [0], [1], [0, 0, 1, 1], [], []>} : vector<8x8xf32>, vector<8x8xf32>, vector<8x8xf32> -> vector<8x8xf32>
    %cst_238 = arith.constant dense<0xFF800000> : vector<8xf32>
    %877 = vector.multi_reduction <maximumf>, %876, %cst_238 [1] : vector<8x8xf32> to vector<8xf32>
    %878 = vector.shape_cast %877 : vector<8xf32> to vector<8x1xf32>
    %879 = vector.broadcast %878 : vector<8x1xf32> to vector<8x8xf32>
    %880 = arith.subf %876, %879 : vector<8x8xf32>
    %881 = math.exp %880 : vector<8x8xf32>
    %cst_239 = arith.constant dense<0.000000e+00> : vector<8xf32>
    %882 = vector.multi_reduction <add>, %881, %cst_239 [1] : vector<8x8xf32> to vector<8xf32>
    %883 = vector.shape_cast %882 : vector<8xf32> to vector<8x1xf32>
    %884 = tpu.reciprocal %883 {approx = true} : vector<8x1xf32> -> vector<8x1xf32>
    %885 = vector.broadcast %884 : vector<8x1xf32> to vector<8x8xf32>
    %886 = arith.mulf %881, %885 : vector<8x8xf32>
    %cst_240 = arith.constant dense<0.000000e+00> : vector<8x8xf32>
    %887 = tpu.matmul %886, %874, %cst_240 {dimension_numbers = #tpu.dot_dimension_numbers<[1], [0], [0], [1], [0, 0, 1, 1], [], []>} : vector<8x8xf32>, vector<8x8xf32>, vector<8x8xf32> -> vector<8x8xf32>
    %888 = tpu.concatenate %839, %855, %871, %887 in 1 : vector<8x8xf32>, vector<8x8xf32>, vector<8x8xf32>, vector<8x8xf32> -> vector<8x32xf32>
    %889 = vector.extract_strided_slice %820 {offsets = [8, 0], sizes = [8, 8], strides = [1, 1]} : vector<16x32xf32> to vector<8x8xf32>
    %890 = vector.extract_strided_slice %822 {offsets = [8, 0], sizes = [8, 8], strides = [1, 1]} : vector<16x32xf32> to vector<8x8xf32>
    %891 = vector.extract_strided_slice %823 {offsets = [8, 0], sizes = [8, 8], strides = [1, 1]} : vector<16x32xf32> to vector<8x8xf32>
    %892 = tpu.transpose %890, [1, 0] : vector<8x8xf32> -> vector<8x8xf32>
    %cst_241 = arith.constant dense<0.000000e+00> : vector<8x8xf32>
    %893 = tpu.matmul %889, %892, %cst_241 {dimension_numbers = #tpu.dot_dimension_numbers<[1], [0], [0], [1], [0, 0, 1, 1], [], []>} : vector<8x8xf32>, vector<8x8xf32>, vector<8x8xf32> -> vector<8x8xf32>
    %cst_242 = arith.constant dense<0xFF800000> : vector<8xf32>
    %894 = vector.multi_reduction <maximumf>, %893, %cst_242 [1] : vector<8x8xf32> to vector<8xf32>
    %895 = vector.shape_cast %894 : vector<8xf32> to vector<8x1xf32>
    %896 = vector.broadcast %895 : vector<8x1xf32> to vector<8x8xf32>
    %897 = arith.subf %893, %896 : vector<8x8xf32>
    %898 = math.exp %897 : vector<8x8xf32>
    %cst_243 = arith.constant dense<0.000000e+00> : vector<8xf32>
    %899 = vector.multi_reduction <add>, %898, %cst_243 [1] : vector<8x8xf32> to vector<8xf32>
    %900 = vector.shape_cast %899 : vector<8xf32> to vector<8x1xf32>
    %901 = tpu.reciprocal %900 {approx = true} : vector<8x1xf32> -> vector<8x1xf32>
    %902 = vector.broadcast %901 : vector<8x1xf32> to vector<8x8xf32>
    %903 = arith.mulf %898, %902 : vector<8x8xf32>
    %cst_244 = arith.constant dense<0.000000e+00> : vector<8x8xf32>
    %904 = tpu.matmul %903, %891, %cst_244 {dimension_numbers = #tpu.dot_dimension_numbers<[1], [0], [0], [1], [0, 0, 1, 1], [], []>} : vector<8x8xf32>, vector<8x8xf32>, vector<8x8xf32> -> vector<8x8xf32>
    %905 = vector.extract_strided_slice %820 {offsets = [8, 8], sizes = [8, 8], strides = [1, 1]} : vector<16x32xf32> to vector<8x8xf32>
    %906 = vector.extract_strided_slice %822 {offsets = [8, 8], sizes = [8, 8], strides = [1, 1]} : vector<16x32xf32> to vector<8x8xf32>
    %907 = vector.extract_strided_slice %823 {offsets = [8, 8], sizes = [8, 8], strides = [1, 1]} : vector<16x32xf32> to vector<8x8xf32>
    %908 = tpu.transpose %906, [1, 0] : vector<8x8xf32> -> vector<8x8xf32>
    %cst_245 = arith.constant dense<0.000000e+00> : vector<8x8xf32>
    %909 = tpu.matmul %905, %908, %cst_245 {dimension_numbers = #tpu.dot_dimension_numbers<[1], [0], [0], [1], [0, 0, 1, 1], [], []>} : vector<8x8xf32>, vector<8x8xf32>, vector<8x8xf32> -> vector<8x8xf32>
    %cst_246 = arith.constant dense<0xFF800000> : vector<8xf32>
    %910 = vector.multi_reduction <maximumf>, %909, %cst_246 [1] : vector<8x8xf32> to vector<8xf32>
    %911 = vector.shape_cast %910 : vector<8xf32> to vector<8x1xf32>
    %912 = vector.broadcast %911 : vector<8x1xf32> to vector<8x8xf32>
    %913 = arith.subf %909, %912 : vector<8x8xf32>
    %914 = math.exp %913 : vector<8x8xf32>
    %cst_247 = arith.constant dense<0.000000e+00> : vector<8xf32>
    %915 = vector.multi_reduction <add>, %914, %cst_247 [1] : vector<8x8xf32> to vector<8xf32>
    %916 = vector.shape_cast %915 : vector<8xf32> to vector<8x1xf32>
    %917 = tpu.reciprocal %916 {approx = true} : vector<8x1xf32> -> vector<8x1xf32>
    %918 = vector.broadcast %917 : vector<8x1xf32> to vector<8x8xf32>
    %919 = arith.mulf %914, %918 : vector<8x8xf32>
    %cst_248 = arith.constant dense<0.000000e+00> : vector<8x8xf32>
    %920 = tpu.matmul %919, %907, %cst_248 {dimension_numbers = #tpu.dot_dimension_numbers<[1], [0], [0], [1], [0, 0, 1, 1], [], []>} : vector<8x8xf32>, vector<8x8xf32>, vector<8x8xf32> -> vector<8x8xf32>
    %921 = vector.extract_strided_slice %820 {offsets = [8, 16], sizes = [8, 8], strides = [1, 1]} : vector<16x32xf32> to vector<8x8xf32>
    %922 = vector.extract_strided_slice %822 {offsets = [8, 16], sizes = [8, 8], strides = [1, 1]} : vector<16x32xf32> to vector<8x8xf32>
    %923 = vector.extract_strided_slice %823 {offsets = [8, 16], sizes = [8, 8], strides = [1, 1]} : vector<16x32xf32> to vector<8x8xf32>
    %924 = tpu.transpose %922, [1, 0] : vector<8x8xf32> -> vector<8x8xf32>
    %cst_249 = arith.constant dense<0.000000e+00> : vector<8x8xf32>
    %925 = tpu.matmul %921, %924, %cst_249 {dimension_numbers = #tpu.dot_dimension_numbers<[1], [0], [0], [1], [0, 0, 1, 1], [], []>} : vector<8x8xf32>, vector<8x8xf32>, vector<8x8xf32> -> vector<8x8xf32>
    %cst_250 = arith.constant dense<0xFF800000> : vector<8xf32>
    %926 = vector.multi_reduction <maximumf>, %925, %cst_250 [1] : vector<8x8xf32> to vector<8xf32>
    %927 = vector.shape_cast %926 : vector<8xf32> to vector<8x1xf32>
    %928 = vector.broadcast %927 : vector<8x1xf32> to vector<8x8xf32>
    %929 = arith.subf %925, %928 : vector<8x8xf32>
    %930 = math.exp %929 : vector<8x8xf32>
    %cst_251 = arith.constant dense<0.000000e+00> : vector<8xf32>
    %931 = vector.multi_reduction <add>, %930, %cst_251 [1] : vector<8x8xf32> to vector<8xf32>
    %932 = vector.shape_cast %931 : vector<8xf32> to vector<8x1xf32>
    %933 = tpu.reciprocal %932 {approx = true} : vector<8x1xf32> -> vector<8x1xf32>
    %934 = vector.broadcast %933 : vector<8x1xf32> to vector<8x8xf32>
    %935 = arith.mulf %930, %934 : vector<8x8xf32>
    %cst_252 = arith.constant dense<0.000000e+00> : vector<8x8xf32>
    %936 = tpu.matmul %935, %923, %cst_252 {dimension_numbers = #tpu.dot_dimension_numbers<[1], [0], [0], [1], [0, 0, 1, 1], [], []>} : vector<8x8xf32>, vector<8x8xf32>, vector<8x8xf32> -> vector<8x8xf32>
    %937 = vector.extract_strided_slice %820 {offsets = [8, 24], sizes = [8, 8], strides = [1, 1]} : vector<16x32xf32> to vector<8x8xf32>
    %938 = vector.extract_strided_slice %822 {offsets = [8, 24], sizes = [8, 8], strides = [1, 1]} : vector<16x32xf32> to vector<8x8xf32>
    %939 = vector.extract_strided_slice %823 {offsets = [8, 24], sizes = [8, 8], strides = [1, 1]} : vector<16x32xf32> to vector<8x8xf32>
    %940 = tpu.transpose %938, [1, 0] : vector<8x8xf32> -> vector<8x8xf32>
    %cst_253 = arith.constant dense<0.000000e+00> : vector<8x8xf32>
    %941 = tpu.matmul %937, %940, %cst_253 {dimension_numbers = #tpu.dot_dimension_numbers<[1], [0], [0], [1], [0, 0, 1, 1], [], []>} : vector<8x8xf32>, vector<8x8xf32>, vector<8x8xf32> -> vector<8x8xf32>
    %cst_254 = arith.constant dense<0xFF800000> : vector<8xf32>
    %942 = vector.multi_reduction <maximumf>, %941, %cst_254 [1] : vector<8x8xf32> to vector<8xf32>
    %943 = vector.shape_cast %942 : vector<8xf32> to vector<8x1xf32>
    %944 = vector.broadcast %943 : vector<8x1xf32> to vector<8x8xf32>
    %945 = arith.subf %941, %944 : vector<8x8xf32>
    %946 = math.exp %945 : vector<8x8xf32>
    %cst_255 = arith.constant dense<0.000000e+00> : vector<8xf32>
    %947 = vector.multi_reduction <add>, %946, %cst_255 [1] : vector<8x8xf32> to vector<8xf32>
    %948 = vector.shape_cast %947 : vector<8xf32> to vector<8x1xf32>
    %949 = tpu.reciprocal %948 {approx = true} : vector<8x1xf32> -> vector<8x1xf32>
    %950 = vector.broadcast %949 : vector<8x1xf32> to vector<8x8xf32>
    %951 = arith.mulf %946, %950 : vector<8x8xf32>
    %cst_256 = arith.constant dense<0.000000e+00> : vector<8x8xf32>
    %952 = tpu.matmul %951, %939, %cst_256 {dimension_numbers = #tpu.dot_dimension_numbers<[1], [0], [0], [1], [0, 0, 1, 1], [], []>} : vector<8x8xf32>, vector<8x8xf32>, vector<8x8xf32> -> vector<8x8xf32>
    %953 = tpu.concatenate %904, %920, %936, %952 in 1 : vector<8x8xf32>, vector<8x8xf32>, vector<8x8xf32>, vector<8x8xf32> -> vector<8x32xf32>
    %954 = tpu.concatenate %888, %953 in 0 : vector<8x32xf32>, vector<8x32xf32> -> vector<16x32xf32>
    %cst_257 = arith.constant dense<0.000000e+00> : vector<16x32xf32>
    %955 = tpu.matmul %954, %1, %cst_257 {dimension_numbers = #tpu.dot_dimension_numbers<[1], [0], [0], [1], [0, 0, 1, 1], [], []>} : vector<16x32xf32>, vector<32x32xf32>, vector<16x32xf32> -> vector<16x32xf32>
    %956 = arith.addf %795, %955 : vector<16x32xf32>
    %cst_258 = arith.constant dense<0.000000e+00> : vector<16xf32>
    %957 = vector.multi_reduction <add>, %956, %cst_258 [1] : vector<16x32xf32> to vector<16xf32>
    %958 = vector.shape_cast %957 : vector<16xf32> to vector<16x1xf32>
    %cst_259 = arith.constant 3.200000e+01 : f32
    %959 = vector.broadcast %cst_259 : f32 to vector<16x1xf32>
    %960 = arith.divf %958, %959 : vector<16x1xf32>
    %961 = vector.broadcast %960 : vector<16x1xf32> to vector<16x32xf32>
    %962 = arith.subf %956, %961 : vector<16x32xf32>
    %963 = arith.mulf %962, %962 : vector<16x32xf32>
    %cst_260 = arith.constant dense<0.000000e+00> : vector<16xf32>
    %964 = vector.multi_reduction <add>, %963, %cst_260 [1] : vector<16x32xf32> to vector<16xf32>
    %965 = vector.shape_cast %964 : vector<16xf32> to vector<16x1xf32>
    %cst_261 = arith.constant 3.200000e+01 : f32
    %966 = vector.broadcast %cst_261 : f32 to vector<16x1xf32>
    %967 = arith.divf %965, %966 : vector<16x1xf32>
    %968 = vector.broadcast %960 : vector<16x1xf32> to vector<16x32xf32>
    %969 = arith.subf %956, %968 : vector<16x32xf32>
    %cst_262 = arith.constant 9.99999974E-6 : f32
    %970 = vector.broadcast %cst_262 : f32 to vector<16x1xf32>
    %971 = arith.addf %967, %970 : vector<16x1xf32>
    %972 = math.rsqrt %971 : vector<16x1xf32>
    %973 = vector.broadcast %972 : vector<16x1xf32> to vector<16x32xf32>
    %974 = arith.mulf %969, %973 : vector<16x32xf32>
    %975 = arith.mulf %974, %18 : vector<16x32xf32>
    %976 = arith.addf %975, %21 : vector<16x32xf32>
    %cst_263 = arith.constant dense<0.000000e+00> : vector<16x64xf32>
    %977 = tpu.matmul %976, %2, %cst_263 {dimension_numbers = #tpu.dot_dimension_numbers<[1], [0], [0], [1], [0, 0, 1, 1], [], []>} : vector<16x32xf32>, vector<32x64xf32>, vector<16x64xf32> -> vector<16x64xf32>
    %978 = arith.addf %977, %6 : vector<16x64xf32>
    %cst_264 = arith.constant 0.000000e+00 : f32
    %979 = vector.broadcast %cst_264 : f32 to vector<16x64xf32>
    %980 = arith.maximumf %978, %979 : vector<16x64xf32>
    %cst_265 = arith.constant dense<0.000000e+00> : vector<16x32xf32>
    %981 = tpu.matmul %980, %3, %cst_265 {dimension_numbers = #tpu.dot_dimension_numbers<[1], [0], [0], [1], [0, 0, 1, 1], [], []>} : vector<16x64xf32>, vector<64x32xf32>, vector<16x32xf32> -> vector<16x32xf32>
    %982 = arith.addf %981, %9 : vector<16x32xf32>
    %983 = arith.addf %956, %982 : vector<16x32xf32>
    %984 = vector.extract_strided_slice %983 {offsets = [0, 0], sizes = [8, 32], strides = [1, 1]} : vector<16x32xf32> to vector<8x32xf32>
    %c0_266 = arith.constant 0 : index
    %c0_267 = arith.constant 0 : index
    %c0_268 = arith.constant 0 : index
    %985 = vector.load %arg12[%c0_266, %c0_267, %c0_268] : memref<8x2x32xf32, #tpu.memory_space<vmem>>, vector<8x1x32xf32>
    %986 = vector.shape_cast %985 : vector<8x1x32xf32> to vector<8x32xf32>
    %987 = vector.shape_cast %984 : vector<8x32xf32> to vector<8x1x32xf32>
    tpu.vector_store %arg12[%c0_266, %c0_267, %c0_268], %987 {strides = array<i32>} : memref<8x2x32xf32, #tpu.memory_space<vmem>>, vector<8x1x32xf32>,
    %988 = vector.extract_strided_slice %983 {offsets = [8, 0], sizes = [8, 32], strides = [1, 1]} : vector<16x32xf32> to vector<8x32xf32>
    %c0_269 = arith.constant 0 : index
    %c1 = arith.constant 1 : index
    %c0_270 = arith.constant 0 : index
    %989 = vector.load %arg12[%c0_269, %c1, %c0_270] : memref<8x2x32xf32, #tpu.memory_space<vmem>>, vector<8x1x32xf32>
    %990 = vector.shape_cast %989 : vector<8x1x32xf32> to vector<8x32xf32>
    %991 = vector.shape_cast %988 : vector<8x32xf32> to vector<8x1x32xf32>
    tpu.vector_store %arg12[%c0_269, %c1, %c0_270], %991 {strides = array<i32>} : memref<8x2x32xf32, #tpu.memory_space<vmem>>, vector<8x1x32xf32>,
    return
  }
}

</mosaic_0001>

<llo_original>
// kernel: tpu_custom_call.1
$region0: #{tpu_custom_call.1}
  #allocation0 [shape = 'u32[]', space=smem, size = 0x4, offset = 0x4, fixed_abs, tag = 'smem constant byte address 0x4 - core index']
  #allocation1 [shape = 'u32[144,128]{1,0:T(1,128)}', space=vmem, size = 0x12000, scoped, tag = 'internal scratch']
  %s0 = inlined_call_operand.hbm [shape: f32[8,2,32], index: 0, kind: input, shape index: {}]
  %s1 = inlined_call_operand.hbm [shape: f32[8,2,32], index: 1, kind: input, shape index: {}]
  %s2 = inlined_call_operand.vmem [shape: f32[32,96], index: 2, kind: input, shape index: {}]
  %s3 = inlined_call_operand.vmem [shape: f32[32,32], index: 3, kind: input, shape index: {}]
  %s4 = inlined_call_operand.vmem [shape: f32[32,64], index: 4, kind: input, shape index: {}]
  %s5 = inlined_call_operand.vmem [shape: f32[1,64], index: 5, kind: input, shape index: {}]
  %s6 = inlined_call_operand.vmem [shape: f32[64,32], index: 6, kind: input, shape index: {}]
  %s7 = inlined_call_operand.vmem [shape: f32[1,32], index: 7, kind: input, shape index: {}]
  %s8 = inlined_call_operand.vmem [shape: f32[1,32], index: 8, kind: input, shape index: {}]
  %s9 = inlined_call_operand.vmem [shape: f32[1,32], index: 9, kind: input, shape index: {}]
  %s10 = inlined_call_operand.vmem [shape: f32[1,32], index: 10, kind: input, shape index: {}]
  %s11 = inlined_call_operand.vmem [shape: f32[1,32], index: 11, kind: input, shape index: {}]
  %s12 = inlined_call_operand.hbm [shape: f32[8,2,32], index: 12, kind: output, shape index: {}]
  %s13 = sld [smem:[#allocation0]]
  $region66: #{tpu_custom_call.1} parent=0
    _
  %s15 = ssub.s32 1, %s13
  %s16 = scalar_select 0, %s15, %s13
  $region1: #{tpu_custom_call.1} parent=0
    #allocation2 [shape = 'u8[8192]{0}', space=vmem, size = 0x2000, scoped, tag = 'input window, operand 0, single buffered']
    #allocation3 [shape = 's32[1]{0}', space=sflag, size = 0x4, scoped, tag = 'scoped memory for tpu_custom_call.1']
    #allocation4 [shape = 's32[1]{0}', space=sflag, size = 0x4, scoped, tag = 'scoped memory for tpu_custom_call.1']
    #allocation5 [shape = 'u8[8192]{0}', space=vmem, size = 0x2000, scoped, tag = 'input window, operand 1, single buffered']
    #allocation6 [shape = 's32[1]{0}', space=sflag, size = 0x4, scoped, tag = 'scoped memory for tpu_custom_call.1']
    #allocation7 [shape = 'u8[8192]{0}', space=vmem, size = 0x2000, scoped, tag = 'output window, operand 0, single buffered']
    %17 = vsyncpa [#allocation3], 0
    %18 = vsyncpa [#allocation6], 0
    %19 = vsyncpa [#allocation4], 0
    // Predicated region
    $region2: #{tpu_custom_call.1} parent=1 // pred_check
      _
    $region3: #{tpu_custom_call.1} parent=1 // pred_check_branch
      %21 = sbr.rel (0) target = $region5
    $region4: #{tpu_custom_call.1} parent=1 // pred_region
      %s23 = ssub.s32 256, 256
      %24 = vsyncadd [#allocation3], %s23
      %s25 = sshll.u32 [#allocation2], 4
      %s26 = int_to_ptr.vmem [resolvable:$true] %s25
      %31 = dma.hbm_to_vmem [thread:$0]  %s0, 256, %s26, [#allocation3], 32, 32, 2
    $region5: #{tpu_custom_call.1} parent=1 // pred_fallthru
      _
    // Predicated region
    $region6: #{tpu_custom_call.1} parent=1 // pred_check
      _
    $region7: #{tpu_custom_call.1} parent=1 // pred_check_branch
      %33 = sbr.rel (0) target = $region9
    $region8: #{tpu_custom_call.1} parent=1 // pred_region
      %s35 = ssub.s32 256, 256
      %36 = vsyncadd [#allocation6], %s35
      %s37 = sshll.u32 [#allocation5], 4
      %s38 = int_to_ptr.vmem [resolvable:$true] %s37
      %43 = dma.hbm_to_vmem [thread:$0]  %s1, 256, %s38, [#allocation6], 32, 32, 2
    $region9: #{tpu_custom_call.1} parent=1 // pred_fallthru
      _
    // Predicated region
    $region10: #{tpu_custom_call.1} parent=1 // pred_check
      _
    $region11: #{tpu_custom_call.1} parent=1 // pred_check_branch
      %45 = sbr.rel (0) target = $region13
    $region12: #{tpu_custom_call.1} parent=1 // pred_region
      _
    $region13: #{tpu_custom_call.1} parent=1 // pred_fallthru
      _
    // Predicated region
    $region14: #{tpu_custom_call.1} parent=1 // pred_check
      _
    $region15: #{tpu_custom_call.1} parent=1 // pred_check_branch
      %47 = sbr.rel (0) target = $region17
    $region16: #{tpu_custom_call.1} parent=1 // pred_region
      _
    $region17: #{tpu_custom_call.1} parent=1 // pred_fallthru
      _
    // Predicated region
    $region18: #{tpu_custom_call.1} parent=1 // pred_check
      _
    $region19: #{tpu_custom_call.1} parent=1 // pred_check_branch
      %49 = sbr.rel (0) target = $region21
    $region20: #{tpu_custom_call.1} parent=1 // pred_region
      _
    $region21: #{tpu_custom_call.1} parent=1 // pred_fallthru
      _
    // Predicated region
    $region22: #{tpu_custom_call.1} parent=1 // pred_check
      _
    $region23: #{tpu_custom_call.1} parent=1 // pred_check_branch
      %51 = sbr.rel (0) target = $region25
    $region24: #{tpu_custom_call.1} parent=1 // pred_region
      _
    $region25: #{tpu_custom_call.1} parent=1 // pred_fallthru
      _
    // Predicated region
    $region26: #{tpu_custom_call.1} parent=1 // pred_check
      _
    $region27: #{tpu_custom_call.1} parent=1 // pred_check_branch
      %53 = sbr.rel (0) target = $region29
    $region28: #{tpu_custom_call.1} parent=1 // pred_region
      _
    $region29: #{tpu_custom_call.1} parent=1 // pred_fallthru
      _
    // Predicated region
    $region30: #{tpu_custom_call.1} parent=1 // pred_check
      _
    $region31: #{tpu_custom_call.1} parent=1 // pred_check_branch
      %55 = sbr.rel (0) target = $region33
    $region32: #{tpu_custom_call.1} parent=1 // pred_region
      _
    $region33: #{tpu_custom_call.1} parent=1 // pred_fallthru
      _
    // Predicated region
    $region34: #{tpu_custom_call.1} parent=1 // pred_check
      _
    $region35: #{tpu_custom_call.1} parent=1 // pred_check_branch
      %57 = sbr.rel (0) target = $region37
    $region36: #{tpu_custom_call.1} parent=1 // pred_region
      _
    $region37: #{tpu_custom_call.1} parent=1 // pred_fallthru
      _
    // Predicated region
    $region38: #{tpu_custom_call.1} parent=1 // pred_check
      _
    $region39: #{tpu_custom_call.1} parent=1 // pred_check_branch
      %59 = sbr.rel (0) target = $region41
    $region40: #{tpu_custom_call.1} parent=1 // pred_region
      _
    $region41: #{tpu_custom_call.1} parent=1 // pred_fallthru
      _
    // Predicated region
    $region42: #{tpu_custom_call.1} parent=1 // pred_check
      _
    $region43: #{tpu_custom_call.1} parent=1 // pred_check_branch
      %61 = sbr.rel (0) target = $region45
    $region44: #{tpu_custom_call.1} parent=1 // pred_region
      _
    $region45: #{tpu_custom_call.1} parent=1 // pred_fallthru
      _
    // Predicated region
    $region46: #{tpu_custom_call.1} parent=1 // pred_check
      _
    $region47: #{tpu_custom_call.1} parent=1 // pred_check_branch
      %63 = sbr.rel (0) target = $region49
    $region48: #{tpu_custom_call.1} parent=1 // pred_region
      _
    $region49: #{tpu_custom_call.1} parent=1 // pred_fallthru
      _
    // Predicated region
    $region50: #{tpu_custom_call.1} parent=1 // pred_check
      _
    $region51: #{tpu_custom_call.1} parent=1 // pred_check_branch
      %65 = sbr.rel (0) target = $region53
    $region52: #{tpu_custom_call.1} parent=1 // pred_region
      %66 = dma.done [#allocation3], 256
    $region53: #{tpu_custom_call.1} parent=1 // pred_fallthru
      _
    // Predicated region
    $region54: #{tpu_custom_call.1} parent=1 // pred_check
      _
    $region55: #{tpu_custom_call.1} parent=1 // pred_check_branch
      %68 = sbr.rel (0) target = $region57
    $region56: #{tpu_custom_call.1} parent=1 // pred_region
      %69 = dma.done [#allocation6], 256
    $region57: #{tpu_custom_call.1} parent=1 // pred_fallthru
      _
    %v70 = vld [vmem:[%s2] sm:$0xff]
    %v71 = vld [vmem:[%s2 + $0x8] sm:$0xff]
    %v72 = vld [vmem:[%s2 + $0x10] sm:$0xff]
    %v73 = vld [vmem:[%s2 + $0x18] sm:$0xff]
    %v74 = vld [vmem:[%s3] sm:$0xff]
    %v75 = vld [vmem:[%s3 + $0x8] sm:$0xff]
    %v76 = vld [vmem:[%s3 + $0x10] sm:$0xff]
    %v77 = vld [vmem:[%s3 + $0x18] sm:$0xff]
    %v78 = vld [vmem:[%s4] sm:$0xff]
    %v79 = vld [vmem:[%s4 + $0x8] sm:$0xff]
    %v80 = vld [vmem:[%s4 + $0x10] sm:$0xff]
    %v81 = vld [vmem:[%s4 + $0x18] sm:$0xff]
    %v82 = vld [vmem:[%s6] sm:$0xff]
    %v83 = vld [vmem:[%s6 + $0x8] sm:$0xff]
    %v84 = vld [vmem:[%s6 + $0x10] sm:$0xff]
    %v85 = vld [vmem:[%s6 + $0x18] sm:$0xff]
    %v86 = vld [vmem:[%s6 + $0x20] sm:$0xff]
    %v87 = vld [vmem:[%s6 + $0x28] sm:$0xff]
    %v88 = vld [vmem:[%s6 + $0x30] sm:$0xff]
    %v89 = vld [vmem:[%s6 + $0x38] sm:$0xff]
    %v90 = vld [vmem:[%s5] sm:$0x1]
    %v92 = vlaneseq
    %v93 = vshrl.u32 %v92, 7
    %v94 = vsub.s32 0, %v93
    %v95 = vrot.slane %v90, %v94
    %v97 = vld [vmem:[%s7] sm:$0x1]
    %v99 = vlaneseq
    %v100 = vshrl.u32 %v99, 7
    %v101 = vsub.s32 0, %v100
    %v102 = vrot.slane %v97, %v101
    %v104 = vld [vmem:[%s8] sm:$0x1]
    %v106 = vlaneseq
    %v107 = vshrl.u32 %v106, 7
    %v108 = vsub.s32 0, %v107
    %v109 = vrot.slane %v104, %v108
    %v111 = vld [vmem:[%s9] sm:$0x1]
    %v113 = vlaneseq
    %v114 = vshrl.u32 %v113, 7
    %v115 = vsub.s32 0, %v114
    %v116 = vrot.slane %v111, %v115
    %v118 = vld [vmem:[%s10] sm:$0x1]
    %v120 = vlaneseq
    %v121 = vshrl.u32 %v120, 7
    %v122 = vsub.s32 0, %v121
    %v123 = vrot.slane %v118, %v122
    %v125 = vld [vmem:[%s11] sm:$0x1]
    %v127 = vlaneseq
    %v128 = vshrl.u32 %v127, 7
    %v129 = vsub.s32 0, %v128
    %v130 = vrot.slane %v125, %v129
    %v132 = vld [vmem:[#allocation2] sm:$0x3]
    %v133 = vld [vmem:[#allocation2 + $0x2] sm:$0x3]
    %v134 = vld [vmem:[#allocation2 + $0x4] sm:$0x3]
    %v135 = vld [vmem:[#allocation2 + $0x6] sm:$0x3]
    %v136 = vld [vmem:[#allocation2 + $0x8] sm:$0x3]
    %v137 = vld [vmem:[#allocation2 + $0xa] sm:$0x3]
    %v138 = vld [vmem:[#allocation2 + $0xc] sm:$0x3]
    %v139 = vld [vmem:[#allocation2 + $0xe] sm:$0x3]
    %v140 = vld [vmem:[#allocation5] sm:$0x3]
    %v141 = vld [vmem:[#allocation5 + $0x2] sm:$0x3]
    %v142 = vld [vmem:[#allocation5 + $0x4] sm:$0x3]
    %v143 = vld [vmem:[#allocation5 + $0x6] sm:$0x3]
    %v144 = vld [vmem:[#allocation5 + $0x8] sm:$0x3]
    %v145 = vld [vmem:[#allocation5 + $0xa] sm:$0x3]
    %v146 = vld [vmem:[#allocation5 + $0xc] sm:$0x3]
    %v147 = vld [vmem:[#allocation5 + $0xe] sm:$0x3]
    %v156 = vrot.slane %v133, 7
    %vm157 = vcmask 1041409
    %v158 = vsel %vm157, %v156, %v132
    %v159 = vrot.slane %v134, 6
    %vm160 = vcmask 1042434
    %v161 = vsel %vm160, %v159, %v158
    %v162 = vrot.slane %v135, 5
    %vm163 = vcmask 1043459
    %v164 = vsel %vm163, %v162, %v161
    %v165 = vrot.slane %v136, 4
    %vm166 = vcmask 1044484
    %v167 = vsel %vm166, %v165, %v164
    %v168 = vrot.slane %v137, 3
    %vm169 = vcmask 1045509
    %v170 = vsel %vm169, %v168, %v167
    %v171 = vrot.slane %v138, 2
    %vm172 = vcmask 1046534
    %v173 = vsel %vm172, %v171, %v170
    %v174 = vrot.slane %v139, 1
    %vm175 = vcmask 1047559
    %v176 = vsel %vm175, %v174, %v173
    %v178 = vrot.slane %v132, 1
    %v179 = vsel %vm157, %v133, %v178
    %v180 = vrot.slane %v134, 7
    %v181 = vsel %vm160, %v180, %v179
    %v182 = vrot.slane %v135, 6
    %v183 = vsel %vm163, %v182, %v181
    %v184 = vrot.slane %v136, 5
    %v185 = vsel %vm166, %v184, %v183
    %v186 = vrot.slane %v137, 4
    %v187 = vsel %vm169, %v186, %v185
    %v188 = vrot.slane %v138, 3
    %v189 = vsel %vm172, %v188, %v187
    %v190 = vrot.slane %v139, 2
    %v191 = vsel %vm175, %v190, %v189
    %v201 = vrot.slane %v141, 7
    %v202 = vsel %vm157, %v201, %v140
    %v203 = vrot.slane %v142, 6
    %v204 = vsel %vm160, %v203, %v202
    %v205 = vrot.slane %v143, 5
    %v206 = vsel %vm163, %v205, %v204
    %v207 = vrot.slane %v144, 4
    %v208 = vsel %vm166, %v207, %v206
    %v209 = vrot.slane %v145, 3
    %v210 = vsel %vm169, %v209, %v208
    %v211 = vrot.slane %v146, 2
    %v212 = vsel %vm172, %v211, %v210
    %v213 = vrot.slane %v147, 1
    %v214 = vsel %vm175, %v213, %v212
    %v215 = vrot.slane %v140, 1
    %v216 = vsel %vm157, %v141, %v215
    %v217 = vrot.slane %v142, 7
    %v218 = vsel %vm160, %v217, %v216
    %v219 = vrot.slane %v143, 6
    %v220 = vsel %vm163, %v219, %v218
    %v221 = vrot.slane %v144, 5
    %v222 = vsel %vm166, %v221, %v220
    %v223 = vrot.slane %v145, 4
    %v224 = vsel %vm169, %v223, %v222
    %v225 = vrot.slane %v146, 3
    %v226 = vsel %vm172, %v225, %v224
    %v227 = vrot.slane %v147, 2
    %v228 = vsel %vm175, %v227, %v226
    %vm229 = vcmask 261120
    %v230 = vsel %vm229, %v214, 0
    %v232 = vsel %vm229, %v228, 0
    %234 = vmatprep.subr.mxu0 0.0
    %235 = vmatpush1.msra.mxu0 0.0
    %236 = vmatprep.subr.mxu0 0.0
    %237 = vmatpush1.msra.mxu0 0.0
    %238 = vmatprep.subr.mxu0 0.0
    %239 = vmatpush1.msra.mxu0 0.0
    %240 = vmatprep.subr.mxu0 0.0
    %241 = vmatpush1.msra.mxu0 0.0
    %242 = vmatprep.subr.mxu0 0.0
    %243 = vmatpush1.msra.mxu0 0.0
    %244 = vmatprep.subr.mxu0 0.0
    %245 = vmatpush1.msra.mxu0 0.0
    %246 = vmatprep.subr.mxu0 0.0
    %247 = vmatpush1.msra.mxu0 0.0
    %248 = vmatprep.subr.mxu0 0.0
    %249 = vmatpush1.msra.mxu0 0.0
    %250 = vmatprep.subr.mxu0 0.0
    %251 = vmatpush1.msra.mxu0 0.0
    %252 = vmatprep.subr.mxu0 0.0
    %253 = vmatpush1.msra.mxu0 0.0
    %254 = vmatprep.subr.mxu0 0.0
    %255 = vmatpush1.msra.mxu0 0.0
    %256 = vmatprep.subr.mxu0 0.0
    %257 = vmatpush1.msra.mxu0 0.0
    %258 = vmatprep.subr.mxu0 0.0
    %259 = vmatpush1.msra.mxu0 %v73
    %260 = vmatprep.subr.mxu0 0.0
    %261 = vmatpush1.msra.mxu0 %v72
    %262 = vmatprep.subr.mxu0 0.0
    %263 = vmatpush1.msra.mxu0 %v71
    %264 = vmatprep.subr.mxu0 0.0
    %265 = vmatpush1.msra.mxu0 %v70
    %266 = vmatprep.subr.mxu0 0.0
    %267 = vmatpush2.msra.mxu0 0.0
    %268 = vmatprep.subr.mxu0 0.0
    %269 = vmatpush2.msra.mxu0 0.0
    %270 = vmatprep.subr.mxu0 0.0
    %271 = vmatpush2.msra.mxu0 0.0
    %272 = vmatprep.subr.mxu0 0.0
    %273 = vmatpush2.msra.mxu0 0.0
    %274 = vmatprep.subr.mxu0 0.0
    %275 = vmatpush2.msra.mxu0 0.0
    %276 = vmatprep.subr.mxu0 0.0
    %277 = vmatpush2.msra.mxu0 0.0
    %278 = vmatprep.subr.mxu0 0.0
    %279 = vmatpush2.msra.mxu0 0.0
    %280 = vmatprep.subr.mxu0 0.0
    %281 = vmatpush2.msra.mxu0 0.0
    %282 = vmatprep.subr.mxu0 0.0
    %283 = vmatpush2.msra.mxu0 0.0
    %284 = vmatprep.subr.mxu0 0.0
    %285 = vmatpush2.msra.mxu0 0.0
    %286 = vmatprep.subr.mxu0 0.0
    %287 = vmatpush2.msra.mxu0 0.0
    %288 = vmatprep.subr.mxu0 0.0
    %289 = vmatpush2.msra.mxu0 0.0
    %290 = vmatprep.subr.mxu0 0.0
    %291 = vmatpush2.msra.mxu0 0.0
    %292 = vmatprep.subr.mxu0 0.0
    %293 = vmatpush2.msra.mxu0 0.0
    %294 = vmatprep.subr.mxu0 0.0
    %295 = vmatpush2.msra.mxu0 0.0
    %296 = vmatprep.subr.mxu0 0.0
    %297 = vmatpush2.msra.mxu0 0.0
    %298 = vmatprep.mubr.f32.mxu0 0.0
    %299 = vmatmul.mubr.f32.gmra.mxu0 %v230
    %v300 = vpop.f32.mrf.mxu0
    %v301 = vadd.f32 0.0, %v300
    %v302 = vpop.f32.mrf.mxu0
    %303 = vmatprep.mubr.f32.mxu0 0.0
    %304 = vmatmul.mubr.f32.gmra.mxu0 %v232
    %v305 = vpop.f32.mrf.mxu0
    %v306 = vadd.f32 0.0, %v305
    %v307 = vpop.f32.mrf.mxu0
    %308 = vdwg.mxu0
    %v309 = vmul.f32 %v301, 0.35355338
    %v310 = vmul.f32 %v306, 0.35355338
    %v311 = vsel %vm229, %v176, 0.0
    %312 = vadd.xlane.f32.xlu0 %v311
    %v313 = vpop.xlane.xlu0 %312
    %v314 = vsel %vm229, %v191, 0.0
    %315 = vadd.xlane.f32.xlu0 %v314
    %v316 = vpop.xlane.xlu0 %315
    %v317 = vrcp.pop 32.0
    %v318 = vmul.f32 %v313, %v317
    %v319 = vmul.f32 %v316, %v317
    %v320 = vsub.f32 %v176, %v318
    %v321 = vsub.f32 %v191, %v319
    %v322 = vmul.f32 %v320, %v320
    %v323 = vmul.f32 %v321, %v321
    %v324 = vsel %vm229, %v322, 0.0
    %325 = vadd.xlane.f32.xlu0 %v324
    %v326 = vpop.xlane.xlu0 %325
    %v327 = vsel %vm229, %v323, 0.0
    %328 = vadd.xlane.f32.xlu0 %v327
    %v329 = vpop.xlane.xlu0 %328
    %v330 = vmul.f32 %v326, %v317
    %v331 = vmul.f32 %v329, %v317
    %v332 = vadd.f32 %v330, 1e-05
    %v333 = vadd.f32 %v331, 1e-05
    %v334 = vrsqrt.pop %v332
    %v335 = vrsqrt.pop %v333
    %v336 = vmul.f32 %v320, %v334
    %v337 = vmul.f32 %v321, %v335
    %v338 = vmul.f32 %v336, %v109
    %v339 = vmul.f32 %v337, %v109
    %v340 = vadd.f32 %v338, %v116
    %v341 = vadd.f32 %v339, %v116
    %v343 = vsel %vm229, %v340, 0
    %v346 = vsel %vm229, %v341, 0
    %348 = vmatprep.subr.mxu0 0.0
    %349 = vmatpush1.msra.mxu0 0.0
    %350 = vmatprep.subr.mxu0 0.0
    %351 = vmatpush1.msra.mxu0 0.0
    %352 = vmatprep.subr.mxu0 0.0
    %353 = vmatpush1.msra.mxu0 0.0
    %354 = vmatprep.subr.mxu0 0.0
    %355 = vmatpush1.msra.mxu0 0.0
    %356 = vmatprep.subr.mxu0 0.0
    %357 = vmatpush1.msra.mxu0 0.0
    %358 = vmatprep.subr.mxu0 0.0
    %359 = vmatpush1.msra.mxu0 0.0
    %360 = vmatprep.subr.mxu0 0.0
    %361 = vmatpush1.msra.mxu0 0.0
    %362 = vmatprep.subr.mxu0 0.0
    %363 = vmatpush1.msra.mxu0 0.0
    %364 = vmatprep.subr.mxu0 0.0
    %365 = vmatpush1.msra.mxu0 0.0
    %366 = vmatprep.subr.mxu0 0.0
    %367 = vmatpush1.msra.mxu0 0.0
    %368 = vmatprep.subr.mxu0 0.0
    %369 = vmatpush1.msra.mxu0 0.0
    %370 = vmatprep.subr.mxu0 0.0
    %371 = vmatpush1.msra.mxu0 0.0
    %372 = vmatprep.subr.mxu0 0.0
    %373 = vmatpush1.msra.mxu0 %v73
    %374 = vmatprep.subr.mxu0 0.0
    %375 = vmatpush1.msra.mxu0 %v72
    %376 = vmatprep.subr.mxu0 0.0
    %377 = vmatpush1.msra.mxu0 %v71
    %378 = vmatprep.subr.mxu0 0.0
    %379 = vmatpush1.msra.mxu0 %v70
    %380 = vmatprep.subr.mxu0 0.0
    %381 = vmatpush2.msra.mxu0 0.0
    %382 = vmatprep.subr.mxu0 0.0
    %383 = vmatpush2.msra.mxu0 0.0
    %384 = vmatprep.subr.mxu0 0.0
    %385 = vmatpush2.msra.mxu0 0.0
    %386 = vmatprep.subr.mxu0 0.0
    %387 = vmatpush2.msra.mxu0 0.0
    %388 = vmatprep.subr.mxu0 0.0
    %389 = vmatpush2.msra.mxu0 0.0
    %390 = vmatprep.subr.mxu0 0.0
    %391 = vmatpush2.msra.mxu0 0.0
    %392 = vmatprep.subr.mxu0 0.0
    %393 = vmatpush2.msra.mxu0 0.0
    %394 = vmatprep.subr.mxu0 0.0
    %395 = vmatpush2.msra.mxu0 0.0
    %396 = vmatprep.subr.mxu0 0.0
    %397 = vmatpush2.msra.mxu0 0.0
    %398 = vmatprep.subr.mxu0 0.0
    %399 = vmatpush2.msra.mxu0 0.0
    %400 = vmatprep.subr.mxu0 0.0
    %401 = vmatpush2.msra.mxu0 0.0
    %402 = vmatprep.subr.mxu0 0.0
    %403 = vmatpush2.msra.mxu0 0.0
    %404 = vmatprep.subr.mxu0 0.0
    %405 = vmatpush2.msra.mxu0 0.0
    %406 = vmatprep.subr.mxu0 0.0
    %407 = vmatpush2.msra.mxu0 0.0
    %408 = vmatprep.subr.mxu0 0.0
    %409 = vmatpush2.msra.mxu0 0.0
    %410 = vmatprep.subr.mxu0 0.0
    %411 = vmatpush2.msra.mxu0 0.0
    %412 = vmatprep.mubr.f32.mxu0 0.0
    %413 = vmatmul.mubr.f32.gmra.mxu0 %v343
    %v414 = vpop.f32.mrf.mxu0
    %v415 = vadd.f32 0.0, %v414
    %v416 = vpop.f32.mrf.mxu0
    %417 = vmatprep.mubr.f32.mxu0 0.0
    %418 = vmatmul.mubr.f32.gmra.mxu0 %v346
    %v419 = vpop.f32.mrf.mxu0
    %v420 = vadd.f32 0.0, %v419
    %v421 = vpop.f32.mrf.mxu0
    %422 = vdwg.mxu0
    %v423 = vmul.f32 %v415, 0.35355338
    %v424 = vmul.f32 %v420, 0.35355338
    %v425 = vadd.f32 %v423, %v309
    %v426 = vadd.f32 %v424, %v310
    %v427 = vadd.f32 %v415, %v301
    %v428 = vadd.f32 %v420, %v306
    %430 = vrot.lane.b32.xlu0 %v427, 96
    %v431 = vpop.permute.xlu0 %430
    %vm432 = vcmask 64512
    %v434 = vsel %vm432, %v425, 0
    %v436 = vsel %vm432, %v431, 0
    %438 = vmatprep.subr.mxu0 0.0
    %439 = vmatpush1.xpose.msra.mxu0 0.0
    %440 = vmatprep.subr.mxu0 0.0
    %441 = vmatpush1.xpose.msra.mxu0 0.0
    %442 = vmatprep.subr.mxu0 0.0
    %443 = vmatpush1.xpose.msra.mxu0 0.0
    %444 = vmatprep.subr.mxu0 0.0
    %445 = vmatpush1.xpose.msra.mxu0 0.0
    %446 = vmatprep.subr.mxu0 0.0
    %447 = vmatpush1.xpose.msra.mxu0 0.0
    %448 = vmatprep.subr.mxu0 0.0
    %449 = vmatpush1.xpose.msra.mxu0 0.0
    %450 = vmatprep.subr.mxu0 0.0
    %451 = vmatpush1.xpose.msra.mxu0 0.0
    %452 = vmatprep.subr.mxu0 0.0
    %453 = vmatpush1.xpose.msra.mxu0 0.0
    %454 = vmatprep.subr.mxu0 0.0
    %455 = vmatpush1.xpose.msra.mxu0 0.0
    %456 = vmatprep.subr.mxu0 0.0
    %457 = vmatpush1.xpose.msra.mxu0 0.0
    %458 = vmatprep.subr.mxu0 0.0
    %459 = vmatpush1.xpose.msra.mxu0 0.0
    %460 = vmatprep.subr.mxu0 0.0
    %461 = vmatpush1.xpose.msra.mxu0 0.0
    %462 = vmatprep.subr.mxu0 0.0
    %463 = vmatpush1.xpose.msra.mxu0 0.0
    %464 = vmatprep.subr.mxu0 0.0
    %465 = vmatpush1.xpose.msra.mxu0 0.0
    %466 = vmatprep.subr.mxu0 0.0
    %467 = vmatpush1.xpose.msra.mxu0 0.0
    %468 = vmatprep.subr.mxu0 0.0
    %469 = vmatpush1.xpose.msra.mxu0 %v436
    %470 = vmatprep.subr.mxu0 0.0
    %471 = vmatpush2.xpose.msra.mxu0 0.0
    %472 = vmatprep.subr.mxu0 0.0
    %473 = vmatpush2.xpose.msra.mxu0 0.0
    %474 = vmatprep.subr.mxu0 0.0
    %475 = vmatpush2.xpose.msra.mxu0 0.0
    %476 = vmatprep.subr.mxu0 0.0
    %477 = vmatpush2.xpose.msra.mxu0 0.0
    %478 = vmatprep.subr.mxu0 0.0
    %479 = vmatpush2.xpose.msra.mxu0 0.0
    %480 = vmatprep.subr.mxu0 0.0
    %481 = vmatpush2.xpose.msra.mxu0 0.0
    %482 = vmatprep.subr.mxu0 0.0
    %483 = vmatpush2.xpose.msra.mxu0 0.0
    %484 = vmatprep.subr.mxu0 0.0
    %485 = vmatpush2.xpose.msra.mxu0 0.0
    %486 = vmatprep.subr.mxu0 0.0
    %487 = vmatpush2.xpose.msra.mxu0 0.0
    %488 = vmatprep.subr.mxu0 0.0
    %489 = vmatpush2.xpose.msra.mxu0 0.0
    %490 = vmatprep.subr.mxu0 0.0
    %491 = vmatpush2.xpose.msra.mxu0 0.0
    %492 = vmatprep.subr.mxu0 0.0
    %493 = vmatpush2.xpose.msra.mxu0 0.0
    %494 = vmatprep.subr.mxu0 0.0
    %495 = vmatpush2.xpose.msra.mxu0 0.0
    %496 = vmatprep.subr.mxu0 0.0
    %497 = vmatpush2.xpose.msra.mxu0 0.0
    %498 = vmatprep.subr.mxu0 0.0
    %499 = vmatpush2.xpose.msra.mxu0 0.0
    %500 = vmatprep.subr.mxu0 0.0
    %501 = vmatpush2.xpose.msra.mxu0 0.0
    %502 = vmatprep.mubr.f32.mxu0 0.0
    %503 = vmatmul.mubr.f32.gmra.mxu0 %v434
    %v504 = vpop.f32.mrf.mxu0
    %v505 = vadd.f32 0.0, %v504
    %v506 = vpop.f32.mrf.mxu0
    %507 = vdwg.mxu0
    %v508 = vsel %vm432, %v505, -inf
    %509 = vmax.xlane.f32.xlu0 %v508
    %v510 = vpop.xlane.xlu0 %509
    %v511 = vsub.f32 %v505, %v510
    %v512 = vmul.f32 %v511, 1.442695
    %v513 = vpow.pop %v512
    %v514 = vsel %vm432, %v513, 0.0
    %515 = vadd.xlane.f32.xlu0 %v514
    %v516 = vpop.xlane.xlu0 %515
    %v517 = vrcp.pop %v516
    %v518 = vmul.f32 %v513, %v517
    %520 = vrot.lane.b32.xlu0 %v415, 64
    %v521 = vpop.permute.xlu0 %520
    %v524 = vsel %vm432, %v518, 0
    %526 = vmatprep.subr.mxu0 0.0
    %527 = vmatpush1.msra.mxu0 0.0
    %528 = vmatprep.subr.mxu0 0.0
    %529 = vmatpush1.msra.mxu0 0.0
    %530 = vmatprep.subr.mxu0 0.0
    %531 = vmatpush1.msra.mxu0 0.0
    %532 = vmatprep.subr.mxu0 0.0
    %533 = vmatpush1.msra.mxu0 0.0
    %534 = vmatprep.subr.mxu0 0.0
    %535 = vmatpush1.msra.mxu0 0.0
    %536 = vmatprep.subr.mxu0 0.0
    %537 = vmatpush1.msra.mxu0 0.0
    %538 = vmatprep.subr.mxu0 0.0
    %539 = vmatpush1.msra.mxu0 0.0
    %540 = vmatprep.subr.mxu0 0.0
    %541 = vmatpush1.msra.mxu0 0.0
    %542 = vmatprep.subr.mxu0 0.0
    %543 = vmatpush1.msra.mxu0 0.0
    %544 = vmatprep.subr.mxu0 0.0
    %545 = vmatpush1.msra.mxu0 0.0
    %546 = vmatprep.subr.mxu0 0.0
    %547 = vmatpush1.msra.mxu0 0.0
    %548 = vmatprep.subr.mxu0 0.0
    %549 = vmatpush1.msra.mxu0 0.0
    %550 = vmatprep.subr.mxu0 0.0
    %551 = vmatpush1.msra.mxu0 0.0
    %552 = vmatprep.subr.mxu0 0.0
    %553 = vmatpush1.msra.mxu0 0.0
    %554 = vmatprep.subr.mxu0 0.0
    %555 = vmatpush1.msra.mxu0 0.0
    %556 = vmatprep.subr.mxu0 0.0
    %557 = vmatpush1.msra.mxu0 %v521
    %558 = vmatprep.subr.mxu0 0.0
    %559 = vmatpush2.msra.mxu0 0.0
    %560 = vmatprep.subr.mxu0 0.0
    %561 = vmatpush2.msra.mxu0 0.0
    %562 = vmatprep.subr.mxu0 0.0
    %563 = vmatpush2.msra.mxu0 0.0
    %564 = vmatprep.subr.mxu0 0.0
    %565 = vmatpush2.msra.mxu0 0.0
    %566 = vmatprep.subr.mxu0 0.0
    %567 = vmatpush2.msra.mxu0 0.0
    %568 = vmatprep.subr.mxu0 0.0
    %569 = vmatpush2.msra.mxu0 0.0
    %570 = vmatprep.subr.mxu0 0.0
    %571 = vmatpush2.msra.mxu0 0.0
    %572 = vmatprep.subr.mxu0 0.0
    %573 = vmatpush2.msra.mxu0 0.0
    %574 = vmatprep.subr.mxu0 0.0
    %575 = vmatpush2.msra.mxu0 0.0
    %576 = vmatprep.subr.mxu0 0.0
    %577 = vmatpush2.msra.mxu0 0.0
    %578 = vmatprep.subr.mxu0 0.0
    %579 = vmatpush2.msra.mxu0 0.0
    %580 = vmatprep.subr.mxu0 0.0
    %581 = vmatpush2.msra.mxu0 0.0
    %582 = vmatprep.subr.mxu0 0.0
    %583 = vmatpush2.msra.mxu0 0.0
    %584 = vmatprep.subr.mxu0 0.0
    %585 = vmatpush2.msra.mxu0 0.0
    %586 = vmatprep.subr.mxu0 0.0
    %587 = vmatpush2.msra.mxu0 0.0
    %588 = vmatprep.subr.mxu0 0.0
    %589 = vmatpush2.msra.mxu0 0.0
    %590 = vmatprep.mubr.f32.mxu0 0.0
    %591 = vmatmul.mubr.f32.gmra.mxu0 %v524
    %v592 = vpop.f32.mrf.mxu0
    %v593 = vadd.f32 0.0, %v592
    %v594 = vpop.f32.mrf.mxu0
    %595 = vdwg.mxu0
    %596 = vrot.lane.b32.xlu0 %v425, 120
    %v597 = vpop.permute.xlu0 %596
    %598 = vrot.lane.b32.xlu0 %v427, 88
    %v599 = vpop.permute.xlu0 %598
    %v600 = vsel %vm432, %v597, 0
    %v602 = vsel %vm432, %v599, 0
    %604 = vmatprep.subr.mxu0 0.0
    %605 = vmatpush1.xpose.msra.mxu0 0.0
    %606 = vmatprep.subr.mxu0 0.0
    %607 = vmatpush1.xpose.msra.mxu0 0.0
    %608 = vmatprep.subr.mxu0 0.0
    %609 = vmatpush1.xpose.msra.mxu0 0.0
    %610 = vmatprep.subr.mxu0 0.0
    %611 = vmatpush1.xpose.msra.mxu0 0.0
    %612 = vmatprep.subr.mxu0 0.0
    %613 = vmatpush1.xpose.msra.mxu0 0.0
    %614 = vmatprep.subr.mxu0 0.0
    %615 = vmatpush1.xpose.msra.mxu0 0.0
    %616 = vmatprep.subr.mxu0 0.0
    %617 = vmatpush1.xpose.msra.mxu0 0.0
    %618 = vmatprep.subr.mxu0 0.0
    %619 = vmatpush1.xpose.msra.mxu0 0.0
    %620 = vmatprep.subr.mxu0 0.0
    %621 = vmatpush1.xpose.msra.mxu0 0.0
    %622 = vmatprep.subr.mxu0 0.0
    %623 = vmatpush1.xpose.msra.mxu0 0.0
    %624 = vmatprep.subr.mxu0 0.0
    %625 = vmatpush1.xpose.msra.mxu0 0.0
    %626 = vmatprep.subr.mxu0 0.0
    %627 = vmatpush1.xpose.msra.mxu0 0.0
    %628 = vmatprep.subr.mxu0 0.0
    %629 = vmatpush1.xpose.msra.mxu0 0.0
    %630 = vmatprep.subr.mxu0 0.0
    %631 = vmatpush1.xpose.msra.mxu0 0.0
    %632 = vmatprep.subr.mxu0 0.0
    %633 = vmatpush1.xpose.msra.mxu0 0.0
    %634 = vmatprep.subr.mxu0 0.0
    %635 = vmatpush1.xpose.msra.mxu0 %v602
    %636 = vmatprep.subr.mxu0 0.0
    %637 = vmatpush2.xpose.msra.mxu0 0.0
    %638 = vmatprep.subr.mxu0 0.0
    %639 = vmatpush2.xpose.msra.mxu0 0.0
    %640 = vmatprep.subr.mxu0 0.0
    %641 = vmatpush2.xpose.msra.mxu0 0.0
    %642 = vmatprep.subr.mxu0 0.0
    %643 = vmatpush2.xpose.msra.mxu0 0.0
    %644 = vmatprep.subr.mxu0 0.0
    %645 = vmatpush2.xpose.msra.mxu0 0.0
    %646 = vmatprep.subr.mxu0 0.0
    %647 = vmatpush2.xpose.msra.mxu0 0.0
    %648 = vmatprep.subr.mxu0 0.0
    %649 = vmatpush2.xpose.msra.mxu0 0.0
    %650 = vmatprep.subr.mxu0 0.0
    %651 = vmatpush2.xpose.msra.mxu0 0.0
    %652 = vmatprep.subr.mxu0 0.0
    %653 = vmatpush2.xpose.msra.mxu0 0.0
    %654 = vmatprep.subr.mxu0 0.0
    %655 = vmatpush2.xpose.msra.mxu0 0.0
    %656 = vmatprep.subr.mxu0 0.0
    %657 = vmatpush2.xpose.msra.mxu0 0.0
    %658 = vmatprep.subr.mxu0 0.0
    %659 = vmatpush2.xpose.msra.mxu0 0.0
    %660 = vmatprep.subr.mxu0 0.0
    %661 = vmatpush2.xpose.msra.mxu0 0.0
    %662 = vmatprep.subr.mxu0 0.0
    %663 = vmatpush2.xpose.msra.mxu0 0.0
    %664 = vmatprep.subr.mxu0 0.0
    %665 = vmatpush2.xpose.msra.mxu0 0.0
    %666 = vmatprep.subr.mxu0 0.0
    %667 = vmatpush2.xpose.msra.mxu0 0.0
    %668 = vmatprep.mubr.f32.mxu0 0.0
    %669 = vmatmul.mubr.f32.gmra.mxu0 %v600
    %v670 = vpop.f32.mrf.mxu0
    %v671 = vadd.f32 0.0, %v670
    %v672 = vpop.f32.mrf.mxu0
    %673 = vdwg.mxu0
    %v674 = vsel %vm432, %v671, -inf
    %675 = vmax.xlane.f32.xlu0 %v674
    %v676 = vpop.xlane.xlu0 %675
    %v677 = vsub.f32 %v671, %v676
    %v678 = vmul.f32 %v677, 1.442695
    %v679 = vpow.pop %v678
    %v680 = vsel %vm432, %v679, 0.0
    %681 = vadd.xlane.f32.xlu0 %v680
    %v682 = vpop.xlane.xlu0 %681
    %v683 = vrcp.pop %v682
    %v684 = vmul.f32 %v679, %v683
    %685 = vrot.lane.b32.xlu0 %v415, 56
    %v686 = vpop.permute.xlu0 %685
    %v689 = vsel %vm432, %v684, 0
    %691 = vmatprep.subr.mxu0 0.0
    %692 = vmatpush1.msra.mxu0 0.0
    %693 = vmatprep.subr.mxu0 0.0
    %694 = vmatpush1.msra.mxu0 0.0
    %695 = vmatprep.subr.mxu0 0.0
    %696 = vmatpush1.msra.mxu0 0.0
    %697 = vmatprep.subr.mxu0 0.0
    %698 = vmatpush1.msra.mxu0 0.0
    %699 = vmatprep.subr.mxu0 0.0
    %700 = vmatpush1.msra.mxu0 0.0
    %701 = vmatprep.subr.mxu0 0.0
    %702 = vmatpush1.msra.mxu0 0.0
    %703 = vmatprep.subr.mxu0 0.0
    %704 = vmatpush1.msra.mxu0 0.0
    %705 = vmatprep.subr.mxu0 0.0
    %706 = vmatpush1.msra.mxu0 0.0
    %707 = vmatprep.subr.mxu0 0.0
    %708 = vmatpush1.msra.mxu0 0.0
    %709 = vmatprep.subr.mxu0 0.0
    %710 = vmatpush1.msra.mxu0 0.0
    %711 = vmatprep.subr.mxu0 0.0
    %712 = vmatpush1.msra.mxu0 0.0
    %713 = vmatprep.subr.mxu0 0.0
    %714 = vmatpush1.msra.mxu0 0.0
    %715 = vmatprep.subr.mxu0 0.0
    %716 = vmatpush1.msra.mxu0 0.0
    %717 = vmatprep.subr.mxu0 0.0
    %718 = vmatpush1.msra.mxu0 0.0
    %719 = vmatprep.subr.mxu0 0.0
    %720 = vmatpush1.msra.mxu0 0.0
    %721 = vmatprep.subr.mxu0 0.0
    %722 = vmatpush1.msra.mxu0 %v686
    %723 = vmatprep.subr.mxu0 0.0
    %724 = vmatpush2.msra.mxu0 0.0
    %725 = vmatprep.subr.mxu0 0.0
    %726 = vmatpush2.msra.mxu0 0.0
    %727 = vmatprep.subr.mxu0 0.0
    %728 = vmatpush2.msra.mxu0 0.0
    %729 = vmatprep.subr.mxu0 0.0
    %730 = vmatpush2.msra.mxu0 0.0
    %731 = vmatprep.subr.mxu0 0.0
    %732 = vmatpush2.msra.mxu0 0.0
    %733 = vmatprep.subr.mxu0 0.0
    %734 = vmatpush2.msra.mxu0 0.0
    %735 = vmatprep.subr.mxu0 0.0
    %736 = vmatpush2.msra.mxu0 0.0
    %737 = vmatprep.subr.mxu0 0.0
    %738 = vmatpush2.msra.mxu0 0.0
    %739 = vmatprep.subr.mxu0 0.0
    %740 = vmatpush2.msra.mxu0 0.0
    %741 = vmatprep.subr.mxu0 0.0
    %742 = vmatpush2.msra.mxu0 0.0
    %743 = vmatprep.subr.mxu0 0.0
    %744 = vmatpush2.msra.mxu0 0.0
    %745 = vmatprep.subr.mxu0 0.0
    %746 = vmatpush2.msra.mxu0 0.0
    %747 = vmatprep.subr.mxu0 0.0
    %748 = vmatpush2.msra.mxu0 0.0
    %749 = vmatprep.subr.mxu0 0.0
    %750 = vmatpush2.msra.mxu0 0.0
    %751 = vmatprep.subr.mxu0 0.0
    %752 = vmatpush2.msra.mxu0 0.0
    %753 = vmatprep.subr.mxu0 0.0
    %754 = vmatpush2.msra.mxu0 0.0
    %755 = vmatprep.mubr.f32.mxu0 0.0
    %756 = vmatmul.mubr.f32.gmra.mxu0 %v689
    %v757 = vpop.f32.mrf.mxu0
    %v758 = vadd.f32 0.0, %v757
    %v759 = vpop.f32.mrf.mxu0
    %760 = vdwg.mxu0
    %761 = vrot.lane.b32.xlu0 %v425, 112
    %v762 = vpop.permute.xlu0 %761
    %763 = vrot.lane.b32.xlu0 %v427, 80
    %v764 = vpop.permute.xlu0 %763
    %v765 = vsel %vm432, %v762, 0
    %v767 = vsel %vm432, %v764, 0
    %769 = vmatprep.subr.mxu0 0.0
    %770 = vmatpush1.xpose.msra.mxu0 0.0
    %771 = vmatprep.subr.mxu0 0.0
    %772 = vmatpush1.xpose.msra.mxu0 0.0
    %773 = vmatprep.subr.mxu0 0.0
    %774 = vmatpush1.xpose.msra.mxu0 0.0
    %775 = vmatprep.subr.mxu0 0.0
    %776 = vmatpush1.xpose.msra.mxu0 0.0
    %777 = vmatprep.subr.mxu0 0.0
    %778 = vmatpush1.xpose.msra.mxu0 0.0
    %779 = vmatprep.subr.mxu0 0.0
    %780 = vmatpush1.xpose.msra.mxu0 0.0
    %781 = vmatprep.subr.mxu0 0.0
    %782 = vmatpush1.xpose.msra.mxu0 0.0
    %783 = vmatprep.subr.mxu0 0.0
    %784 = vmatpush1.xpose.msra.mxu0 0.0
    %785 = vmatprep.subr.mxu0 0.0
    %786 = vmatpush1.xpose.msra.mxu0 0.0
    %787 = vmatprep.subr.mxu0 0.0
    %788 = vmatpush1.xpose.msra.mxu0 0.0
    %789 = vmatprep.subr.mxu0 0.0
    %790 = vmatpush1.xpose.msra.mxu0 0.0
    %791 = vmatprep.subr.mxu0 0.0
    %792 = vmatpush1.xpose.msra.mxu0 0.0
    %793 = vmatprep.subr.mxu0 0.0
    %794 = vmatpush1.xpose.msra.mxu0 0.0
    %795 = vmatprep.subr.mxu0 0.0
    %796 = vmatpush1.xpose.msra.mxu0 0.0
    %797 = vmatprep.subr.mxu0 0.0
    %798 = vmatpush1.xpose.msra.mxu0 0.0
    %799 = vmatprep.subr.mxu0 0.0
    %800 = vmatpush1.xpose.msra.mxu0 %v767
    %801 = vmatprep.subr.mxu0 0.0
    %802 = vmatpush2.xpose.msra.mxu0 0.0
    %803 = vmatprep.subr.mxu0 0.0
    %804 = vmatpush2.xpose.msra.mxu0 0.0
    %805 = vmatprep.subr.mxu0 0.0
    %806 = vmatpush2.xpose.msra.mxu0 0.0
    %807 = vmatprep.subr.mxu0 0.0
    %808 = vmatpush2.xpose.msra.mxu0 0.0
    %809 = vmatprep.subr.mxu0 0.0
    %810 = vmatpush2.xpose.msra.mxu0 0.0
    %811 = vmatprep.subr.mxu0 0.0
    %812 = vmatpush2.xpose.msra.mxu0 0.0
    %813 = vmatprep.subr.mxu0 0.0
    %814 = vmatpush2.xpose.msra.mxu0 0.0
    %815 = vmatprep.subr.mxu0 0.0
    %816 = vmatpush2.xpose.msra.mxu0 0.0
    %817 = vmatprep.subr.mxu0 0.0
    %818 = vmatpush2.xpose.msra.mxu0 0.0
    %819 = vmatprep.subr.mxu0 0.0
    %820 = vmatpush2.xpose.msra.mxu0 0.0
    %821 = vmatprep.subr.mxu0 0.0
    %822 = vmatpush2.xpose.msra.mxu0 0.0
    %823 = vmatprep.subr.mxu0 0.0
    %824 = vmatpush2.xpose.msra.mxu0 0.0
    %825 = vmatprep.subr.mxu0 0.0
    %826 = vmatpush2.xpose.msra.mxu0 0.0
    %827 = vmatprep.subr.mxu0 0.0
    %828 = vmatpush2.xpose.msra.mxu0 0.0
    %829 = vmatprep.subr.mxu0 0.0
    %830 = vmatpush2.xpose.msra.mxu0 0.0
    %831 = vmatprep.subr.mxu0 0.0
    %832 = vmatpush2.xpose.msra.mxu0 0.0
    %833 = vmatprep.mubr.f32.mxu0 0.0
    %834 = vmatmul.mubr.f32.gmra.mxu0 %v765
    %v835 = vpop.f32.mrf.mxu0
    %v836 = vadd.f32 0.0, %v835
    %v837 = vpop.f32.mrf.mxu0
    %838 = vdwg.mxu0
    %v839 = vsel %vm432, %v836, -inf
    %840 = vmax.xlane.f32.xlu0 %v839
    %v841 = vpop.xlane.xlu0 %840
    %v842 = vsub.f32 %v836, %v841
    %v843 = vmul.f32 %v842, 1.442695
    %v844 = vpow.pop %v843
    %v845 = vsel %vm432, %v844, 0.0
    %846 = vadd.xlane.f32.xlu0 %v845
    %v847 = vpop.xlane.xlu0 %846
    %v848 = vrcp.pop %v847
    %v849 = vmul.f32 %v844, %v848
    %850 = vrot.lane.b32.xlu0 %v415, 48
    %v851 = vpop.permute.xlu0 %850
    %v854 = vsel %vm432, %v849, 0
    %856 = vmatprep.subr.mxu0 0.0
    %857 = vmatpush1.msra.mxu0 0.0
    %858 = vmatprep.subr.mxu0 0.0
    %859 = vmatpush1.msra.mxu0 0.0
    %860 = vmatprep.subr.mxu0 0.0
    %861 = vmatpush1.msra.mxu0 0.0
    %862 = vmatprep.subr.mxu0 0.0
    %863 = vmatpush1.msra.mxu0 0.0
    %864 = vmatprep.subr.mxu0 0.0
    %865 = vmatpush1.msra.mxu0 0.0
    %866 = vmatprep.subr.mxu0 0.0
    %867 = vmatpush1.msra.mxu0 0.0
    %868 = vmatprep.subr.mxu0 0.0
    %869 = vmatpush1.msra.mxu0 0.0
    %870 = vmatprep.subr.mxu0 0.0
    %871 = vmatpush1.msra.mxu0 0.0
    %872 = vmatprep.subr.mxu0 0.0
    %873 = vmatpush1.msra.mxu0 0.0
    %874 = vmatprep.subr.mxu0 0.0
    %875 = vmatpush1.msra.mxu0 0.0
    %876 = vmatprep.subr.mxu0 0.0
    %877 = vmatpush1.msra.mxu0 0.0
    %878 = vmatprep.subr.mxu0 0.0
    %879 = vmatpush1.msra.mxu0 0.0
    %880 = vmatprep.subr.mxu0 0.0
    %881 = vmatpush1.msra.mxu0 0.0
    %882 = vmatprep.subr.mxu0 0.0
    %883 = vmatpush1.msra.mxu0 0.0
    %884 = vmatprep.subr.mxu0 0.0
    %885 = vmatpush1.msra.mxu0 0.0
    %886 = vmatprep.subr.mxu0 0.0
    %887 = vmatpush1.msra.mxu0 %v851
    %888 = vmatprep.subr.mxu0 0.0
    %889 = vmatpush2.msra.mxu0 0.0
    %890 = vmatprep.subr.mxu0 0.0
    %891 = vmatpush2.msra.mxu0 0.0
    %892 = vmatprep.subr.mxu0 0.0
    %893 = vmatpush2.msra.mxu0 0.0
    %894 = vmatprep.subr.mxu0 0.0
    %895 = vmatpush2.msra.mxu0 0.0
    %896 = vmatprep.subr.mxu0 0.0
    %897 = vmatpush2.msra.mxu0 0.0
    %898 = vmatprep.subr.mxu0 0.0
    %899 = vmatpush2.msra.mxu0 0.0
    %900 = vmatprep.subr.mxu0 0.0
    %901 = vmatpush2.msra.mxu0 0.0
    %902 = vmatprep.subr.mxu0 0.0
    %903 = vmatpush2.msra.mxu0 0.0
    %904 = vmatprep.subr.mxu0 0.0
    %905 = vmatpush2.msra.mxu0 0.0
    %906 = vmatprep.subr.mxu0 0.0
    %907 = vmatpush2.msra.mxu0 0.0
    %908 = vmatprep.subr.mxu0 0.0
    %909 = vmatpush2.msra.mxu0 0.0
    %910 = vmatprep.subr.mxu0 0.0
    %911 = vmatpush2.msra.mxu0 0.0
    %912 = vmatprep.subr.mxu0 0.0
    %913 = vmatpush2.msra.mxu0 0.0
    %914 = vmatprep.subr.mxu0 0.0
    %915 = vmatpush2.msra.mxu0 0.0
    %916 = vmatprep.subr.mxu0 0.0
    %917 = vmatpush2.msra.mxu0 0.0
    %918 = vmatprep.subr.mxu0 0.0
    %919 = vmatpush2.msra.mxu0 0.0
    %920 = vmatprep.mubr.f32.mxu0 0.0
    %921 = vmatmul.mubr.f32.gmra.mxu0 %v854
    %v922 = vpop.f32.mrf.mxu0
    %v923 = vadd.f32 0.0, %v922
    %v924 = vpop.f32.mrf.mxu0
    %925 = vdwg.mxu0
    %926 = vrot.lane.b32.xlu0 %v425, 104
    %v927 = vpop.permute.xlu0 %926
    %928 = vrot.lane.b32.xlu0 %v427, 72
    %v929 = vpop.permute.xlu0 %928
    %v930 = vsel %vm432, %v927, 0
    %v932 = vsel %vm432, %v929, 0
    %934 = vmatprep.subr.mxu0 0.0
    %935 = vmatpush1.xpose.msra.mxu0 0.0
    %936 = vmatprep.subr.mxu0 0.0
    %937 = vmatpush1.xpose.msra.mxu0 0.0
    %938 = vmatprep.subr.mxu0 0.0
    %939 = vmatpush1.xpose.msra.mxu0 0.0
    %940 = vmatprep.subr.mxu0 0.0
    %941 = vmatpush1.xpose.msra.mxu0 0.0
    %942 = vmatprep.subr.mxu0 0.0
    %943 = vmatpush1.xpose.msra.mxu0 0.0
    %944 = vmatprep.subr.mxu0 0.0
    %945 = vmatpush1.xpose.msra.mxu0 0.0
    %946 = vmatprep.subr.mxu0 0.0
    %947 = vmatpush1.xpose.msra.mxu0 0.0
    %948 = vmatprep.subr.mxu0 0.0
    %949 = vmatpush1.xpose.msra.mxu0 0.0
    %950 = vmatprep.subr.mxu0 0.0
    %951 = vmatpush1.xpose.msra.mxu0 0.0
    %952 = vmatprep.subr.mxu0 0.0
    %953 = vmatpush1.xpose.msra.mxu0 0.0
    %954 = vmatprep.subr.mxu0 0.0
    %955 = vmatpush1.xpose.msra.mxu0 0.0
    %956 = vmatprep.subr.mxu0 0.0
    %957 = vmatpush1.xpose.msra.mxu0 0.0
    %958 = vmatprep.subr.mxu0 0.0
    %959 = vmatpush1.xpose.msra.mxu0 0.0
    %960 = vmatprep.subr.mxu0 0.0
    %961 = vmatpush1.xpose.msra.mxu0 0.0
    %962 = vmatprep.subr.mxu0 0.0
    %963 = vmatpush1.xpose.msra.mxu0 0.0
    %964 = vmatprep.subr.mxu0 0.0
    %965 = vmatpush1.xpose.msra.mxu0 %v932
    %966 = vmatprep.subr.mxu0 0.0
    %967 = vmatpush2.xpose.msra.mxu0 0.0
    %968 = vmatprep.subr.mxu0 0.0
    %969 = vmatpush2.xpose.msra.mxu0 0.0
    %970 = vmatprep.subr.mxu0 0.0
    %971 = vmatpush2.xpose.msra.mxu0 0.0
    %972 = vmatprep.subr.mxu0 0.0
    %973 = vmatpush2.xpose.msra.mxu0 0.0
    %974 = vmatprep.subr.mxu0 0.0
    %975 = vmatpush2.xpose.msra.mxu0 0.0
    %976 = vmatprep.subr.mxu0 0.0
    %977 = vmatpush2.xpose.msra.mxu0 0.0
    %978 = vmatprep.subr.mxu0 0.0
    %979 = vmatpush2.xpose.msra.mxu0 0.0
    %980 = vmatprep.subr.mxu0 0.0
    %981 = vmatpush2.xpose.msra.mxu0 0.0
    %982 = vmatprep.subr.mxu0 0.0
    %983 = vmatpush2.xpose.msra.mxu0 0.0
    %984 = vmatprep.subr.mxu0 0.0
    %985 = vmatpush2.xpose.msra.mxu0 0.0
    %986 = vmatprep.subr.mxu0 0.0
    %987 = vmatpush2.xpose.msra.mxu0 0.0
    %988 = vmatprep.subr.mxu0 0.0
    %989 = vmatpush2.xpose.msra.mxu0 0.0
    %990 = vmatprep.subr.mxu0 0.0
    %991 = vmatpush2.xpose.msra.mxu0 0.0
    %992 = vmatprep.subr.mxu0 0.0
    %993 = vmatpush2.xpose.msra.mxu0 0.0
    %994 = vmatprep.subr.mxu0 0.0
    %995 = vmatpush2.xpose.msra.mxu0 0.0
    %996 = vmatprep.subr.mxu0 0.0
    %997 = vmatpush2.xpose.msra.mxu0 0.0
    %998 = vmatprep.mubr.f32.mxu0 0.0
    %999 = vmatmul.mubr.f32.gmra.mxu0 %v930
    %v1000 = vpop.f32.mrf.mxu0
    %v1001 = vadd.f32 0.0, %v1000
    %v1002 = vpop.f32.mrf.mxu0
    %1003 = vdwg.mxu0
    %v1004 = vsel %vm432, %v1001, -inf
    %1005 = vmax.xlane.f32.xlu0 %v1004
    %v1006 = vpop.xlane.xlu0 %1005
    %v1007 = vsub.f32 %v1001, %v1006
    %v1008 = vmul.f32 %v1007, 1.442695
    %v1009 = vpow.pop %v1008
    %v1010 = vsel %vm432, %v1009, 0.0
    %1011 = vadd.xlane.f32.xlu0 %v1010
    %v1012 = vpop.xlane.xlu0 %1011
    %v1013 = vrcp.pop %v1012
    %v1014 = vmul.f32 %v1009, %v1013
    %1015 = vrot.lane.b32.xlu0 %v415, 40
    %v1016 = vpop.permute.xlu0 %1015
    %v1019 = vsel %vm432, %v1014, 0
    %1021 = vmatprep.subr.mxu0 0.0
    %1022 = vmatpush1.msra.mxu0 0.0
    %1023 = vmatprep.subr.mxu0 0.0
    %1024 = vmatpush1.msra.mxu0 0.0
    %1025 = vmatprep.subr.mxu0 0.0
    %1026 = vmatpush1.msra.mxu0 0.0
    %1027 = vmatprep.subr.mxu0 0.0
    %1028 = vmatpush1.msra.mxu0 0.0
    %1029 = vmatprep.subr.mxu0 0.0
    %1030 = vmatpush1.msra.mxu0 0.0
    %1031 = vmatprep.subr.mxu0 0.0
    %1032 = vmatpush1.msra.mxu0 0.0
    %1033 = vmatprep.subr.mxu0 0.0
    %1034 = vmatpush1.msra.mxu0 0.0
    %1035 = vmatprep.subr.mxu0 0.0
    %1036 = vmatpush1.msra.mxu0 0.0
    %1037 = vmatprep.subr.mxu0 0.0
    %1038 = vmatpush1.msra.mxu0 0.0
    %1039 = vmatprep.subr.mxu0 0.0
    %1040 = vmatpush1.msra.mxu0 0.0
    %1041 = vmatprep.subr.mxu0 0.0
    %1042 = vmatpush1.msra.mxu0 0.0
    %1043 = vmatprep.subr.mxu0 0.0
    %1044 = vmatpush1.msra.mxu0 0.0
    %1045 = vmatprep.subr.mxu0 0.0
    %1046 = vmatpush1.msra.mxu0 0.0
    %1047 = vmatprep.subr.mxu0 0.0
    %1048 = vmatpush1.msra.mxu0 0.0
    %1049 = vmatprep.subr.mxu0 0.0
    %1050 = vmatpush1.msra.mxu0 0.0
    %1051 = vmatprep.subr.mxu0 0.0
    %1052 = vmatpush1.msra.mxu0 %v1016
    %1053 = vmatprep.subr.mxu0 0.0
    %1054 = vmatpush2.msra.mxu0 0.0
    %1055 = vmatprep.subr.mxu0 0.0
    %1056 = vmatpush2.msra.mxu0 0.0
    %1057 = vmatprep.subr.mxu0 0.0
    %1058 = vmatpush2.msra.mxu0 0.0
    %1059 = vmatprep.subr.mxu0 0.0
    %1060 = vmatpush2.msra.mxu0 0.0
    %1061 = vmatprep.subr.mxu0 0.0
    %1062 = vmatpush2.msra.mxu0 0.0
    %1063 = vmatprep.subr.mxu0 0.0
    %1064 = vmatpush2.msra.mxu0 0.0
    %1065 = vmatprep.subr.mxu0 0.0
    %1066 = vmatpush2.msra.mxu0 0.0
    %1067 = vmatprep.subr.mxu0 0.0
    %1068 = vmatpush2.msra.mxu0 0.0
    %1069 = vmatprep.subr.mxu0 0.0
    %1070 = vmatpush2.msra.mxu0 0.0
    %1071 = vmatprep.subr.mxu0 0.0
    %1072 = vmatpush2.msra.mxu0 0.0
    %1073 = vmatprep.subr.mxu0 0.0
    %1074 = vmatpush2.msra.mxu0 0.0
    %1075 = vmatprep.subr.mxu0 0.0
    %1076 = vmatpush2.msra.mxu0 0.0
    %1077 = vmatprep.subr.mxu0 0.0
    %1078 = vmatpush2.msra.mxu0 0.0
    %1079 = vmatprep.subr.mxu0 0.0
    %1080 = vmatpush2.msra.mxu0 0.0
    %1081 = vmatprep.subr.mxu0 0.0
    %1082 = vmatpush2.msra.mxu0 0.0
    %1083 = vmatprep.subr.mxu0 0.0
    %1084 = vmatpush2.msra.mxu0 0.0
    %1085 = vmatprep.mubr.f32.mxu0 0.0
    %1086 = vmatmul.mubr.f32.gmra.mxu0 %v1019
    %v1087 = vpop.f32.mrf.mxu0
    %v1088 = vadd.f32 0.0, %v1087
    %v1089 = vpop.f32.mrf.mxu0
    %1090 = vdwg.mxu0
    %1092 = vrot.lane.b32.xlu0 %v758, 8
    %v1093 = vpop.permute.xlu0 %1092
    %1096 = vrot.lane.b32.xlu0 %v923, 16
    %v1097 = vpop.permute.xlu0 %1096
    %1100 = vrot.lane.b32.xlu0 %v1088, 24
    %v1101 = vpop.permute.xlu0 %1100
    %v1103 = vsel %vm432, %v593, %v1093
    %vm1104 = vcmask 130048
    %v1105 = vsel %vm1104, %v1103, %v1097
    %vm1106 = vcmask 195584
    %v1107 = vsel %vm1106, %v1105, %v1101
    %1109 = vrot.lane.b32.xlu0 %v428, 96
    %v1110 = vpop.permute.xlu0 %1109
    %v1112 = vsel %vm432, %v426, 0
    %v1114 = vsel %vm432, %v1110, 0
    %1116 = vmatprep.subr.mxu0 0.0
    %1117 = vmatpush1.xpose.msra.mxu0 0.0
    %1118 = vmatprep.subr.mxu0 0.0
    %1119 = vmatpush1.xpose.msra.mxu0 0.0
    %1120 = vmatprep.subr.mxu0 0.0
    %1121 = vmatpush1.xpose.msra.mxu0 0.0
    %1122 = vmatprep.subr.mxu0 0.0
    %1123 = vmatpush1.xpose.msra.mxu0 0.0
    %1124 = vmatprep.subr.mxu0 0.0
    %1125 = vmatpush1.xpose.msra.mxu0 0.0
    %1126 = vmatprep.subr.mxu0 0.0
    %1127 = vmatpush1.xpose.msra.mxu0 0.0
    %1128 = vmatprep.subr.mxu0 0.0
    %1129 = vmatpush1.xpose.msra.mxu0 0.0
    %1130 = vmatprep.subr.mxu0 0.0
    %1131 = vmatpush1.xpose.msra.mxu0 0.0
    %1132 = vmatprep.subr.mxu0 0.0
    %1133 = vmatpush1.xpose.msra.mxu0 0.0
    %1134 = vmatprep.subr.mxu0 0.0
    %1135 = vmatpush1.xpose.msra.mxu0 0.0
    %1136 = vmatprep.subr.mxu0 0.0
    %1137 = vmatpush1.xpose.msra.mxu0 0.0
    %1138 = vmatprep.subr.mxu0 0.0
    %1139 = vmatpush1.xpose.msra.mxu0 0.0
    %1140 = vmatprep.subr.mxu0 0.0
    %1141 = vmatpush1.xpose.msra.mxu0 0.0
    %1142 = vmatprep.subr.mxu0 0.0
    %1143 = vmatpush1.xpose.msra.mxu0 0.0
    %1144 = vmatprep.subr.mxu0 0.0
    %1145 = vmatpush1.xpose.msra.mxu0 0.0
    %1146 = vmatprep.subr.mxu0 0.0
    %1147 = vmatpush1.xpose.msra.mxu0 %v1114
    %1148 = vmatprep.subr.mxu0 0.0
    %1149 = vmatpush2.xpose.msra.mxu0 0.0
    %1150 = vmatprep.subr.mxu0 0.0
    %1151 = vmatpush2.xpose.msra.mxu0 0.0
    %1152 = vmatprep.subr.mxu0 0.0
    %1153 = vmatpush2.xpose.msra.mxu0 0.0
    %1154 = vmatprep.subr.mxu0 0.0
    %1155 = vmatpush2.xpose.msra.mxu0 0.0
    %1156 = vmatprep.subr.mxu0 0.0
    %1157 = vmatpush2.xpose.msra.mxu0 0.0
    %1158 = vmatprep.subr.mxu0 0.0
    %1159 = vmatpush2.xpose.msra.mxu0 0.0
    %1160 = vmatprep.subr.mxu0 0.0
    %1161 = vmatpush2.xpose.msra.mxu0 0.0
    %1162 = vmatprep.subr.mxu0 0.0
    %1163 = vmatpush2.xpose.msra.mxu0 0.0
    %1164 = vmatprep.subr.mxu0 0.0
    %1165 = vmatpush2.xpose.msra.mxu0 0.0
    %1166 = vmatprep.subr.mxu0 0.0
    %1167 = vmatpush2.xpose.msra.mxu0 0.0
    %1168 = vmatprep.subr.mxu0 0.0
    %1169 = vmatpush2.xpose.msra.mxu0 0.0
    %1170 = vmatprep.subr.mxu0 0.0
    %1171 = vmatpush2.xpose.msra.mxu0 0.0
    %1172 = vmatprep.subr.mxu0 0.0
    %1173 = vmatpush2.xpose.msra.mxu0 0.0
    %1174 = vmatprep.subr.mxu0 0.0
    %1175 = vmatpush2.xpose.msra.mxu0 0.0
    %1176 = vmatprep.subr.mxu0 0.0
    %1177 = vmatpush2.xpose.msra.mxu0 0.0
    %1178 = vmatprep.subr.mxu0 0.0
    %1179 = vmatpush2.xpose.msra.mxu0 0.0
    %1180 = vmatprep.mubr.f32.mxu0 0.0
    %1181 = vmatmul.mubr.f32.gmra.mxu0 %v1112
    %v1182 = vpop.f32.mrf.mxu0
    %v1183 = vadd.f32 0.0, %v1182
    %v1184 = vpop.f32.mrf.mxu0
    %1185 = vdwg.mxu0
    %v1186 = vsel %vm432, %v1183, -inf
    %1187 = vmax.xlane.f32.xlu0 %v1186
    %v1188 = vpop.xlane.xlu0 %1187
    %v1189 = vsub.f32 %v1183, %v1188
    %v1190 = vmul.f32 %v1189, 1.442695
    %v1191 = vpow.pop %v1190
    %v1192 = vsel %vm432, %v1191, 0.0
    %1193 = vadd.xlane.f32.xlu0 %v1192
    %v1194 = vpop.xlane.xlu0 %1193
    %v1195 = vrcp.pop %v1194
    %v1196 = vmul.f32 %v1191, %v1195
    %1198 = vrot.lane.b32.xlu0 %v420, 64
    %v1199 = vpop.permute.xlu0 %1198
    %v1202 = vsel %vm432, %v1196, 0
    %1204 = vmatprep.subr.mxu0 0.0
    %1205 = vmatpush1.msra.mxu0 0.0
    %1206 = vmatprep.subr.mxu0 0.0
    %1207 = vmatpush1.msra.mxu0 0.0
    %1208 = vmatprep.subr.mxu0 0.0
    %1209 = vmatpush1.msra.mxu0 0.0
    %1210 = vmatprep.subr.mxu0 0.0
    %1211 = vmatpush1.msra.mxu0 0.0
    %1212 = vmatprep.subr.mxu0 0.0
    %1213 = vmatpush1.msra.mxu0 0.0
    %1214 = vmatprep.subr.mxu0 0.0
    %1215 = vmatpush1.msra.mxu0 0.0
    %1216 = vmatprep.subr.mxu0 0.0
    %1217 = vmatpush1.msra.mxu0 0.0
    %1218 = vmatprep.subr.mxu0 0.0
    %1219 = vmatpush1.msra.mxu0 0.0
    %1220 = vmatprep.subr.mxu0 0.0
    %1221 = vmatpush1.msra.mxu0 0.0
    %1222 = vmatprep.subr.mxu0 0.0
    %1223 = vmatpush1.msra.mxu0 0.0
    %1224 = vmatprep.subr.mxu0 0.0
    %1225 = vmatpush1.msra.mxu0 0.0
    %1226 = vmatprep.subr.mxu0 0.0
    %1227 = vmatpush1.msra.mxu0 0.0
    %1228 = vmatprep.subr.mxu0 0.0
    %1229 = vmatpush1.msra.mxu0 0.0
    %1230 = vmatprep.subr.mxu0 0.0
    %1231 = vmatpush1.msra.mxu0 0.0
    %1232 = vmatprep.subr.mxu0 0.0
    %1233 = vmatpush1.msra.mxu0 0.0
    %1234 = vmatprep.subr.mxu0 0.0
    %1235 = vmatpush1.msra.mxu0 %v1199
    %1236 = vmatprep.subr.mxu0 0.0
    %1237 = vmatpush2.msra.mxu0 0.0
    %1238 = vmatprep.subr.mxu0 0.0
    %1239 = vmatpush2.msra.mxu0 0.0
    %1240 = vmatprep.subr.mxu0 0.0
    %1241 = vmatpush2.msra.mxu0 0.0
    %1242 = vmatprep.subr.mxu0 0.0
    %1243 = vmatpush2.msra.mxu0 0.0
    %1244 = vmatprep.subr.mxu0 0.0
    %1245 = vmatpush2.msra.mxu0 0.0
    %1246 = vmatprep.subr.mxu0 0.0
    %1247 = vmatpush2.msra.mxu0 0.0
    %1248 = vmatprep.subr.mxu0 0.0
    %1249 = vmatpush2.msra.mxu0 0.0
    %1250 = vmatprep.subr.mxu0 0.0
    %1251 = vmatpush2.msra.mxu0 0.0
    %1252 = vmatprep.subr.mxu0 0.0
    %1253 = vmatpush2.msra.mxu0 0.0
    %1254 = vmatprep.subr.mxu0 0.0
    %1255 = vmatpush2.msra.mxu0 0.0
    %1256 = vmatprep.subr.mxu0 0.0
    %1257 = vmatpush2.msra.mxu0 0.0
    %1258 = vmatprep.subr.mxu0 0.0
    %1259 = vmatpush2.msra.mxu0 0.0
    %1260 = vmatprep.subr.mxu0 0.0
    %1261 = vmatpush2.msra.mxu0 0.0
    %1262 = vmatprep.subr.mxu0 0.0
    %1263 = vmatpush2.msra.mxu0 0.0
    %1264 = vmatprep.subr.mxu0 0.0
    %1265 = vmatpush2.msra.mxu0 0.0
    %1266 = vmatprep.subr.mxu0 0.0
    %1267 = vmatpush2.msra.mxu0 0.0
    %1268 = vmatprep.mubr.f32.mxu0 0.0
    %1269 = vmatmul.mubr.f32.gmra.mxu0 %v1202
    %v1270 = vpop.f32.mrf.mxu0
    %v1271 = vadd.f32 0.0, %v1270
    %v1272 = vpop.f32.mrf.mxu0
    %1273 = vdwg.mxu0
    %1274 = vrot.lane.b32.xlu0 %v426, 120
    %v1275 = vpop.permute.xlu0 %1274
    %1276 = vrot.lane.b32.xlu0 %v428, 88
    %v1277 = vpop.permute.xlu0 %1276
    %v1278 = vsel %vm432, %v1275, 0
    %v1280 = vsel %vm432, %v1277, 0
    %1282 = vmatprep.subr.mxu0 0.0
    %1283 = vmatpush1.xpose.msra.mxu0 0.0
    %1284 = vmatprep.subr.mxu0 0.0
    %1285 = vmatpush1.xpose.msra.mxu0 0.0
    %1286 = vmatprep.subr.mxu0 0.0
    %1287 = vmatpush1.xpose.msra.mxu0 0.0
    %1288 = vmatprep.subr.mxu0 0.0
    %1289 = vmatpush1.xpose.msra.mxu0 0.0
    %1290 = vmatprep.subr.mxu0 0.0
    %1291 = vmatpush1.xpose.msra.mxu0 0.0
    %1292 = vmatprep.subr.mxu0 0.0
    %1293 = vmatpush1.xpose.msra.mxu0 0.0
    %1294 = vmatprep.subr.mxu0 0.0
    %1295 = vmatpush1.xpose.msra.mxu0 0.0
    %1296 = vmatprep.subr.mxu0 0.0
    %1297 = vmatpush1.xpose.msra.mxu0 0.0
    %1298 = vmatprep.subr.mxu0 0.0
    %1299 = vmatpush1.xpose.msra.mxu0 0.0
    %1300 = vmatprep.subr.mxu0 0.0
    %1301 = vmatpush1.xpose.msra.mxu0 0.0
    %1302 = vmatprep.subr.mxu0 0.0
    %1303 = vmatpush1.xpose.msra.mxu0 0.0
    %1304 = vmatprep.subr.mxu0 0.0
    %1305 = vmatpush1.xpose.msra.mxu0 0.0
    %1306 = vmatprep.subr.mxu0 0.0
    %1307 = vmatpush1.xpose.msra.mxu0 0.0
    %1308 = vmatprep.subr.mxu0 0.0
    %1309 = vmatpush1.xpose.msra.mxu0 0.0
    %1310 = vmatprep.subr.mxu0 0.0
    %1311 = vmatpush1.xpose.msra.mxu0 0.0
    %1312 = vmatprep.subr.mxu0 0.0
    %1313 = vmatpush1.xpose.msra.mxu0 %v1280
    %1314 = vmatprep.subr.mxu0 0.0
    %1315 = vmatpush2.xpose.msra.mxu0 0.0
    %1316 = vmatprep.subr.mxu0 0.0
    %1317 = vmatpush2.xpose.msra.mxu0 0.0
    %1318 = vmatprep.subr.mxu0 0.0
    %1319 = vmatpush2.xpose.msra.mxu0 0.0
    %1320 = vmatprep.subr.mxu0 0.0
    %1321 = vmatpush2.xpose.msra.mxu0 0.0
    %1322 = vmatprep.subr.mxu0 0.0
    %1323 = vmatpush2.xpose.msra.mxu0 0.0
    %1324 = vmatprep.subr.mxu0 0.0
    %1325 = vmatpush2.xpose.msra.mxu0 0.0
    %1326 = vmatprep.subr.mxu0 0.0
    %1327 = vmatpush2.xpose.msra.mxu0 0.0
    %1328 = vmatprep.subr.mxu0 0.0
    %1329 = vmatpush2.xpose.msra.mxu0 0.0
    %1330 = vmatprep.subr.mxu0 0.0
    %1331 = vmatpush2.xpose.msra.mxu0 0.0
    %1332 = vmatprep.subr.mxu0 0.0
    %1333 = vmatpush2.xpose.msra.mxu0 0.0
    %1334 = vmatprep.subr.mxu0 0.0
    %1335 = vmatpush2.xpose.msra.mxu0 0.0
    %1336 = vmatprep.subr.mxu0 0.0
    %1337 = vmatpush2.xpose.msra.mxu0 0.0
    %1338 = vmatprep.subr.mxu0 0.0
    %1339 = vmatpush2.xpose.msra.mxu0 0.0
    %1340 = vmatprep.subr.mxu0 0.0
    %1341 = vmatpush2.xpose.msra.mxu0 0.0
    %1342 = vmatprep.subr.mxu0 0.0
    %1343 = vmatpush2.xpose.msra.mxu0 0.0
    %1344 = vmatprep.subr.mxu0 0.0
    %1345 = vmatpush2.xpose.msra.mxu0 0.0
    %1346 = vmatprep.mubr.f32.mxu0 0.0
    %1347 = vmatmul.mubr.f32.gmra.mxu0 %v1278
    %v1348 = vpop.f32.mrf.mxu0
    %v1349 = vadd.f32 0.0, %v1348
    %v1350 = vpop.f32.mrf.mxu0
    %1351 = vdwg.mxu0
    %v1352 = vsel %vm432, %v1349, -inf
    %1353 = vmax.xlane.f32.xlu0 %v1352
    %v1354 = vpop.xlane.xlu0 %1353
    %v1355 = vsub.f32 %v1349, %v1354
    %v1356 = vmul.f32 %v1355, 1.442695
    %v1357 = vpow.pop %v1356
    %v1358 = vsel %vm432, %v1357, 0.0
    %1359 = vadd.xlane.f32.xlu0 %v1358
    %v1360 = vpop.xlane.xlu0 %1359
    %v1361 = vrcp.pop %v1360
    %v1362 = vmul.f32 %v1357, %v1361
    %1363 = vrot.lane.b32.xlu0 %v420, 56
    %v1364 = vpop.permute.xlu0 %1363
    %v1367 = vsel %vm432, %v1362, 0
    %1369 = vmatprep.subr.mxu0 0.0
    %1370 = vmatpush1.msra.mxu0 0.0
    %1371 = vmatprep.subr.mxu0 0.0
    %1372 = vmatpush1.msra.mxu0 0.0
    %1373 = vmatprep.subr.mxu0 0.0
    %1374 = vmatpush1.msra.mxu0 0.0
    %1375 = vmatprep.subr.mxu0 0.0
    %1376 = vmatpush1.msra.mxu0 0.0
    %1377 = vmatprep.subr.mxu0 0.0
    %1378 = vmatpush1.msra.mxu0 0.0
    %1379 = vmatprep.subr.mxu0 0.0
    %1380 = vmatpush1.msra.mxu0 0.0
    %1381 = vmatprep.subr.mxu0 0.0
    %1382 = vmatpush1.msra.mxu0 0.0
    %1383 = vmatprep.subr.mxu0 0.0
    %1384 = vmatpush1.msra.mxu0 0.0
    %1385 = vmatprep.subr.mxu0 0.0
    %1386 = vmatpush1.msra.mxu0 0.0
    %1387 = vmatprep.subr.mxu0 0.0
    %1388 = vmatpush1.msra.mxu0 0.0
    %1389 = vmatprep.subr.mxu0 0.0
    %1390 = vmatpush1.msra.mxu0 0.0
    %1391 = vmatprep.subr.mxu0 0.0
    %1392 = vmatpush1.msra.mxu0 0.0
    %1393 = vmatprep.subr.mxu0 0.0
    %1394 = vmatpush1.msra.mxu0 0.0
    %1395 = vmatprep.subr.mxu0 0.0
    %1396 = vmatpush1.msra.mxu0 0.0
    %1397 = vmatprep.subr.mxu0 0.0
    %1398 = vmatpush1.msra.mxu0 0.0
    %1399 = vmatprep.subr.mxu0 0.0
    %1400 = vmatpush1.msra.mxu0 %v1364
    %1401 = vmatprep.subr.mxu0 0.0
    %1402 = vmatpush2.msra.mxu0 0.0
    %1403 = vmatprep.subr.mxu0 0.0
    %1404 = vmatpush2.msra.mxu0 0.0
    %1405 = vmatprep.subr.mxu0 0.0
    %1406 = vmatpush2.msra.mxu0 0.0
    %1407 = vmatprep.subr.mxu0 0.0
    %1408 = vmatpush2.msra.mxu0 0.0
    %1409 = vmatprep.subr.mxu0 0.0
    %1410 = vmatpush2.msra.mxu0 0.0
    %1411 = vmatprep.subr.mxu0 0.0
    %1412 = vmatpush2.msra.mxu0 0.0
    %1413 = vmatprep.subr.mxu0 0.0
    %1414 = vmatpush2.msra.mxu0 0.0
    %1415 = vmatprep.subr.mxu0 0.0
    %1416 = vmatpush2.msra.mxu0 0.0
    %1417 = vmatprep.subr.mxu0 0.0
    %1418 = vmatpush2.msra.mxu0 0.0
    %1419 = vmatprep.subr.mxu0 0.0
    %1420 = vmatpush2.msra.mxu0 0.0
    %1421 = vmatprep.subr.mxu0 0.0
    %1422 = vmatpush2.msra.mxu0 0.0
    %1423 = vmatprep.subr.mxu0 0.0
    %1424 = vmatpush2.msra.mxu0 0.0
    %1425 = vmatprep.subr.mxu0 0.0
    %1426 = vmatpush2.msra.mxu0 0.0
    %1427 = vmatprep.subr.mxu0 0.0
    %1428 = vmatpush2.msra.mxu0 0.0
    %1429 = vmatprep.subr.mxu0 0.0
    %1430 = vmatpush2.msra.mxu0 0.0
    %1431 = vmatprep.subr.mxu0 0.0
    %1432 = vmatpush2.msra.mxu0 0.0
    %1433 = vmatprep.mubr.f32.mxu0 0.0
    %1434 = vmatmul.mubr.f32.gmra.mxu0 %v1367
    %v1435 = vpop.f32.mrf.mxu0
    %v1436 = vadd.f32 0.0, %v1435
    %v1437 = vpop.f32.mrf.mxu0
    %1438 = vdwg.mxu0
    %1439 = vrot.lane.b32.xlu0 %v426, 112
    %v1440 = vpop.permute.xlu0 %1439
    %1441 = vrot.lane.b32.xlu0 %v428, 80
    %v1442 = vpop.permute.xlu0 %1441
    %v1443 = vsel %vm432, %v1440, 0
    %v1445 = vsel %vm432, %v1442, 0
    %1447 = vmatprep.subr.mxu0 0.0
    %1448 = vmatpush1.xpose.msra.mxu0 0.0
    %1449 = vmatprep.subr.mxu0 0.0
    %1450 = vmatpush1.xpose.msra.mxu0 0.0
    %1451 = vmatprep.subr.mxu0 0.0
    %1452 = vmatpush1.xpose.msra.mxu0 0.0
    %1453 = vmatprep.subr.mxu0 0.0
    %1454 = vmatpush1.xpose.msra.mxu0 0.0
    %1455 = vmatprep.subr.mxu0 0.0
    %1456 = vmatpush1.xpose.msra.mxu0 0.0
    %1457 = vmatprep.subr.mxu0 0.0
    %1458 = vmatpush1.xpose.msra.mxu0 0.0
    %1459 = vmatprep.subr.mxu0 0.0
    %1460 = vmatpush1.xpose.msra.mxu0 0.0
    %1461 = vmatprep.subr.mxu0 0.0
    %1462 = vmatpush1.xpose.msra.mxu0 0.0
    %1463 = vmatprep.subr.mxu0 0.0
    %1464 = vmatpush1.xpose.msra.mxu0 0.0
    %1465 = vmatprep.subr.mxu0 0.0
    %1466 = vmatpush1.xpose.msra.mxu0 0.0
    %1467 = vmatprep.subr.mxu0 0.0
    %1468 = vmatpush1.xpose.msra.mxu0 0.0
    %1469 = vmatprep.subr.mxu0 0.0
    %1470 = vmatpush1.xpose.msra.mxu0 0.0
    %1471 = vmatprep.subr.mxu0 0.0
    %1472 = vmatpush1.xpose.msra.mxu0 0.0
    %1473 = vmatprep.subr.mxu0 0.0
    %1474 = vmatpush1.xpose.msra.mxu0 0.0
    %1475 = vmatprep.subr.mxu0 0.0
    %1476 = vmatpush1.xpose.msra.mxu0 0.0
    %1477 = vmatprep.subr.mxu0 0.0
    %1478 = vmatpush1.xpose.msra.mxu0 %v1445
    %1479 = vmatprep.subr.mxu0 0.0
    %1480 = vmatpush2.xpose.msra.mxu0 0.0
    %1481 = vmatprep.subr.mxu0 0.0
    %1482 = vmatpush2.xpose.msra.mxu0 0.0
    %1483 = vmatprep.subr.mxu0 0.0
    %1484 = vmatpush2.xpose.msra.mxu0 0.0
    %1485 = vmatprep.subr.mxu0 0.0
    %1486 = vmatpush2.xpose.msra.mxu0 0.0
    %1487 = vmatprep.subr.mxu0 0.0
    %1488 = vmatpush2.xpose.msra.mxu0 0.0
    %1489 = vmatprep.subr.mxu0 0.0
    %1490 = vmatpush2.xpose.msra.mxu0 0.0
    %1491 = vmatprep.subr.mxu0 0.0
    %1492 = vmatpush2.xpose.msra.mxu0 0.0
    %1493 = vmatprep.subr.mxu0 0.0
    %1494 = vmatpush2.xpose.msra.mxu0 0.0
    %1495 = vmatprep.subr.mxu0 0.0
    %1496 = vmatpush2.xpose.msra.mxu0 0.0
    %1497 = vmatprep.subr.mxu0 0.0
    %1498 = vmatpush2.xpose.msra.mxu0 0.0
    %1499 = vmatprep.subr.mxu0 0.0
    %1500 = vmatpush2.xpose.msra.mxu0 0.0
    %1501 = vmatprep.subr.mxu0 0.0
    %1502 = vmatpush2.xpose.msra.mxu0 0.0
    %1503 = vmatprep.subr.mxu0 0.0
    %1504 = vmatpush2.xpose.msra.mxu0 0.0
    %1505 = vmatprep.subr.mxu0 0.0
    %1506 = vmatpush2.xpose.msra.mxu0 0.0
    %1507 = vmatprep.subr.mxu0 0.0
    %1508 = vmatpush2.xpose.msra.mxu0 0.0
    %1509 = vmatprep.subr.mxu0 0.0
    %1510 = vmatpush2.xpose.msra.mxu0 0.0
    %1511 = vmatprep.mubr.f32.mxu0 0.0
    %1512 = vmatmul.mubr.f32.gmra.mxu0 %v1443
    %v1513 = vpop.f32.mrf.mxu0
    %v1514 = vadd.f32 0.0, %v1513
    %v1515 = vpop.f32.mrf.mxu0
    %1516 = vdwg.mxu0
    %v1517 = vsel %vm432, %v1514, -inf
    %1518 = vmax.xlane.f32.xlu0 %v1517
    %v1519 = vpop.xlane.xlu0 %1518
    %v1520 = vsub.f32 %v1514, %v1519
    %v1521 = vmul.f32 %v1520, 1.442695
    %v1522 = vpow.pop %v1521
    %v1523 = vsel %vm432, %v1522, 0.0
    %1524 = vadd.xlane.f32.xlu0 %v1523
    %v1525 = vpop.xlane.xlu0 %1524
    %v1526 = vrcp.pop %v1525
    %v1527 = vmul.f32 %v1522, %v1526
    %1528 = vrot.lane.b32.xlu0 %v420, 48
    %v1529 = vpop.permute.xlu0 %1528
    %v1532 = vsel %vm432, %v1527, 0
    %1534 = vmatprep.subr.mxu0 0.0
    %1535 = vmatpush1.msra.mxu0 0.0
    %1536 = vmatprep.subr.mxu0 0.0
    %1537 = vmatpush1.msra.mxu0 0.0
    %1538 = vmatprep.subr.mxu0 0.0
    %1539 = vmatpush1.msra.mxu0 0.0
    %1540 = vmatprep.subr.mxu0 0.0
    %1541 = vmatpush1.msra.mxu0 0.0
    %1542 = vmatprep.subr.mxu0 0.0
    %1543 = vmatpush1.msra.mxu0 0.0
    %1544 = vmatprep.subr.mxu0 0.0
    %1545 = vmatpush1.msra.mxu0 0.0
    %1546 = vmatprep.subr.mxu0 0.0
    %1547 = vmatpush1.msra.mxu0 0.0
    %1548 = vmatprep.subr.mxu0 0.0
    %1549 = vmatpush1.msra.mxu0 0.0
    %1550 = vmatprep.subr.mxu0 0.0
    %1551 = vmatpush1.msra.mxu0 0.0
    %1552 = vmatprep.subr.mxu0 0.0
    %1553 = vmatpush1.msra.mxu0 0.0
    %1554 = vmatprep.subr.mxu0 0.0
    %1555 = vmatpush1.msra.mxu0 0.0
    %1556 = vmatprep.subr.mxu0 0.0
    %1557 = vmatpush1.msra.mxu0 0.0
    %1558 = vmatprep.subr.mxu0 0.0
    %1559 = vmatpush1.msra.mxu0 0.0
    %1560 = vmatprep.subr.mxu0 0.0
    %1561 = vmatpush1.msra.mxu0 0.0
    %1562 = vmatprep.subr.mxu0 0.0
    %1563 = vmatpush1.msra.mxu0 0.0
    %1564 = vmatprep.subr.mxu0 0.0
    %1565 = vmatpush1.msra.mxu0 %v1529
    %1566 = vmatprep.subr.mxu0 0.0
    %1567 = vmatpush2.msra.mxu0 0.0
    %1568 = vmatprep.subr.mxu0 0.0
    %1569 = vmatpush2.msra.mxu0 0.0
    %1570 = vmatprep.subr.mxu0 0.0
    %1571 = vmatpush2.msra.mxu0 0.0
    %1572 = vmatprep.subr.mxu0 0.0
    %1573 = vmatpush2.msra.mxu0 0.0
    %1574 = vmatprep.subr.mxu0 0.0
    %1575 = vmatpush2.msra.mxu0 0.0
    %1576 = vmatprep.subr.mxu0 0.0
    %1577 = vmatpush2.msra.mxu0 0.0
    %1578 = vmatprep.subr.mxu0 0.0
    %1579 = vmatpush2.msra.mxu0 0.0
    %1580 = vmatprep.subr.mxu0 0.0
    %1581 = vmatpush2.msra.mxu0 0.0
    %1582 = vmatprep.subr.mxu0 0.0
    %1583 = vmatpush2.msra.mxu0 0.0
    %1584 = vmatprep.subr.mxu0 0.0
    %1585 = vmatpush2.msra.mxu0 0.0
    %1586 = vmatprep.subr.mxu0 0.0
    %1587 = vmatpush2.msra.mxu0 0.0
    %1588 = vmatprep.subr.mxu0 0.0
    %1589 = vmatpush2.msra.mxu0 0.0
    %1590 = vmatprep.subr.mxu0 0.0
    %1591 = vmatpush2.msra.mxu0 0.0
    %1592 = vmatprep.subr.mxu0 0.0
    %1593 = vmatpush2.msra.mxu0 0.0
    %1594 = vmatprep.subr.mxu0 0.0
    %1595 = vmatpush2.msra.mxu0 0.0
    %1596 = vmatprep.subr.mxu0 0.0
    %1597 = vmatpush2.msra.mxu0 0.0
    %1598 = vmatprep.mubr.f32.mxu0 0.0
    %1599 = vmatmul.mubr.f32.gmra.mxu0 %v1532
    %v1600 = vpop.f32.mrf.mxu0
    %v1601 = vadd.f32 0.0, %v1600
    %v1602 = vpop.f32.mrf.mxu0
    %1603 = vdwg.mxu0
    %1604 = vrot.lane.b32.xlu0 %v426, 104
    %v1605 = vpop.permute.xlu0 %1604
    %1606 = vrot.lane.b32.xlu0 %v428, 72
    %v1607 = vpop.permute.xlu0 %1606
    %v1608 = vsel %vm432, %v1605, 0
    %v1610 = vsel %vm432, %v1607, 0
    %1612 = vmatprep.subr.mxu0 0.0
    %1613 = vmatpush1.xpose.msra.mxu0 0.0
    %1614 = vmatprep.subr.mxu0 0.0
    %1615 = vmatpush1.xpose.msra.mxu0 0.0
    %1616 = vmatprep.subr.mxu0 0.0
    %1617 = vmatpush1.xpose.msra.mxu0 0.0
    %1618 = vmatprep.subr.mxu0 0.0
    %1619 = vmatpush1.xpose.msra.mxu0 0.0
    %1620 = vmatprep.subr.mxu0 0.0
    %1621 = vmatpush1.xpose.msra.mxu0 0.0
    %1622 = vmatprep.subr.mxu0 0.0
    %1623 = vmatpush1.xpose.msra.mxu0 0.0
    %1624 = vmatprep.subr.mxu0 0.0
    %1625 = vmatpush1.xpose.msra.mxu0 0.0
    %1626 = vmatprep.subr.mxu0 0.0
    %1627 = vmatpush1.xpose.msra.mxu0 0.0
    %1628 = vmatprep.subr.mxu0 0.0
    %1629 = vmatpush1.xpose.msra.mxu0 0.0
    %1630 = vmatprep.subr.mxu0 0.0
    %1631 = vmatpush1.xpose.msra.mxu0 0.0
    %1632 = vmatprep.subr.mxu0 0.0
    %1633 = vmatpush1.xpose.msra.mxu0 0.0
    %1634 = vmatprep.subr.mxu0 0.0
    %1635 = vmatpush1.xpose.msra.mxu0 0.0
    %1636 = vmatprep.subr.mxu0 0.0
    %1637 = vmatpush1.xpose.msra.mxu0 0.0
    %1638 = vmatprep.subr.mxu0 0.0
    %1639 = vmatpush1.xpose.msra.mxu0 0.0
    %1640 = vmatprep.subr.mxu0 0.0
    %1641 = vmatpush1.xpose.msra.mxu0 0.0
    %1642 = vmatprep.subr.mxu0 0.0
    %1643 = vmatpush1.xpose.msra.mxu0 %v1610
    %1644 = vmatprep.subr.mxu0 0.0
    %1645 = vmatpush2.xpose.msra.mxu0 0.0
    %1646 = vmatprep.subr.mxu0 0.0
    %1647 = vmatpush2.xpose.msra.mxu0 0.0
    %1648 = vmatprep.subr.mxu0 0.0
    %1649 = vmatpush2.xpose.msra.mxu0 0.0
    %1650 = vmatprep.subr.mxu0 0.0
    %1651 = vmatpush2.xpose.msra.mxu0 0.0
    %1652 = vmatprep.subr.mxu0 0.0
    %1653 = vmatpush2.xpose.msra.mxu0 0.0
    %1654 = vmatprep.subr.mxu0 0.0
    %1655 = vmatpush2.xpose.msra.mxu0 0.0
    %1656 = vmatprep.subr.mxu0 0.0
    %1657 = vmatpush2.xpose.msra.mxu0 0.0
    %1658 = vmatprep.subr.mxu0 0.0
    %1659 = vmatpush2.xpose.msra.mxu0 0.0
    %1660 = vmatprep.subr.mxu0 0.0
    %1661 = vmatpush2.xpose.msra.mxu0 0.0
    %1662 = vmatprep.subr.mxu0 0.0
    %1663 = vmatpush2.xpose.msra.mxu0 0.0
    %1664 = vmatprep.subr.mxu0 0.0
    %1665 = vmatpush2.xpose.msra.mxu0 0.0
    %1666 = vmatprep.subr.mxu0 0.0
    %1667 = vmatpush2.xpose.msra.mxu0 0.0
    %1668 = vmatprep.subr.mxu0 0.0
    %1669 = vmatpush2.xpose.msra.mxu0 0.0
    %1670 = vmatprep.subr.mxu0 0.0
    %1671 = vmatpush2.xpose.msra.mxu0 0.0
    %1672 = vmatprep.subr.mxu0 0.0
    %1673 = vmatpush2.xpose.msra.mxu0 0.0
    %1674 = vmatprep.subr.mxu0 0.0
    %1675 = vmatpush2.xpose.msra.mxu0 0.0
    %1676 = vmatprep.mubr.f32.mxu0 0.0
    %1677 = vmatmul.mubr.f32.gmra.mxu0 %v1608
    %v1678 = vpop.f32.mrf.mxu0
    %v1679 = vadd.f32 0.0, %v1678
    %v1680 = vpop.f32.mrf.mxu0
    %1681 = vdwg.mxu0
    %v1682 = vsel %vm432, %v1679, -inf
    %1683 = vmax.xlane.f32.xlu0 %v1682
    %v1684 = vpop.xlane.xlu0 %1683
    %v1685 = vsub.f32 %v1679, %v1684
    %v1686 = vmul.f32 %v1685, 1.442695
    %v1687 = vpow.pop %v1686
    %v1688 = vsel %vm432, %v1687, 0.0
    %1689 = vadd.xlane.f32.xlu0 %v1688
    %v1690 = vpop.xlane.xlu0 %1689
    %v1691 = vrcp.pop %v1690
    %v1692 = vmul.f32 %v1687, %v1691
    %1693 = vrot.lane.b32.xlu0 %v420, 40
    %v1694 = vpop.permute.xlu0 %1693
    %v1697 = vsel %vm432, %v1692, 0
    %1699 = vmatprep.subr.mxu0 0.0
    %1700 = vmatpush1.msra.mxu0 0.0
    %1701 = vmatprep.subr.mxu0 0.0
    %1702 = vmatpush1.msra.mxu0 0.0
    %1703 = vmatprep.subr.mxu0 0.0
    %1704 = vmatpush1.msra.mxu0 0.0
    %1705 = vmatprep.subr.mxu0 0.0
    %1706 = vmatpush1.msra.mxu0 0.0
    %1707 = vmatprep.subr.mxu0 0.0
    %1708 = vmatpush1.msra.mxu0 0.0
    %1709 = vmatprep.subr.mxu0 0.0
    %1710 = vmatpush1.msra.mxu0 0.0
    %1711 = vmatprep.subr.mxu0 0.0
    %1712 = vmatpush1.msra.mxu0 0.0
    %1713 = vmatprep.subr.mxu0 0.0
    %1714 = vmatpush1.msra.mxu0 0.0
    %1715 = vmatprep.subr.mxu0 0.0
    %1716 = vmatpush1.msra.mxu0 0.0
    %1717 = vmatprep.subr.mxu0 0.0
    %1718 = vmatpush1.msra.mxu0 0.0
    %1719 = vmatprep.subr.mxu0 0.0
    %1720 = vmatpush1.msra.mxu0 0.0
    %1721 = vmatprep.subr.mxu0 0.0
    %1722 = vmatpush1.msra.mxu0 0.0
    %1723 = vmatprep.subr.mxu0 0.0
    %1724 = vmatpush1.msra.mxu0 0.0
    %1725 = vmatprep.subr.mxu0 0.0
    %1726 = vmatpush1.msra.mxu0 0.0
    %1727 = vmatprep.subr.mxu0 0.0
    %1728 = vmatpush1.msra.mxu0 0.0
    %1729 = vmatprep.subr.mxu0 0.0
    %1730 = vmatpush1.msra.mxu0 %v1694
    %1731 = vmatprep.subr.mxu0 0.0
    %1732 = vmatpush2.msra.mxu0 0.0
    %1733 = vmatprep.subr.mxu0 0.0
    %1734 = vmatpush2.msra.mxu0 0.0
    %1735 = vmatprep.subr.mxu0 0.0
    %1736 = vmatpush2.msra.mxu0 0.0
    %1737 = vmatprep.subr.mxu0 0.0
    %1738 = vmatpush2.msra.mxu0 0.0
    %1739 = vmatprep.subr.mxu0 0.0
    %1740 = vmatpush2.msra.mxu0 0.0
    %1741 = vmatprep.subr.mxu0 0.0
    %1742 = vmatpush2.msra.mxu0 0.0
    %1743 = vmatprep.subr.mxu0 0.0
    %1744 = vmatpush2.msra.mxu0 0.0
    %1745 = vmatprep.subr.mxu0 0.0
    %1746 = vmatpush2.msra.mxu0 0.0
    %1747 = vmatprep.subr.mxu0 0.0
    %1748 = vmatpush2.msra.mxu0 0.0
    %1749 = vmatprep.subr.mxu0 0.0
    %1750 = vmatpush2.msra.mxu0 0.0
    %1751 = vmatprep.subr.mxu0 0.0
    %1752 = vmatpush2.msra.mxu0 0.0
    %1753 = vmatprep.subr.mxu0 0.0
    %1754 = vmatpush2.msra.mxu0 0.0
    %1755 = vmatprep.subr.mxu0 0.0
    %1756 = vmatpush2.msra.mxu0 0.0
    %1757 = vmatprep.subr.mxu0 0.0
    %1758 = vmatpush2.msra.mxu0 0.0
    %1759 = vmatprep.subr.mxu0 0.0
    %1760 = vmatpush2.msra.mxu0 0.0
    %1761 = vmatprep.subr.mxu0 0.0
    %1762 = vmatpush2.msra.mxu0 0.0
    %1763 = vmatprep.mubr.f32.mxu0 0.0
    %1764 = vmatmul.mubr.f32.gmra.mxu0 %v1697
    %v1765 = vpop.f32.mrf.mxu0
    %v1766 = vadd.f32 0.0, %v1765
    %v1767 = vpop.f32.mrf.mxu0
    %1768 = vdwg.mxu0
    %1770 = vrot.lane.b32.xlu0 %v1436, 8
    %v1771 = vpop.permute.xlu0 %1770
    %1774 = vrot.lane.b32.xlu0 %v1601, 16
    %v1775 = vpop.permute.xlu0 %1774
    %1778 = vrot.lane.b32.xlu0 %v1766, 24
    %v1779 = vpop.permute.xlu0 %1778
    %v1781 = vsel %vm432, %v1271, %v1771
    %v1782 = vsel %vm1104, %v1781, %v1775
    %v1783 = vsel %vm1106, %v1782, %v1779
    %v1785 = vsel %vm229, %v1107, 0
    %v1788 = vsel %vm229, %v1783, 0
    %1790 = vmatprep.subr.mxu0 0.0
    %1791 = vmatpush1.msra.mxu0 0.0
    %1792 = vmatprep.subr.mxu0 0.0
    %1793 = vmatpush1.msra.mxu0 0.0
    %1794 = vmatprep.subr.mxu0 0.0
    %1795 = vmatpush1.msra.mxu0 0.0
    %1796 = vmatprep.subr.mxu0 0.0
    %1797 = vmatpush1.msra.mxu0 0.0
    %1798 = vmatprep.subr.mxu0 0.0
    %1799 = vmatpush1.msra.mxu0 0.0
    %1800 = vmatprep.subr.mxu0 0.0
    %1801 = vmatpush1.msra.mxu0 0.0
    %1802 = vmatprep.subr.mxu0 0.0
    %1803 = vmatpush1.msra.mxu0 0.0
    %1804 = vmatprep.subr.mxu0 0.0
    %1805 = vmatpush1.msra.mxu0 0.0
    %1806 = vmatprep.subr.mxu0 0.0
    %1807 = vmatpush1.msra.mxu0 0.0
    %1808 = vmatprep.subr.mxu0 0.0
    %1809 = vmatpush1.msra.mxu0 0.0
    %1810 = vmatprep.subr.mxu0 0.0
    %1811 = vmatpush1.msra.mxu0 0.0
    %1812 = vmatprep.subr.mxu0 0.0
    %1813 = vmatpush1.msra.mxu0 0.0
    %1814 = vmatprep.subr.mxu0 0.0
    %1815 = vmatpush1.msra.mxu0 %v77
    %1816 = vmatprep.subr.mxu0 0.0
    %1817 = vmatpush1.msra.mxu0 %v76
    %1818 = vmatprep.subr.mxu0 0.0
    %1819 = vmatpush1.msra.mxu0 %v75
    %1820 = vmatprep.subr.mxu0 0.0
    %1821 = vmatpush1.msra.mxu0 %v74
    %1822 = vmatprep.subr.mxu0 0.0
    %1823 = vmatpush2.msra.mxu0 0.0
    %1824 = vmatprep.subr.mxu0 0.0
    %1825 = vmatpush2.msra.mxu0 0.0
    %1826 = vmatprep.subr.mxu0 0.0
    %1827 = vmatpush2.msra.mxu0 0.0
    %1828 = vmatprep.subr.mxu0 0.0
    %1829 = vmatpush2.msra.mxu0 0.0
    %1830 = vmatprep.subr.mxu0 0.0
    %1831 = vmatpush2.msra.mxu0 0.0
    %1832 = vmatprep.subr.mxu0 0.0
    %1833 = vmatpush2.msra.mxu0 0.0
    %1834 = vmatprep.subr.mxu0 0.0
    %1835 = vmatpush2.msra.mxu0 0.0
    %1836 = vmatprep.subr.mxu0 0.0
    %1837 = vmatpush2.msra.mxu0 0.0
    %1838 = vmatprep.subr.mxu0 0.0
    %1839 = vmatpush2.msra.mxu0 0.0
    %1840 = vmatprep.subr.mxu0 0.0
    %1841 = vmatpush2.msra.mxu0 0.0
    %1842 = vmatprep.subr.mxu0 0.0
    %1843 = vmatpush2.msra.mxu0 0.0
    %1844 = vmatprep.subr.mxu0 0.0
    %1845 = vmatpush2.msra.mxu0 0.0
    %1846 = vmatprep.subr.mxu0 0.0
    %1847 = vmatpush2.msra.mxu0 0.0
    %1848 = vmatprep.subr.mxu0 0.0
    %1849 = vmatpush2.msra.mxu0 0.0
    %1850 = vmatprep.subr.mxu0 0.0
    %1851 = vmatpush2.msra.mxu0 0.0
    %1852 = vmatprep.subr.mxu0 0.0
    %1853 = vmatpush2.msra.mxu0 0.0
    %1854 = vmatprep.mubr.f32.mxu0 0.0
    %1855 = vmatmul.mubr.f32.gmra.mxu0 %v1785
    %v1856 = vpop.f32.mrf.mxu0
    %v1857 = vadd.f32 0.0, %v1856
    %v1858 = vpop.f32.mrf.mxu0
    %1859 = vmatprep.mubr.f32.mxu0 0.0
    %1860 = vmatmul.mubr.f32.gmra.mxu0 %v1788
    %v1861 = vpop.f32.mrf.mxu0
    %v1862 = vadd.f32 0.0, %v1861
    %v1863 = vpop.f32.mrf.mxu0
    %1864 = vdwg.mxu0
    %v1865 = vadd.f32 %v176, %v1857
    %v1866 = vadd.f32 %v191, %v1862
    %v1867 = vsel %vm229, %v1865, 0.0
    %1868 = vadd.xlane.f32.xlu0 %v1867
    %v1869 = vpop.xlane.xlu0 %1868
    %v1870 = vsel %vm229, %v1866, 0.0
    %1871 = vadd.xlane.f32.xlu0 %v1870
    %v1872 = vpop.xlane.xlu0 %1871
    %v1873 = vmul.f32 %v1869, %v317
    %v1874 = vmul.f32 %v1872, %v317
    %v1875 = vsub.f32 %v1865, %v1873
    %v1876 = vsub.f32 %v1866, %v1874
    %v1877 = vmul.f32 %v1875, %v1875
    %v1878 = vmul.f32 %v1876, %v1876
    %v1879 = vsel %vm229, %v1877, 0.0
    %1880 = vadd.xlane.f32.xlu0 %v1879
    %v1881 = vpop.xlane.xlu0 %1880
    %v1882 = vsel %vm229, %v1878, 0.0
    %1883 = vadd.xlane.f32.xlu0 %v1882
    %v1884 = vpop.xlane.xlu0 %1883
    %v1885 = vmul.f32 %v1881, %v317
    %v1886 = vmul.f32 %v1884, %v317
    %v1887 = vadd.f32 %v1885, 1e-05
    %v1888 = vadd.f32 %v1886, 1e-05
    %v1889 = vrsqrt.pop %v1887
    %v1890 = vrsqrt.pop %v1888
    %v1891 = vmul.f32 %v1875, %v1889
    %v1892 = vmul.f32 %v1876, %v1890
    %v1893 = vmul.f32 %v1891, %v123
    %v1894 = vmul.f32 %v1892, %v123
    %v1895 = vadd.f32 %v1893, %v130
    %v1896 = vadd.f32 %v1894, %v130
    %v1898 = vsel %vm229, %v1895, 0
    %v1901 = vsel %vm229, %v1896, 0
    %1903 = vmatprep.subr.mxu0 0.0
    %1904 = vmatpush1.msra.mxu0 0.0
    %1905 = vmatprep.subr.mxu0 0.0
    %1906 = vmatpush1.msra.mxu0 0.0
    %1907 = vmatprep.subr.mxu0 0.0
    %1908 = vmatpush1.msra.mxu0 0.0
    %1909 = vmatprep.subr.mxu0 0.0
    %1910 = vmatpush1.msra.mxu0 0.0
    %1911 = vmatprep.subr.mxu0 0.0
    %1912 = vmatpush1.msra.mxu0 0.0
    %1913 = vmatprep.subr.mxu0 0.0
    %1914 = vmatpush1.msra.mxu0 0.0
    %1915 = vmatprep.subr.mxu0 0.0
    %1916 = vmatpush1.msra.mxu0 0.0
    %1917 = vmatprep.subr.mxu0 0.0
    %1918 = vmatpush1.msra.mxu0 0.0
    %1919 = vmatprep.subr.mxu0 0.0
    %1920 = vmatpush1.msra.mxu0 0.0
    %1921 = vmatprep.subr.mxu0 0.0
    %1922 = vmatpush1.msra.mxu0 0.0
    %1923 = vmatprep.subr.mxu0 0.0
    %1924 = vmatpush1.msra.mxu0 0.0
    %1925 = vmatprep.subr.mxu0 0.0
    %1926 = vmatpush1.msra.mxu0 0.0
    %1927 = vmatprep.subr.mxu0 0.0
    %1928 = vmatpush1.msra.mxu0 %v81
    %1929 = vmatprep.subr.mxu0 0.0
    %1930 = vmatpush1.msra.mxu0 %v80
    %1931 = vmatprep.subr.mxu0 0.0
    %1932 = vmatpush1.msra.mxu0 %v79
    %1933 = vmatprep.subr.mxu0 0.0
    %1934 = vmatpush1.msra.mxu0 %v78
    %1935 = vmatprep.subr.mxu0 0.0
    %1936 = vmatpush2.msra.mxu0 0.0
    %1937 = vmatprep.subr.mxu0 0.0
    %1938 = vmatpush2.msra.mxu0 0.0
    %1939 = vmatprep.subr.mxu0 0.0
    %1940 = vmatpush2.msra.mxu0 0.0
    %1941 = vmatprep.subr.mxu0 0.0
    %1942 = vmatpush2.msra.mxu0 0.0
    %1943 = vmatprep.subr.mxu0 0.0
    %1944 = vmatpush2.msra.mxu0 0.0
    %1945 = vmatprep.subr.mxu0 0.0
    %1946 = vmatpush2.msra.mxu0 0.0
    %1947 = vmatprep.subr.mxu0 0.0
    %1948 = vmatpush2.msra.mxu0 0.0
    %1949 = vmatprep.subr.mxu0 0.0
    %1950 = vmatpush2.msra.mxu0 0.0
    %1951 = vmatprep.subr.mxu0 0.0
    %1952 = vmatpush2.msra.mxu0 0.0
    %1953 = vmatprep.subr.mxu0 0.0
    %1954 = vmatpush2.msra.mxu0 0.0
    %1955 = vmatprep.subr.mxu0 0.0
    %1956 = vmatpush2.msra.mxu0 0.0
    %1957 = vmatprep.subr.mxu0 0.0
    %1958 = vmatpush2.msra.mxu0 0.0
    %1959 = vmatprep.subr.mxu0 0.0
    %1960 = vmatpush2.msra.mxu0 0.0
    %1961 = vmatprep.subr.mxu0 0.0
    %1962 = vmatpush2.msra.mxu0 0.0
    %1963 = vmatprep.subr.mxu0 0.0
    %1964 = vmatpush2.msra.mxu0 0.0
    %1965 = vmatprep.subr.mxu0 0.0
    %1966 = vmatpush2.msra.mxu0 0.0
    %1967 = vmatprep.mubr.f32.mxu0 0.0
    %1968 = vmatmul.mubr.f32.gmra.mxu0 %v1898
    %v1969 = vpop.f32.mrf.mxu0
    %v1970 = vadd.f32 %v95, %v1969
    %v1971 = vpop.f32.mrf.mxu0
    %1972 = vmatprep.mubr.f32.mxu0 0.0
    %1973 = vmatmul.mubr.f32.gmra.mxu0 %v1901
    %v1974 = vpop.f32.mrf.mxu0
    %v1975 = vadd.f32 %v95, %v1974
    %v1976 = vpop.f32.mrf.mxu0
    %1977 = vdwg.mxu0
    %v1978 = vmax.f32 %v1970, 0.0
    %v1979 = vmax.f32 %v1975, 0.0
    %vm1980 = vcmask 523264
    %v1982 = vsel %vm1980, %v1978, 0
    %v1985 = vsel %vm1980, %v1979, 0
    %1987 = vmatprep.subr.mxu0 0.0
    %1988 = vmatpush1.msra.mxu0 0.0
    %1989 = vmatprep.subr.mxu0 0.0
    %1990 = vmatpush1.msra.mxu0 0.0
    %1991 = vmatprep.subr.mxu0 0.0
    %1992 = vmatpush1.msra.mxu0 0.0
    %1993 = vmatprep.subr.mxu0 0.0
    %1994 = vmatpush1.msra.mxu0 0.0
    %1995 = vmatprep.subr.mxu0 0.0
    %1996 = vmatpush1.msra.mxu0 0.0
    %1997 = vmatprep.subr.mxu0 0.0
    %1998 = vmatpush1.msra.mxu0 0.0
    %1999 = vmatprep.subr.mxu0 0.0
    %2000 = vmatpush1.msra.mxu0 0.0
    %2001 = vmatprep.subr.mxu0 0.0
    %2002 = vmatpush1.msra.mxu0 0.0
    %2003 = vmatprep.subr.mxu0 0.0
    %2004 = vmatpush1.msra.mxu0 %v89
    %2005 = vmatprep.subr.mxu0 0.0
    %2006 = vmatpush1.msra.mxu0 %v88
    %2007 = vmatprep.subr.mxu0 0.0
    %2008 = vmatpush1.msra.mxu0 %v87
    %2009 = vmatprep.subr.mxu0 0.0
    %2010 = vmatpush1.msra.mxu0 %v86
    %2011 = vmatprep.subr.mxu0 0.0
    %2012 = vmatpush1.msra.mxu0 %v85
    %2013 = vmatprep.subr.mxu0 0.0
    %2014 = vmatpush1.msra.mxu0 %v84
    %2015 = vmatprep.subr.mxu0 0.0
    %2016 = vmatpush1.msra.mxu0 %v83
    %2017 = vmatprep.subr.mxu0 0.0
    %2018 = vmatpush1.msra.mxu0 %v82
    %2019 = vmatprep.subr.mxu0 0.0
    %2020 = vmatpush2.msra.mxu0 0.0
    %2021 = vmatprep.subr.mxu0 0.0
    %2022 = vmatpush2.msra.mxu0 0.0
    %2023 = vmatprep.subr.mxu0 0.0
    %2024 = vmatpush2.msra.mxu0 0.0
    %2025 = vmatprep.subr.mxu0 0.0
    %2026 = vmatpush2.msra.mxu0 0.0
    %2027 = vmatprep.subr.mxu0 0.0
    %2028 = vmatpush2.msra.mxu0 0.0
    %2029 = vmatprep.subr.mxu0 0.0
    %2030 = vmatpush2.msra.mxu0 0.0
    %2031 = vmatprep.subr.mxu0 0.0
    %2032 = vmatpush2.msra.mxu0 0.0
    %2033 = vmatprep.subr.mxu0 0.0
    %2034 = vmatpush2.msra.mxu0 0.0
    %2035 = vmatprep.subr.mxu0 0.0
    %2036 = vmatpush2.msra.mxu0 0.0
    %2037 = vmatprep.subr.mxu0 0.0
    %2038 = vmatpush2.msra.mxu0 0.0
    %2039 = vmatprep.subr.mxu0 0.0
    %2040 = vmatpush2.msra.mxu0 0.0
    %2041 = vmatprep.subr.mxu0 0.0
    %2042 = vmatpush2.msra.mxu0 0.0
    %2043 = vmatprep.subr.mxu0 0.0
    %2044 = vmatpush2.msra.mxu0 0.0
    %2045 = vmatprep.subr.mxu0 0.0
    %2046 = vmatpush2.msra.mxu0 0.0
    %2047 = vmatprep.subr.mxu0 0.0
    %2048 = vmatpush2.msra.mxu0 0.0
    %2049 = vmatprep.subr.mxu0 0.0
    %2050 = vmatpush2.msra.mxu0 0.0
    %2051 = vmatprep.mubr.f32.mxu0 0.0
    %2052 = vmatmul.mubr.f32.gmra.mxu0 %v1982
    %v2053 = vpop.f32.mrf.mxu0
    %v2054 = vadd.f32 %v102, %v2053
    %v2055 = vpop.f32.mrf.mxu0
    %2056 = vmatprep.mubr.f32.mxu0 0.0
    %2057 = vmatmul.mubr.f32.gmra.mxu0 %v1985
    %v2058 = vpop.f32.mrf.mxu0
    %v2059 = vadd.f32 %v102, %v2058
    %v2060 = vpop.f32.mrf.mxu0
    %2061 = vdwg.mxu0
    %v2062 = vadd.f32 %v1865, %v2054
    %v2063 = vadd.f32 %v1866, %v2059
    %v2064 = vsel %vm229, %v2062, 0.0
    %2065 = vadd.xlane.f32.xlu0 %v2064
    %v2066 = vpop.xlane.xlu0 %2065
    %v2067 = vsel %vm229, %v2063, 0.0
    %2068 = vadd.xlane.f32.xlu0 %v2067
    %v2069 = vpop.xlane.xlu0 %2068
    %v2070 = vmul.f32 %v2066, %v317
    %v2071 = vmul.f32 %v2069, %v317
    %v2072 = vsub.f32 %v2062, %v2070
    %v2073 = vsub.f32 %v2063, %v2071
    %v2074 = vmul.f32 %v2072, %v2072
    %v2075 = vmul.f32 %v2073, %v2073
    %v2076 = vsel %vm229, %v2074, 0.0
    %2077 = vadd.xlane.f32.xlu0 %v2076
    %v2078 = vpop.xlane.xlu0 %2077
    %v2079 = vsel %vm229, %v2075, 0.0
    %2080 = vadd.xlane.f32.xlu0 %v2079
    %v2081 = vpop.xlane.xlu0 %2080
    %v2082 = vmul.f32 %v2078, %v317
    %v2083 = vmul.f32 %v2081, %v317
    %v2084 = vadd.f32 %v2082, 1e-05
    %v2085 = vadd.f32 %v2083, 1e-05
    %v2086 = vrsqrt.pop %v2084
    %v2087 = vrsqrt.pop %v2085
    %v2088 = vmul.f32 %v2072, %v2086
    %v2089 = vmul.f32 %v2073, %v2087
    %v2090 = vmul.f32 %v2088, %v109
    %v2091 = vmul.f32 %v2089, %v109
    %v2092 = vadd.f32 %v2090, %v116
    %v2093 = vadd.f32 %v2091, %v116
    %v2095 = vsel %vm229, %v2092, 0
    %v2098 = vsel %vm229, %v2093, 0
    %2100 = vmatprep.subr.mxu0 0.0
    %2101 = vmatpush1.msra.mxu0 0.0
    %2102 = vmatprep.subr.mxu0 0.0
    %2103 = vmatpush1.msra.mxu0 0.0
    %2104 = vmatprep.subr.mxu0 0.0
    %2105 = vmatpush1.msra.mxu0 0.0
    %2106 = vmatprep.subr.mxu0 0.0
    %2107 = vmatpush1.msra.mxu0 0.0
    %2108 = vmatprep.subr.mxu0 0.0
    %2109 = vmatpush1.msra.mxu0 0.0
    %2110 = vmatprep.subr.mxu0 0.0
    %2111 = vmatpush1.msra.mxu0 0.0
    %2112 = vmatprep.subr.mxu0 0.0
    %2113 = vmatpush1.msra.mxu0 0.0
    %2114 = vmatprep.subr.mxu0 0.0
    %2115 = vmatpush1.msra.mxu0 0.0
    %2116 = vmatprep.subr.mxu0 0.0
    %2117 = vmatpush1.msra.mxu0 0.0
    %2118 = vmatprep.subr.mxu0 0.0
    %2119 = vmatpush1.msra.mxu0 0.0
    %2120 = vmatprep.subr.mxu0 0.0
    %2121 = vmatpush1.msra.mxu0 0.0
    %2122 = vmatprep.subr.mxu0 0.0
    %2123 = vmatpush1.msra.mxu0 0.0
    %2124 = vmatprep.subr.mxu0 0.0
    %2125 = vmatpush1.msra.mxu0 %v73
    %2126 = vmatprep.subr.mxu0 0.0
    %2127 = vmatpush1.msra.mxu0 %v72
    %2128 = vmatprep.subr.mxu0 0.0
    %2129 = vmatpush1.msra.mxu0 %v71
    %2130 = vmatprep.subr.mxu0 0.0
    %2131 = vmatpush1.msra.mxu0 %v70
    %2132 = vmatprep.subr.mxu0 0.0
    %2133 = vmatpush2.msra.mxu0 0.0
    %2134 = vmatprep.subr.mxu0 0.0
    %2135 = vmatpush2.msra.mxu0 0.0
    %2136 = vmatprep.subr.mxu0 0.0
    %2137 = vmatpush2.msra.mxu0 0.0
    %2138 = vmatprep.subr.mxu0 0.0
    %2139 = vmatpush2.msra.mxu0 0.0
    %2140 = vmatprep.subr.mxu0 0.0
    %2141 = vmatpush2.msra.mxu0 0.0
    %2142 = vmatprep.subr.mxu0 0.0
    %2143 = vmatpush2.msra.mxu0 0.0
    %2144 = vmatprep.subr.mxu0 0.0
    %2145 = vmatpush2.msra.mxu0 0.0
    %2146 = vmatprep.subr.mxu0 0.0
    %2147 = vmatpush2.msra.mxu0 0.0
    %2148 = vmatprep.subr.mxu0 0.0
    %2149 = vmatpush2.msra.mxu0 0.0
    %2150 = vmatprep.subr.mxu0 0.0
    %2151 = vmatpush2.msra.mxu0 0.0
    %2152 = vmatprep.subr.mxu0 0.0
    %2153 = vmatpush2.msra.mxu0 0.0
    %2154 = vmatprep.subr.mxu0 0.0
    %2155 = vmatpush2.msra.mxu0 0.0
    %2156 = vmatprep.subr.mxu0 0.0
    %2157 = vmatpush2.msra.mxu0 0.0
    %2158 = vmatprep.subr.mxu0 0.0
    %2159 = vmatpush2.msra.mxu0 0.0
    %2160 = vmatprep.subr.mxu0 0.0
    %2161 = vmatpush2.msra.mxu0 0.0
    %2162 = vmatprep.subr.mxu0 0.0
    %2163 = vmatpush2.msra.mxu0 0.0
    %2164 = vmatprep.mubr.f32.mxu0 0.0
    %2165 = vmatmul.mubr.f32.gmra.mxu0 %v2095
    %v2166 = vpop.f32.mrf.mxu0
    %v2167 = vadd.f32 0.0, %v2166
    %v2168 = vpop.f32.mrf.mxu0
    %2169 = vmatprep.mubr.f32.mxu0 0.0
    %2170 = vmatmul.mubr.f32.gmra.mxu0 %v2098
    %v2171 = vpop.f32.mrf.mxu0
    %v2172 = vadd.f32 0.0, %v2171
    %v2173 = vpop.f32.mrf.mxu0
    %2174 = vdwg.mxu0
    %v2175 = vmul.f32 %v2167, 0.35355338
    %v2176 = vmul.f32 %v2172, 0.35355338
    %v2177 = vadd.f32 %v2175, %v309
    %v2178 = vadd.f32 %v2176, %v310
    %v2179 = vadd.f32 %v2167, %v301
    %v2180 = vadd.f32 %v2172, %v306
    %2182 = vrot.lane.b32.xlu0 %v2179, 96
    %v2183 = vpop.permute.xlu0 %2182
    %v2185 = vsel %vm432, %v2177, 0
    %v2187 = vsel %vm432, %v2183, 0
    %2189 = vmatprep.subr.mxu0 0.0
    %2190 = vmatpush1.xpose.msra.mxu0 0.0
    %2191 = vmatprep.subr.mxu0 0.0
    %2192 = vmatpush1.xpose.msra.mxu0 0.0
    %2193 = vmatprep.subr.mxu0 0.0
    %2194 = vmatpush1.xpose.msra.mxu0 0.0
    %2195 = vmatprep.subr.mxu0 0.0
    %2196 = vmatpush1.xpose.msra.mxu0 0.0
    %2197 = vmatprep.subr.mxu0 0.0
    %2198 = vmatpush1.xpose.msra.mxu0 0.0
    %2199 = vmatprep.subr.mxu0 0.0
    %2200 = vmatpush1.xpose.msra.mxu0 0.0
    %2201 = vmatprep.subr.mxu0 0.0
    %2202 = vmatpush1.xpose.msra.mxu0 0.0
    %2203 = vmatprep.subr.mxu0 0.0
    %2204 = vmatpush1.xpose.msra.mxu0 0.0
    %2205 = vmatprep.subr.mxu0 0.0
    %2206 = vmatpush1.xpose.msra.mxu0 0.0
    %2207 = vmatprep.subr.mxu0 0.0
    %2208 = vmatpush1.xpose.msra.mxu0 0.0
    %2209 = vmatprep.subr.mxu0 0.0
    %2210 = vmatpush1.xpose.msra.mxu0 0.0
    %2211 = vmatprep.subr.mxu0 0.0
    %2212 = vmatpush1.xpose.msra.mxu0 0.0
    %2213 = vmatprep.subr.mxu0 0.0
    %2214 = vmatpush1.xpose.msra.mxu0 0.0
    %2215 = vmatprep.subr.mxu0 0.0
    %2216 = vmatpush1.xpose.msra.mxu0 0.0
    %2217 = vmatprep.subr.mxu0 0.0
    %2218 = vmatpush1.xpose.msra.mxu0 0.0
    %2219 = vmatprep.subr.mxu0 0.0
    %2220 = vmatpush1.xpose.msra.mxu0 %v2187
    %2221 = vmatprep.subr.mxu0 0.0
    %2222 = vmatpush2.xpose.msra.mxu0 0.0
    %2223 = vmatprep.subr.mxu0 0.0
    %2224 = vmatpush2.xpose.msra.mxu0 0.0
    %2225 = vmatprep.subr.mxu0 0.0
    %2226 = vmatpush2.xpose.msra.mxu0 0.0
    %2227 = vmatprep.subr.mxu0 0.0
    %2228 = vmatpush2.xpose.msra.mxu0 0.0
    %2229 = vmatprep.subr.mxu0 0.0
    %2230 = vmatpush2.xpose.msra.mxu0 0.0
    %2231 = vmatprep.subr.mxu0 0.0
    %2232 = vmatpush2.xpose.msra.mxu0 0.0
    %2233 = vmatprep.subr.mxu0 0.0
    %2234 = vmatpush2.xpose.msra.mxu0 0.0
    %2235 = vmatprep.subr.mxu0 0.0
    %2236 = vmatpush2.xpose.msra.mxu0 0.0
    %2237 = vmatprep.subr.mxu0 0.0
    %2238 = vmatpush2.xpose.msra.mxu0 0.0
    %2239 = vmatprep.subr.mxu0 0.0
    %2240 = vmatpush2.xpose.msra.mxu0 0.0
    %2241 = vmatprep.subr.mxu0 0.0
    %2242 = vmatpush2.xpose.msra.mxu0 0.0
    %2243 = vmatprep.subr.mxu0 0.0
    %2244 = vmatpush2.xpose.msra.mxu0 0.0
    %2245 = vmatprep.subr.mxu0 0.0
    %2246 = vmatpush2.xpose.msra.mxu0 0.0
    %2247 = vmatprep.subr.mxu0 0.0
    %2248 = vmatpush2.xpose.msra.mxu0 0.0
    %2249 = vmatprep.subr.mxu0 0.0
    %2250 = vmatpush2.xpose.msra.mxu0 0.0
    %2251 = vmatprep.subr.mxu0 0.0
    %2252 = vmatpush2.xpose.msra.mxu0 0.0
    %2253 = vmatprep.mubr.f32.mxu0 0.0
    %2254 = vmatmul.mubr.f32.gmra.mxu0 %v2185
    %v2255 = vpop.f32.mrf.mxu0
    %v2256 = vadd.f32 0.0, %v2255
    %v2257 = vpop.f32.mrf.mxu0
    %2258 = vdwg.mxu0
    %v2259 = vsel %vm432, %v2256, -inf
    %2260 = vmax.xlane.f32.xlu0 %v2259
    %v2261 = vpop.xlane.xlu0 %2260
    %v2262 = vsub.f32 %v2256, %v2261
    %v2263 = vmul.f32 %v2262, 1.442695
    %v2264 = vpow.pop %v2263
    %v2265 = vsel %vm432, %v2264, 0.0
    %2266 = vadd.xlane.f32.xlu0 %v2265
    %v2267 = vpop.xlane.xlu0 %2266
    %v2268 = vrcp.pop %v2267
    %v2269 = vmul.f32 %v2264, %v2268
    %2271 = vrot.lane.b32.xlu0 %v2167, 64
    %v2272 = vpop.permute.xlu0 %2271
    %v2275 = vsel %vm432, %v2269, 0
    %2277 = vmatprep.subr.mxu0 0.0
    %2278 = vmatpush1.msra.mxu0 0.0
    %2279 = vmatprep.subr.mxu0 0.0
    %2280 = vmatpush1.msra.mxu0 0.0
    %2281 = vmatprep.subr.mxu0 0.0
    %2282 = vmatpush1.msra.mxu0 0.0
    %2283 = vmatprep.subr.mxu0 0.0
    %2284 = vmatpush1.msra.mxu0 0.0
    %2285 = vmatprep.subr.mxu0 0.0
    %2286 = vmatpush1.msra.mxu0 0.0
    %2287 = vmatprep.subr.mxu0 0.0
    %2288 = vmatpush1.msra.mxu0 0.0
    %2289 = vmatprep.subr.mxu0 0.0
    %2290 = vmatpush1.msra.mxu0 0.0
    %2291 = vmatprep.subr.mxu0 0.0
    %2292 = vmatpush1.msra.mxu0 0.0
    %2293 = vmatprep.subr.mxu0 0.0
    %2294 = vmatpush1.msra.mxu0 0.0
    %2295 = vmatprep.subr.mxu0 0.0
    %2296 = vmatpush1.msra.mxu0 0.0
    %2297 = vmatprep.subr.mxu0 0.0
    %2298 = vmatpush1.msra.mxu0 0.0
    %2299 = vmatprep.subr.mxu0 0.0
    %2300 = vmatpush1.msra.mxu0 0.0
    %2301 = vmatprep.subr.mxu0 0.0
    %2302 = vmatpush1.msra.mxu0 0.0
    %2303 = vmatprep.subr.mxu0 0.0
    %2304 = vmatpush1.msra.mxu0 0.0
    %2305 = vmatprep.subr.mxu0 0.0
    %2306 = vmatpush1.msra.mxu0 0.0
    %2307 = vmatprep.subr.mxu0 0.0
    %2308 = vmatpush1.msra.mxu0 %v2272
    %2309 = vmatprep.subr.mxu0 0.0
    %2310 = vmatpush2.msra.mxu0 0.0
    %2311 = vmatprep.subr.mxu0 0.0
    %2312 = vmatpush2.msra.mxu0 0.0
    %2313 = vmatprep.subr.mxu0 0.0
    %2314 = vmatpush2.msra.mxu0 0.0
    %2315 = vmatprep.subr.mxu0 0.0
    %2316 = vmatpush2.msra.mxu0 0.0
    %2317 = vmatprep.subr.mxu0 0.0
    %2318 = vmatpush2.msra.mxu0 0.0
    %2319 = vmatprep.subr.mxu0 0.0
    %2320 = vmatpush2.msra.mxu0 0.0
    %2321 = vmatprep.subr.mxu0 0.0
    %2322 = vmatpush2.msra.mxu0 0.0
    %2323 = vmatprep.subr.mxu0 0.0
    %2324 = vmatpush2.msra.mxu0 0.0
    %2325 = vmatprep.subr.mxu0 0.0
    %2326 = vmatpush2.msra.mxu0 0.0
    %2327 = vmatprep.subr.mxu0 0.0
    %2328 = vmatpush2.msra.mxu0 0.0
    %2329 = vmatprep.subr.mxu0 0.0
    %2330 = vmatpush2.msra.mxu0 0.0
    %2331 = vmatprep.subr.mxu0 0.0
    %2332 = vmatpush2.msra.mxu0 0.0
    %2333 = vmatprep.subr.mxu0 0.0
    %2334 = vmatpush2.msra.mxu0 0.0
    %2335 = vmatprep.subr.mxu0 0.0
    %2336 = vmatpush2.msra.mxu0 0.0
    %2337 = vmatprep.subr.mxu0 0.0
    %2338 = vmatpush2.msra.mxu0 0.0
    %2339 = vmatprep.subr.mxu0 0.0
    %2340 = vmatpush2.msra.mxu0 0.0
    %2341 = vmatprep.mubr.f32.mxu0 0.0
    %2342 = vmatmul.mubr.f32.gmra.mxu0 %v2275
    %v2343 = vpop.f32.mrf.mxu0
    %v2344 = vadd.f32 0.0, %v2343
    %v2345 = vpop.f32.mrf.mxu0
    %2346 = vdwg.mxu0
    %2347 = vrot.lane.b32.xlu0 %v2177, 120
    %v2348 = vpop.permute.xlu0 %2347
    %2349 = vrot.lane.b32.xlu0 %v2179, 88
    %v2350 = vpop.permute.xlu0 %2349
    %v2351 = vsel %vm432, %v2348, 0
    %v2353 = vsel %vm432, %v2350, 0
    %2355 = vmatprep.subr.mxu0 0.0
    %2356 = vmatpush1.xpose.msra.mxu0 0.0
    %2357 = vmatprep.subr.mxu0 0.0
    %2358 = vmatpush1.xpose.msra.mxu0 0.0
    %2359 = vmatprep.subr.mxu0 0.0
    %2360 = vmatpush1.xpose.msra.mxu0 0.0
    %2361 = vmatprep.subr.mxu0 0.0
    %2362 = vmatpush1.xpose.msra.mxu0 0.0
    %2363 = vmatprep.subr.mxu0 0.0
    %2364 = vmatpush1.xpose.msra.mxu0 0.0
    %2365 = vmatprep.subr.mxu0 0.0
    %2366 = vmatpush1.xpose.msra.mxu0 0.0
    %2367 = vmatprep.subr.mxu0 0.0
    %2368 = vmatpush1.xpose.msra.mxu0 0.0
    %2369 = vmatprep.subr.mxu0 0.0
    %2370 = vmatpush1.xpose.msra.mxu0 0.0
    %2371 = vmatprep.subr.mxu0 0.0
    %2372 = vmatpush1.xpose.msra.mxu0 0.0
    %2373 = vmatprep.subr.mxu0 0.0
    %2374 = vmatpush1.xpose.msra.mxu0 0.0
    %2375 = vmatprep.subr.mxu0 0.0
    %2376 = vmatpush1.xpose.msra.mxu0 0.0
    %2377 = vmatprep.subr.mxu0 0.0
    %2378 = vmatpush1.xpose.msra.mxu0 0.0
    %2379 = vmatprep.subr.mxu0 0.0
    %2380 = vmatpush1.xpose.msra.mxu0 0.0
    %2381 = vmatprep.subr.mxu0 0.0
    %2382 = vmatpush1.xpose.msra.mxu0 0.0
    %2383 = vmatprep.subr.mxu0 0.0
    %2384 = vmatpush1.xpose.msra.mxu0 0.0
    %2385 = vmatprep.subr.mxu0 0.0
    %2386 = vmatpush1.xpose.msra.mxu0 %v2353
    %2387 = vmatprep.subr.mxu0 0.0
    %2388 = vmatpush2.xpose.msra.mxu0 0.0
    %2389 = vmatprep.subr.mxu0 0.0
    %2390 = vmatpush2.xpose.msra.mxu0 0.0
    %2391 = vmatprep.subr.mxu0 0.0
    %2392 = vmatpush2.xpose.msra.mxu0 0.0
    %2393 = vmatprep.subr.mxu0 0.0
    %2394 = vmatpush2.xpose.msra.mxu0 0.0
    %2395 = vmatprep.subr.mxu0 0.0
    %2396 = vmatpush2.xpose.msra.mxu0 0.0
    %2397 = vmatprep.subr.mxu0 0.0
    %2398 = vmatpush2.xpose.msra.mxu0 0.0
    %2399 = vmatprep.subr.mxu0 0.0
    %2400 = vmatpush2.xpose.msra.mxu0 0.0
    %2401 = vmatprep.subr.mxu0 0.0
    %2402 = vmatpush2.xpose.msra.mxu0 0.0
    %2403 = vmatprep.subr.mxu0 0.0
    %2404 = vmatpush2.xpose.msra.mxu0 0.0
    %2405 = vmatprep.subr.mxu0 0.0
    %2406 = vmatpush2.xpose.msra.mxu0 0.0
    %2407 = vmatprep.subr.mxu0 0.0
    %2408 = vmatpush2.xpose.msra.mxu0 0.0
    %2409 = vmatprep.subr.mxu0 0.0
    %2410 = vmatpush2.xpose.msra.mxu0 0.0
    %2411 = vmatprep.subr.mxu0 0.0
    %2412 = vmatpush2.xpose.msra.mxu0 0.0
    %2413 = vmatprep.subr.mxu0 0.0
    %2414 = vmatpush2.xpose.msra.mxu0 0.0
    %2415 = vmatprep.subr.mxu0 0.0
    %2416 = vmatpush2.xpose.msra.mxu0 0.0
    %2417 = vmatprep.subr.mxu0 0.0
    %2418 = vmatpush2.xpose.msra.mxu0 0.0
    %2419 = vmatprep.mubr.f32.mxu0 0.0
    %2420 = vmatmul.mubr.f32.gmra.mxu0 %v2351
    %v2421 = vpop.f32.mrf.mxu0
    %v2422 = vadd.f32 0.0, %v2421
    %v2423 = vpop.f32.mrf.mxu0
    %2424 = vdwg.mxu0
    %v2425 = vsel %vm432, %v2422, -inf
    %2426 = vmax.xlane.f32.xlu0 %v2425
    %v2427 = vpop.xlane.xlu0 %2426
    %v2428 = vsub.f32 %v2422, %v2427
    %v2429 = vmul.f32 %v2428, 1.442695
    %v2430 = vpow.pop %v2429
    %v2431 = vsel %vm432, %v2430, 0.0
    %2432 = vadd.xlane.f32.xlu0 %v2431
    %v2433 = vpop.xlane.xlu0 %2432
    %v2434 = vrcp.pop %v2433
    %v2435 = vmul.f32 %v2430, %v2434
    %2436 = vrot.lane.b32.xlu0 %v2167, 56
    %v2437 = vpop.permute.xlu0 %2436
    %v2440 = vsel %vm432, %v2435, 0
    %2442 = vmatprep.subr.mxu0 0.0
    %2443 = vmatpush1.msra.mxu0 0.0
    %2444 = vmatprep.subr.mxu0 0.0
    %2445 = vmatpush1.msra.mxu0 0.0
    %2446 = vmatprep.subr.mxu0 0.0
    %2447 = vmatpush1.msra.mxu0 0.0
    %2448 = vmatprep.subr.mxu0 0.0
    %2449 = vmatpush1.msra.mxu0 0.0
    %2450 = vmatprep.subr.mxu0 0.0
    %2451 = vmatpush1.msra.mxu0 0.0
    %2452 = vmatprep.subr.mxu0 0.0
    %2453 = vmatpush1.msra.mxu0 0.0
    %2454 = vmatprep.subr.mxu0 0.0
    %2455 = vmatpush1.msra.mxu0 0.0
    %2456 = vmatprep.subr.mxu0 0.0
    %2457 = vmatpush1.msra.mxu0 0.0
    %2458 = vmatprep.subr.mxu0 0.0
    %2459 = vmatpush1.msra.mxu0 0.0
    %2460 = vmatprep.subr.mxu0 0.0
    %2461 = vmatpush1.msra.mxu0 0.0
    %2462 = vmatprep.subr.mxu0 0.0
    %2463 = vmatpush1.msra.mxu0 0.0
    %2464 = vmatprep.subr.mxu0 0.0
    %2465 = vmatpush1.msra.mxu0 0.0
    %2466 = vmatprep.subr.mxu0 0.0
    %2467 = vmatpush1.msra.mxu0 0.0
    %2468 = vmatprep.subr.mxu0 0.0
    %2469 = vmatpush1.msra.mxu0 0.0
    %2470 = vmatprep.subr.mxu0 0.0
    %2471 = vmatpush1.msra.mxu0 0.0
    %2472 = vmatprep.subr.mxu0 0.0
    %2473 = vmatpush1.msra.mxu0 %v2437
    %2474 = vmatprep.subr.mxu0 0.0
    %2475 = vmatpush2.msra.mxu0 0.0
    %2476 = vmatprep.subr.mxu0 0.0
    %2477 = vmatpush2.msra.mxu0 0.0
    %2478 = vmatprep.subr.mxu0 0.0
    %2479 = vmatpush2.msra.mxu0 0.0
    %2480 = vmatprep.subr.mxu0 0.0
    %2481 = vmatpush2.msra.mxu0 0.0
    %2482 = vmatprep.subr.mxu0 0.0
    %2483 = vmatpush2.msra.mxu0 0.0
    %2484 = vmatprep.subr.mxu0 0.0
    %2485 = vmatpush2.msra.mxu0 0.0
    %2486 = vmatprep.subr.mxu0 0.0
    %2487 = vmatpush2.msra.mxu0 0.0
    %2488 = vmatprep.subr.mxu0 0.0
    %2489 = vmatpush2.msra.mxu0 0.0
    %2490 = vmatprep.subr.mxu0 0.0
    %2491 = vmatpush2.msra.mxu0 0.0
    %2492 = vmatprep.subr.mxu0 0.0
    %2493 = vmatpush2.msra.mxu0 0.0
    %2494 = vmatprep.subr.mxu0 0.0
    %2495 = vmatpush2.msra.mxu0 0.0
    %2496 = vmatprep.subr.mxu0 0.0
    %2497 = vmatpush2.msra.mxu0 0.0
    %2498 = vmatprep.subr.mxu0 0.0
    %2499 = vmatpush2.msra.mxu0 0.0
    %2500 = vmatprep.subr.mxu0 0.0
    %2501 = vmatpush2.msra.mxu0 0.0
    %2502 = vmatprep.subr.mxu0 0.0
    %2503 = vmatpush2.msra.mxu0 0.0
    %2504 = vmatprep.subr.mxu0 0.0
    %2505 = vmatpush2.msra.mxu0 0.0
    %2506 = vmatprep.mubr.f32.mxu0 0.0
    %2507 = vmatmul.mubr.f32.gmra.mxu0 %v2440
    %v2508 = vpop.f32.mrf.mxu0
    %v2509 = vadd.f32 0.0, %v2508
    %v2510 = vpop.f32.mrf.mxu0
    %2511 = vdwg.mxu0
    %2512 = vrot.lane.b32.xlu0 %v2177, 112
    %v2513 = vpop.permute.xlu0 %2512
    %2514 = vrot.lane.b32.xlu0 %v2179, 80
    %v2515 = vpop.permute.xlu0 %2514
    %v2516 = vsel %vm432, %v2513, 0
    %v2518 = vsel %vm432, %v2515, 0
    %2520 = vmatprep.subr.mxu0 0.0
    %2521 = vmatpush1.xpose.msra.mxu0 0.0
    %2522 = vmatprep.subr.mxu0 0.0
    %2523 = vmatpush1.xpose.msra.mxu0 0.0
    %2524 = vmatprep.subr.mxu0 0.0
    %2525 = vmatpush1.xpose.msra.mxu0 0.0
    %2526 = vmatprep.subr.mxu0 0.0
    %2527 = vmatpush1.xpose.msra.mxu0 0.0
    %2528 = vmatprep.subr.mxu0 0.0
    %2529 = vmatpush1.xpose.msra.mxu0 0.0
    %2530 = vmatprep.subr.mxu0 0.0
    %2531 = vmatpush1.xpose.msra.mxu0 0.0
    %2532 = vmatprep.subr.mxu0 0.0
    %2533 = vmatpush1.xpose.msra.mxu0 0.0
    %2534 = vmatprep.subr.mxu0 0.0
    %2535 = vmatpush1.xpose.msra.mxu0 0.0
    %2536 = vmatprep.subr.mxu0 0.0
    %2537 = vmatpush1.xpose.msra.mxu0 0.0
    %2538 = vmatprep.subr.mxu0 0.0
    %2539 = vmatpush1.xpose.msra.mxu0 0.0
    %2540 = vmatprep.subr.mxu0 0.0
    %2541 = vmatpush1.xpose.msra.mxu0 0.0
    %2542 = vmatprep.subr.mxu0 0.0
    %2543 = vmatpush1.xpose.msra.mxu0 0.0
    %2544 = vmatprep.subr.mxu0 0.0
    %2545 = vmatpush1.xpose.msra.mxu0 0.0
    %2546 = vmatprep.subr.mxu0 0.0
    %2547 = vmatpush1.xpose.msra.mxu0 0.0
    %2548 = vmatprep.subr.mxu0 0.0
    %2549 = vmatpush1.xpose.msra.mxu0 0.0
    %2550 = vmatprep.subr.mxu0 0.0
    %2551 = vmatpush1.xpose.msra.mxu0 %v2518
    %2552 = vmatprep.subr.mxu0 0.0
    %2553 = vmatpush2.xpose.msra.mxu0 0.0
    %2554 = vmatprep.subr.mxu0 0.0
    %2555 = vmatpush2.xpose.msra.mxu0 0.0
    %2556 = vmatprep.subr.mxu0 0.0
    %2557 = vmatpush2.xpose.msra.mxu0 0.0
    %2558 = vmatprep.subr.mxu0 0.0
    %2559 = vmatpush2.xpose.msra.mxu0 0.0
    %2560 = vmatprep.subr.mxu0 0.0
    %2561 = vmatpush2.xpose.msra.mxu0 0.0
    %2562 = vmatprep.subr.mxu0 0.0
    %2563 = vmatpush2.xpose.msra.mxu0 0.0
    %2564 = vmatprep.subr.mxu0 0.0
    %2565 = vmatpush2.xpose.msra.mxu0 0.0
    %2566 = vmatprep.subr.mxu0 0.0
    %2567 = vmatpush2.xpose.msra.mxu0 0.0
    %2568 = vmatprep.subr.mxu0 0.0
    %2569 = vmatpush2.xpose.msra.mxu0 0.0
    %2570 = vmatprep.subr.mxu0 0.0
    %2571 = vmatpush2.xpose.msra.mxu0 0.0
    %2572 = vmatprep.subr.mxu0 0.0
    %2573 = vmatpush2.xpose.msra.mxu0 0.0
    %2574 = vmatprep.subr.mxu0 0.0
    %2575 = vmatpush2.xpose.msra.mxu0 0.0
    %2576 = vmatprep.subr.mxu0 0.0
    %2577 = vmatpush2.xpose.msra.mxu0 0.0
    %2578 = vmatprep.subr.mxu0 0.0
    %2579 = vmatpush2.xpose.msra.mxu0 0.0
    %2580 = vmatprep.subr.mxu0 0.0
    %2581 = vmatpush2.xpose.msra.mxu0 0.0
    %2582 = vmatprep.subr.mxu0 0.0
    %2583 = vmatpush2.xpose.msra.mxu0 0.0
    %2584 = vmatprep.mubr.f32.mxu0 0.0
    %2585 = vmatmul.mubr.f32.gmra.mxu0 %v2516
    %v2586 = vpop.f32.mrf.mxu0
    %v2587 = vadd.f32 0.0, %v2586
    %v2588 = vpop.f32.mrf.mxu0
    %2589 = vdwg.mxu0
    %v2590 = vsel %vm432, %v2587, -inf
    %2591 = vmax.xlane.f32.xlu0 %v2590
    %v2592 = vpop.xlane.xlu0 %2591
    %v2593 = vsub.f32 %v2587, %v2592
    %v2594 = vmul.f32 %v2593, 1.442695
    %v2595 = vpow.pop %v2594
    %v2596 = vsel %vm432, %v2595, 0.0
    %2597 = vadd.xlane.f32.xlu0 %v2596
    %v2598 = vpop.xlane.xlu0 %2597
    %v2599 = vrcp.pop %v2598
    %v2600 = vmul.f32 %v2595, %v2599
    %2601 = vrot.lane.b32.xlu0 %v2167, 48
    %v2602 = vpop.permute.xlu0 %2601
    %v2605 = vsel %vm432, %v2600, 0
    %2607 = vmatprep.subr.mxu0 0.0
    %2608 = vmatpush1.msra.mxu0 0.0
    %2609 = vmatprep.subr.mxu0 0.0
    %2610 = vmatpush1.msra.mxu0 0.0
    %2611 = vmatprep.subr.mxu0 0.0
    %2612 = vmatpush1.msra.mxu0 0.0
    %2613 = vmatprep.subr.mxu0 0.0
    %2614 = vmatpush1.msra.mxu0 0.0
    %2615 = vmatprep.subr.mxu0 0.0
    %2616 = vmatpush1.msra.mxu0 0.0
    %2617 = vmatprep.subr.mxu0 0.0
    %2618 = vmatpush1.msra.mxu0 0.0
    %2619 = vmatprep.subr.mxu0 0.0
    %2620 = vmatpush1.msra.mxu0 0.0
    %2621 = vmatprep.subr.mxu0 0.0
    %2622 = vmatpush1.msra.mxu0 0.0
    %2623 = vmatprep.subr.mxu0 0.0
    %2624 = vmatpush1.msra.mxu0 0.0
    %2625 = vmatprep.subr.mxu0 0.0
    %2626 = vmatpush1.msra.mxu0 0.0
    %2627 = vmatprep.subr.mxu0 0.0
    %2628 = vmatpush1.msra.mxu0 0.0
    %2629 = vmatprep.subr.mxu0 0.0
    %2630 = vmatpush1.msra.mxu0 0.0
    %2631 = vmatprep.subr.mxu0 0.0
    %2632 = vmatpush1.msra.mxu0 0.0
    %2633 = vmatprep.subr.mxu0 0.0
    %2634 = vmatpush1.msra.mxu0 0.0
    %2635 = vmatprep.subr.mxu0 0.0
    %2636 = vmatpush1.msra.mxu0 0.0
    %2637 = vmatprep.subr.mxu0 0.0
    %2638 = vmatpush1.msra.mxu0 %v2602
    %2639 = vmatprep.subr.mxu0 0.0
    %2640 = vmatpush2.msra.mxu0 0.0
    %2641 = vmatprep.subr.mxu0 0.0
    %2642 = vmatpush2.msra.mxu0 0.0
    %2643 = vmatprep.subr.mxu0 0.0
    %2644 = vmatpush2.msra.mxu0 0.0
    %2645 = vmatprep.subr.mxu0 0.0
    %2646 = vmatpush2.msra.mxu0 0.0
    %2647 = vmatprep.subr.mxu0 0.0
    %2648 = vmatpush2.msra.mxu0 0.0
    %2649 = vmatprep.subr.mxu0 0.0
    %2650 = vmatpush2.msra.mxu0 0.0
    %2651 = vmatprep.subr.mxu0 0.0
    %2652 = vmatpush2.msra.mxu0 0.0
    %2653 = vmatprep.subr.mxu0 0.0
    %2654 = vmatpush2.msra.mxu0 0.0
    %2655 = vmatprep.subr.mxu0 0.0
    %2656 = vmatpush2.msra.mxu0 0.0
    %2657 = vmatprep.subr.mxu0 0.0
    %2658 = vmatpush2.msra.mxu0 0.0
    %2659 = vmatprep.subr.mxu0 0.0
    %2660 = vmatpush2.msra.mxu0 0.0
    %2661 = vmatprep.subr.mxu0 0.0
    %2662 = vmatpush2.msra.mxu0 0.0
    %2663 = vmatprep.subr.mxu0 0.0
    %2664 = vmatpush2.msra.mxu0 0.0
    %2665 = vmatprep.subr.mxu0 0.0
    %2666 = vmatpush2.msra.mxu0 0.0
    %2667 = vmatprep.subr.mxu0 0.0
    %2668 = vmatpush2.msra.mxu0 0.0
    %2669 = vmatprep.subr.mxu0 0.0
    %2670 = vmatpush2.msra.mxu0 0.0
    %2671 = vmatprep.mubr.f32.mxu0 0.0
    %2672 = vmatmul.mubr.f32.gmra.mxu0 %v2605
    %v2673 = vpop.f32.mrf.mxu0
    %v2674 = vadd.f32 0.0, %v2673
    %v2675 = vpop.f32.mrf.mxu0
    %2676 = vdwg.mxu0
    %2677 = vrot.lane.b32.xlu0 %v2177, 104
    %v2678 = vpop.permute.xlu0 %2677
    %2679 = vrot.lane.b32.xlu0 %v2179, 72
    %v2680 = vpop.permute.xlu0 %2679
    %v2681 = vsel %vm432, %v2678, 0
    %v2683 = vsel %vm432, %v2680, 0
    %2685 = vmatprep.subr.mxu0 0.0
    %2686 = vmatpush1.xpose.msra.mxu0 0.0
    %2687 = vmatprep.subr.mxu0 0.0
    %2688 = vmatpush1.xpose.msra.mxu0 0.0
    %2689 = vmatprep.subr.mxu0 0.0
    %2690 = vmatpush1.xpose.msra.mxu0 0.0
    %2691 = vmatprep.subr.mxu0 0.0
    %2692 = vmatpush1.xpose.msra.mxu0 0.0
    %2693 = vmatprep.subr.mxu0 0.0
    %2694 = vmatpush1.xpose.msra.mxu0 0.0
    %2695 = vmatprep.subr.mxu0 0.0
    %2696 = vmatpush1.xpose.msra.mxu0 0.0
    %2697 = vmatprep.subr.mxu0 0.0
    %2698 = vmatpush1.xpose.msra.mxu0 0.0
    %2699 = vmatprep.subr.mxu0 0.0
    %2700 = vmatpush1.xpose.msra.mxu0 0.0
    %2701 = vmatprep.subr.mxu0 0.0
    %2702 = vmatpush1.xpose.msra.mxu0 0.0
    %2703 = vmatprep.subr.mxu0 0.0
    %2704 = vmatpush1.xpose.msra.mxu0 0.0
    %2705 = vmatprep.subr.mxu0 0.0
    %2706 = vmatpush1.xpose.msra.mxu0 0.0
    %2707 = vmatprep.subr.mxu0 0.0
    %2708 = vmatpush1.xpose.msra.mxu0 0.0
    %2709 = vmatprep.subr.mxu0 0.0
    %2710 = vmatpush1.xpose.msra.mxu0 0.0
    %2711 = vmatprep.subr.mxu0 0.0
    %2712 = vmatpush1.xpose.msra.mxu0 0.0
    %2713 = vmatprep.subr.mxu0 0.0
    %2714 = vmatpush1.xpose.msra.mxu0 0.0
    %2715 = vmatprep.subr.mxu0 0.0
    %2716 = vmatpush1.xpose.msra.mxu0 %v2683
    %2717 = vmatprep.subr.mxu0 0.0
    %2718 = vmatpush2.xpose.msra.mxu0 0.0
    %2719 = vmatprep.subr.mxu0 0.0
    %2720 = vmatpush2.xpose.msra.mxu0 0.0
    %2721 = vmatprep.subr.mxu0 0.0
    %2722 = vmatpush2.xpose.msra.mxu0 0.0
    %2723 = vmatprep.subr.mxu0 0.0
    %2724 = vmatpush2.xpose.msra.mxu0 0.0
    %2725 = vmatprep.subr.mxu0 0.0
    %2726 = vmatpush2.xpose.msra.mxu0 0.0
    %2727 = vmatprep.subr.mxu0 0.0
    %2728 = vmatpush2.xpose.msra.mxu0 0.0
    %2729 = vmatprep.subr.mxu0 0.0
    %2730 = vmatpush2.xpose.msra.mxu0 0.0
    %2731 = vmatprep.subr.mxu0 0.0
    %2732 = vmatpush2.xpose.msra.mxu0 0.0
    %2733 = vmatprep.subr.mxu0 0.0
    %2734 = vmatpush2.xpose.msra.mxu0 0.0
    %2735 = vmatprep.subr.mxu0 0.0
    %2736 = vmatpush2.xpose.msra.mxu0 0.0
    %2737 = vmatprep.subr.mxu0 0.0
    %2738 = vmatpush2.xpose.msra.mxu0 0.0
    %2739 = vmatprep.subr.mxu0 0.0
    %2740 = vmatpush2.xpose.msra.mxu0 0.0
    %2741 = vmatprep.subr.mxu0 0.0
    %2742 = vmatpush2.xpose.msra.mxu0 0.0
    %2743 = vmatprep.subr.mxu0 0.0
    %2744 = vmatpush2.xpose.msra.mxu0 0.0
    %2745 = vmatprep.subr.mxu0 0.0
    %2746 = vmatpush2.xpose.msra.mxu0 0.0
    %2747 = vmatprep.subr.mxu0 0.0
    %2748 = vmatpush2.xpose.msra.mxu0 0.0
    %2749 = vmatprep.mubr.f32.mxu0 0.0
    %2750 = vmatmul.mubr.f32.gmra.mxu0 %v2681
    %v2751 = vpop.f32.mrf.mxu0
    %v2752 = vadd.f32 0.0, %v2751
    %v2753 = vpop.f32.mrf.mxu0
    %2754 = vdwg.mxu0
    %v2755 = vsel %vm432, %v2752, -inf
    %2756 = vmax.xlane.f32.xlu0 %v2755
    %v2757 = vpop.xlane.xlu0 %2756
    %v2758 = vsub.f32 %v2752, %v2757
    %v2759 = vmul.f32 %v2758, 1.442695
    %v2760 = vpow.pop %v2759
    %v2761 = vsel %vm432, %v2760, 0.0
    %2762 = vadd.xlane.f32.xlu0 %v2761
    %v2763 = vpop.xlane.xlu0 %2762
    %v2764 = vrcp.pop %v2763
    %v2765 = vmul.f32 %v2760, %v2764
    %2766 = vrot.lane.b32.xlu0 %v2167, 40
    %v2767 = vpop.permute.xlu0 %2766
    %v2770 = vsel %vm432, %v2765, 0
    %2772 = vmatprep.subr.mxu0 0.0
    %2773 = vmatpush1.msra.mxu0 0.0
    %2774 = vmatprep.subr.mxu0 0.0
    %2775 = vmatpush1.msra.mxu0 0.0
    %2776 = vmatprep.subr.mxu0 0.0
    %2777 = vmatpush1.msra.mxu0 0.0
    %2778 = vmatprep.subr.mxu0 0.0
    %2779 = vmatpush1.msra.mxu0 0.0
    %2780 = vmatprep.subr.mxu0 0.0
    %2781 = vmatpush1.msra.mxu0 0.0
    %2782 = vmatprep.subr.mxu0 0.0
    %2783 = vmatpush1.msra.mxu0 0.0
    %2784 = vmatprep.subr.mxu0 0.0
    %2785 = vmatpush1.msra.mxu0 0.0
    %2786 = vmatprep.subr.mxu0 0.0
    %2787 = vmatpush1.msra.mxu0 0.0
    %2788 = vmatprep.subr.mxu0 0.0
    %2789 = vmatpush1.msra.mxu0 0.0
    %2790 = vmatprep.subr.mxu0 0.0
    %2791 = vmatpush1.msra.mxu0 0.0
    %2792 = vmatprep.subr.mxu0 0.0
    %2793 = vmatpush1.msra.mxu0 0.0
    %2794 = vmatprep.subr.mxu0 0.0
    %2795 = vmatpush1.msra.mxu0 0.0
    %2796 = vmatprep.subr.mxu0 0.0
    %2797 = vmatpush1.msra.mxu0 0.0
    %2798 = vmatprep.subr.mxu0 0.0
    %2799 = vmatpush1.msra.mxu0 0.0
    %2800 = vmatprep.subr.mxu0 0.0
    %2801 = vmatpush1.msra.mxu0 0.0
    %2802 = vmatprep.subr.mxu0 0.0
    %2803 = vmatpush1.msra.mxu0 %v2767
    %2804 = vmatprep.subr.mxu0 0.0
    %2805 = vmatpush2.msra.mxu0 0.0
    %2806 = vmatprep.subr.mxu0 0.0
    %2807 = vmatpush2.msra.mxu0 0.0
    %2808 = vmatprep.subr.mxu0 0.0
    %2809 = vmatpush2.msra.mxu0 0.0
    %2810 = vmatprep.subr.mxu0 0.0
    %2811 = vmatpush2.msra.mxu0 0.0
    %2812 = vmatprep.subr.mxu0 0.0
    %2813 = vmatpush2.msra.mxu0 0.0
    %2814 = vmatprep.subr.mxu0 0.0
    %2815 = vmatpush2.msra.mxu0 0.0
    %2816 = vmatprep.subr.mxu0 0.0
    %2817 = vmatpush2.msra.mxu0 0.0
    %2818 = vmatprep.subr.mxu0 0.0
    %2819 = vmatpush2.msra.mxu0 0.0
    %2820 = vmatprep.subr.mxu0 0.0
    %2821 = vmatpush2.msra.mxu0 0.0
    %2822 = vmatprep.subr.mxu0 0.0
    %2823 = vmatpush2.msra.mxu0 0.0
    %2824 = vmatprep.subr.mxu0 0.0
    %2825 = vmatpush2.msra.mxu0 0.0
    %2826 = vmatprep.subr.mxu0 0.0
    %2827 = vmatpush2.msra.mxu0 0.0
    %2828 = vmatprep.subr.mxu0 0.0
    %2829 = vmatpush2.msra.mxu0 0.0
    %2830 = vmatprep.subr.mxu0 0.0
    %2831 = vmatpush2.msra.mxu0 0.0
    %2832 = vmatprep.subr.mxu0 0.0
    %2833 = vmatpush2.msra.mxu0 0.0
    %2834 = vmatprep.subr.mxu0 0.0
    %2835 = vmatpush2.msra.mxu0 0.0
    %2836 = vmatprep.mubr.f32.mxu0 0.0
    %2837 = vmatmul.mubr.f32.gmra.mxu0 %v2770
    %v2838 = vpop.f32.mrf.mxu0
    %v2839 = vadd.f32 0.0, %v2838
    %v2840 = vpop.f32.mrf.mxu0
    %2841 = vdwg.mxu0
    %2843 = vrot.lane.b32.xlu0 %v2509, 8
    %v2844 = vpop.permute.xlu0 %2843
    %2847 = vrot.lane.b32.xlu0 %v2674, 16
    %v2848 = vpop.permute.xlu0 %2847
    %2851 = vrot.lane.b32.xlu0 %v2839, 24
    %v2852 = vpop.permute.xlu0 %2851
    %v2854 = vsel %vm432, %v2344, %v2844
    %v2855 = vsel %vm1104, %v2854, %v2848
    %v2856 = vsel %vm1106, %v2855, %v2852
    %2858 = vrot.lane.b32.xlu0 %v2180, 96
    %v2859 = vpop.permute.xlu0 %2858
    %v2861 = vsel %vm432, %v2178, 0
    %v2863 = vsel %vm432, %v2859, 0
    %2865 = vmatprep.subr.mxu0 0.0
    %2866 = vmatpush1.xpose.msra.mxu0 0.0
    %2867 = vmatprep.subr.mxu0 0.0
    %2868 = vmatpush1.xpose.msra.mxu0 0.0
    %2869 = vmatprep.subr.mxu0 0.0
    %2870 = vmatpush1.xpose.msra.mxu0 0.0
    %2871 = vmatprep.subr.mxu0 0.0
    %2872 = vmatpush1.xpose.msra.mxu0 0.0
    %2873 = vmatprep.subr.mxu0 0.0
    %2874 = vmatpush1.xpose.msra.mxu0 0.0
    %2875 = vmatprep.subr.mxu0 0.0
    %2876 = vmatpush1.xpose.msra.mxu0 0.0
    %2877 = vmatprep.subr.mxu0 0.0
    %2878 = vmatpush1.xpose.msra.mxu0 0.0
    %2879 = vmatprep.subr.mxu0 0.0
    %2880 = vmatpush1.xpose.msra.mxu0 0.0
    %2881 = vmatprep.subr.mxu0 0.0
    %2882 = vmatpush1.xpose.msra.mxu0 0.0
    %2883 = vmatprep.subr.mxu0 0.0
    %2884 = vmatpush1.xpose.msra.mxu0 0.0
    %2885 = vmatprep.subr.mxu0 0.0
    %2886 = vmatpush1.xpose.msra.mxu0 0.0
    %2887 = vmatprep.subr.mxu0 0.0
    %2888 = vmatpush1.xpose.msra.mxu0 0.0
    %2889 = vmatprep.subr.mxu0 0.0
    %2890 = vmatpush1.xpose.msra.mxu0 0.0
    %2891 = vmatprep.subr.mxu0 0.0
    %2892 = vmatpush1.xpose.msra.mxu0 0.0
    %2893 = vmatprep.subr.mxu0 0.0
    %2894 = vmatpush1.xpose.msra.mxu0 0.0
    %2895 = vmatprep.subr.mxu0 0.0
    %2896 = vmatpush1.xpose.msra.mxu0 %v2863
    %2897 = vmatprep.subr.mxu0 0.0
    %2898 = vmatpush2.xpose.msra.mxu0 0.0
    %2899 = vmatprep.subr.mxu0 0.0
    %2900 = vmatpush2.xpose.msra.mxu0 0.0
    %2901 = vmatprep.subr.mxu0 0.0
    %2902 = vmatpush2.xpose.msra.mxu0 0.0
    %2903 = vmatprep.subr.mxu0 0.0
    %2904 = vmatpush2.xpose.msra.mxu0 0.0
    %2905 = vmatprep.subr.mxu0 0.0
    %2906 = vmatpush2.xpose.msra.mxu0 0.0
    %2907 = vmatprep.subr.mxu0 0.0
    %2908 = vmatpush2.xpose.msra.mxu0 0.0
    %2909 = vmatprep.subr.mxu0 0.0
    %2910 = vmatpush2.xpose.msra.mxu0 0.0
    %2911 = vmatprep.subr.mxu0 0.0
    %2912 = vmatpush2.xpose.msra.mxu0 0.0
    %2913 = vmatprep.subr.mxu0 0.0
    %2914 = vmatpush2.xpose.msra.mxu0 0.0
    %2915 = vmatprep.subr.mxu0 0.0
    %2916 = vmatpush2.xpose.msra.mxu0 0.0
    %2917 = vmatprep.subr.mxu0 0.0
    %2918 = vmatpush2.xpose.msra.mxu0 0.0
    %2919 = vmatprep.subr.mxu0 0.0
    %2920 = vmatpush2.xpose.msra.mxu0 0.0
    %2921 = vmatprep.subr.mxu0 0.0
    %2922 = vmatpush2.xpose.msra.mxu0 0.0
    %2923 = vmatprep.subr.mxu0 0.0
    %2924 = vmatpush2.xpose.msra.mxu0 0.0
    %2925 = vmatprep.subr.mxu0 0.0
    %2926 = vmatpush2.xpose.msra.mxu0 0.0
    %2927 = vmatprep.subr.mxu0 0.0
    %2928 = vmatpush2.xpose.msra.mxu0 0.0
    %2929 = vmatprep.mubr.f32.mxu0 0.0
    %2930 = vmatmul.mubr.f32.gmra.mxu0 %v2861
    %v2931 = vpop.f32.mrf.mxu0
    %v2932 = vadd.f32 0.0, %v2931
    %v2933 = vpop.f32.mrf.mxu0
    %2934 = vdwg.mxu0
    %v2935 = vsel %vm432, %v2932, -inf
    %2936 = vmax.xlane.f32.xlu0 %v2935
    %v2937 = vpop.xlane.xlu0 %2936
    %v2938 = vsub.f32 %v2932, %v2937
    %v2939 = vmul.f32 %v2938, 1.442695
    %v2940 = vpow.pop %v2939
    %v2941 = vsel %vm432, %v2940, 0.0
    %2942 = vadd.xlane.f32.xlu0 %v2941
    %v2943 = vpop.xlane.xlu0 %2942
    %v2944 = vrcp.pop %v2943
    %v2945 = vmul.f32 %v2940, %v2944
    %2947 = vrot.lane.b32.xlu0 %v2172, 64
    %v2948 = vpop.permute.xlu0 %2947
    %v2951 = vsel %vm432, %v2945, 0
    %2953 = vmatprep.subr.mxu0 0.0
    %2954 = vmatpush1.msra.mxu0 0.0
    %2955 = vmatprep.subr.mxu0 0.0
    %2956 = vmatpush1.msra.mxu0 0.0
    %2957 = vmatprep.subr.mxu0 0.0
    %2958 = vmatpush1.msra.mxu0 0.0
    %2959 = vmatprep.subr.mxu0 0.0
    %2960 = vmatpush1.msra.mxu0 0.0
    %2961 = vmatprep.subr.mxu0 0.0
    %2962 = vmatpush1.msra.mxu0 0.0
    %2963 = vmatprep.subr.mxu0 0.0
    %2964 = vmatpush1.msra.mxu0 0.0
    %2965 = vmatprep.subr.mxu0 0.0
    %2966 = vmatpush1.msra.mxu0 0.0
    %2967 = vmatprep.subr.mxu0 0.0
    %2968 = vmatpush1.msra.mxu0 0.0
    %2969 = vmatprep.subr.mxu0 0.0
    %2970 = vmatpush1.msra.mxu0 0.0
    %2971 = vmatprep.subr.mxu0 0.0
    %2972 = vmatpush1.msra.mxu0 0.0
    %2973 = vmatprep.subr.mxu0 0.0
    %2974 = vmatpush1.msra.mxu0 0.0
    %2975 = vmatprep.subr.mxu0 0.0
    %2976 = vmatpush1.msra.mxu0 0.0
    %2977 = vmatprep.subr.mxu0 0.0
    %2978 = vmatpush1.msra.mxu0 0.0
    %2979 = vmatprep.subr.mxu0 0.0
    %2980 = vmatpush1.msra.mxu0 0.0
    %2981 = vmatprep.subr.mxu0 0.0
    %2982 = vmatpush1.msra.mxu0 0.0
    %2983 = vmatprep.subr.mxu0 0.0
    %2984 = vmatpush1.msra.mxu0 %v2948
    %2985 = vmatprep.subr.mxu0 0.0
    %2986 = vmatpush2.msra.mxu0 0.0
    %2987 = vmatprep.subr.mxu0 0.0
    %2988 = vmatpush2.msra.mxu0 0.0
    %2989 = vmatprep.subr.mxu0 0.0
    %2990 = vmatpush2.msra.mxu0 0.0
    %2991 = vmatprep.subr.mxu0 0.0
    %2992 = vmatpush2.msra.mxu0 0.0
    %2993 = vmatprep.subr.mxu0 0.0
    %2994 = vmatpush2.msra.mxu0 0.0
    %2995 = vmatprep.subr.mxu0 0.0
    %2996 = vmatpush2.msra.mxu0 0.0
    %2997 = vmatprep.subr.mxu0 0.0
    %2998 = vmatpush2.msra.mxu0 0.0
    %2999 = vmatprep.subr.mxu0 0.0
    %3000 = vmatpush2.msra.mxu0 0.0
    %3001 = vmatprep.subr.mxu0 0.0
    %3002 = vmatpush2.msra.mxu0 0.0
    %3003 = vmatprep.subr.mxu0 0.0
    %3004 = vmatpush2.msra.mxu0 0.0
    %3005 = vmatprep.subr.mxu0 0.0
    %3006 = vmatpush2.msra.mxu0 0.0
    %3007 = vmatprep.subr.mxu0 0.0
    %3008 = vmatpush2.msra.mxu0 0.0
    %3009 = vmatprep.subr.mxu0 0.0
    %3010 = vmatpush2.msra.mxu0 0.0
    %3011 = vmatprep.subr.mxu0 0.0
    %3012 = vmatpush2.msra.mxu0 0.0
    %3013 = vmatprep.subr.mxu0 0.0
    %3014 = vmatpush2.msra.mxu0 0.0
    %3015 = vmatprep.subr.mxu0 0.0
    %3016 = vmatpush2.msra.mxu0 0.0
    %3017 = vmatprep.mubr.f32.mxu0 0.0
    %3018 = vmatmul.mubr.f32.gmra.mxu0 %v2951
    %v3019 = vpop.f32.mrf.mxu0
    %v3020 = vadd.f32 0.0, %v3019
    %v3021 = vpop.f32.mrf.mxu0
    %3022 = vdwg.mxu0
    %3023 = vrot.lane.b32.xlu0 %v2178, 120
    %v3024 = vpop.permute.xlu0 %3023
    %3025 = vrot.lane.b32.xlu0 %v2180, 88
    %v3026 = vpop.permute.xlu0 %3025
    %v3027 = vsel %vm432, %v3024, 0
    %v3029 = vsel %vm432, %v3026, 0
    %3031 = vmatprep.subr.mxu0 0.0
    %3032 = vmatpush1.xpose.msra.mxu0 0.0
    %3033 = vmatprep.subr.mxu0 0.0
    %3034 = vmatpush1.xpose.msra.mxu0 0.0
    %3035 = vmatprep.subr.mxu0 0.0
    %3036 = vmatpush1.xpose.msra.mxu0 0.0
    %3037 = vmatprep.subr.mxu0 0.0
    %3038 = vmatpush1.xpose.msra.mxu0 0.0
    %3039 = vmatprep.subr.mxu0 0.0
    %3040 = vmatpush1.xpose.msra.mxu0 0.0
    %3041 = vmatprep.subr.mxu0 0.0
    %3042 = vmatpush1.xpose.msra.mxu0 0.0
    %3043 = vmatprep.subr.mxu0 0.0
    %3044 = vmatpush1.xpose.msra.mxu0 0.0
    %3045 = vmatprep.subr.mxu0 0.0
    %3046 = vmatpush1.xpose.msra.mxu0 0.0
    %3047 = vmatprep.subr.mxu0 0.0
    %3048 = vmatpush1.xpose.msra.mxu0 0.0
    %3049 = vmatprep.subr.mxu0 0.0
    %3050 = vmatpush1.xpose.msra.mxu0 0.0
    %3051 = vmatprep.subr.mxu0 0.0
    %3052 = vmatpush1.xpose.msra.mxu0 0.0
    %3053 = vmatprep.subr.mxu0 0.0
    %3054 = vmatpush1.xpose.msra.mxu0 0.0
    %3055 = vmatprep.subr.mxu0 0.0
    %3056 = vmatpush1.xpose.msra.mxu0 0.0
    %3057 = vmatprep.subr.mxu0 0.0
    %3058 = vmatpush1.xpose.msra.mxu0 0.0
    %3059 = vmatprep.subr.mxu0 0.0
    %3060 = vmatpush1.xpose.msra.mxu0 0.0
    %3061 = vmatprep.subr.mxu0 0.0
    %3062 = vmatpush1.xpose.msra.mxu0 %v3029
    %3063 = vmatprep.subr.mxu0 0.0
    %3064 = vmatpush2.xpose.msra.mxu0 0.0
    %3065 = vmatprep.subr.mxu0 0.0
    %3066 = vmatpush2.xpose.msra.mxu0 0.0
    %3067 = vmatprep.subr.mxu0 0.0
    %3068 = vmatpush2.xpose.msra.mxu0 0.0
    %3069 = vmatprep.subr.mxu0 0.0
    %3070 = vmatpush2.xpose.msra.mxu0 0.0
    %3071 = vmatprep.subr.mxu0 0.0
    %3072 = vmatpush2.xpose.msra.mxu0 0.0
    %3073 = vmatprep.subr.mxu0 0.0
    %3074 = vmatpush2.xpose.msra.mxu0 0.0
    %3075 = vmatprep.subr.mxu0 0.0
    %3076 = vmatpush2.xpose.msra.mxu0 0.0
    %3077 = vmatprep.subr.mxu0 0.0
    %3078 = vmatpush2.xpose.msra.mxu0 0.0
    %3079 = vmatprep.subr.mxu0 0.0
    %3080 = vmatpush2.xpose.msra.mxu0 0.0
    %3081 = vmatprep.subr.mxu0 0.0
    %3082 = vmatpush2.xpose.msra.mxu0 0.0
    %3083 = vmatprep.subr.mxu0 0.0
    %3084 = vmatpush2.xpose.msra.mxu0 0.0
    %3085 = vmatprep.subr.mxu0 0.0
    %3086 = vmatpush2.xpose.msra.mxu0 0.0
    %3087 = vmatprep.subr.mxu0 0.0
    %3088 = vmatpush2.xpose.msra.mxu0 0.0
    %3089 = vmatprep.subr.mxu0 0.0
    %3090 = vmatpush2.xpose.msra.mxu0 0.0
    %3091 = vmatprep.subr.mxu0 0.0
    %3092 = vmatpush2.xpose.msra.mxu0 0.0
    %3093 = vmatprep.subr.mxu0 0.0
    %3094 = vmatpush2.xpose.msra.mxu0 0.0
    %3095 = vmatprep.mubr.f32.mxu0 0.0
    %3096 = vmatmul.mubr.f32.gmra.mxu0 %v3027
    %v3097 = vpop.f32.mrf.mxu0
    %v3098 = vadd.f32 0.0, %v3097
    %v3099 = vpop.f32.mrf.mxu0
    %3100 = vdwg.mxu0
    %v3101 = vsel %vm432, %v3098, -inf
    %3102 = vmax.xlane.f32.xlu0 %v3101
    %v3103 = vpop.xlane.xlu0 %3102
    %v3104 = vsub.f32 %v3098, %v3103
    %v3105 = vmul.f32 %v3104, 1.442695
    %v3106 = vpow.pop %v3105
    %v3107 = vsel %vm432, %v3106, 0.0
    %3108 = vadd.xlane.f32.xlu0 %v3107
    %v3109 = vpop.xlane.xlu0 %3108
    %v3110 = vrcp.pop %v3109
    %v3111 = vmul.f32 %v3106, %v3110
    %3112 = vrot.lane.b32.xlu0 %v2172, 56
    %v3113 = vpop.permute.xlu0 %3112
    %v3116 = vsel %vm432, %v3111, 0
    %3118 = vmatprep.subr.mxu0 0.0
    %3119 = vmatpush1.msra.mxu0 0.0
    %3120 = vmatprep.subr.mxu0 0.0
    %3121 = vmatpush1.msra.mxu0 0.0
    %3122 = vmatprep.subr.mxu0 0.0
    %3123 = vmatpush1.msra.mxu0 0.0
    %3124 = vmatprep.subr.mxu0 0.0
    %3125 = vmatpush1.msra.mxu0 0.0
    %3126 = vmatprep.subr.mxu0 0.0
    %3127 = vmatpush1.msra.mxu0 0.0
    %3128 = vmatprep.subr.mxu0 0.0
    %3129 = vmatpush1.msra.mxu0 0.0
    %3130 = vmatprep.subr.mxu0 0.0
    %3131 = vmatpush1.msra.mxu0 0.0
    %3132 = vmatprep.subr.mxu0 0.0
    %3133 = vmatpush1.msra.mxu0 0.0
    %3134 = vmatprep.subr.mxu0 0.0
    %3135 = vmatpush1.msra.mxu0 0.0
    %3136 = vmatprep.subr.mxu0 0.0
    %3137 = vmatpush1.msra.mxu0 0.0
    %3138 = vmatprep.subr.mxu0 0.0
    %3139 = vmatpush1.msra.mxu0 0.0
    %3140 = vmatprep.subr.mxu0 0.0
    %3141 = vmatpush1.msra.mxu0 0.0
    %3142 = vmatprep.subr.mxu0 0.0
    %3143 = vmatpush1.msra.mxu0 0.0
    %3144 = vmatprep.subr.mxu0 0.0
    %3145 = vmatpush1.msra.mxu0 0.0
    %3146 = vmatprep.subr.mxu0 0.0
    %3147 = vmatpush1.msra.mxu0 0.0
    %3148 = vmatprep.subr.mxu0 0.0
    %3149 = vmatpush1.msra.mxu0 %v3113
    %3150 = vmatprep.subr.mxu0 0.0
    %3151 = vmatpush2.msra.mxu0 0.0
    %3152 = vmatprep.subr.mxu0 0.0
    %3153 = vmatpush2.msra.mxu0 0.0
    %3154 = vmatprep.subr.mxu0 0.0
    %3155 = vmatpush2.msra.mxu0 0.0
    %3156 = vmatprep.subr.mxu0 0.0
    %3157 = vmatpush2.msra.mxu0 0.0
    %3158 = vmatprep.subr.mxu0 0.0
    %3159 = vmatpush2.msra.mxu0 0.0
    %3160 = vmatprep.subr.mxu0 0.0
    %3161 = vmatpush2.msra.mxu0 0.0
    %3162 = vmatprep.subr.mxu0 0.0
    %3163 = vmatpush2.msra.mxu0 0.0
    %3164 = vmatprep.subr.mxu0 0.0
    %3165 = vmatpush2.msra.mxu0 0.0
    %3166 = vmatprep.subr.mxu0 0.0
    %3167 = vmatpush2.msra.mxu0 0.0
    %3168 = vmatprep.subr.mxu0 0.0
    %3169 = vmatpush2.msra.mxu0 0.0
    %3170 = vmatprep.subr.mxu0 0.0
    %3171 = vmatpush2.msra.mxu0 0.0
    %3172 = vmatprep.subr.mxu0 0.0
    %3173 = vmatpush2.msra.mxu0 0.0
    %3174 = vmatprep.subr.mxu0 0.0
    %3175 = vmatpush2.msra.mxu0 0.0
    %3176 = vmatprep.subr.mxu0 0.0
    %3177 = vmatpush2.msra.mxu0 0.0
    %3178 = vmatprep.subr.mxu0 0.0
    %3179 = vmatpush2.msra.mxu0 0.0
    %3180 = vmatprep.subr.mxu0 0.0
    %3181 = vmatpush2.msra.mxu0 0.0
    %3182 = vmatprep.mubr.f32.mxu0 0.0
    %3183 = vmatmul.mubr.f32.gmra.mxu0 %v3116
    %v3184 = vpop.f32.mrf.mxu0
    %v3185 = vadd.f32 0.0, %v3184
    %v3186 = vpop.f32.mrf.mxu0
    %3187 = vdwg.mxu0
    %3188 = vrot.lane.b32.xlu0 %v2178, 112
    %v3189 = vpop.permute.xlu0 %3188
    %3190 = vrot.lane.b32.xlu0 %v2180, 80
    %v3191 = vpop.permute.xlu0 %3190
    %v3192 = vsel %vm432, %v3189, 0
    %v3194 = vsel %vm432, %v3191, 0
    %3196 = vmatprep.subr.mxu0 0.0
    %3197 = vmatpush1.xpose.msra.mxu0 0.0
    %3198 = vmatprep.subr.mxu0 0.0
    %3199 = vmatpush1.xpose.msra.mxu0 0.0
    %3200 = vmatprep.subr.mxu0 0.0
    %3201 = vmatpush1.xpose.msra.mxu0 0.0
    %3202 = vmatprep.subr.mxu0 0.0
    %3203 = vmatpush1.xpose.msra.mxu0 0.0
    %3204 = vmatprep.subr.mxu0 0.0
    %3205 = vmatpush1.xpose.msra.mxu0 0.0
    %3206 = vmatprep.subr.mxu0 0.0
    %3207 = vmatpush1.xpose.msra.mxu0 0.0
    %3208 = vmatprep.subr.mxu0 0.0
    %3209 = vmatpush1.xpose.msra.mxu0 0.0
    %3210 = vmatprep.subr.mxu0 0.0
    %3211 = vmatpush1.xpose.msra.mxu0 0.0
    %3212 = vmatprep.subr.mxu0 0.0
    %3213 = vmatpush1.xpose.msra.mxu0 0.0
    %3214 = vmatprep.subr.mxu0 0.0
    %3215 = vmatpush1.xpose.msra.mxu0 0.0
    %3216 = vmatprep.subr.mxu0 0.0
    %3217 = vmatpush1.xpose.msra.mxu0 0.0
    %3218 = vmatprep.subr.mxu0 0.0
    %3219 = vmatpush1.xpose.msra.mxu0 0.0
    %3220 = vmatprep.subr.mxu0 0.0
    %3221 = vmatpush1.xpose.msra.mxu0 0.0
    %3222 = vmatprep.subr.mxu0 0.0
    %3223 = vmatpush1.xpose.msra.mxu0 0.0
    %3224 = vmatprep.subr.mxu0 0.0
    %3225 = vmatpush1.xpose.msra.mxu0 0.0
    %3226 = vmatprep.subr.mxu0 0.0
    %3227 = vmatpush1.xpose.msra.mxu0 %v3194
    %3228 = vmatprep.subr.mxu0 0.0
    %3229 = vmatpush2.xpose.msra.mxu0 0.0
    %3230 = vmatprep.subr.mxu0 0.0
    %3231 = vmatpush2.xpose.msra.mxu0 0.0
    %3232 = vmatprep.subr.mxu0 0.0
    %3233 = vmatpush2.xpose.msra.mxu0 0.0
    %3234 = vmatprep.subr.mxu0 0.0
    %3235 = vmatpush2.xpose.msra.mxu0 0.0
    %3236 = vmatprep.subr.mxu0 0.0
    %3237 = vmatpush2.xpose.msra.mxu0 0.0
    %3238 = vmatprep.subr.mxu0 0.0
    %3239 = vmatpush2.xpose.msra.mxu0 0.0
    %3240 = vmatprep.subr.mxu0 0.0
    %3241 = vmatpush2.xpose.msra.mxu0 0.0
    %3242 = vmatprep.subr.mxu0 0.0
    %3243 = vmatpush2.xpose.msra.mxu0 0.0
    %3244 = vmatprep.subr.mxu0 0.0
    %3245 = vmatpush2.xpose.msra.mxu0 0.0
    %3246 = vmatprep.subr.mxu0 0.0
    %3247 = vmatpush2.xpose.msra.mxu0 0.0
    %3248 = vmatprep.subr.mxu0 0.0
    %3249 = vmatpush2.xpose.msra.mxu0 0.0
    %3250 = vmatprep.subr.mxu0 0.0
    %3251 = vmatpush2.xpose.msra.mxu0 0.0
    %3252 = vmatprep.subr.mxu0 0.0
    %3253 = vmatpush2.xpose.msra.mxu0 0.0
    %3254 = vmatprep.subr.mxu0 0.0
    %3255 = vmatpush2.xpose.msra.mxu0 0.0
    %3256 = vmatprep.subr.mxu0 0.0
    %3257 = vmatpush2.xpose.msra.mxu0 0.0
    %3258 = vmatprep.subr.mxu0 0.0
    %3259 = vmatpush2.xpose.msra.mxu0 0.0
    %3260 = vmatprep.mubr.f32.mxu0 0.0
    %3261 = vmatmul.mubr.f32.gmra.mxu0 %v3192
    %v3262 = vpop.f32.mrf.mxu0
    %v3263 = vadd.f32 0.0, %v3262
    %v3264 = vpop.f32.mrf.mxu0
    %3265 = vdwg.mxu0
    %v3266 = vsel %vm432, %v3263, -inf
    %3267 = vmax.xlane.f32.xlu0 %v3266
    %v3268 = vpop.xlane.xlu0 %3267
    %v3269 = vsub.f32 %v3263, %v3268
    %v3270 = vmul.f32 %v3269, 1.442695
    %v3271 = vpow.pop %v3270
    %v3272 = vsel %vm432, %v3271, 0.0
    %3273 = vadd.xlane.f32.xlu0 %v3272
    %v3274 = vpop.xlane.xlu0 %3273
    %v3275 = vrcp.pop %v3274
    %v3276 = vmul.f32 %v3271, %v3275
    %3277 = vrot.lane.b32.xlu0 %v2172, 48
    %v3278 = vpop.permute.xlu0 %3277
    %v3281 = vsel %vm432, %v3276, 0
    %3283 = vmatprep.subr.mxu0 0.0
    %3284 = vmatpush1.msra.mxu0 0.0
    %3285 = vmatprep.subr.mxu0 0.0
    %3286 = vmatpush1.msra.mxu0 0.0
    %3287 = vmatprep.subr.mxu0 0.0
    %3288 = vmatpush1.msra.mxu0 0.0
    %3289 = vmatprep.subr.mxu0 0.0
    %3290 = vmatpush1.msra.mxu0 0.0
    %3291 = vmatprep.subr.mxu0 0.0
    %3292 = vmatpush1.msra.mxu0 0.0
    %3293 = vmatprep.subr.mxu0 0.0
    %3294 = vmatpush1.msra.mxu0 0.0
    %3295 = vmatprep.subr.mxu0 0.0
    %3296 = vmatpush1.msra.mxu0 0.0
    %3297 = vmatprep.subr.mxu0 0.0
    %3298 = vmatpush1.msra.mxu0 0.0
    %3299 = vmatprep.subr.mxu0 0.0
    %3300 = vmatpush1.msra.mxu0 0.0
    %3301 = vmatprep.subr.mxu0 0.0
    %3302 = vmatpush1.msra.mxu0 0.0
    %3303 = vmatprep.subr.mxu0 0.0
    %3304 = vmatpush1.msra.mxu0 0.0
    %3305 = vmatprep.subr.mxu0 0.0
    %3306 = vmatpush1.msra.mxu0 0.0
    %3307 = vmatprep.subr.mxu0 0.0
    %3308 = vmatpush1.msra.mxu0 0.0
    %3309 = vmatprep.subr.mxu0 0.0
    %3310 = vmatpush1.msra.mxu0 0.0
    %3311 = vmatprep.subr.mxu0 0.0
    %3312 = vmatpush1.msra.mxu0 0.0
    %3313 = vmatprep.subr.mxu0 0.0
    %3314 = vmatpush1.msra.mxu0 %v3278
    %3315 = vmatprep.subr.mxu0 0.0
    %3316 = vmatpush2.msra.mxu0 0.0
    %3317 = vmatprep.subr.mxu0 0.0
    %3318 = vmatpush2.msra.mxu0 0.0
    %3319 = vmatprep.subr.mxu0 0.0
    %3320 = vmatpush2.msra.mxu0 0.0
    %3321 = vmatprep.subr.mxu0 0.0
    %3322 = vmatpush2.msra.mxu0 0.0
    %3323 = vmatprep.subr.mxu0 0.0
    %3324 = vmatpush2.msra.mxu0 0.0
    %3325 = vmatprep.subr.mxu0 0.0
    %3326 = vmatpush2.msra.mxu0 0.0
    %3327 = vmatprep.subr.mxu0 0.0
    %3328 = vmatpush2.msra.mxu0 0.0
    %3329 = vmatprep.subr.mxu0 0.0
    %3330 = vmatpush2.msra.mxu0 0.0
    %3331 = vmatprep.subr.mxu0 0.0
    %3332 = vmatpush2.msra.mxu0 0.0
    %3333 = vmatprep.subr.mxu0 0.0
    %3334 = vmatpush2.msra.mxu0 0.0
    %3335 = vmatprep.subr.mxu0 0.0
    %3336 = vmatpush2.msra.mxu0 0.0
    %3337 = vmatprep.subr.mxu0 0.0
    %3338 = vmatpush2.msra.mxu0 0.0
    %3339 = vmatprep.subr.mxu0 0.0
    %3340 = vmatpush2.msra.mxu0 0.0
    %3341 = vmatprep.subr.mxu0 0.0
    %3342 = vmatpush2.msra.mxu0 0.0
    %3343 = vmatprep.subr.mxu0 0.0
    %3344 = vmatpush2.msra.mxu0 0.0
    %3345 = vmatprep.subr.mxu0 0.0
    %3346 = vmatpush2.msra.mxu0 0.0
    %3347 = vmatprep.mubr.f32.mxu0 0.0
    %3348 = vmatmul.mubr.f32.gmra.mxu0 %v3281
    %v3349 = vpop.f32.mrf.mxu0
    %v3350 = vadd.f32 0.0, %v3349
    %v3351 = vpop.f32.mrf.mxu0
    %3352 = vdwg.mxu0
    %3353 = vrot.lane.b32.xlu0 %v2178, 104
    %v3354 = vpop.permute.xlu0 %3353
    %3355 = vrot.lane.b32.xlu0 %v2180, 72
    %v3356 = vpop.permute.xlu0 %3355
    %v3357 = vsel %vm432, %v3354, 0
    %v3359 = vsel %vm432, %v3356, 0
    %3361 = vmatprep.subr.mxu0 0.0
    %3362 = vmatpush1.xpose.msra.mxu0 0.0
    %3363 = vmatprep.subr.mxu0 0.0
    %3364 = vmatpush1.xpose.msra.mxu0 0.0
    %3365 = vmatprep.subr.mxu0 0.0
    %3366 = vmatpush1.xpose.msra.mxu0 0.0
    %3367 = vmatprep.subr.mxu0 0.0
    %3368 = vmatpush1.xpose.msra.mxu0 0.0
    %3369 = vmatprep.subr.mxu0 0.0
    %3370 = vmatpush1.xpose.msra.mxu0 0.0
    %3371 = vmatprep.subr.mxu0 0.0
    %3372 = vmatpush1.xpose.msra.mxu0 0.0
    %3373 = vmatprep.subr.mxu0 0.0
    %3374 = vmatpush1.xpose.msra.mxu0 0.0
    %3375 = vmatprep.subr.mxu0 0.0
    %3376 = vmatpush1.xpose.msra.mxu0 0.0
    %3377 = vmatprep.subr.mxu0 0.0
    %3378 = vmatpush1.xpose.msra.mxu0 0.0
    %3379 = vmatprep.subr.mxu0 0.0
    %3380 = vmatpush1.xpose.msra.mxu0 0.0
    %3381 = vmatprep.subr.mxu0 0.0
    %3382 = vmatpush1.xpose.msra.mxu0 0.0
    %3383 = vmatprep.subr.mxu0 0.0
    %3384 = vmatpush1.xpose.msra.mxu0 0.0
    %3385 = vmatprep.subr.mxu0 0.0
    %3386 = vmatpush1.xpose.msra.mxu0 0.0
    %3387 = vmatprep.subr.mxu0 0.0
    %3388 = vmatpush1.xpose.msra.mxu0 0.0
    %3389 = vmatprep.subr.mxu0 0.0
    %3390 = vmatpush1.xpose.msra.mxu0 0.0
    %3391 = vmatprep.subr.mxu0 0.0
    %3392 = vmatpush1.xpose.msra.mxu0 %v3359
    %3393 = vmatprep.subr.mxu0 0.0
    %3394 = vmatpush2.xpose.msra.mxu0 0.0
    %3395 = vmatprep.subr.mxu0 0.0
    %3396 = vmatpush2.xpose.msra.mxu0 0.0
    %3397 = vmatprep.subr.mxu0 0.0
    %3398 = vmatpush2.xpose.msra.mxu0 0.0
    %3399 = vmatprep.subr.mxu0 0.0
    %3400 = vmatpush2.xpose.msra.mxu0 0.0
    %3401 = vmatprep.subr.mxu0 0.0
    %3402 = vmatpush2.xpose.msra.mxu0 0.0
    %3403 = vmatprep.subr.mxu0 0.0
    %3404 = vmatpush2.xpose.msra.mxu0 0.0
    %3405 = vmatprep.subr.mxu0 0.0
    %3406 = vmatpush2.xpose.msra.mxu0 0.0
    %3407 = vmatprep.subr.mxu0 0.0
    %3408 = vmatpush2.xpose.msra.mxu0 0.0
    %3409 = vmatprep.subr.mxu0 0.0
    %3410 = vmatpush2.xpose.msra.mxu0 0.0
    %3411 = vmatprep.subr.mxu0 0.0
    %3412 = vmatpush2.xpose.msra.mxu0 0.0
    %3413 = vmatprep.subr.mxu0 0.0
    %3414 = vmatpush2.xpose.msra.mxu0 0.0
    %3415 = vmatprep.subr.mxu0 0.0
    %3416 = vmatpush2.xpose.msra.mxu0 0.0
    %3417 = vmatprep.subr.mxu0 0.0
    %3418 = vmatpush2.xpose.msra.mxu0 0.0
    %3419 = vmatprep.subr.mxu0 0.0
    %3420 = vmatpush2.xpose.msra.mxu0 0.0
    %3421 = vmatprep.subr.mxu0 0.0
    %3422 = vmatpush2.xpose.msra.mxu0 0.0
    %3423 = vmatprep.subr.mxu0 0.0
    %3424 = vmatpush2.xpose.msra.mxu0 0.0
    %3425 = vmatprep.mubr.f32.mxu0 0.0
    %3426 = vmatmul.mubr.f32.gmra.mxu0 %v3357
    %v3427 = vpop.f32.mrf.mxu0
    %v3428 = vadd.f32 0.0, %v3427
    %v3429 = vpop.f32.mrf.mxu0
    %3430 = vdwg.mxu0
    %v3431 = vsel %vm432, %v3428, -inf
    %3432 = vmax.xlane.f32.xlu0 %v3431
    %v3433 = vpop.xlane.xlu0 %3432
    %v3434 = vsub.f32 %v3428, %v3433
    %v3435 = vmul.f32 %v3434, 1.442695
    %v3436 = vpow.pop %v3435
    %v3437 = vsel %vm432, %v3436, 0.0
    %3438 = vadd.xlane.f32.xlu0 %v3437
    %v3439 = vpop.xlane.xlu0 %3438
    %v3440 = vrcp.pop %v3439
    %v3441 = vmul.f32 %v3436, %v3440
    %3442 = vrot.lane.b32.xlu0 %v2172, 40
    %v3443 = vpop.permute.xlu0 %3442
    %v3446 = vsel %vm432, %v3441, 0
    %3448 = vmatprep.subr.mxu0 0.0
    %3449 = vmatpush1.msra.mxu0 0.0
    %3450 = vmatprep.subr.mxu0 0.0
    %3451 = vmatpush1.msra.mxu0 0.0
    %3452 = vmatprep.subr.mxu0 0.0
    %3453 = vmatpush1.msra.mxu0 0.0
    %3454 = vmatprep.subr.mxu0 0.0
    %3455 = vmatpush1.msra.mxu0 0.0
    %3456 = vmatprep.subr.mxu0 0.0
    %3457 = vmatpush1.msra.mxu0 0.0
    %3458 = vmatprep.subr.mxu0 0.0
    %3459 = vmatpush1.msra.mxu0 0.0
    %3460 = vmatprep.subr.mxu0 0.0
    %3461 = vmatpush1.msra.mxu0 0.0
    %3462 = vmatprep.subr.mxu0 0.0
    %3463 = vmatpush1.msra.mxu0 0.0
    %3464 = vmatprep.subr.mxu0 0.0
    %3465 = vmatpush1.msra.mxu0 0.0
    %3466 = vmatprep.subr.mxu0 0.0
    %3467 = vmatpush1.msra.mxu0 0.0
    %3468 = vmatprep.subr.mxu0 0.0
    %3469 = vmatpush1.msra.mxu0 0.0
    %3470 = vmatprep.subr.mxu0 0.0
    %3471 = vmatpush1.msra.mxu0 0.0
    %3472 = vmatprep.subr.mxu0 0.0
    %3473 = vmatpush1.msra.mxu0 0.0
    %3474 = vmatprep.subr.mxu0 0.0
    %3475 = vmatpush1.msra.mxu0 0.0
    %3476 = vmatprep.subr.mxu0 0.0
    %3477 = vmatpush1.msra.mxu0 0.0
    %3478 = vmatprep.subr.mxu0 0.0
    %3479 = vmatpush1.msra.mxu0 %v3443
    %3480 = vmatprep.subr.mxu0 0.0
    %3481 = vmatpush2.msra.mxu0 0.0
    %3482 = vmatprep.subr.mxu0 0.0
    %3483 = vmatpush2.msra.mxu0 0.0
    %3484 = vmatprep.subr.mxu0 0.0
    %3485 = vmatpush2.msra.mxu0 0.0
    %3486 = vmatprep.subr.mxu0 0.0
    %3487 = vmatpush2.msra.mxu0 0.0
    %3488 = vmatprep.subr.mxu0 0.0
    %3489 = vmatpush2.msra.mxu0 0.0
    %3490 = vmatprep.subr.mxu0 0.0
    %3491 = vmatpush2.msra.mxu0 0.0
    %3492 = vmatprep.subr.mxu0 0.0
    %3493 = vmatpush2.msra.mxu0 0.0
    %3494 = vmatprep.subr.mxu0 0.0
    %3495 = vmatpush2.msra.mxu0 0.0
    %3496 = vmatprep.subr.mxu0 0.0
    %3497 = vmatpush2.msra.mxu0 0.0
    %3498 = vmatprep.subr.mxu0 0.0
    %3499 = vmatpush2.msra.mxu0 0.0
    %3500 = vmatprep.subr.mxu0 0.0
    %3501 = vmatpush2.msra.mxu0 0.0
    %3502 = vmatprep.subr.mxu0 0.0
    %3503 = vmatpush2.msra.mxu0 0.0
    %3504 = vmatprep.subr.mxu0 0.0
    %3505 = vmatpush2.msra.mxu0 0.0
    %3506 = vmatprep.subr.mxu0 0.0
    %3507 = vmatpush2.msra.mxu0 0.0
    %3508 = vmatprep.subr.mxu0 0.0
    %3509 = vmatpush2.msra.mxu0 0.0
    %3510 = vmatprep.subr.mxu0 0.0
    %3511 = vmatpush2.msra.mxu0 0.0
    %3512 = vmatprep.mubr.f32.mxu0 0.0
    %3513 = vmatmul.mubr.f32.gmra.mxu0 %v3446
    %v3514 = vpop.f32.mrf.mxu0
    %v3515 = vadd.f32 0.0, %v3514
    %v3516 = vpop.f32.mrf.mxu0
    %3517 = vdwg.mxu0
    %3519 = vrot.lane.b32.xlu0 %v3185, 8
    %v3520 = vpop.permute.xlu0 %3519
    %3523 = vrot.lane.b32.xlu0 %v3350, 16
    %v3524 = vpop.permute.xlu0 %3523
    %3527 = vrot.lane.b32.xlu0 %v3515, 24
    %v3528 = vpop.permute.xlu0 %3527
    %v3530 = vsel %vm432, %v3020, %v3520
    %v3531 = vsel %vm1104, %v3530, %v3524
    %v3532 = vsel %vm1106, %v3531, %v3528
    %v3534 = vsel %vm229, %v2856, 0
    %v3537 = vsel %vm229, %v3532, 0
    %3539 = vmatprep.subr.mxu0 0.0
    %3540 = vmatpush1.msra.mxu0 0.0
    %3541 = vmatprep.subr.mxu0 0.0
    %3542 = vmatpush1.msra.mxu0 0.0
    %3543 = vmatprep.subr.mxu0 0.0
    %3544 = vmatpush1.msra.mxu0 0.0
    %3545 = vmatprep.subr.mxu0 0.0
    %3546 = vmatpush1.msra.mxu0 0.0
    %3547 = vmatprep.subr.mxu0 0.0
    %3548 = vmatpush1.msra.mxu0 0.0
    %3549 = vmatprep.subr.mxu0 0.0
    %3550 = vmatpush1.msra.mxu0 0.0
    %3551 = vmatprep.subr.mxu0 0.0
    %3552 = vmatpush1.msra.mxu0 0.0
    %3553 = vmatprep.subr.mxu0 0.0
    %3554 = vmatpush1.msra.mxu0 0.0
    %3555 = vmatprep.subr.mxu0 0.0
    %3556 = vmatpush1.msra.mxu0 0.0
    %3557 = vmatprep.subr.mxu0 0.0
    %3558 = vmatpush1.msra.mxu0 0.0
    %3559 = vmatprep.subr.mxu0 0.0
    %3560 = vmatpush1.msra.mxu0 0.0
    %3561 = vmatprep.subr.mxu0 0.0
    %3562 = vmatpush1.msra.mxu0 0.0
    %3563 = vmatprep.subr.mxu0 0.0
    %3564 = vmatpush1.msra.mxu0 %v77
    %3565 = vmatprep.subr.mxu0 0.0
    %3566 = vmatpush1.msra.mxu0 %v76
    %3567 = vmatprep.subr.mxu0 0.0
    %3568 = vmatpush1.msra.mxu0 %v75
    %3569 = vmatprep.subr.mxu0 0.0
    %3570 = vmatpush1.msra.mxu0 %v74
    %3571 = vmatprep.subr.mxu0 0.0
    %3572 = vmatpush2.msra.mxu0 0.0
    %3573 = vmatprep.subr.mxu0 0.0
    %3574 = vmatpush2.msra.mxu0 0.0
    %3575 = vmatprep.subr.mxu0 0.0
    %3576 = vmatpush2.msra.mxu0 0.0
    %3577 = vmatprep.subr.mxu0 0.0
    %3578 = vmatpush2.msra.mxu0 0.0
    %3579 = vmatprep.subr.mxu0 0.0
    %3580 = vmatpush2.msra.mxu0 0.0
    %3581 = vmatprep.subr.mxu0 0.0
    %3582 = vmatpush2.msra.mxu0 0.0
    %3583 = vmatprep.subr.mxu0 0.0
    %3584 = vmatpush2.msra.mxu0 0.0
    %3585 = vmatprep.subr.mxu0 0.0
    %3586 = vmatpush2.msra.mxu0 0.0
    %3587 = vmatprep.subr.mxu0 0.0
    %3588 = vmatpush2.msra.mxu0 0.0
    %3589 = vmatprep.subr.mxu0 0.0
    %3590 = vmatpush2.msra.mxu0 0.0
    %3591 = vmatprep.subr.mxu0 0.0
    %3592 = vmatpush2.msra.mxu0 0.0
    %3593 = vmatprep.subr.mxu0 0.0
    %3594 = vmatpush2.msra.mxu0 0.0
    %3595 = vmatprep.subr.mxu0 0.0
    %3596 = vmatpush2.msra.mxu0 0.0
    %3597 = vmatprep.subr.mxu0 0.0
    %3598 = vmatpush2.msra.mxu0 0.0
    %3599 = vmatprep.subr.mxu0 0.0
    %3600 = vmatpush2.msra.mxu0 0.0
    %3601 = vmatprep.subr.mxu0 0.0
    %3602 = vmatpush2.msra.mxu0 0.0
    %3603 = vmatprep.mubr.f32.mxu0 0.0
    %3604 = vmatmul.mubr.f32.gmra.mxu0 %v3534
    %v3605 = vpop.f32.mrf.mxu0
    %v3606 = vadd.f32 0.0, %v3605
    %v3607 = vpop.f32.mrf.mxu0
    %3608 = vmatprep.mubr.f32.mxu0 0.0
    %3609 = vmatmul.mubr.f32.gmra.mxu0 %v3537
    %v3610 = vpop.f32.mrf.mxu0
    %v3611 = vadd.f32 0.0, %v3610
    %v3612 = vpop.f32.mrf.mxu0
    %3613 = vdwg.mxu0
    %v3614 = vadd.f32 %v2062, %v3606
    %v3615 = vadd.f32 %v2063, %v3611
    %v3616 = vsel %vm229, %v3614, 0.0
    %3617 = vadd.xlane.f32.xlu0 %v3616
    %v3618 = vpop.xlane.xlu0 %3617
    %v3619 = vsel %vm229, %v3615, 0.0
    %3620 = vadd.xlane.f32.xlu0 %v3619
    %v3621 = vpop.xlane.xlu0 %3620
    %v3622 = vmul.f32 %v3618, %v317
    %v3623 = vmul.f32 %v3621, %v317
    %v3624 = vsub.f32 %v3614, %v3622
    %v3625 = vsub.f32 %v3615, %v3623
    %v3626 = vmul.f32 %v3624, %v3624
    %v3627 = vmul.f32 %v3625, %v3625
    %v3628 = vsel %vm229, %v3626, 0.0
    %3629 = vadd.xlane.f32.xlu0 %v3628
    %v3630 = vpop.xlane.xlu0 %3629
    %v3631 = vsel %vm229, %v3627, 0.0
    %3632 = vadd.xlane.f32.xlu0 %v3631
    %v3633 = vpop.xlane.xlu0 %3632
    %v3634 = vmul.f32 %v3630, %v317
    %v3635 = vmul.f32 %v3633, %v317
    %v3636 = vadd.f32 %v3634, 1e-05
    %v3637 = vadd.f32 %v3635, 1e-05
    %v3638 = vrsqrt.pop %v3636
    %v3639 = vrsqrt.pop %v3637
    %v3640 = vmul.f32 %v3624, %v3638
    %v3641 = vmul.f32 %v3625, %v3639
    %v3642 = vmul.f32 %v3640, %v123
    %v3643 = vmul.f32 %v3641, %v123
    %v3644 = vadd.f32 %v3642, %v130
    %v3645 = vadd.f32 %v3643, %v130
    %v3647 = vsel %vm229, %v3644, 0
    %v3650 = vsel %vm229, %v3645, 0
    %3652 = vmatprep.subr.mxu0 0.0
    %3653 = vmatpush1.msra.mxu0 0.0
    %3654 = vmatprep.subr.mxu0 0.0
    %3655 = vmatpush1.msra.mxu0 0.0
    %3656 = vmatprep.subr.mxu0 0.0
    %3657 = vmatpush1.msra.mxu0 0.0
    %3658 = vmatprep.subr.mxu0 0.0
    %3659 = vmatpush1.msra.mxu0 0.0
    %3660 = vmatprep.subr.mxu0 0.0
    %3661 = vmatpush1.msra.mxu0 0.0
    %3662 = vmatprep.subr.mxu0 0.0
    %3663 = vmatpush1.msra.mxu0 0.0
    %3664 = vmatprep.subr.mxu0 0.0
    %3665 = vmatpush1.msra.mxu0 0.0
    %3666 = vmatprep.subr.mxu0 0.0
    %3667 = vmatpush1.msra.mxu0 0.0
    %3668 = vmatprep.subr.mxu0 0.0
    %3669 = vmatpush1.msra.mxu0 0.0
    %3670 = vmatprep.subr.mxu0 0.0
    %3671 = vmatpush1.msra.mxu0 0.0
    %3672 = vmatprep.subr.mxu0 0.0
    %3673 = vmatpush1.msra.mxu0 0.0
    %3674 = vmatprep.subr.mxu0 0.0
    %3675 = vmatpush1.msra.mxu0 0.0
    %3676 = vmatprep.subr.mxu0 0.0
    %3677 = vmatpush1.msra.mxu0 %v81
    %3678 = vmatprep.subr.mxu0 0.0
    %3679 = vmatpush1.msra.mxu0 %v80
    %3680 = vmatprep.subr.mxu0 0.0
    %3681 = vmatpush1.msra.mxu0 %v79
    %3682 = vmatprep.subr.mxu0 0.0
    %3683 = vmatpush1.msra.mxu0 %v78
    %3684 = vmatprep.subr.mxu0 0.0
    %3685 = vmatpush2.msra.mxu0 0.0
    %3686 = vmatprep.subr.mxu0 0.0
    %3687 = vmatpush2.msra.mxu0 0.0
    %3688 = vmatprep.subr.mxu0 0.0
    %3689 = vmatpush2.msra.mxu0 0.0
    %3690 = vmatprep.subr.mxu0 0.0
    %3691 = vmatpush2.msra.mxu0 0.0
    %3692 = vmatprep.subr.mxu0 0.0
    %3693 = vmatpush2.msra.mxu0 0.0
    %3694 = vmatprep.subr.mxu0 0.0
    %3695 = vmatpush2.msra.mxu0 0.0
    %3696 = vmatprep.subr.mxu0 0.0
    %3697 = vmatpush2.msra.mxu0 0.0
    %3698 = vmatprep.subr.mxu0 0.0
    %3699 = vmatpush2.msra.mxu0 0.0
    %3700 = vmatprep.subr.mxu0 0.0
    %3701 = vmatpush2.msra.mxu0 0.0
    %3702 = vmatprep.subr.mxu0 0.0
    %3703 = vmatpush2.msra.mxu0 0.0
    %3704 = vmatprep.subr.mxu0 0.0
    %3705 = vmatpush2.msra.mxu0 0.0
    %3706 = vmatprep.subr.mxu0 0.0
    %3707 = vmatpush2.msra.mxu0 0.0
    %3708 = vmatprep.subr.mxu0 0.0
    %3709 = vmatpush2.msra.mxu0 0.0
    %3710 = vmatprep.subr.mxu0 0.0
    %3711 = vmatpush2.msra.mxu0 0.0
    %3712 = vmatprep.subr.mxu0 0.0
    %3713 = vmatpush2.msra.mxu0 0.0
    %3714 = vmatprep.subr.mxu0 0.0
    %3715 = vmatpush2.msra.mxu0 0.0
    %3716 = vmatprep.mubr.f32.mxu0 0.0
    %3717 = vmatmul.mubr.f32.gmra.mxu0 %v3647
    %v3718 = vpop.f32.mrf.mxu0
    %v3719 = vadd.f32 %v95, %v3718
    %v3720 = vpop.f32.mrf.mxu0
    %3721 = vmatprep.mubr.f32.mxu0 0.0
    %3722 = vmatmul.mubr.f32.gmra.mxu0 %v3650
    %v3723 = vpop.f32.mrf.mxu0
    %v3724 = vadd.f32 %v95, %v3723
    %v3725 = vpop.f32.mrf.mxu0
    %3726 = vdwg.mxu0
    %v3727 = vmax.f32 %v3719, 0.0
    %v3728 = vmax.f32 %v3724, 0.0
    %v3730 = vsel %vm1980, %v3727, 0
    %v3733 = vsel %vm1980, %v3728, 0
    %3735 = vmatprep.subr.mxu0 0.0
    %3736 = vmatpush1.msra.mxu0 0.0
    %3737 = vmatprep.subr.mxu0 0.0
    %3738 = vmatpush1.msra.mxu0 0.0
    %3739 = vmatprep.subr.mxu0 0.0
    %3740 = vmatpush1.msra.mxu0 0.0
    %3741 = vmatprep.subr.mxu0 0.0
    %3742 = vmatpush1.msra.mxu0 0.0
    %3743 = vmatprep.subr.mxu0 0.0
    %3744 = vmatpush1.msra.mxu0 0.0
    %3745 = vmatprep.subr.mxu0 0.0
    %3746 = vmatpush1.msra.mxu0 0.0
    %3747 = vmatprep.subr.mxu0 0.0
    %3748 = vmatpush1.msra.mxu0 0.0
    %3749 = vmatprep.subr.mxu0 0.0
    %3750 = vmatpush1.msra.mxu0 0.0
    %3751 = vmatprep.subr.mxu0 0.0
    %3752 = vmatpush1.msra.mxu0 %v89
    %3753 = vmatprep.subr.mxu0 0.0
    %3754 = vmatpush1.msra.mxu0 %v88
    %3755 = vmatprep.subr.mxu0 0.0
    %3756 = vmatpush1.msra.mxu0 %v87
    %3757 = vmatprep.subr.mxu0 0.0
    %3758 = vmatpush1.msra.mxu0 %v86
    %3759 = vmatprep.subr.mxu0 0.0
    %3760 = vmatpush1.msra.mxu0 %v85
    %3761 = vmatprep.subr.mxu0 0.0
    %3762 = vmatpush1.msra.mxu0 %v84
    %3763 = vmatprep.subr.mxu0 0.0
    %3764 = vmatpush1.msra.mxu0 %v83
    %3765 = vmatprep.subr.mxu0 0.0
    %3766 = vmatpush1.msra.mxu0 %v82
    %3767 = vmatprep.subr.mxu0 0.0
    %3768 = vmatpush2.msra.mxu0 0.0
    %3769 = vmatprep.subr.mxu0 0.0
    %3770 = vmatpush2.msra.mxu0 0.0
    %3771 = vmatprep.subr.mxu0 0.0
    %3772 = vmatpush2.msra.mxu0 0.0
    %3773 = vmatprep.subr.mxu0 0.0
    %3774 = vmatpush2.msra.mxu0 0.0
    %3775 = vmatprep.subr.mxu0 0.0
    %3776 = vmatpush2.msra.mxu0 0.0
    %3777 = vmatprep.subr.mxu0 0.0
    %3778 = vmatpush2.msra.mxu0 0.0
    %3779 = vmatprep.subr.mxu0 0.0
    %3780 = vmatpush2.msra.mxu0 0.0
    %3781 = vmatprep.subr.mxu0 0.0
    %3782 = vmatpush2.msra.mxu0 0.0
    %3783 = vmatprep.subr.mxu0 0.0
    %3784 = vmatpush2.msra.mxu0 0.0
    %3785 = vmatprep.subr.mxu0 0.0
    %3786 = vmatpush2.msra.mxu0 0.0
    %3787 = vmatprep.subr.mxu0 0.0
    %3788 = vmatpush2.msra.mxu0 0.0
    %3789 = vmatprep.subr.mxu0 0.0
    %3790 = vmatpush2.msra.mxu0 0.0
    %3791 = vmatprep.subr.mxu0 0.0
    %3792 = vmatpush2.msra.mxu0 0.0
    %3793 = vmatprep.subr.mxu0 0.0
    %3794 = vmatpush2.msra.mxu0 0.0
    %3795 = vmatprep.subr.mxu0 0.0
    %3796 = vmatpush2.msra.mxu0 0.0
    %3797 = vmatprep.subr.mxu0 0.0
    %3798 = vmatpush2.msra.mxu0 0.0
    %3799 = vmatprep.mubr.f32.mxu0 0.0
    %3800 = vmatmul.mubr.f32.gmra.mxu0 %v3730
    %v3801 = vpop.f32.mrf.mxu0
    %v3802 = vadd.f32 %v102, %v3801
    %v3803 = vpop.f32.mrf.mxu0
    %3804 = vmatprep.mubr.f32.mxu0 0.0
    %3805 = vmatmul.mubr.f32.gmra.mxu0 %v3733
    %v3806 = vpop.f32.mrf.mxu0
    %v3807 = vadd.f32 %v102, %v3806
    %v3808 = vpop.f32.mrf.mxu0
    %3809 = vdwg.mxu0
    %v3810 = vadd.f32 %v3614, %v3802
    %v3811 = vadd.f32 %v3615, %v3807
    %v3812 = vsel %vm229, %v3810, 0.0
    %3813 = vadd.xlane.f32.xlu0 %v3812
    %v3814 = vpop.xlane.xlu0 %3813
    %v3815 = vsel %vm229, %v3811, 0.0
    %3816 = vadd.xlane.f32.xlu0 %v3815
    %v3817 = vpop.xlane.xlu0 %3816
    %v3818 = vmul.f32 %v3814, %v317
    %v3819 = vmul.f32 %v3817, %v317
    %v3820 = vsub.f32 %v3810, %v3818
    %v3821 = vsub.f32 %v3811, %v3819
    %v3822 = vmul.f32 %v3820, %v3820
    %v3823 = vmul.f32 %v3821, %v3821
    %v3824 = vsel %vm229, %v3822, 0.0
    %3825 = vadd.xlane.f32.xlu0 %v3824
    %v3826 = vpop.xlane.xlu0 %3825
    %v3827 = vsel %vm229, %v3823, 0.0
    %3828 = vadd.xlane.f32.xlu0 %v3827
    %v3829 = vpop.xlane.xlu0 %3828
    %v3830 = vmul.f32 %v3826, %v317
    %v3831 = vmul.f32 %v3829, %v317
    %v3832 = vadd.f32 %v3830, 1e-05
    %v3833 = vadd.f32 %v3831, 1e-05
    %v3834 = vrsqrt.pop %v3832
    %v3835 = vrsqrt.pop %v3833
    %v3836 = vmul.f32 %v3820, %v3834
    %v3837 = vmul.f32 %v3821, %v3835
    %v3838 = vmul.f32 %v3836, %v109
    %v3839 = vmul.f32 %v3837, %v109
    %v3840 = vadd.f32 %v3838, %v116
    %v3841 = vadd.f32 %v3839, %v116
    %v3843 = vsel %vm229, %v3840, 0
    %v3846 = vsel %vm229, %v3841, 0
    %3848 = vmatprep.subr.mxu0 0.0
    %3849 = vmatpush1.msra.mxu0 0.0
    %3850 = vmatprep.subr.mxu0 0.0
    %3851 = vmatpush1.msra.mxu0 0.0
    %3852 = vmatprep.subr.mxu0 0.0
    %3853 = vmatpush1.msra.mxu0 0.0
    %3854 = vmatprep.subr.mxu0 0.0
    %3855 = vmatpush1.msra.mxu0 0.0
    %3856 = vmatprep.subr.mxu0 0.0
    %3857 = vmatpush1.msra.mxu0 0.0
    %3858 = vmatprep.subr.mxu0 0.0
    %3859 = vmatpush1.msra.mxu0 0.0
    %3860 = vmatprep.subr.mxu0 0.0
    %3861 = vmatpush1.msra.mxu0 0.0
    %3862 = vmatprep.subr.mxu0 0.0
    %3863 = vmatpush1.msra.mxu0 0.0
    %3864 = vmatprep.subr.mxu0 0.0
    %3865 = vmatpush1.msra.mxu0 0.0
    %3866 = vmatprep.subr.mxu0 0.0
    %3867 = vmatpush1.msra.mxu0 0.0
    %3868 = vmatprep.subr.mxu0 0.0
    %3869 = vmatpush1.msra.mxu0 0.0
    %3870 = vmatprep.subr.mxu0 0.0
    %3871 = vmatpush1.msra.mxu0 0.0
    %3872 = vmatprep.subr.mxu0 0.0
    %3873 = vmatpush1.msra.mxu0 %v73
    %3874 = vmatprep.subr.mxu0 0.0
    %3875 = vmatpush1.msra.mxu0 %v72
    %3876 = vmatprep.subr.mxu0 0.0
    %3877 = vmatpush1.msra.mxu0 %v71
    %3878 = vmatprep.subr.mxu0 0.0
    %3879 = vmatpush1.msra.mxu0 %v70
    %3880 = vmatprep.subr.mxu0 0.0
    %3881 = vmatpush2.msra.mxu0 0.0
    %3882 = vmatprep.subr.mxu0 0.0
    %3883 = vmatpush2.msra.mxu0 0.0
    %3884 = vmatprep.subr.mxu0 0.0
    %3885 = vmatpush2.msra.mxu0 0.0
    %3886 = vmatprep.subr.mxu0 0.0
    %3887 = vmatpush2.msra.mxu0 0.0
    %3888 = vmatprep.subr.mxu0 0.0
    %3889 = vmatpush2.msra.mxu0 0.0
    %3890 = vmatprep.subr.mxu0 0.0
    %3891 = vmatpush2.msra.mxu0 0.0
    %3892 = vmatprep.subr.mxu0 0.0
    %3893 = vmatpush2.msra.mxu0 0.0
    %3894 = vmatprep.subr.mxu0 0.0
    %3895 = vmatpush2.msra.mxu0 0.0
    %3896 = vmatprep.subr.mxu0 0.0
    %3897 = vmatpush2.msra.mxu0 0.0
    %3898 = vmatprep.subr.mxu0 0.0
    %3899 = vmatpush2.msra.mxu0 0.0
    %3900 = vmatprep.subr.mxu0 0.0
    %3901 = vmatpush2.msra.mxu0 0.0
    %3902 = vmatprep.subr.mxu0 0.0
    %3903 = vmatpush2.msra.mxu0 0.0
    %3904 = vmatprep.subr.mxu0 0.0
    %3905 = vmatpush2.msra.mxu0 0.0
    %3906 = vmatprep.subr.mxu0 0.0
    %3907 = vmatpush2.msra.mxu0 0.0
    %3908 = vmatprep.subr.mxu0 0.0
    %3909 = vmatpush2.msra.mxu0 0.0
    %3910 = vmatprep.subr.mxu0 0.0
    %3911 = vmatpush2.msra.mxu0 0.0
    %3912 = vmatprep.mubr.f32.mxu0 0.0
    %3913 = vmatmul.mubr.f32.gmra.mxu0 %v3843
    %v3914 = vpop.f32.mrf.mxu0
    %v3915 = vadd.f32 0.0, %v3914
    %v3916 = vpop.f32.mrf.mxu0
    %3917 = vmatprep.mubr.f32.mxu0 0.0
    %3918 = vmatmul.mubr.f32.gmra.mxu0 %v3846
    %v3919 = vpop.f32.mrf.mxu0
    %v3920 = vadd.f32 0.0, %v3919
    %v3921 = vpop.f32.mrf.mxu0
    %3922 = vdwg.mxu0
    %v3923 = vmul.f32 %v3915, 0.35355338
    %v3924 = vmul.f32 %v3920, 0.35355338
    %v3925 = vadd.f32 %v3923, %v309
    %v3926 = vadd.f32 %v3924, %v310
    %v3927 = vadd.f32 %v3915, %v301
    %v3928 = vadd.f32 %v3920, %v306
    %3930 = vrot.lane.b32.xlu0 %v3927, 96
    %v3931 = vpop.permute.xlu0 %3930
    %v3933 = vsel %vm432, %v3925, 0
    %v3935 = vsel %vm432, %v3931, 0
    %3937 = vmatprep.subr.mxu0 0.0
    %3938 = vmatpush1.xpose.msra.mxu0 0.0
    %3939 = vmatprep.subr.mxu0 0.0
    %3940 = vmatpush1.xpose.msra.mxu0 0.0
    %3941 = vmatprep.subr.mxu0 0.0
    %3942 = vmatpush1.xpose.msra.mxu0 0.0
    %3943 = vmatprep.subr.mxu0 0.0
    %3944 = vmatpush1.xpose.msra.mxu0 0.0
    %3945 = vmatprep.subr.mxu0 0.0
    %3946 = vmatpush1.xpose.msra.mxu0 0.0
    %3947 = vmatprep.subr.mxu0 0.0
    %3948 = vmatpush1.xpose.msra.mxu0 0.0
    %3949 = vmatprep.subr.mxu0 0.0
    %3950 = vmatpush1.xpose.msra.mxu0 0.0
    %3951 = vmatprep.subr.mxu0 0.0
    %3952 = vmatpush1.xpose.msra.mxu0 0.0
    %3953 = vmatprep.subr.mxu0 0.0
    %3954 = vmatpush1.xpose.msra.mxu0 0.0
    %3955 = vmatprep.subr.mxu0 0.0
    %3956 = vmatpush1.xpose.msra.mxu0 0.0
    %3957 = vmatprep.subr.mxu0 0.0
    %3958 = vmatpush1.xpose.msra.mxu0 0.0
    %3959 = vmatprep.subr.mxu0 0.0
    %3960 = vmatpush1.xpose.msra.mxu0 0.0
    %3961 = vmatprep.subr.mxu0 0.0
    %3962 = vmatpush1.xpose.msra.mxu0 0.0
    %3963 = vmatprep.subr.mxu0 0.0
    %3964 = vmatpush1.xpose.msra.mxu0 0.0
    %3965 = vmatprep.subr.mxu0 0.0
    %3966 = vmatpush1.xpose.msra.mxu0 0.0
    %3967 = vmatprep.subr.mxu0 0.0
    %3968 = vmatpush1.xpose.msra.mxu0 %v3935
    %3969 = vmatprep.subr.mxu0 0.0
    %3970 = vmatpush2.xpose.msra.mxu0 0.0
    %3971 = vmatprep.subr.mxu0 0.0
    %3972 = vmatpush2.xpose.msra.mxu0 0.0
    %3973 = vmatprep.subr.mxu0 0.0
    %3974 = vmatpush2.xpose.msra.mxu0 0.0
    %3975 = vmatprep.subr.mxu0 0.0
    %3976 = vmatpush2.xpose.msra.mxu0 0.0
    %3977 = vmatprep.subr.mxu0 0.0
    %3978 = vmatpush2.xpose.msra.mxu0 0.0
    %3979 = vmatprep.subr.mxu0 0.0
    %3980 = vmatpush2.xpose.msra.mxu0 0.0
    %3981 = vmatprep.subr.mxu0 0.0
    %3982 = vmatpush2.xpose.msra.mxu0 0.0
    %3983 = vmatprep.subr.mxu0 0.0
    %3984 = vmatpush2.xpose.msra.mxu0 0.0
    %3985 = vmatprep.subr.mxu0 0.0
    %3986 = vmatpush2.xpose.msra.mxu0 0.0
    %3987 = vmatprep.subr.mxu0 0.0
    %3988 = vmatpush2.xpose.msra.mxu0 0.0
    %3989 = vmatprep.subr.mxu0 0.0
    %3990 = vmatpush2.xpose.msra.mxu0 0.0
    %3991 = vmatprep.subr.mxu0 0.0
    %3992 = vmatpush2.xpose.msra.mxu0 0.0
    %3993 = vmatprep.subr.mxu0 0.0
    %3994 = vmatpush2.xpose.msra.mxu0 0.0
    %3995 = vmatprep.subr.mxu0 0.0
    %3996 = vmatpush2.xpose.msra.mxu0 0.0
    %3997 = vmatprep.subr.mxu0 0.0
    %3998 = vmatpush2.xpose.msra.mxu0 0.0
    %3999 = vmatprep.subr.mxu0 0.0
    %4000 = vmatpush2.xpose.msra.mxu0 0.0
    %4001 = vmatprep.mubr.f32.mxu0 0.0
    %4002 = vmatmul.mubr.f32.gmra.mxu0 %v3933
    %v4003 = vpop.f32.mrf.mxu0
    %v4004 = vadd.f32 0.0, %v4003
    %v4005 = vpop.f32.mrf.mxu0
    %4006 = vdwg.mxu0
    %v4007 = vsel %vm432, %v4004, -inf
    %4008 = vmax.xlane.f32.xlu0 %v4007
    %v4009 = vpop.xlane.xlu0 %4008
    %v4010 = vsub.f32 %v4004, %v4009
    %v4011 = vmul.f32 %v4010, 1.442695
    %v4012 = vpow.pop %v4011
    %v4013 = vsel %vm432, %v4012, 0.0
    %4014 = vadd.xlane.f32.xlu0 %v4013
    %v4015 = vpop.xlane.xlu0 %4014
    %v4016 = vrcp.pop %v4015
    %v4017 = vmul.f32 %v4012, %v4016
    %4019 = vrot.lane.b32.xlu0 %v3915, 64
    %v4020 = vpop.permute.xlu0 %4019
    %v4023 = vsel %vm432, %v4017, 0
    %4025 = vmatprep.subr.mxu0 0.0
    %4026 = vmatpush1.msra.mxu0 0.0
    %4027 = vmatprep.subr.mxu0 0.0
    %4028 = vmatpush1.msra.mxu0 0.0
    %4029 = vmatprep.subr.mxu0 0.0
    %4030 = vmatpush1.msra.mxu0 0.0
    %4031 = vmatprep.subr.mxu0 0.0
    %4032 = vmatpush1.msra.mxu0 0.0
    %4033 = vmatprep.subr.mxu0 0.0
    %4034 = vmatpush1.msra.mxu0 0.0
    %4035 = vmatprep.subr.mxu0 0.0
    %4036 = vmatpush1.msra.mxu0 0.0
    %4037 = vmatprep.subr.mxu0 0.0
    %4038 = vmatpush1.msra.mxu0 0.0
    %4039 = vmatprep.subr.mxu0 0.0
    %4040 = vmatpush1.msra.mxu0 0.0
    %4041 = vmatprep.subr.mxu0 0.0
    %4042 = vmatpush1.msra.mxu0 0.0
    %4043 = vmatprep.subr.mxu0 0.0
    %4044 = vmatpush1.msra.mxu0 0.0
    %4045 = vmatprep.subr.mxu0 0.0
    %4046 = vmatpush1.msra.mxu0 0.0
    %4047 = vmatprep.subr.mxu0 0.0
    %4048 = vmatpush1.msra.mxu0 0.0
    %4049 = vmatprep.subr.mxu0 0.0
    %4050 = vmatpush1.msra.mxu0 0.0
    %4051 = vmatprep.subr.mxu0 0.0
    %4052 = vmatpush1.msra.mxu0 0.0
    %4053 = vmatprep.subr.mxu0 0.0
    %4054 = vmatpush1.msra.mxu0 0.0
    %4055 = vmatprep.subr.mxu0 0.0
    %4056 = vmatpush1.msra.mxu0 %v4020
    %4057 = vmatprep.subr.mxu0 0.0
    %4058 = vmatpush2.msra.mxu0 0.0
    %4059 = vmatprep.subr.mxu0 0.0
    %4060 = vmatpush2.msra.mxu0 0.0
    %4061 = vmatprep.subr.mxu0 0.0
    %4062 = vmatpush2.msra.mxu0 0.0
    %4063 = vmatprep.subr.mxu0 0.0
    %4064 = vmatpush2.msra.mxu0 0.0
    %4065 = vmatprep.subr.mxu0 0.0
    %4066 = vmatpush2.msra.mxu0 0.0
    %4067 = vmatprep.subr.mxu0 0.0
    %4068 = vmatpush2.msra.mxu0 0.0
    %4069 = vmatprep.subr.mxu0 0.0
    %4070 = vmatpush2.msra.mxu0 0.0
    %4071 = vmatprep.subr.mxu0 0.0
    %4072 = vmatpush2.msra.mxu0 0.0
    %4073 = vmatprep.subr.mxu0 0.0
    %4074 = vmatpush2.msra.mxu0 0.0
    %4075 = vmatprep.subr.mxu0 0.0
    %4076 = vmatpush2.msra.mxu0 0.0
    %4077 = vmatprep.subr.mxu0 0.0
    %4078 = vmatpush2.msra.mxu0 0.0
    %4079 = vmatprep.subr.mxu0 0.0
    %4080 = vmatpush2.msra.mxu0 0.0
    %4081 = vmatprep.subr.mxu0 0.0
    %4082 = vmatpush2.msra.mxu0 0.0
    %4083 = vmatprep.subr.mxu0 0.0
    %4084 = vmatpush2.msra.mxu0 0.0
    %4085 = vmatprep.subr.mxu0 0.0
    %4086 = vmatpush2.msra.mxu0 0.0
    %4087 = vmatprep.subr.mxu0 0.0
    %4088 = vmatpush2.msra.mxu0 0.0
    %4089 = vmatprep.mubr.f32.mxu0 0.0
    %4090 = vmatmul.mubr.f32.gmra.mxu0 %v4023
    %v4091 = vpop.f32.mrf.mxu0
    %v4092 = vadd.f32 0.0, %v4091
    %v4093 = vpop.f32.mrf.mxu0
    %4094 = vdwg.mxu0
    %4095 = vrot.lane.b32.xlu0 %v3925, 120
    %v4096 = vpop.permute.xlu0 %4095
    %4097 = vrot.lane.b32.xlu0 %v3927, 88
    %v4098 = vpop.permute.xlu0 %4097
    %v4099 = vsel %vm432, %v4096, 0
    %v4101 = vsel %vm432, %v4098, 0
    %4103 = vmatprep.subr.mxu0 0.0
    %4104 = vmatpush1.xpose.msra.mxu0 0.0
    %4105 = vmatprep.subr.mxu0 0.0
    %4106 = vmatpush1.xpose.msra.mxu0 0.0
    %4107 = vmatprep.subr.mxu0 0.0
    %4108 = vmatpush1.xpose.msra.mxu0 0.0
    %4109 = vmatprep.subr.mxu0 0.0
    %4110 = vmatpush1.xpose.msra.mxu0 0.0
    %4111 = vmatprep.subr.mxu0 0.0
    %4112 = vmatpush1.xpose.msra.mxu0 0.0
    %4113 = vmatprep.subr.mxu0 0.0
    %4114 = vmatpush1.xpose.msra.mxu0 0.0
    %4115 = vmatprep.subr.mxu0 0.0
    %4116 = vmatpush1.xpose.msra.mxu0 0.0
    %4117 = vmatprep.subr.mxu0 0.0
    %4118 = vmatpush1.xpose.msra.mxu0 0.0
    %4119 = vmatprep.subr.mxu0 0.0
    %4120 = vmatpush1.xpose.msra.mxu0 0.0
    %4121 = vmatprep.subr.mxu0 0.0
    %4122 = vmatpush1.xpose.msra.mxu0 0.0
    %4123 = vmatprep.subr.mxu0 0.0
    %4124 = vmatpush1.xpose.msra.mxu0 0.0
    %4125 = vmatprep.subr.mxu0 0.0
    %4126 = vmatpush1.xpose.msra.mxu0 0.0
    %4127 = vmatprep.subr.mxu0 0.0
    %4128 = vmatpush1.xpose.msra.mxu0 0.0
    %4129 = vmatprep.subr.mxu0 0.0
    %4130 = vmatpush1.xpose.msra.mxu0 0.0
    %4131 = vmatprep.subr.mxu0 0.0
    %4132 = vmatpush1.xpose.msra.mxu0 0.0
    %4133 = vmatprep.subr.mxu0 0.0
    %4134 = vmatpush1.xpose.msra.mxu0 %v4101
    %4135 = vmatprep.subr.mxu0 0.0
    %4136 = vmatpush2.xpose.msra.mxu0 0.0
    %4137 = vmatprep.subr.mxu0 0.0
    %4138 = vmatpush2.xpose.msra.mxu0 0.0
    %4139 = vmatprep.subr.mxu0 0.0
    %4140 = vmatpush2.xpose.msra.mxu0 0.0
    %4141 = vmatprep.subr.mxu0 0.0
    %4142 = vmatpush2.xpose.msra.mxu0 0.0
    %4143 = vmatprep.subr.mxu0 0.0
    %4144 = vmatpush2.xpose.msra.mxu0 0.0
    %4145 = vmatprep.subr.mxu0 0.0
    %4146 = vmatpush2.xpose.msra.mxu0 0.0
    %4147 = vmatprep.subr.mxu0 0.0
    %4148 = vmatpush2.xpose.msra.mxu0 0.0
    %4149 = vmatprep.subr.mxu0 0.0
    %4150 = vmatpush2.xpose.msra.mxu0 0.0
    %4151 = vmatprep.subr.mxu0 0.0
    %4152 = vmatpush2.xpose.msra.mxu0 0.0
    %4153 = vmatprep.subr.mxu0 0.0
    %4154 = vmatpush2.xpose.msra.mxu0 0.0
    %4155 = vmatprep.subr.mxu0 0.0
    %4156 = vmatpush2.xpose.msra.mxu0 0.0
    %4157 = vmatprep.subr.mxu0 0.0
    %4158 = vmatpush2.xpose.msra.mxu0 0.0
    %4159 = vmatprep.subr.mxu0 0.0
    %4160 = vmatpush2.xpose.msra.mxu0 0.0
    %4161 = vmatprep.subr.mxu0 0.0
    %4162 = vmatpush2.xpose.msra.mxu0 0.0
    %4163 = vmatprep.subr.mxu0 0.0
    %4164 = vmatpush2.xpose.msra.mxu0 0.0
    %4165 = vmatprep.subr.mxu0 0.0
    %4166 = vmatpush2.xpose.msra.mxu0 0.0
    %4167 = vmatprep.mubr.f32.mxu0 0.0
    %4168 = vmatmul.mubr.f32.gmra.mxu0 %v4099
    %v4169 = vpop.f32.mrf.mxu0
    %v4170 = vadd.f32 0.0, %v4169
    %v4171 = vpop.f32.mrf.mxu0
    %4172 = vdwg.mxu0
    %v4173 = vsel %vm432, %v4170, -inf
    %4174 = vmax.xlane.f32.xlu0 %v4173
    %v4175 = vpop.xlane.xlu0 %4174
    %v4176 = vsub.f32 %v4170, %v4175
    %v4177 = vmul.f32 %v4176, 1.442695
    %v4178 = vpow.pop %v4177
    %v4179 = vsel %vm432, %v4178, 0.0
    %4180 = vadd.xlane.f32.xlu0 %v4179
    %v4181 = vpop.xlane.xlu0 %4180
    %v4182 = vrcp.pop %v4181
    %v4183 = vmul.f32 %v4178, %v4182
    %4184 = vrot.lane.b32.xlu0 %v3915, 56
    %v4185 = vpop.permute.xlu0 %4184
    %v4188 = vsel %vm432, %v4183, 0
    %4190 = vmatprep.subr.mxu0 0.0
    %4191 = vmatpush1.msra.mxu0 0.0
    %4192 = vmatprep.subr.mxu0 0.0
    %4193 = vmatpush1.msra.mxu0 0.0
    %4194 = vmatprep.subr.mxu0 0.0
    %4195 = vmatpush1.msra.mxu0 0.0
    %4196 = vmatprep.subr.mxu0 0.0
    %4197 = vmatpush1.msra.mxu0 0.0
    %4198 = vmatprep.subr.mxu0 0.0
    %4199 = vmatpush1.msra.mxu0 0.0
    %4200 = vmatprep.subr.mxu0 0.0
    %4201 = vmatpush1.msra.mxu0 0.0
    %4202 = vmatprep.subr.mxu0 0.0
    %4203 = vmatpush1.msra.mxu0 0.0
    %4204 = vmatprep.subr.mxu0 0.0
    %4205 = vmatpush1.msra.mxu0 0.0
    %4206 = vmatprep.subr.mxu0 0.0
    %4207 = vmatpush1.msra.mxu0 0.0
    %4208 = vmatprep.subr.mxu0 0.0
    %4209 = vmatpush1.msra.mxu0 0.0
    %4210 = vmatprep.subr.mxu0 0.0
    %4211 = vmatpush1.msra.mxu0 0.0
    %4212 = vmatprep.subr.mxu0 0.0
    %4213 = vmatpush1.msra.mxu0 0.0
    %4214 = vmatprep.subr.mxu0 0.0
    %4215 = vmatpush1.msra.mxu0 0.0
    %4216 = vmatprep.subr.mxu0 0.0
    %4217 = vmatpush1.msra.mxu0 0.0
    %4218 = vmatprep.subr.mxu0 0.0
    %4219 = vmatpush1.msra.mxu0 0.0
    %4220 = vmatprep.subr.mxu0 0.0
    %4221 = vmatpush1.msra.mxu0 %v4185
    %4222 = vmatprep.subr.mxu0 0.0
    %4223 = vmatpush2.msra.mxu0 0.0
    %4224 = vmatprep.subr.mxu0 0.0
    %4225 = vmatpush2.msra.mxu0 0.0
    %4226 = vmatprep.subr.mxu0 0.0
    %4227 = vmatpush2.msra.mxu0 0.0
    %4228 = vmatprep.subr.mxu0 0.0
    %4229 = vmatpush2.msra.mxu0 0.0
    %4230 = vmatprep.subr.mxu0 0.0
    %4231 = vmatpush2.msra.mxu0 0.0
    %4232 = vmatprep.subr.mxu0 0.0
    %4233 = vmatpush2.msra.mxu0 0.0
    %4234 = vmatprep.subr.mxu0 0.0
    %4235 = vmatpush2.msra.mxu0 0.0
    %4236 = vmatprep.subr.mxu0 0.0
    %4237 = vmatpush2.msra.mxu0 0.0
    %4238 = vmatprep.subr.mxu0 0.0
    %4239 = vmatpush2.msra.mxu0 0.0
    %4240 = vmatprep.subr.mxu0 0.0
    %4241 = vmatpush2.msra.mxu0 0.0
    %4242 = vmatprep.subr.mxu0 0.0
    %4243 = vmatpush2.msra.mxu0 0.0
    %4244 = vmatprep.subr.mxu0 0.0
    %4245 = vmatpush2.msra.mxu0 0.0
    %4246 = vmatprep.subr.mxu0 0.0
    %4247 = vmatpush2.msra.mxu0 0.0
    %4248 = vmatprep.subr.mxu0 0.0
    %4249 = vmatpush2.msra.mxu0 0.0
    %4250 = vmatprep.subr.mxu0 0.0
    %4251 = vmatpush2.msra.mxu0 0.0
    %4252 = vmatprep.subr.mxu0 0.0
    %4253 = vmatpush2.msra.mxu0 0.0
    %4254 = vmatprep.mubr.f32.mxu0 0.0
    %4255 = vmatmul.mubr.f32.gmra.mxu0 %v4188
    %v4256 = vpop.f32.mrf.mxu0
    %v4257 = vadd.f32 0.0, %v4256
    %v4258 = vpop.f32.mrf.mxu0
    %4259 = vdwg.mxu0
    %4260 = vrot.lane.b32.xlu0 %v3925, 112
    %v4261 = vpop.permute.xlu0 %4260
    %4262 = vrot.lane.b32.xlu0 %v3927, 80
    %v4263 = vpop.permute.xlu0 %4262
    %v4264 = vsel %vm432, %v4261, 0
    %v4266 = vsel %vm432, %v4263, 0
    %4268 = vmatprep.subr.mxu0 0.0
    %4269 = vmatpush1.xpose.msra.mxu0 0.0
    %4270 = vmatprep.subr.mxu0 0.0
    %4271 = vmatpush1.xpose.msra.mxu0 0.0
    %4272 = vmatprep.subr.mxu0 0.0
    %4273 = vmatpush1.xpose.msra.mxu0 0.0
    %4274 = vmatprep.subr.mxu0 0.0
    %4275 = vmatpush1.xpose.msra.mxu0 0.0
    %4276 = vmatprep.subr.mxu0 0.0
    %4277 = vmatpush1.xpose.msra.mxu0 0.0
    %4278 = vmatprep.subr.mxu0 0.0
    %4279 = vmatpush1.xpose.msra.mxu0 0.0
    %4280 = vmatprep.subr.mxu0 0.0
    %4281 = vmatpush1.xpose.msra.mxu0 0.0
    %4282 = vmatprep.subr.mxu0 0.0
    %4283 = vmatpush1.xpose.msra.mxu0 0.0
    %4284 = vmatprep.subr.mxu0 0.0
    %4285 = vmatpush1.xpose.msra.mxu0 0.0
    %4286 = vmatprep.subr.mxu0 0.0
    %4287 = vmatpush1.xpose.msra.mxu0 0.0
    %4288 = vmatprep.subr.mxu0 0.0
    %4289 = vmatpush1.xpose.msra.mxu0 0.0
    %4290 = vmatprep.subr.mxu0 0.0
    %4291 = vmatpush1.xpose.msra.mxu0 0.0
    %4292 = vmatprep.subr.mxu0 0.0
    %4293 = vmatpush1.xpose.msra.mxu0 0.0
    %4294 = vmatprep.subr.mxu0 0.0
    %4295 = vmatpush1.xpose.msra.mxu0 0.0
    %4296 = vmatprep.subr.mxu0 0.0
    %4297 = vmatpush1.xpose.msra.mxu0 0.0
    %4298 = vmatprep.subr.mxu0 0.0
    %4299 = vmatpush1.xpose.msra.mxu0 %v4266
    %4300 = vmatprep.subr.mxu0 0.0
    %4301 = vmatpush2.xpose.msra.mxu0 0.0
    %4302 = vmatprep.subr.mxu0 0.0
    %4303 = vmatpush2.xpose.msra.mxu0 0.0
    %4304 = vmatprep.subr.mxu0 0.0
    %4305 = vmatpush2.xpose.msra.mxu0 0.0
    %4306 = vmatprep.subr.mxu0 0.0
    %4307 = vmatpush2.xpose.msra.mxu0 0.0
    %4308 = vmatprep.subr.mxu0 0.0
    %4309 = vmatpush2.xpose.msra.mxu0 0.0
    %4310 = vmatprep.subr.mxu0 0.0
    %4311 = vmatpush2.xpose.msra.mxu0 0.0
    %4312 = vmatprep.subr.mxu0 0.0
    %4313 = vmatpush2.xpose.msra.mxu0 0.0
    %4314 = vmatprep.subr.mxu0 0.0
    %4315 = vmatpush2.xpose.msra.mxu0 0.0
    %4316 = vmatprep.subr.mxu0 0.0
    %4317 = vmatpush2.xpose.msra.mxu0 0.0
    %4318 = vmatprep.subr.mxu0 0.0
    %4319 = vmatpush2.xpose.msra.mxu0 0.0
    %4320 = vmatprep.subr.mxu0 0.0
    %4321 = vmatpush2.xpose.msra.mxu0 0.0
    %4322 = vmatprep.subr.mxu0 0.0
    %4323 = vmatpush2.xpose.msra.mxu0 0.0
    %4324 = vmatprep.subr.mxu0 0.0
    %4325 = vmatpush2.xpose.msra.mxu0 0.0
    %4326 = vmatprep.subr.mxu0 0.0
    %4327 = vmatpush2.xpose.msra.mxu0 0.0
    %4328 = vmatprep.subr.mxu0 0.0
    %4329 = vmatpush2.xpose.msra.mxu0 0.0
    %4330 = vmatprep.subr.mxu0 0.0
    %4331 = vmatpush2.xpose.msra.mxu0 0.0
    %4332 = vmatprep.mubr.f32.mxu0 0.0
    %4333 = vmatmul.mubr.f32.gmra.mxu0 %v4264
    %v4334 = vpop.f32.mrf.mxu0
    %v4335 = vadd.f32 0.0, %v4334
    %v4336 = vpop.f32.mrf.mxu0
    %4337 = vdwg.mxu0
    %v4338 = vsel %vm432, %v4335, -inf
    %4339 = vmax.xlane.f32.xlu0 %v4338
    %v4340 = vpop.xlane.xlu0 %4339
    %v4341 = vsub.f32 %v4335, %v4340
    %v4342 = vmul.f32 %v4341, 1.442695
    %v4343 = vpow.pop %v4342
    %v4344 = vsel %vm432, %v4343, 0.0
    %4345 = vadd.xlane.f32.xlu0 %v4344
    %v4346 = vpop.xlane.xlu0 %4345
    %v4347 = vrcp.pop %v4346
    %v4348 = vmul.f32 %v4343, %v4347
    %4349 = vrot.lane.b32.xlu0 %v3915, 48
    %v4350 = vpop.permute.xlu0 %4349
    %v4353 = vsel %vm432, %v4348, 0
    %4355 = vmatprep.subr.mxu0 0.0
    %4356 = vmatpush1.msra.mxu0 0.0
    %4357 = vmatprep.subr.mxu0 0.0
    %4358 = vmatpush1.msra.mxu0 0.0
    %4359 = vmatprep.subr.mxu0 0.0
    %4360 = vmatpush1.msra.mxu0 0.0
    %4361 = vmatprep.subr.mxu0 0.0
    %4362 = vmatpush1.msra.mxu0 0.0
    %4363 = vmatprep.subr.mxu0 0.0
    %4364 = vmatpush1.msra.mxu0 0.0
    %4365 = vmatprep.subr.mxu0 0.0
    %4366 = vmatpush1.msra.mxu0 0.0
    %4367 = vmatprep.subr.mxu0 0.0
    %4368 = vmatpush1.msra.mxu0 0.0
    %4369 = vmatprep.subr.mxu0 0.0
    %4370 = vmatpush1.msra.mxu0 0.0
    %4371 = vmatprep.subr.mxu0 0.0
    %4372 = vmatpush1.msra.mxu0 0.0
    %4373 = vmatprep.subr.mxu0 0.0
    %4374 = vmatpush1.msra.mxu0 0.0
    %4375 = vmatprep.subr.mxu0 0.0
    %4376 = vmatpush1.msra.mxu0 0.0
    %4377 = vmatprep.subr.mxu0 0.0
    %4378 = vmatpush1.msra.mxu0 0.0
    %4379 = vmatprep.subr.mxu0 0.0
    %4380 = vmatpush1.msra.mxu0 0.0
    %4381 = vmatprep.subr.mxu0 0.0
    %4382 = vmatpush1.msra.mxu0 0.0
    %4383 = vmatprep.subr.mxu0 0.0
    %4384 = vmatpush1.msra.mxu0 0.0
    %4385 = vmatprep.subr.mxu0 0.0
    %4386 = vmatpush1.msra.mxu0 %v4350
    %4387 = vmatprep.subr.mxu0 0.0
    %4388 = vmatpush2.msra.mxu0 0.0
    %4389 = vmatprep.subr.mxu0 0.0
    %4390 = vmatpush2.msra.mxu0 0.0
    %4391 = vmatprep.subr.mxu0 0.0
    %4392 = vmatpush2.msra.mxu0 0.0
    %4393 = vmatprep.subr.mxu0 0.0
    %4394 = vmatpush2.msra.mxu0 0.0
    %4395 = vmatprep.subr.mxu0 0.0
    %4396 = vmatpush2.msra.mxu0 0.0
    %4397 = vmatprep.subr.mxu0 0.0
    %4398 = vmatpush2.msra.mxu0 0.0
    %4399 = vmatprep.subr.mxu0 0.0
    %4400 = vmatpush2.msra.mxu0 0.0
    %4401 = vmatprep.subr.mxu0 0.0
    %4402 = vmatpush2.msra.mxu0 0.0
    %4403 = vmatprep.subr.mxu0 0.0
    %4404 = vmatpush2.msra.mxu0 0.0
    %4405 = vmatprep.subr.mxu0 0.0
    %4406 = vmatpush2.msra.mxu0 0.0
    %4407 = vmatprep.subr.mxu0 0.0
    %4408 = vmatpush2.msra.mxu0 0.0
    %4409 = vmatprep.subr.mxu0 0.0
    %4410 = vmatpush2.msra.mxu0 0.0
    %4411 = vmatprep.subr.mxu0 0.0
    %4412 = vmatpush2.msra.mxu0 0.0
    %4413 = vmatprep.subr.mxu0 0.0
    %4414 = vmatpush2.msra.mxu0 0.0
    %4415 = vmatprep.subr.mxu0 0.0
    %4416 = vmatpush2.msra.mxu0 0.0
    %4417 = vmatprep.subr.mxu0 0.0
    %4418 = vmatpush2.msra.mxu0 0.0
    %4419 = vmatprep.mubr.f32.mxu0 0.0
    %4420 = vmatmul.mubr.f32.gmra.mxu0 %v4353
    %v4421 = vpop.f32.mrf.mxu0
    %v4422 = vadd.f32 0.0, %v4421
    %v4423 = vpop.f32.mrf.mxu0
    %4424 = vdwg.mxu0
    %4425 = vrot.lane.b32.xlu0 %v3925, 104
    %v4426 = vpop.permute.xlu0 %4425
    %4427 = vrot.lane.b32.xlu0 %v3927, 72
    %v4428 = vpop.permute.xlu0 %4427
    %v4429 = vsel %vm432, %v4426, 0
    %v4431 = vsel %vm432, %v4428, 0
    %4433 = vmatprep.subr.mxu0 0.0
    %4434 = vmatpush1.xpose.msra.mxu0 0.0
    %4435 = vmatprep.subr.mxu0 0.0
    %4436 = vmatpush1.xpose.msra.mxu0 0.0
    %4437 = vmatprep.subr.mxu0 0.0
    %4438 = vmatpush1.xpose.msra.mxu0 0.0
    %4439 = vmatprep.subr.mxu0 0.0
    %4440 = vmatpush1.xpose.msra.mxu0 0.0
    %4441 = vmatprep.subr.mxu0 0.0
    %4442 = vmatpush1.xpose.msra.mxu0 0.0
    %4443 = vmatprep.subr.mxu0 0.0
    %4444 = vmatpush1.xpose.msra.mxu0 0.0
    %4445 = vmatprep.subr.mxu0 0.0
    %4446 = vmatpush1.xpose.msra.mxu0 0.0
    %4447 = vmatprep.subr.mxu0 0.0
    %4448 = vmatpush1.xpose.msra.mxu0 0.0
    %4449 = vmatprep.subr.mxu0 0.0
    %4450 = vmatpush1.xpose.msra.mxu0 0.0
    %4451 = vmatprep.subr.mxu0 0.0
    %4452 = vmatpush1.xpose.msra.mxu0 0.0
    %4453 = vmatprep.subr.mxu0 0.0
    %4454 = vmatpush1.xpose.msra.mxu0 0.0
    %4455 = vmatprep.subr.mxu0 0.0
    %4456 = vmatpush1.xpose.msra.mxu0 0.0
    %4457 = vmatprep.subr.mxu0 0.0
    %4458 = vmatpush1.xpose.msra.mxu0 0.0
    %4459 = vmatprep.subr.mxu0 0.0
    %4460 = vmatpush1.xpose.msra.mxu0 0.0
    %4461 = vmatprep.subr.mxu0 0.0
    %4462 = vmatpush1.xpose.msra.mxu0 0.0
    %4463 = vmatprep.subr.mxu0 0.0
    %4464 = vmatpush1.xpose.msra.mxu0 %v4431
    %4465 = vmatprep.subr.mxu0 0.0
    %4466 = vmatpush2.xpose.msra.mxu0 0.0
    %4467 = vmatprep.subr.mxu0 0.0
    %4468 = vmatpush2.xpose.msra.mxu0 0.0
    %4469 = vmatprep.subr.mxu0 0.0
    %4470 = vmatpush2.xpose.msra.mxu0 0.0
    %4471 = vmatprep.subr.mxu0 0.0
    %4472 = vmatpush2.xpose.msra.mxu0 0.0
    %4473 = vmatprep.subr.mxu0 0.0
    %4474 = vmatpush2.xpose.msra.mxu0 0.0
    %4475 = vmatprep.subr.mxu0 0.0
    %4476 = vmatpush2.xpose.msra.mxu0 0.0
    %4477 = vmatprep.subr.mxu0 0.0
    %4478 = vmatpush2.xpose.msra.mxu0 0.0
    %4479 = vmatprep.subr.mxu0 0.0
    %4480 = vmatpush2.xpose.msra.mxu0 0.0
    %4481 = vmatprep.subr.mxu0 0.0
    %4482 = vmatpush2.xpose.msra.mxu0 0.0
    %4483 = vmatprep.subr.mxu0 0.0
    %4484 = vmatpush2.xpose.msra.mxu0 0.0
    %4485 = vmatprep.subr.mxu0 0.0
    %4486 = vmatpush2.xpose.msra.mxu0 0.0
    %4487 = vmatprep.subr.mxu0 0.0
    %4488 = vmatpush2.xpose.msra.mxu0 0.0
    %4489 = vmatprep.subr.mxu0 0.0
    %4490 = vmatpush2.xpose.msra.mxu0 0.0
    %4491 = vmatprep.subr.mxu0 0.0
    %4492 = vmatpush2.xpose.msra.mxu0 0.0
    %4493 = vmatprep.subr.mxu0 0.0
    %4494 = vmatpush2.xpose.msra.mxu0 0.0
    %4495 = vmatprep.subr.mxu0 0.0
    %4496 = vmatpush2.xpose.msra.mxu0 0.0
    %4497 = vmatprep.mubr.f32.mxu0 0.0
    %4498 = vmatmul.mubr.f32.gmra.mxu0 %v4429
    %v4499 = vpop.f32.mrf.mxu0
    %v4500 = vadd.f32 0.0, %v4499
    %v4501 = vpop.f32.mrf.mxu0
    %4502 = vdwg.mxu0
    %v4503 = vsel %vm432, %v4500, -inf
    %4504 = vmax.xlane.f32.xlu0 %v4503
    %v4505 = vpop.xlane.xlu0 %4504
    %v4506 = vsub.f32 %v4500, %v4505
    %v4507 = vmul.f32 %v4506, 1.442695
    %v4508 = vpow.pop %v4507
    %v4509 = vsel %vm432, %v4508, 0.0
    %4510 = vadd.xlane.f32.xlu0 %v4509
    %v4511 = vpop.xlane.xlu0 %4510
    %v4512 = vrcp.pop %v4511
    %v4513 = vmul.f32 %v4508, %v4512
    %4514 = vrot.lane.b32.xlu0 %v3915, 40
    %v4515 = vpop.permute.xlu0 %4514
    %v4518 = vsel %vm432, %v4513, 0
    %4520 = vmatprep.subr.mxu0 0.0
    %4521 = vmatpush1.msra.mxu0 0.0
    %4522 = vmatprep.subr.mxu0 0.0
    %4523 = vmatpush1.msra.mxu0 0.0
    %4524 = vmatprep.subr.mxu0 0.0
    %4525 = vmatpush1.msra.mxu0 0.0
    %4526 = vmatprep.subr.mxu0 0.0
    %4527 = vmatpush1.msra.mxu0 0.0
    %4528 = vmatprep.subr.mxu0 0.0
    %4529 = vmatpush1.msra.mxu0 0.0
    %4530 = vmatprep.subr.mxu0 0.0
    %4531 = vmatpush1.msra.mxu0 0.0
    %4532 = vmatprep.subr.mxu0 0.0
    %4533 = vmatpush1.msra.mxu0 0.0
    %4534 = vmatprep.subr.mxu0 0.0
    %4535 = vmatpush1.msra.mxu0 0.0
    %4536 = vmatprep.subr.mxu0 0.0
    %4537 = vmatpush1.msra.mxu0 0.0
    %4538 = vmatprep.subr.mxu0 0.0
    %4539 = vmatpush1.msra.mxu0 0.0
    %4540 = vmatprep.subr.mxu0 0.0
    %4541 = vmatpush1.msra.mxu0 0.0
    %4542 = vmatprep.subr.mxu0 0.0
    %4543 = vmatpush1.msra.mxu0 0.0
    %4544 = vmatprep.subr.mxu0 0.0
    %4545 = vmatpush1.msra.mxu0 0.0
    %4546 = vmatprep.subr.mxu0 0.0
    %4547 = vmatpush1.msra.mxu0 0.0
    %4548 = vmatprep.subr.mxu0 0.0
    %4549 = vmatpush1.msra.mxu0 0.0
    %4550 = vmatprep.subr.mxu0 0.0
    %4551 = vmatpush1.msra.mxu0 %v4515
    %4552 = vmatprep.subr.mxu0 0.0
    %4553 = vmatpush2.msra.mxu0 0.0
    %4554 = vmatprep.subr.mxu0 0.0
    %4555 = vmatpush2.msra.mxu0 0.0
    %4556 = vmatprep.subr.mxu0 0.0
    %4557 = vmatpush2.msra.mxu0 0.0
    %4558 = vmatprep.subr.mxu0 0.0
    %4559 = vmatpush2.msra.mxu0 0.0
    %4560 = vmatprep.subr.mxu0 0.0
    %4561 = vmatpush2.msra.mxu0 0.0
    %4562 = vmatprep.subr.mxu0 0.0
    %4563 = vmatpush2.msra.mxu0 0.0
    %4564 = vmatprep.subr.mxu0 0.0
    %4565 = vmatpush2.msra.mxu0 0.0
    %4566 = vmatprep.subr.mxu0 0.0
    %4567 = vmatpush2.msra.mxu0 0.0
    %4568 = vmatprep.subr.mxu0 0.0
    %4569 = vmatpush2.msra.mxu0 0.0
    %4570 = vmatprep.subr.mxu0 0.0
    %4571 = vmatpush2.msra.mxu0 0.0
    %4572 = vmatprep.subr.mxu0 0.0
    %4573 = vmatpush2.msra.mxu0 0.0
    %4574 = vmatprep.subr.mxu0 0.0
    %4575 = vmatpush2.msra.mxu0 0.0
    %4576 = vmatprep.subr.mxu0 0.0
    %4577 = vmatpush2.msra.mxu0 0.0
    %4578 = vmatprep.subr.mxu0 0.0
    %4579 = vmatpush2.msra.mxu0 0.0
    %4580 = vmatprep.subr.mxu0 0.0
    %4581 = vmatpush2.msra.mxu0 0.0
    %4582 = vmatprep.subr.mxu0 0.0
    %4583 = vmatpush2.msra.mxu0 0.0
    %4584 = vmatprep.mubr.f32.mxu0 0.0
    %4585 = vmatmul.mubr.f32.gmra.mxu0 %v4518
    %v4586 = vpop.f32.mrf.mxu0
    %v4587 = vadd.f32 0.0, %v4586
    %v4588 = vpop.f32.mrf.mxu0
    %4589 = vdwg.mxu0
    %4591 = vrot.lane.b32.xlu0 %v4257, 8
    %v4592 = vpop.permute.xlu0 %4591
    %4595 = vrot.lane.b32.xlu0 %v4422, 16
    %v4596 = vpop.permute.xlu0 %4595
    %4599 = vrot.lane.b32.xlu0 %v4587, 24
    %v4600 = vpop.permute.xlu0 %4599
    %v4602 = vsel %vm432, %v4092, %v4592
    %v4603 = vsel %vm1104, %v4602, %v4596
    %v4604 = vsel %vm1106, %v4603, %v4600
    %4606 = vrot.lane.b32.xlu0 %v3928, 96
    %v4607 = vpop.permute.xlu0 %4606
    %v4609 = vsel %vm432, %v3926, 0
    %v4611 = vsel %vm432, %v4607, 0
    %4613 = vmatprep.subr.mxu0 0.0
    %4614 = vmatpush1.xpose.msra.mxu0 0.0
    %4615 = vmatprep.subr.mxu0 0.0
    %4616 = vmatpush1.xpose.msra.mxu0 0.0
    %4617 = vmatprep.subr.mxu0 0.0
    %4618 = vmatpush1.xpose.msra.mxu0 0.0
    %4619 = vmatprep.subr.mxu0 0.0
    %4620 = vmatpush1.xpose.msra.mxu0 0.0
    %4621 = vmatprep.subr.mxu0 0.0
    %4622 = vmatpush1.xpose.msra.mxu0 0.0
    %4623 = vmatprep.subr.mxu0 0.0
    %4624 = vmatpush1.xpose.msra.mxu0 0.0
    %4625 = vmatprep.subr.mxu0 0.0
    %4626 = vmatpush1.xpose.msra.mxu0 0.0
    %4627 = vmatprep.subr.mxu0 0.0
    %4628 = vmatpush1.xpose.msra.mxu0 0.0
    %4629 = vmatprep.subr.mxu0 0.0
    %4630 = vmatpush1.xpose.msra.mxu0 0.0
    %4631 = vmatprep.subr.mxu0 0.0
    %4632 = vmatpush1.xpose.msra.mxu0 0.0
    %4633 = vmatprep.subr.mxu0 0.0
    %4634 = vmatpush1.xpose.msra.mxu0 0.0
    %4635 = vmatprep.subr.mxu0 0.0
    %4636 = vmatpush1.xpose.msra.mxu0 0.0
    %4637 = vmatprep.subr.mxu0 0.0
    %4638 = vmatpush1.xpose.msra.mxu0 0.0
    %4639 = vmatprep.subr.mxu0 0.0
    %4640 = vmatpush1.xpose.msra.mxu0 0.0
    %4641 = vmatprep.subr.mxu0 0.0
    %4642 = vmatpush1.xpose.msra.mxu0 0.0
    %4643 = vmatprep.subr.mxu0 0.0
    %4644 = vmatpush1.xpose.msra.mxu0 %v4611
    %4645 = vmatprep.subr.mxu0 0.0
    %4646 = vmatpush2.xpose.msra.mxu0 0.0
    %4647 = vmatprep.subr.mxu0 0.0
    %4648 = vmatpush2.xpose.msra.mxu0 0.0
    %4649 = vmatprep.subr.mxu0 0.0
    %4650 = vmatpush2.xpose.msra.mxu0 0.0
    %4651 = vmatprep.subr.mxu0 0.0
    %4652 = vmatpush2.xpose.msra.mxu0 0.0
    %4653 = vmatprep.subr.mxu0 0.0
    %4654 = vmatpush2.xpose.msra.mxu0 0.0
    %4655 = vmatprep.subr.mxu0 0.0
    %4656 = vmatpush2.xpose.msra.mxu0 0.0
    %4657 = vmatprep.subr.mxu0 0.0
    %4658 = vmatpush2.xpose.msra.mxu0 0.0
    %4659 = vmatprep.subr.mxu0 0.0
    %4660 = vmatpush2.xpose.msra.mxu0 0.0
    %4661 = vmatprep.subr.mxu0 0.0
    %4662 = vmatpush2.xpose.msra.mxu0 0.0
    %4663 = vmatprep.subr.mxu0 0.0
    %4664 = vmatpush2.xpose.msra.mxu0 0.0
    %4665 = vmatprep.subr.mxu0 0.0
    %4666 = vmatpush2.xpose.msra.mxu0 0.0
    %4667 = vmatprep.subr.mxu0 0.0
    %4668 = vmatpush2.xpose.msra.mxu0 0.0
    %4669 = vmatprep.subr.mxu0 0.0
    %4670 = vmatpush2.xpose.msra.mxu0 0.0
    %4671 = vmatprep.subr.mxu0 0.0
    %4672 = vmatpush2.xpose.msra.mxu0 0.0
    %4673 = vmatprep.subr.mxu0 0.0
    %4674 = vmatpush2.xpose.msra.mxu0 0.0
    %4675 = vmatprep.subr.mxu0 0.0
    %4676 = vmatpush2.xpose.msra.mxu0 0.0
    %4677 = vmatprep.mubr.f32.mxu0 0.0
    %4678 = vmatmul.mubr.f32.gmra.mxu0 %v4609
    %v4679 = vpop.f32.mrf.mxu0
    %v4680 = vadd.f32 0.0, %v4679
    %v4681 = vpop.f32.mrf.mxu0
    %4682 = vdwg.mxu0
    %v4683 = vsel %vm432, %v4680, -inf
    %4684 = vmax.xlane.f32.xlu0 %v4683
    %v4685 = vpop.xlane.xlu0 %4684
    %v4686 = vsub.f32 %v4680, %v4685
    %v4687 = vmul.f32 %v4686, 1.442695
    %v4688 = vpow.pop %v4687
    %v4689 = vsel %vm432, %v4688, 0.0
    %4690 = vadd.xlane.f32.xlu0 %v4689
    %v4691 = vpop.xlane.xlu0 %4690
    %v4692 = vrcp.pop %v4691
    %v4693 = vmul.f32 %v4688, %v4692
    %4695 = vrot.lane.b32.xlu0 %v3920, 64
    %v4696 = vpop.permute.xlu0 %4695
    %v4699 = vsel %vm432, %v4693, 0
    %4701 = vmatprep.subr.mxu0 0.0
    %4702 = vmatpush1.msra.mxu0 0.0
    %4703 = vmatprep.subr.mxu0 0.0
    %4704 = vmatpush1.msra.mxu0 0.0
    %4705 = vmatprep.subr.mxu0 0.0
    %4706 = vmatpush1.msra.mxu0 0.0
    %4707 = vmatprep.subr.mxu0 0.0
    %4708 = vmatpush1.msra.mxu0 0.0
    %4709 = vmatprep.subr.mxu0 0.0
    %4710 = vmatpush1.msra.mxu0 0.0
    %4711 = vmatprep.subr.mxu0 0.0
    %4712 = vmatpush1.msra.mxu0 0.0
    %4713 = vmatprep.subr.mxu0 0.0
    %4714 = vmatpush1.msra.mxu0 0.0
    %4715 = vmatprep.subr.mxu0 0.0
    %4716 = vmatpush1.msra.mxu0 0.0
    %4717 = vmatprep.subr.mxu0 0.0
    %4718 = vmatpush1.msra.mxu0 0.0
    %4719 = vmatprep.subr.mxu0 0.0
    %4720 = vmatpush1.msra.mxu0 0.0
    %4721 = vmatprep.subr.mxu0 0.0
    %4722 = vmatpush1.msra.mxu0 0.0
    %4723 = vmatprep.subr.mxu0 0.0
    %4724 = vmatpush1.msra.mxu0 0.0
    %4725 = vmatprep.subr.mxu0 0.0
    %4726 = vmatpush1.msra.mxu0 0.0
    %4727 = vmatprep.subr.mxu0 0.0
    %4728 = vmatpush1.msra.mxu0 0.0
    %4729 = vmatprep.subr.mxu0 0.0
    %4730 = vmatpush1.msra.mxu0 0.0
    %4731 = vmatprep.subr.mxu0 0.0
    %4732 = vmatpush1.msra.mxu0 %v4696
    %4733 = vmatprep.subr.mxu0 0.0
    %4734 = vmatpush2.msra.mxu0 0.0
    %4735 = vmatprep.subr.mxu0 0.0
    %4736 = vmatpush2.msra.mxu0 0.0
    %4737 = vmatprep.subr.mxu0 0.0
    %4738 = vmatpush2.msra.mxu0 0.0
    %4739 = vmatprep.subr.mxu0 0.0
    %4740 = vmatpush2.msra.mxu0 0.0
    %4741 = vmatprep.subr.mxu0 0.0
    %4742 = vmatpush2.msra.mxu0 0.0
    %4743 = vmatprep.subr.mxu0 0.0
    %4744 = vmatpush2.msra.mxu0 0.0
    %4745 = vmatprep.subr.mxu0 0.0
    %4746 = vmatpush2.msra.mxu0 0.0
    %4747 = vmatprep.subr.mxu0 0.0
    %4748 = vmatpush2.msra.mxu0 0.0
    %4749 = vmatprep.subr.mxu0 0.0
    %4750 = vmatpush2.msra.mxu0 0.0
    %4751 = vmatprep.subr.mxu0 0.0
    %4752 = vmatpush2.msra.mxu0 0.0
    %4753 = vmatprep.subr.mxu0 0.0
    %4754 = vmatpush2.msra.mxu0 0.0
    %4755 = vmatprep.subr.mxu0 0.0
    %4756 = vmatpush2.msra.mxu0 0.0
    %4757 = vmatprep.subr.mxu0 0.0
    %4758 = vmatpush2.msra.mxu0 0.0
    %4759 = vmatprep.subr.mxu0 0.0
    %4760 = vmatpush2.msra.mxu0 0.0
    %4761 = vmatprep.subr.mxu0 0.0
    %4762 = vmatpush2.msra.mxu0 0.0
    %4763 = vmatprep.subr.mxu0 0.0
    %4764 = vmatpush2.msra.mxu0 0.0
    %4765 = vmatprep.mubr.f32.mxu0 0.0
    %4766 = vmatmul.mubr.f32.gmra.mxu0 %v4699
    %v4767 = vpop.f32.mrf.mxu0
    %v4768 = vadd.f32 0.0, %v4767
    %v4769 = vpop.f32.mrf.mxu0
    %4770 = vdwg.mxu0
    %4771 = vrot.lane.b32.xlu0 %v3926, 120
    %v4772 = vpop.permute.xlu0 %4771
    %4773 = vrot.lane.b32.xlu0 %v3928, 88
    %v4774 = vpop.permute.xlu0 %4773
    %v4775 = vsel %vm432, %v4772, 0
    %v4777 = vsel %vm432, %v4774, 0
    %4779 = vmatprep.subr.mxu0 0.0
    %4780 = vmatpush1.xpose.msra.mxu0 0.0
    %4781 = vmatprep.subr.mxu0 0.0
    %4782 = vmatpush1.xpose.msra.mxu0 0.0
    %4783 = vmatprep.subr.mxu0 0.0
    %4784 = vmatpush1.xpose.msra.mxu0 0.0
    %4785 = vmatprep.subr.mxu0 0.0
    %4786 = vmatpush1.xpose.msra.mxu0 0.0
    %4787 = vmatprep.subr.mxu0 0.0
    %4788 = vmatpush1.xpose.msra.mxu0 0.0
    %4789 = vmatprep.subr.mxu0 0.0
    %4790 = vmatpush1.xpose.msra.mxu0 0.0
    %4791 = vmatprep.subr.mxu0 0.0
    %4792 = vmatpush1.xpose.msra.mxu0 0.0
    %4793 = vmatprep.subr.mxu0 0.0
    %4794 = vmatpush1.xpose.msra.mxu0 0.0
    %4795 = vmatprep.subr.mxu0 0.0
    %4796 = vmatpush1.xpose.msra.mxu0 0.0
    %4797 = vmatprep.subr.mxu0 0.0
    %4798 = vmatpush1.xpose.msra.mxu0 0.0
    %4799 = vmatprep.subr.mxu0 0.0
    %4800 = vmatpush1.xpose.msra.mxu0 0.0
    %4801 = vmatprep.subr.mxu0 0.0
    %4802 = vmatpush1.xpose.msra.mxu0 0.0
    %4803 = vmatprep.subr.mxu0 0.0
    %4804 = vmatpush1.xpose.msra.mxu0 0.0
    %4805 = vmatprep.subr.mxu0 0.0
    %4806 = vmatpush1.xpose.msra.mxu0 0.0
    %4807 = vmatprep.subr.mxu0 0.0
    %4808 = vmatpush1.xpose.msra.mxu0 0.0
    %4809 = vmatprep.subr.mxu0 0.0
    %4810 = vmatpush1.xpose.msra.mxu0 %v4777
    %4811 = vmatprep.subr.mxu0 0.0
    %4812 = vmatpush2.xpose.msra.mxu0 0.0
    %4813 = vmatprep.subr.mxu0 0.0
    %4814 = vmatpush2.xpose.msra.mxu0 0.0
    %4815 = vmatprep.subr.mxu0 0.0
    %4816 = vmatpush2.xpose.msra.mxu0 0.0
    %4817 = vmatprep.subr.mxu0 0.0
    %4818 = vmatpush2.xpose.msra.mxu0 0.0
    %4819 = vmatprep.subr.mxu0 0.0
    %4820 = vmatpush2.xpose.msra.mxu0 0.0
    %4821 = vmatprep.subr.mxu0 0.0
    %4822 = vmatpush2.xpose.msra.mxu0 0.0
    %4823 = vmatprep.subr.mxu0 0.0
    %4824 = vmatpush2.xpose.msra.mxu0 0.0
    %4825 = vmatprep.subr.mxu0 0.0
    %4826 = vmatpush2.xpose.msra.mxu0 0.0
    %4827 = vmatprep.subr.mxu0 0.0
    %4828 = vmatpush2.xpose.msra.mxu0 0.0
    %4829 = vmatprep.subr.mxu0 0.0
    %4830 = vmatpush2.xpose.msra.mxu0 0.0
    %4831 = vmatprep.subr.mxu0 0.0
    %4832 = vmatpush2.xpose.msra.mxu0 0.0
    %4833 = vmatprep.subr.mxu0 0.0
    %4834 = vmatpush2.xpose.msra.mxu0 0.0
    %4835 = vmatprep.subr.mxu0 0.0
    %4836 = vmatpush2.xpose.msra.mxu0 0.0
    %4837 = vmatprep.subr.mxu0 0.0
    %4838 = vmatpush2.xpose.msra.mxu0 0.0
    %4839 = vmatprep.subr.mxu0 0.0
    %4840 = vmatpush2.xpose.msra.mxu0 0.0
    %4841 = vmatprep.subr.mxu0 0.0
    %4842 = vmatpush2.xpose.msra.mxu0 0.0
    %4843 = vmatprep.mubr.f32.mxu0 0.0
    %4844 = vmatmul.mubr.f32.gmra.mxu0 %v4775
    %v4845 = vpop.f32.mrf.mxu0
    %v4846 = vadd.f32 0.0, %v4845
    %v4847 = vpop.f32.mrf.mxu0
    %4848 = vdwg.mxu0
    %v4849 = vsel %vm432, %v4846, -inf
    %4850 = vmax.xlane.f32.xlu0 %v4849
    %v4851 = vpop.xlane.xlu0 %4850
    %v4852 = vsub.f32 %v4846, %v4851
    %v4853 = vmul.f32 %v4852, 1.442695
    %v4854 = vpow.pop %v4853
    %v4855 = vsel %vm432, %v4854, 0.0
    %4856 = vadd.xlane.f32.xlu0 %v4855
    %v4857 = vpop.xlane.xlu0 %4856
    %v4858 = vrcp.pop %v4857
    %v4859 = vmul.f32 %v4854, %v4858
    %4860 = vrot.lane.b32.xlu0 %v3920, 56
    %v4861 = vpop.permute.xlu0 %4860
    %v4864 = vsel %vm432, %v4859, 0
    %4866 = vmatprep.subr.mxu0 0.0
    %4867 = vmatpush1.msra.mxu0 0.0
    %4868 = vmatprep.subr.mxu0 0.0
    %4869 = vmatpush1.msra.mxu0 0.0
    %4870 = vmatprep.subr.mxu0 0.0
    %4871 = vmatpush1.msra.mxu0 0.0
    %4872 = vmatprep.subr.mxu0 0.0
    %4873 = vmatpush1.msra.mxu0 0.0
    %4874 = vmatprep.subr.mxu0 0.0
    %4875 = vmatpush1.msra.mxu0 0.0
    %4876 = vmatprep.subr.mxu0 0.0
    %4877 = vmatpush1.msra.mxu0 0.0
    %4878 = vmatprep.subr.mxu0 0.0
    %4879 = vmatpush1.msra.mxu0 0.0
    %4880 = vmatprep.subr.mxu0 0.0
    %4881 = vmatpush1.msra.mxu0 0.0
    %4882 = vmatprep.subr.mxu0 0.0
    %4883 = vmatpush1.msra.mxu0 0.0
    %4884 = vmatprep.subr.mxu0 0.0
    %4885 = vmatpush1.msra.mxu0 0.0
    %4886 = vmatprep.subr.mxu0 0.0
    %4887 = vmatpush1.msra.mxu0 0.0
    %4888 = vmatprep.subr.mxu0 0.0
    %4889 = vmatpush1.msra.mxu0 0.0
    %4890 = vmatprep.subr.mxu0 0.0
    %4891 = vmatpush1.msra.mxu0 0.0
    %4892 = vmatprep.subr.mxu0 0.0
    %4893 = vmatpush1.msra.mxu0 0.0
    %4894 = vmatprep.subr.mxu0 0.0
    %4895 = vmatpush1.msra.mxu0 0.0
    %4896 = vmatprep.subr.mxu0 0.0
    %4897 = vmatpush1.msra.mxu0 %v4861
    %4898 = vmatprep.subr.mxu0 0.0
    %4899 = vmatpush2.msra.mxu0 0.0
    %4900 = vmatprep.subr.mxu0 0.0
    %4901 = vmatpush2.msra.mxu0 0.0
    %4902 = vmatprep.subr.mxu0 0.0
    %4903 = vmatpush2.msra.mxu0 0.0
    %4904 = vmatprep.subr.mxu0 0.0
    %4905 = vmatpush2.msra.mxu0 0.0
    %4906 = vmatprep.subr.mxu0 0.0
    %4907 = vmatpush2.msra.mxu0 0.0
    %4908 = vmatprep.subr.mxu0 0.0
    %4909 = vmatpush2.msra.mxu0 0.0
    %4910 = vmatprep.subr.mxu0 0.0
    %4911 = vmatpush2.msra.mxu0 0.0
    %4912 = vmatprep.subr.mxu0 0.0
    %4913 = vmatpush2.msra.mxu0 0.0
    %4914 = vmatprep.subr.mxu0 0.0
    %4915 = vmatpush2.msra.mxu0 0.0
    %4916 = vmatprep.subr.mxu0 0.0
    %4917 = vmatpush2.msra.mxu0 0.0
    %4918 = vmatprep.subr.mxu0 0.0
    %4919 = vmatpush2.msra.mxu0 0.0
    %4920 = vmatprep.subr.mxu0 0.0
    %4921 = vmatpush2.msra.mxu0 0.0
    %4922 = vmatprep.subr.mxu0 0.0
    %4923 = vmatpush2.msra.mxu0 0.0
    %4924 = vmatprep.subr.mxu0 0.0
    %4925 = vmatpush2.msra.mxu0 0.0
    %4926 = vmatprep.subr.mxu0 0.0
    %4927 = vmatpush2.msra.mxu0 0.0
    %4928 = vmatprep.subr.mxu0 0.0
    %4929 = vmatpush2.msra.mxu0 0.0
    %4930 = vmatprep.mubr.f32.mxu0 0.0
    %4931 = vmatmul.mubr.f32.gmra.mxu0 %v4864
    %v4932 = vpop.f32.mrf.mxu0
    %v4933 = vadd.f32 0.0, %v4932
    %v4934 = vpop.f32.mrf.mxu0
    %4935 = vdwg.mxu0
    %4936 = vrot.lane.b32.xlu0 %v3926, 112
    %v4937 = vpop.permute.xlu0 %4936
    %4938 = vrot.lane.b32.xlu0 %v3928, 80
    %v4939 = vpop.permute.xlu0 %4938
    %v4940 = vsel %vm432, %v4937, 0
    %v4942 = vsel %vm432, %v4939, 0
    %4944 = vmatprep.subr.mxu0 0.0
    %4945 = vmatpush1.xpose.msra.mxu0 0.0
    %4946 = vmatprep.subr.mxu0 0.0
    %4947 = vmatpush1.xpose.msra.mxu0 0.0
    %4948 = vmatprep.subr.mxu0 0.0
    %4949 = vmatpush1.xpose.msra.mxu0 0.0
    %4950 = vmatprep.subr.mxu0 0.0
    %4951 = vmatpush1.xpose.msra.mxu0 0.0
    %4952 = vmatprep.subr.mxu0 0.0
    %4953 = vmatpush1.xpose.msra.mxu0 0.0
    %4954 = vmatprep.subr.mxu0 0.0
    %4955 = vmatpush1.xpose.msra.mxu0 0.0
    %4956 = vmatprep.subr.mxu0 0.0
    %4957 = vmatpush1.xpose.msra.mxu0 0.0
    %4958 = vmatprep.subr.mxu0 0.0
    %4959 = vmatpush1.xpose.msra.mxu0 0.0
    %4960 = vmatprep.subr.mxu0 0.0
    %4961 = vmatpush1.xpose.msra.mxu0 0.0
    %4962 = vmatprep.subr.mxu0 0.0
    %4963 = vmatpush1.xpose.msra.mxu0 0.0
    %4964 = vmatprep.subr.mxu0 0.0
    %4965 = vmatpush1.xpose.msra.mxu0 0.0
    %4966 = vmatprep.subr.mxu0 0.0
    %4967 = vmatpush1.xpose.msra.mxu0 0.0
    %4968 = vmatprep.subr.mxu0 0.0
    %4969 = vmatpush1.xpose.msra.mxu0 0.0
    %4970 = vmatprep.subr.mxu0 0.0
    %4971 = vmatpush1.xpose.msra.mxu0 0.0
    %4972 = vmatprep.subr.mxu0 0.0
    %4973 = vmatpush1.xpose.msra.mxu0 0.0
    %4974 = vmatprep.subr.mxu0 0.0
    %4975 = vmatpush1.xpose.msra.mxu0 %v4942
    %4976 = vmatprep.subr.mxu0 0.0
    %4977 = vmatpush2.xpose.msra.mxu0 0.0
    %4978 = vmatprep.subr.mxu0 0.0
    %4979 = vmatpush2.xpose.msra.mxu0 0.0
    %4980 = vmatprep.subr.mxu0 0.0
    %4981 = vmatpush2.xpose.msra.mxu0 0.0
    %4982 = vmatprep.subr.mxu0 0.0
    %4983 = vmatpush2.xpose.msra.mxu0 0.0
    %4984 = vmatprep.subr.mxu0 0.0
    %4985 = vmatpush2.xpose.msra.mxu0 0.0
    %4986 = vmatprep.subr.mxu0 0.0
    %4987 = vmatpush2.xpose.msra.mxu0 0.0
    %4988 = vmatprep.subr.mxu0 0.0
    %4989 = vmatpush2.xpose.msra.mxu0 0.0
    %4990 = vmatprep.subr.mxu0 0.0
    %4991 = vmatpush2.xpose.msra.mxu0 0.0
    %4992 = vmatprep.subr.mxu0 0.0
    %4993 = vmatpush2.xpose.msra.mxu0 0.0
    %4994 = vmatprep.subr.mxu0 0.0
    %4995 = vmatpush2.xpose.msra.mxu0 0.0
    %4996 = vmatprep.subr.mxu0 0.0
    %4997 = vmatpush2.xpose.msra.mxu0 0.0
    %4998 = vmatprep.subr.mxu0 0.0
    %4999 = vmatpush2.xpose.msra.mxu0 0.0
    %5000 = vmatprep.subr.mxu0 0.0
    %5001 = vmatpush2.xpose.msra.mxu0 0.0
    %5002 = vmatprep.subr.mxu0 0.0
    %5003 = vmatpush2.xpose.msra.mxu0 0.0
    %5004 = vmatprep.subr.mxu0 0.0
    %5005 = vmatpush2.xpose.msra.mxu0 0.0
    %5006 = vmatprep.subr.mxu0 0.0
    %5007 = vmatpush2.xpose.msra.mxu0 0.0
    %5008 = vmatprep.mubr.f32.mxu0 0.0
    %5009 = vmatmul.mubr.f32.gmra.mxu0 %v4940
    %v5010 = vpop.f32.mrf.mxu0
    %v5011 = vadd.f32 0.0, %v5010
    %v5012 = vpop.f32.mrf.mxu0
    %5013 = vdwg.mxu0
    %v5014 = vsel %vm432, %v5011, -inf
    %5015 = vmax.xlane.f32.xlu0 %v5014
    %v5016 = vpop.xlane.xlu0 %5015
    %v5017 = vsub.f32 %v5011, %v5016
    %v5018 = vmul.f32 %v5017, 1.442695
    %v5019 = vpow.pop %v5018
    %v5020 = vsel %vm432, %v5019, 0.0
    %5021 = vadd.xlane.f32.xlu0 %v5020
    %v5022 = vpop.xlane.xlu0 %5021
    %v5023 = vrcp.pop %v5022
    %v5024 = vmul.f32 %v5019, %v5023
    %5025 = vrot.lane.b32.xlu0 %v3920, 48
    %v5026 = vpop.permute.xlu0 %5025
    %v5029 = vsel %vm432, %v5024, 0
    %5031 = vmatprep.subr.mxu0 0.0
    %5032 = vmatpush1.msra.mxu0 0.0
    %5033 = vmatprep.subr.mxu0 0.0
    %5034 = vmatpush1.msra.mxu0 0.0
    %5035 = vmatprep.subr.mxu0 0.0
    %5036 = vmatpush1.msra.mxu0 0.0
    %5037 = vmatprep.subr.mxu0 0.0
    %5038 = vmatpush1.msra.mxu0 0.0
    %5039 = vmatprep.subr.mxu0 0.0
    %5040 = vmatpush1.msra.mxu0 0.0
    %5041 = vmatprep.subr.mxu0 0.0
    %5042 = vmatpush1.msra.mxu0 0.0
    %5043 = vmatprep.subr.mxu0 0.0
    %5044 = vmatpush1.msra.mxu0 0.0
    %5045 = vmatprep.subr.mxu0 0.0
    %5046 = vmatpush1.msra.mxu0 0.0
    %5047 = vmatprep.subr.mxu0 0.0
    %5048 = vmatpush1.msra.mxu0 0.0
    %5049 = vmatprep.subr.mxu0 0.0
    %5050 = vmatpush1.msra.mxu0 0.0
    %5051 = vmatprep.subr.mxu0 0.0
    %5052 = vmatpush1.msra.mxu0 0.0
    %5053 = vmatprep.subr.mxu0 0.0
    %5054 = vmatpush1.msra.mxu0 0.0
    %5055 = vmatprep.subr.mxu0 0.0
    %5056 = vmatpush1.msra.mxu0 0.0
    %5057 = vmatprep.subr.mxu0 0.0
    %5058 = vmatpush1.msra.mxu0 0.0
    %5059 = vmatprep.subr.mxu0 0.0
    %5060 = vmatpush1.msra.mxu0 0.0
    %5061 = vmatprep.subr.mxu0 0.0
    %5062 = vmatpush1.msra.mxu0 %v5026
    %5063 = vmatprep.subr.mxu0 0.0
    %5064 = vmatpush2.msra.mxu0 0.0
    %5065 = vmatprep.subr.mxu0 0.0
    %5066 = vmatpush2.msra.mxu0 0.0
    %5067 = vmatprep.subr.mxu0 0.0
    %5068 = vmatpush2.msra.mxu0 0.0
    %5069 = vmatprep.subr.mxu0 0.0
    %5070 = vmatpush2.msra.mxu0 0.0
    %5071 = vmatprep.subr.mxu0 0.0
    %5072 = vmatpush2.msra.mxu0 0.0
    %5073 = vmatprep.subr.mxu0 0.0
    %5074 = vmatpush2.msra.mxu0 0.0
    %5075 = vmatprep.subr.mxu0 0.0
    %5076 = vmatpush2.msra.mxu0 0.0
    %5077 = vmatprep.subr.mxu0 0.0
    %5078 = vmatpush2.msra.mxu0 0.0
    %5079 = vmatprep.subr.mxu0 0.0
    %5080 = vmatpush2.msra.mxu0 0.0
    %5081 = vmatprep.subr.mxu0 0.0
    %5082 = vmatpush2.msra.mxu0 0.0
    %5083 = vmatprep.subr.mxu0 0.0
    %5084 = vmatpush2.msra.mxu0 0.0
    %5085 = vmatprep.subr.mxu0 0.0
    %5086 = vmatpush2.msra.mxu0 0.0
    %5087 = vmatprep.subr.mxu0 0.0
    %5088 = vmatpush2.msra.mxu0 0.0
    %5089 = vmatprep.subr.mxu0 0.0
    %5090 = vmatpush2.msra.mxu0 0.0
    %5091 = vmatprep.subr.mxu0 0.0
    %5092 = vmatpush2.msra.mxu0 0.0
    %5093 = vmatprep.subr.mxu0 0.0
    %5094 = vmatpush2.msra.mxu0 0.0
    %5095 = vmatprep.mubr.f32.mxu0 0.0
    %5096 = vmatmul.mubr.f32.gmra.mxu0 %v5029
    %v5097 = vpop.f32.mrf.mxu0
    %v5098 = vadd.f32 0.0, %v5097
    %v5099 = vpop.f32.mrf.mxu0
    %5100 = vdwg.mxu0
    %5101 = vrot.lane.b32.xlu0 %v3926, 104
    %v5102 = vpop.permute.xlu0 %5101
    %5103 = vrot.lane.b32.xlu0 %v3928, 72
    %v5104 = vpop.permute.xlu0 %5103
    %v5105 = vsel %vm432, %v5102, 0
    %v5107 = vsel %vm432, %v5104, 0
    %5109 = vmatprep.subr.mxu0 0.0
    %5110 = vmatpush1.xpose.msra.mxu0 0.0
    %5111 = vmatprep.subr.mxu0 0.0
    %5112 = vmatpush1.xpose.msra.mxu0 0.0
    %5113 = vmatprep.subr.mxu0 0.0
    %5114 = vmatpush1.xpose.msra.mxu0 0.0
    %5115 = vmatprep.subr.mxu0 0.0
    %5116 = vmatpush1.xpose.msra.mxu0 0.0
    %5117 = vmatprep.subr.mxu0 0.0
    %5118 = vmatpush1.xpose.msra.mxu0 0.0
    %5119 = vmatprep.subr.mxu0 0.0
    %5120 = vmatpush1.xpose.msra.mxu0 0.0
    %5121 = vmatprep.subr.mxu0 0.0
    %5122 = vmatpush1.xpose.msra.mxu0 0.0
    %5123 = vmatprep.subr.mxu0 0.0
    %5124 = vmatpush1.xpose.msra.mxu0 0.0
    %5125 = vmatprep.subr.mxu0 0.0
    %5126 = vmatpush1.xpose.msra.mxu0 0.0
    %5127 = vmatprep.subr.mxu0 0.0
    %5128 = vmatpush1.xpose.msra.mxu0 0.0
    %5129 = vmatprep.subr.mxu0 0.0
    %5130 = vmatpush1.xpose.msra.mxu0 0.0
    %5131 = vmatprep.subr.mxu0 0.0
    %5132 = vmatpush1.xpose.msra.mxu0 0.0
    %5133 = vmatprep.subr.mxu0 0.0
    %5134 = vmatpush1.xpose.msra.mxu0 0.0
    %5135 = vmatprep.subr.mxu0 0.0
    %5136 = vmatpush1.xpose.msra.mxu0 0.0
    %5137 = vmatprep.subr.mxu0 0.0
    %5138 = vmatpush1.xpose.msra.mxu0 0.0
    %5139 = vmatprep.subr.mxu0 0.0
    %5140 = vmatpush1.xpose.msra.mxu0 %v5107
    %5141 = vmatprep.subr.mxu0 0.0
    %5142 = vmatpush2.xpose.msra.mxu0 0.0
    %5143 = vmatprep.subr.mxu0 0.0
    %5144 = vmatpush2.xpose.msra.mxu0 0.0
    %5145 = vmatprep.subr.mxu0 0.0
    %5146 = vmatpush2.xpose.msra.mxu0 0.0
    %5147 = vmatprep.subr.mxu0 0.0
    %5148 = vmatpush2.xpose.msra.mxu0 0.0
    %5149 = vmatprep.subr.mxu0 0.0
    %5150 = vmatpush2.xpose.msra.mxu0 0.0
    %5151 = vmatprep.subr.mxu0 0.0
    %5152 = vmatpush2.xpose.msra.mxu0 0.0
    %5153 = vmatprep.subr.mxu0 0.0
    %5154 = vmatpush2.xpose.msra.mxu0 0.0
    %5155 = vmatprep.subr.mxu0 0.0
    %5156 = vmatpush2.xpose.msra.mxu0 0.0
    %5157 = vmatprep.subr.mxu0 0.0
    %5158 = vmatpush2.xpose.msra.mxu0 0.0
    %5159 = vmatprep.subr.mxu0 0.0
    %5160 = vmatpush2.xpose.msra.mxu0 0.0
    %5161 = vmatprep.subr.mxu0 0.0
    %5162 = vmatpush2.xpose.msra.mxu0 0.0
    %5163 = vmatprep.subr.mxu0 0.0
    %5164 = vmatpush2.xpose.msra.mxu0 0.0
    %5165 = vmatprep.subr.mxu0 0.0
    %5166 = vmatpush2.xpose.msra.mxu0 0.0
    %5167 = vmatprep.subr.mxu0 0.0
    %5168 = vmatpush2.xpose.msra.mxu0 0.0
    %5169 = vmatprep.subr.mxu0 0.0
    %5170 = vmatpush2.xpose.msra.mxu0 0.0
    %5171 = vmatprep.subr.mxu0 0.0
    %5172 = vmatpush2.xpose.msra.mxu0 0.0
    %5173 = vmatprep.mubr.f32.mxu0 0.0
    %5174 = vmatmul.mubr.f32.gmra.mxu0 %v5105
    %v5175 = vpop.f32.mrf.mxu0
    %v5176 = vadd.f32 0.0, %v5175
    %v5177 = vpop.f32.mrf.mxu0
    %5178 = vdwg.mxu0
    %v5179 = vsel %vm432, %v5176, -inf
    %5180 = vmax.xlane.f32.xlu0 %v5179
    %v5181 = vpop.xlane.xlu0 %5180
    %v5182 = vsub.f32 %v5176, %v5181
    %v5183 = vmul.f32 %v5182, 1.442695
    %v5184 = vpow.pop %v5183
    %v5185 = vsel %vm432, %v5184, 0.0
    %5186 = vadd.xlane.f32.xlu0 %v5185
    %v5187 = vpop.xlane.xlu0 %5186
    %v5188 = vrcp.pop %v5187
    %v5189 = vmul.f32 %v5184, %v5188
    %5190 = vrot.lane.b32.xlu0 %v3920, 40
    %v5191 = vpop.permute.xlu0 %5190
    %v5194 = vsel %vm432, %v5189, 0
    %5196 = vmatprep.subr.mxu0 0.0
    %5197 = vmatpush1.msra.mxu0 0.0
    %5198 = vmatprep.subr.mxu0 0.0
    %5199 = vmatpush1.msra.mxu0 0.0
    %5200 = vmatprep.subr.mxu0 0.0
    %5201 = vmatpush1.msra.mxu0 0.0
    %5202 = vmatprep.subr.mxu0 0.0
    %5203 = vmatpush1.msra.mxu0 0.0
    %5204 = vmatprep.subr.mxu0 0.0
    %5205 = vmatpush1.msra.mxu0 0.0
    %5206 = vmatprep.subr.mxu0 0.0
    %5207 = vmatpush1.msra.mxu0 0.0
    %5208 = vmatprep.subr.mxu0 0.0
    %5209 = vmatpush1.msra.mxu0 0.0
    %5210 = vmatprep.subr.mxu0 0.0
    %5211 = vmatpush1.msra.mxu0 0.0
    %5212 = vmatprep.subr.mxu0 0.0
    %5213 = vmatpush1.msra.mxu0 0.0
    %5214 = vmatprep.subr.mxu0 0.0
    %5215 = vmatpush1.msra.mxu0 0.0
    %5216 = vmatprep.subr.mxu0 0.0
    %5217 = vmatpush1.msra.mxu0 0.0
    %5218 = vmatprep.subr.mxu0 0.0
    %5219 = vmatpush1.msra.mxu0 0.0
    %5220 = vmatprep.subr.mxu0 0.0
    %5221 = vmatpush1.msra.mxu0 0.0
    %5222 = vmatprep.subr.mxu0 0.0
    %5223 = vmatpush1.msra.mxu0 0.0
    %5224 = vmatprep.subr.mxu0 0.0
    %5225 = vmatpush1.msra.mxu0 0.0
    %5226 = vmatprep.subr.mxu0 0.0
    %5227 = vmatpush1.msra.mxu0 %v5191
    %5228 = vmatprep.subr.mxu0 0.0
    %5229 = vmatpush2.msra.mxu0 0.0
    %5230 = vmatprep.subr.mxu0 0.0
    %5231 = vmatpush2.msra.mxu0 0.0
    %5232 = vmatprep.subr.mxu0 0.0
    %5233 = vmatpush2.msra.mxu0 0.0
    %5234 = vmatprep.subr.mxu0 0.0
    %5235 = vmatpush2.msra.mxu0 0.0
    %5236 = vmatprep.subr.mxu0 0.0
    %5237 = vmatpush2.msra.mxu0 0.0
    %5238 = vmatprep.subr.mxu0 0.0
    %5239 = vmatpush2.msra.mxu0 0.0
    %5240 = vmatprep.subr.mxu0 0.0
    %5241 = vmatpush2.msra.mxu0 0.0
    %5242 = vmatprep.subr.mxu0 0.0
    %5243 = vmatpush2.msra.mxu0 0.0
    %5244 = vmatprep.subr.mxu0 0.0
    %5245 = vmatpush2.msra.mxu0 0.0
    %5246 = vmatprep.subr.mxu0 0.0
    %5247 = vmatpush2.msra.mxu0 0.0
    %5248 = vmatprep.subr.mxu0 0.0
    %5249 = vmatpush2.msra.mxu0 0.0
    %5250 = vmatprep.subr.mxu0 0.0
    %5251 = vmatpush2.msra.mxu0 0.0
    %5252 = vmatprep.subr.mxu0 0.0
    %5253 = vmatpush2.msra.mxu0 0.0
    %5254 = vmatprep.subr.mxu0 0.0
    %5255 = vmatpush2.msra.mxu0 0.0
    %5256 = vmatprep.subr.mxu0 0.0
    %5257 = vmatpush2.msra.mxu0 0.0
    %5258 = vmatprep.subr.mxu0 0.0
    %5259 = vmatpush2.msra.mxu0 0.0
    %5260 = vmatprep.mubr.f32.mxu0 0.0
    %5261 = vmatmul.mubr.f32.gmra.mxu0 %v5194
    %v5262 = vpop.f32.mrf.mxu0
    %v5263 = vadd.f32 0.0, %v5262
    %v5264 = vpop.f32.mrf.mxu0
    %5265 = vdwg.mxu0
    %5267 = vrot.lane.b32.xlu0 %v4933, 8
    %v5268 = vpop.permute.xlu0 %5267
    %5271 = vrot.lane.b32.xlu0 %v5098, 16
    %v5272 = vpop.permute.xlu0 %5271
    %5275 = vrot.lane.b32.xlu0 %v5263, 24
    %v5276 = vpop.permute.xlu0 %5275
    %v5278 = vsel %vm432, %v4768, %v5268
    %v5279 = vsel %vm1104, %v5278, %v5272
    %v5280 = vsel %vm1106, %v5279, %v5276
    %v5282 = vsel %vm229, %v4604, 0
    %v5285 = vsel %vm229, %v5280, 0
    %5287 = vmatprep.subr.mxu0 0.0
    %5288 = vmatpush1.msra.mxu0 0.0
    %5289 = vmatprep.subr.mxu0 0.0
    %5290 = vmatpush1.msra.mxu0 0.0
    %5291 = vmatprep.subr.mxu0 0.0
    %5292 = vmatpush1.msra.mxu0 0.0
    %5293 = vmatprep.subr.mxu0 0.0
    %5294 = vmatpush1.msra.mxu0 0.0
    %5295 = vmatprep.subr.mxu0 0.0
    %5296 = vmatpush1.msra.mxu0 0.0
    %5297 = vmatprep.subr.mxu0 0.0
    %5298 = vmatpush1.msra.mxu0 0.0
    %5299 = vmatprep.subr.mxu0 0.0
    %5300 = vmatpush1.msra.mxu0 0.0
    %5301 = vmatprep.subr.mxu0 0.0
    %5302 = vmatpush1.msra.mxu0 0.0
    %5303 = vmatprep.subr.mxu0 0.0
    %5304 = vmatpush1.msra.mxu0 0.0
    %5305 = vmatprep.subr.mxu0 0.0
    %5306 = vmatpush1.msra.mxu0 0.0
    %5307 = vmatprep.subr.mxu0 0.0
    %5308 = vmatpush1.msra.mxu0 0.0
    %5309 = vmatprep.subr.mxu0 0.0
    %5310 = vmatpush1.msra.mxu0 0.0
    %5311 = vmatprep.subr.mxu0 0.0
    %5312 = vmatpush1.msra.mxu0 %v77
    %5313 = vmatprep.subr.mxu0 0.0
    %5314 = vmatpush1.msra.mxu0 %v76
    %5315 = vmatprep.subr.mxu0 0.0
    %5316 = vmatpush1.msra.mxu0 %v75
    %5317 = vmatprep.subr.mxu0 0.0
    %5318 = vmatpush1.msra.mxu0 %v74
    %5319 = vmatprep.subr.mxu0 0.0
    %5320 = vmatpush2.msra.mxu0 0.0
    %5321 = vmatprep.subr.mxu0 0.0
    %5322 = vmatpush2.msra.mxu0 0.0
    %5323 = vmatprep.subr.mxu0 0.0
    %5324 = vmatpush2.msra.mxu0 0.0
    %5325 = vmatprep.subr.mxu0 0.0
    %5326 = vmatpush2.msra.mxu0 0.0
    %5327 = vmatprep.subr.mxu0 0.0
    %5328 = vmatpush2.msra.mxu0 0.0
    %5329 = vmatprep.subr.mxu0 0.0
    %5330 = vmatpush2.msra.mxu0 0.0
    %5331 = vmatprep.subr.mxu0 0.0
    %5332 = vmatpush2.msra.mxu0 0.0
    %5333 = vmatprep.subr.mxu0 0.0
    %5334 = vmatpush2.msra.mxu0 0.0
    %5335 = vmatprep.subr.mxu0 0.0
    %5336 = vmatpush2.msra.mxu0 0.0
    %5337 = vmatprep.subr.mxu0 0.0
    %5338 = vmatpush2.msra.mxu0 0.0
    %5339 = vmatprep.subr.mxu0 0.0
    %5340 = vmatpush2.msra.mxu0 0.0
    %5341 = vmatprep.subr.mxu0 0.0
    %5342 = vmatpush2.msra.mxu0 0.0
    %5343 = vmatprep.subr.mxu0 0.0
    %5344 = vmatpush2.msra.mxu0 0.0
    %5345 = vmatprep.subr.mxu0 0.0
    %5346 = vmatpush2.msra.mxu0 0.0
    %5347 = vmatprep.subr.mxu0 0.0
    %5348 = vmatpush2.msra.mxu0 0.0
    %5349 = vmatprep.subr.mxu0 0.0
    %5350 = vmatpush2.msra.mxu0 0.0
    %5351 = vmatprep.mubr.f32.mxu0 0.0
    %5352 = vmatmul.mubr.f32.gmra.mxu0 %v5282
    %v5353 = vpop.f32.mrf.mxu0
    %v5354 = vadd.f32 0.0, %v5353
    %v5355 = vpop.f32.mrf.mxu0
    %5356 = vmatprep.mubr.f32.mxu0 0.0
    %5357 = vmatmul.mubr.f32.gmra.mxu0 %v5285
    %v5358 = vpop.f32.mrf.mxu0
    %v5359 = vadd.f32 0.0, %v5358
    %v5360 = vpop.f32.mrf.mxu0
    %5361 = vdwg.mxu0
    %v5362 = vadd.f32 %v3810, %v5354
    %v5363 = vadd.f32 %v3811, %v5359
    %v5364 = vsel %vm229, %v5362, 0.0
    %5365 = vadd.xlane.f32.xlu0 %v5364
    %v5366 = vpop.xlane.xlu0 %5365
    %v5367 = vsel %vm229, %v5363, 0.0
    %5368 = vadd.xlane.f32.xlu0 %v5367
    %v5369 = vpop.xlane.xlu0 %5368
    %v5370 = vmul.f32 %v5366, %v317
    %v5371 = vmul.f32 %v5369, %v317
    %v5372 = vsub.f32 %v5362, %v5370
    %v5373 = vsub.f32 %v5363, %v5371
    %v5374 = vmul.f32 %v5372, %v5372
    %v5375 = vmul.f32 %v5373, %v5373
    %v5376 = vsel %vm229, %v5374, 0.0
    %5377 = vadd.xlane.f32.xlu0 %v5376
    %v5378 = vpop.xlane.xlu0 %5377
    %v5379 = vsel %vm229, %v5375, 0.0
    %5380 = vadd.xlane.f32.xlu0 %v5379
    %v5381 = vpop.xlane.xlu0 %5380
    %v5382 = vmul.f32 %v5378, %v317
    %v5383 = vmul.f32 %v5381, %v317
    %v5384 = vadd.f32 %v5382, 1e-05
    %v5385 = vadd.f32 %v5383, 1e-05
    %v5386 = vrsqrt.pop %v5384
    %v5387 = vrsqrt.pop %v5385
    %v5388 = vmul.f32 %v5372, %v5386
    %v5389 = vmul.f32 %v5373, %v5387
    %v5390 = vmul.f32 %v5388, %v123
    %v5391 = vmul.f32 %v5389, %v123
    %v5392 = vadd.f32 %v5390, %v130
    %v5393 = vadd.f32 %v5391, %v130
    %v5395 = vsel %vm229, %v5392, 0
    %v5398 = vsel %vm229, %v5393, 0
    %5400 = vmatprep.subr.mxu0 0.0
    %5401 = vmatpush1.msra.mxu0 0.0
    %5402 = vmatprep.subr.mxu0 0.0
    %5403 = vmatpush1.msra.mxu0 0.0
    %5404 = vmatprep.subr.mxu0 0.0
    %5405 = vmatpush1.msra.mxu0 0.0
    %5406 = vmatprep.subr.mxu0 0.0
    %5407 = vmatpush1.msra.mxu0 0.0
    %5408 = vmatprep.subr.mxu0 0.0
    %5409 = vmatpush1.msra.mxu0 0.0
    %5410 = vmatprep.subr.mxu0 0.0
    %5411 = vmatpush1.msra.mxu0 0.0
    %5412 = vmatprep.subr.mxu0 0.0
    %5413 = vmatpush1.msra.mxu0 0.0
    %5414 = vmatprep.subr.mxu0 0.0
    %5415 = vmatpush1.msra.mxu0 0.0
    %5416 = vmatprep.subr.mxu0 0.0
    %5417 = vmatpush1.msra.mxu0 0.0
    %5418 = vmatprep.subr.mxu0 0.0
    %5419 = vmatpush1.msra.mxu0 0.0
    %5420 = vmatprep.subr.mxu0 0.0
    %5421 = vmatpush1.msra.mxu0 0.0
    %5422 = vmatprep.subr.mxu0 0.0
    %5423 = vmatpush1.msra.mxu0 0.0
    %5424 = vmatprep.subr.mxu0 0.0
    %5425 = vmatpush1.msra.mxu0 %v81
    %5426 = vmatprep.subr.mxu0 0.0
    %5427 = vmatpush1.msra.mxu0 %v80
    %5428 = vmatprep.subr.mxu0 0.0
    %5429 = vmatpush1.msra.mxu0 %v79
    %5430 = vmatprep.subr.mxu0 0.0
    %5431 = vmatpush1.msra.mxu0 %v78
    %5432 = vmatprep.subr.mxu0 0.0
    %5433 = vmatpush2.msra.mxu0 0.0
    %5434 = vmatprep.subr.mxu0 0.0
    %5435 = vmatpush2.msra.mxu0 0.0
    %5436 = vmatprep.subr.mxu0 0.0
    %5437 = vmatpush2.msra.mxu0 0.0
    %5438 = vmatprep.subr.mxu0 0.0
    %5439 = vmatpush2.msra.mxu0 0.0
    %5440 = vmatprep.subr.mxu0 0.0
    %5441 = vmatpush2.msra.mxu0 0.0
    %5442 = vmatprep.subr.mxu0 0.0
    %5443 = vmatpush2.msra.mxu0 0.0
    %5444 = vmatprep.subr.mxu0 0.0
    %5445 = vmatpush2.msra.mxu0 0.0
    %5446 = vmatprep.subr.mxu0 0.0
    %5447 = vmatpush2.msra.mxu0 0.0
    %5448 = vmatprep.subr.mxu0 0.0
    %5449 = vmatpush2.msra.mxu0 0.0
    %5450 = vmatprep.subr.mxu0 0.0
    %5451 = vmatpush2.msra.mxu0 0.0
    %5452 = vmatprep.subr.mxu0 0.0
    %5453 = vmatpush2.msra.mxu0 0.0
    %5454 = vmatprep.subr.mxu0 0.0
    %5455 = vmatpush2.msra.mxu0 0.0
    %5456 = vmatprep.subr.mxu0 0.0
    %5457 = vmatpush2.msra.mxu0 0.0
    %5458 = vmatprep.subr.mxu0 0.0
    %5459 = vmatpush2.msra.mxu0 0.0
    %5460 = vmatprep.subr.mxu0 0.0
    %5461 = vmatpush2.msra.mxu0 0.0
    %5462 = vmatprep.subr.mxu0 0.0
    %5463 = vmatpush2.msra.mxu0 0.0
    %5464 = vmatprep.mubr.f32.mxu0 0.0
    %5465 = vmatmul.mubr.f32.gmra.mxu0 %v5395
    %v5466 = vpop.f32.mrf.mxu0
    %v5467 = vadd.f32 %v95, %v5466
    %v5468 = vpop.f32.mrf.mxu0
    %5469 = vmatprep.mubr.f32.mxu0 0.0
    %5470 = vmatmul.mubr.f32.gmra.mxu0 %v5398
    %v5471 = vpop.f32.mrf.mxu0
    %v5472 = vadd.f32 %v95, %v5471
    %v5473 = vpop.f32.mrf.mxu0
    %5474 = vdwg.mxu0
    %v5475 = vmax.f32 %v5467, 0.0
    %v5476 = vmax.f32 %v5472, 0.0
    %v5478 = vsel %vm1980, %v5475, 0
    %v5481 = vsel %vm1980, %v5476, 0
    %5483 = vmatprep.subr.mxu0 0.0
    %5484 = vmatpush1.msra.mxu0 0.0
    %5485 = vmatprep.subr.mxu0 0.0
    %5486 = vmatpush1.msra.mxu0 0.0
    %5487 = vmatprep.subr.mxu0 0.0
    %5488 = vmatpush1.msra.mxu0 0.0
    %5489 = vmatprep.subr.mxu0 0.0
    %5490 = vmatpush1.msra.mxu0 0.0
    %5491 = vmatprep.subr.mxu0 0.0
    %5492 = vmatpush1.msra.mxu0 0.0
    %5493 = vmatprep.subr.mxu0 0.0
    %5494 = vmatpush1.msra.mxu0 0.0
    %5495 = vmatprep.subr.mxu0 0.0
    %5496 = vmatpush1.msra.mxu0 0.0
    %5497 = vmatprep.subr.mxu0 0.0
    %5498 = vmatpush1.msra.mxu0 0.0
    %5499 = vmatprep.subr.mxu0 0.0
    %5500 = vmatpush1.msra.mxu0 %v89
    %5501 = vmatprep.subr.mxu0 0.0
    %5502 = vmatpush1.msra.mxu0 %v88
    %5503 = vmatprep.subr.mxu0 0.0
    %5504 = vmatpush1.msra.mxu0 %v87
    %5505 = vmatprep.subr.mxu0 0.0
    %5506 = vmatpush1.msra.mxu0 %v86
    %5507 = vmatprep.subr.mxu0 0.0
    %5508 = vmatpush1.msra.mxu0 %v85
    %5509 = vmatprep.subr.mxu0 0.0
    %5510 = vmatpush1.msra.mxu0 %v84
    %5511 = vmatprep.subr.mxu0 0.0
    %5512 = vmatpush1.msra.mxu0 %v83
    %5513 = vmatprep.subr.mxu0 0.0
    %5514 = vmatpush1.msra.mxu0 %v82
    %5515 = vmatprep.subr.mxu0 0.0
    %5516 = vmatpush2.msra.mxu0 0.0
    %5517 = vmatprep.subr.mxu0 0.0
    %5518 = vmatpush2.msra.mxu0 0.0
    %5519 = vmatprep.subr.mxu0 0.0
    %5520 = vmatpush2.msra.mxu0 0.0
    %5521 = vmatprep.subr.mxu0 0.0
    %5522 = vmatpush2.msra.mxu0 0.0
    %5523 = vmatprep.subr.mxu0 0.0
    %5524 = vmatpush2.msra.mxu0 0.0
    %5525 = vmatprep.subr.mxu0 0.0
    %5526 = vmatpush2.msra.mxu0 0.0
    %5527 = vmatprep.subr.mxu0 0.0
    %5528 = vmatpush2.msra.mxu0 0.0
    %5529 = vmatprep.subr.mxu0 0.0
    %5530 = vmatpush2.msra.mxu0 0.0
    %5531 = vmatprep.subr.mxu0 0.0
    %5532 = vmatpush2.msra.mxu0 0.0
    %5533 = vmatprep.subr.mxu0 0.0
    %5534 = vmatpush2.msra.mxu0 0.0
    %5535 = vmatprep.subr.mxu0 0.0
    %5536 = vmatpush2.msra.mxu0 0.0
    %5537 = vmatprep.subr.mxu0 0.0
    %5538 = vmatpush2.msra.mxu0 0.0
    %5539 = vmatprep.subr.mxu0 0.0
    %5540 = vmatpush2.msra.mxu0 0.0
    %5541 = vmatprep.subr.mxu0 0.0
    %5542 = vmatpush2.msra.mxu0 0.0
    %5543 = vmatprep.subr.mxu0 0.0
    %5544 = vmatpush2.msra.mxu0 0.0
    %5545 = vmatprep.subr.mxu0 0.0
    %5546 = vmatpush2.msra.mxu0 0.0
    %5547 = vmatprep.mubr.f32.mxu0 0.0
    %5548 = vmatmul.mubr.f32.gmra.mxu0 %v5478
    %v5549 = vpop.f32.mrf.mxu0
    %v5550 = vadd.f32 %v102, %v5549
    %v5551 = vpop.f32.mrf.mxu0
    %5552 = vmatprep.mubr.f32.mxu0 0.0
    %5553 = vmatmul.mubr.f32.gmra.mxu0 %v5481
    %v5554 = vpop.f32.mrf.mxu0
    %v5555 = vadd.f32 %v102, %v5554
    %v5556 = vpop.f32.mrf.mxu0
    %5557 = vdwg.mxu0
    %v5558 = vadd.f32 %v5362, %v5550
    %v5559 = vadd.f32 %v5363, %v5555
    %v5560 = vsel %vm229, %v5558, 0.0
    %5561 = vadd.xlane.f32.xlu0 %v5560
    %v5562 = vpop.xlane.xlu0 %5561
    %v5563 = vsel %vm229, %v5559, 0.0
    %5564 = vadd.xlane.f32.xlu0 %v5563
    %v5565 = vpop.xlane.xlu0 %5564
    %v5566 = vmul.f32 %v5562, %v317
    %v5567 = vmul.f32 %v5565, %v317
    %v5568 = vsub.f32 %v5558, %v5566
    %v5569 = vsub.f32 %v5559, %v5567
    %v5570 = vmul.f32 %v5568, %v5568
    %v5571 = vmul.f32 %v5569, %v5569
    %v5572 = vsel %vm229, %v5570, 0.0
    %5573 = vadd.xlane.f32.xlu0 %v5572
    %v5574 = vpop.xlane.xlu0 %5573
    %v5575 = vsel %vm229, %v5571, 0.0
    %5576 = vadd.xlane.f32.xlu0 %v5575
    %v5577 = vpop.xlane.xlu0 %5576
    %v5578 = vmul.f32 %v5574, %v317
    %v5579 = vmul.f32 %v5577, %v317
    %v5580 = vadd.f32 %v5578, 1e-05
    %v5581 = vadd.f32 %v5579, 1e-05
    %v5582 = vrsqrt.pop %v5580
    %v5583 = vrsqrt.pop %v5581
    %v5584 = vmul.f32 %v5568, %v5582
    %v5585 = vmul.f32 %v5569, %v5583
    %v5586 = vmul.f32 %v5584, %v109
    %v5587 = vmul.f32 %v5585, %v109
    %v5588 = vadd.f32 %v5586, %v116
    %v5589 = vadd.f32 %v5587, %v116
    %v5591 = vsel %vm229, %v5588, 0
    %v5594 = vsel %vm229, %v5589, 0
    %5596 = vmatprep.subr.mxu0 0.0
    %5597 = vmatpush1.msra.mxu0 0.0
    %5598 = vmatprep.subr.mxu0 0.0
    %5599 = vmatpush1.msra.mxu0 0.0
    %5600 = vmatprep.subr.mxu0 0.0
    %5601 = vmatpush1.msra.mxu0 0.0
    %5602 = vmatprep.subr.mxu0 0.0
    %5603 = vmatpush1.msra.mxu0 0.0
    %5604 = vmatprep.subr.mxu0 0.0
    %5605 = vmatpush1.msra.mxu0 0.0
    %5606 = vmatprep.subr.mxu0 0.0
    %5607 = vmatpush1.msra.mxu0 0.0
    %5608 = vmatprep.subr.mxu0 0.0
    %5609 = vmatpush1.msra.mxu0 0.0
    %5610 = vmatprep.subr.mxu0 0.0
    %5611 = vmatpush1.msra.mxu0 0.0
    %5612 = vmatprep.subr.mxu0 0.0
    %5613 = vmatpush1.msra.mxu0 0.0
    %5614 = vmatprep.subr.mxu0 0.0
    %5615 = vmatpush1.msra.mxu0 0.0
    %5616 = vmatprep.subr.mxu0 0.0
    %5617 = vmatpush1.msra.mxu0 0.0
    %5618 = vmatprep.subr.mxu0 0.0
    %5619 = vmatpush1.msra.mxu0 0.0
    %5620 = vmatprep.subr.mxu0 0.0
    %5621 = vmatpush1.msra.mxu0 %v73
    %5622 = vmatprep.subr.mxu0 0.0
    %5623 = vmatpush1.msra.mxu0 %v72
    %5624 = vmatprep.subr.mxu0 0.0
    %5625 = vmatpush1.msra.mxu0 %v71
    %5626 = vmatprep.subr.mxu0 0.0
    %5627 = vmatpush1.msra.mxu0 %v70
    %5628 = vmatprep.subr.mxu0 0.0
    %5629 = vmatpush2.msra.mxu0 0.0
    %5630 = vmatprep.subr.mxu0 0.0
    %5631 = vmatpush2.msra.mxu0 0.0
    %5632 = vmatprep.subr.mxu0 0.0
    %5633 = vmatpush2.msra.mxu0 0.0
    %5634 = vmatprep.subr.mxu0 0.0
    %5635 = vmatpush2.msra.mxu0 0.0
    %5636 = vmatprep.subr.mxu0 0.0
    %5637 = vmatpush2.msra.mxu0 0.0
    %5638 = vmatprep.subr.mxu0 0.0
    %5639 = vmatpush2.msra.mxu0 0.0
    %5640 = vmatprep.subr.mxu0 0.0
    %5641 = vmatpush2.msra.mxu0 0.0
    %5642 = vmatprep.subr.mxu0 0.0
    %5643 = vmatpush2.msra.mxu0 0.0
    %5644 = vmatprep.subr.mxu0 0.0
    %5645 = vmatpush2.msra.mxu0 0.0
    %5646 = vmatprep.subr.mxu0 0.0
    %5647 = vmatpush2.msra.mxu0 0.0
    %5648 = vmatprep.subr.mxu0 0.0
    %5649 = vmatpush2.msra.mxu0 0.0
    %5650 = vmatprep.subr.mxu0 0.0
    %5651 = vmatpush2.msra.mxu0 0.0
    %5652 = vmatprep.subr.mxu0 0.0
    %5653 = vmatpush2.msra.mxu0 0.0
    %5654 = vmatprep.subr.mxu0 0.0
    %5655 = vmatpush2.msra.mxu0 0.0
    %5656 = vmatprep.subr.mxu0 0.0
    %5657 = vmatpush2.msra.mxu0 0.0
    %5658 = vmatprep.subr.mxu0 0.0
    %5659 = vmatpush2.msra.mxu0 0.0
    %5660 = vmatprep.mubr.f32.mxu0 0.0
    %5661 = vmatmul.mubr.f32.gmra.mxu0 %v5591
    %v5662 = vpop.f32.mrf.mxu0
    %v5663 = vadd.f32 0.0, %v5662
    %v5664 = vpop.f32.mrf.mxu0
    %5665 = vmatprep.mubr.f32.mxu0 0.0
    %5666 = vmatmul.mubr.f32.gmra.mxu0 %v5594
    %v5667 = vpop.f32.mrf.mxu0
    %v5668 = vadd.f32 0.0, %v5667
    %v5669 = vpop.f32.mrf.mxu0
    %5670 = vdwg.mxu0
    %v5671 = vmul.f32 %v5663, 0.35355338
    %v5672 = vmul.f32 %v5668, 0.35355338
    %v5673 = vadd.f32 %v5671, %v309
    %v5674 = vadd.f32 %v5672, %v310
    %v5675 = vadd.f32 %v5663, %v301
    %v5676 = vadd.f32 %v5668, %v306
    %5678 = vrot.lane.b32.xlu0 %v5675, 96
    %v5679 = vpop.permute.xlu0 %5678
    %v5681 = vsel %vm432, %v5673, 0
    %v5683 = vsel %vm432, %v5679, 0
    %5685 = vmatprep.subr.mxu0 0.0
    %5686 = vmatpush1.xpose.msra.mxu0 0.0
    %5687 = vmatprep.subr.mxu0 0.0
    %5688 = vmatpush1.xpose.msra.mxu0 0.0
    %5689 = vmatprep.subr.mxu0 0.0
    %5690 = vmatpush1.xpose.msra.mxu0 0.0
    %5691 = vmatprep.subr.mxu0 0.0
    %5692 = vmatpush1.xpose.msra.mxu0 0.0
    %5693 = vmatprep.subr.mxu0 0.0
    %5694 = vmatpush1.xpose.msra.mxu0 0.0
    %5695 = vmatprep.subr.mxu0 0.0
    %5696 = vmatpush1.xpose.msra.mxu0 0.0
    %5697 = vmatprep.subr.mxu0 0.0
    %5698 = vmatpush1.xpose.msra.mxu0 0.0
    %5699 = vmatprep.subr.mxu0 0.0
    %5700 = vmatpush1.xpose.msra.mxu0 0.0
    %5701 = vmatprep.subr.mxu0 0.0
    %5702 = vmatpush1.xpose.msra.mxu0 0.0
    %5703 = vmatprep.subr.mxu0 0.0
    %5704 = vmatpush1.xpose.msra.mxu0 0.0
    %5705 = vmatprep.subr.mxu0 0.0
    %5706 = vmatpush1.xpose.msra.mxu0 0.0
    %5707 = vmatprep.subr.mxu0 0.0
    %5708 = vmatpush1.xpose.msra.mxu0 0.0
    %5709 = vmatprep.subr.mxu0 0.0
    %5710 = vmatpush1.xpose.msra.mxu0 0.0
    %5711 = vmatprep.subr.mxu0 0.0
    %5712 = vmatpush1.xpose.msra.mxu0 0.0
    %5713 = vmatprep.subr.mxu0 0.0
    %5714 = vmatpush1.xpose.msra.mxu0 0.0
    %5715 = vmatprep.subr.mxu0 0.0
    %5716 = vmatpush1.xpose.msra.mxu0 %v5683
    %5717 = vmatprep.subr.mxu0 0.0
    %5718 = vmatpush2.xpose.msra.mxu0 0.0
    %5719 = vmatprep.subr.mxu0 0.0
    %5720 = vmatpush2.xpose.msra.mxu0 0.0
    %5721 = vmatprep.subr.mxu0 0.0
    %5722 = vmatpush2.xpose.msra.mxu0 0.0
    %5723 = vmatprep.subr.mxu0 0.0
    %5724 = vmatpush2.xpose.msra.mxu0 0.0
    %5725 = vmatprep.subr.mxu0 0.0
    %5726 = vmatpush2.xpose.msra.mxu0 0.0
    %5727 = vmatprep.subr.mxu0 0.0
    %5728 = vmatpush2.xpose.msra.mxu0 0.0
    %5729 = vmatprep.subr.mxu0 0.0
    %5730 = vmatpush2.xpose.msra.mxu0 0.0
    %5731 = vmatprep.subr.mxu0 0.0
    %5732 = vmatpush2.xpose.msra.mxu0 0.0
    %5733 = vmatprep.subr.mxu0 0.0
    %5734 = vmatpush2.xpose.msra.mxu0 0.0
    %5735 = vmatprep.subr.mxu0 0.0
    %5736 = vmatpush2.xpose.msra.mxu0 0.0
    %5737 = vmatprep.subr.mxu0 0.0
    %5738 = vmatpush2.xpose.msra.mxu0 0.0
    %5739 = vmatprep.subr.mxu0 0.0
    %5740 = vmatpush2.xpose.msra.mxu0 0.0
    %5741 = vmatprep.subr.mxu0 0.0
    %5742 = vmatpush2.xpose.msra.mxu0 0.0
    %5743 = vmatprep.subr.mxu0 0.0
    %5744 = vmatpush2.xpose.msra.mxu0 0.0
    %5745 = vmatprep.subr.mxu0 0.0
    %5746 = vmatpush2.xpose.msra.mxu0 0.0
    %5747 = vmatprep.subr.mxu0 0.0
    %5748 = vmatpush2.xpose.msra.mxu0 0.0
    %5749 = vmatprep.mubr.f32.mxu0 0.0
    %5750 = vmatmul.mubr.f32.gmra.mxu0 %v5681
    %v5751 = vpop.f32.mrf.mxu0
    %v5752 = vadd.f32 0.0, %v5751
    %v5753 = vpop.f32.mrf.mxu0
    %5754 = vdwg.mxu0
    %v5755 = vsel %vm432, %v5752, -inf
    %5756 = vmax.xlane.f32.xlu0 %v5755
    %v5757 = vpop.xlane.xlu0 %5756
    %v5758 = vsub.f32 %v5752, %v5757
    %v5759 = vmul.f32 %v5758, 1.442695
    %v5760 = vpow.pop %v5759
    %v5761 = vsel %vm432, %v5760, 0.0
    %5762 = vadd.xlane.f32.xlu0 %v5761
    %v5763 = vpop.xlane.xlu0 %5762
    %v5764 = vrcp.pop %v5763
    %v5765 = vmul.f32 %v5760, %v5764
    %5767 = vrot.lane.b32.xlu0 %v5663, 64
    %v5768 = vpop.permute.xlu0 %5767
    %v5771 = vsel %vm432, %v5765, 0
    %5773 = vmatprep.subr.mxu0 0.0
    %5774 = vmatpush1.msra.mxu0 0.0
    %5775 = vmatprep.subr.mxu0 0.0
    %5776 = vmatpush1.msra.mxu0 0.0
    %5777 = vmatprep.subr.mxu0 0.0
    %5778 = vmatpush1.msra.mxu0 0.0
    %5779 = vmatprep.subr.mxu0 0.0
    %5780 = vmatpush1.msra.mxu0 0.0
    %5781 = vmatprep.subr.mxu0 0.0
    %5782 = vmatpush1.msra.mxu0 0.0
    %5783 = vmatprep.subr.mxu0 0.0
    %5784 = vmatpush1.msra.mxu0 0.0
    %5785 = vmatprep.subr.mxu0 0.0
    %5786 = vmatpush1.msra.mxu0 0.0
    %5787 = vmatprep.subr.mxu0 0.0
    %5788 = vmatpush1.msra.mxu0 0.0
    %5789 = vmatprep.subr.mxu0 0.0
    %5790 = vmatpush1.msra.mxu0 0.0
    %5791 = vmatprep.subr.mxu0 0.0
    %5792 = vmatpush1.msra.mxu0 0.0
    %5793 = vmatprep.subr.mxu0 0.0
    %5794 = vmatpush1.msra.mxu0 0.0
    %5795 = vmatprep.subr.mxu0 0.0
    %5796 = vmatpush1.msra.mxu0 0.0
    %5797 = vmatprep.subr.mxu0 0.0
    %5798 = vmatpush1.msra.mxu0 0.0
    %5799 = vmatprep.subr.mxu0 0.0
    %5800 = vmatpush1.msra.mxu0 0.0
    %5801 = vmatprep.subr.mxu0 0.0
    %5802 = vmatpush1.msra.mxu0 0.0
    %5803 = vmatprep.subr.mxu0 0.0
    %5804 = vmatpush1.msra.mxu0 %v5768
    %5805 = vmatprep.subr.mxu0 0.0
    %5806 = vmatpush2.msra.mxu0 0.0
    %5807 = vmatprep.subr.mxu0 0.0
    %5808 = vmatpush2.msra.mxu0 0.0
    %5809 = vmatprep.subr.mxu0 0.0
    %5810 = vmatpush2.msra.mxu0 0.0
    %5811 = vmatprep.subr.mxu0 0.0
    %5812 = vmatpush2.msra.mxu0 0.0
    %5813 = vmatprep.subr.mxu0 0.0
    %5814 = vmatpush2.msra.mxu0 0.0
    %5815 = vmatprep.subr.mxu0 0.0
    %5816 = vmatpush2.msra.mxu0 0.0
    %5817 = vmatprep.subr.mxu0 0.0
    %5818 = vmatpush2.msra.mxu0 0.0
    %5819 = vmatprep.subr.mxu0 0.0
    %5820 = vmatpush2.msra.mxu0 0.0
    %5821 = vmatprep.subr.mxu0 0.0
    %5822 = vmatpush2.msra.mxu0 0.0
    %5823 = vmatprep.subr.mxu0 0.0
    %5824 = vmatpush2.msra.mxu0 0.0
    %5825 = vmatprep.subr.mxu0 0.0
    %5826 = vmatpush2.msra.mxu0 0.0
    %5827 = vmatprep.subr.mxu0 0.0
    %5828 = vmatpush2.msra.mxu0 0.0
    %5829 = vmatprep.subr.mxu0 0.0
    %5830 = vmatpush2.msra.mxu0 0.0
    %5831 = vmatprep.subr.mxu0 0.0
    %5832 = vmatpush2.msra.mxu0 0.0
    %5833 = vmatprep.subr.mxu0 0.0
    %5834 = vmatpush2.msra.mxu0 0.0
    %5835 = vmatprep.subr.mxu0 0.0
    %5836 = vmatpush2.msra.mxu0 0.0
    %5837 = vmatprep.mubr.f32.mxu0 0.0
    %5838 = vmatmul.mubr.f32.gmra.mxu0 %v5771
    %v5839 = vpop.f32.mrf.mxu0
    %v5840 = vadd.f32 0.0, %v5839
    %v5841 = vpop.f32.mrf.mxu0
    %5842 = vdwg.mxu0
    %5843 = vrot.lane.b32.xlu0 %v5673, 120
    %v5844 = vpop.permute.xlu0 %5843
    %5845 = vrot.lane.b32.xlu0 %v5675, 88
    %v5846 = vpop.permute.xlu0 %5845
    %v5847 = vsel %vm432, %v5844, 0
    %v5849 = vsel %vm432, %v5846, 0
    %5851 = vmatprep.subr.mxu0 0.0
    %5852 = vmatpush1.xpose.msra.mxu0 0.0
    %5853 = vmatprep.subr.mxu0 0.0
    %5854 = vmatpush1.xpose.msra.mxu0 0.0
    %5855 = vmatprep.subr.mxu0 0.0
    %5856 = vmatpush1.xpose.msra.mxu0 0.0
    %5857 = vmatprep.subr.mxu0 0.0
    %5858 = vmatpush1.xpose.msra.mxu0 0.0
    %5859 = vmatprep.subr.mxu0 0.0
    %5860 = vmatpush1.xpose.msra.mxu0 0.0
    %5861 = vmatprep.subr.mxu0 0.0
    %5862 = vmatpush1.xpose.msra.mxu0 0.0
    %5863 = vmatprep.subr.mxu0 0.0
    %5864 = vmatpush1.xpose.msra.mxu0 0.0
    %5865 = vmatprep.subr.mxu0 0.0
    %5866 = vmatpush1.xpose.msra.mxu0 0.0
    %5867 = vmatprep.subr.mxu0 0.0
    %5868 = vmatpush1.xpose.msra.mxu0 0.0
    %5869 = vmatprep.subr.mxu0 0.0
    %5870 = vmatpush1.xpose.msra.mxu0 0.0
    %5871 = vmatprep.subr.mxu0 0.0
    %5872 = vmatpush1.xpose.msra.mxu0 0.0
    %5873 = vmatprep.subr.mxu0 0.0
    %5874 = vmatpush1.xpose.msra.mxu0 0.0
    %5875 = vmatprep.subr.mxu0 0.0
    %5876 = vmatpush1.xpose.msra.mxu0 0.0
    %5877 = vmatprep.subr.mxu0 0.0
    %5878 = vmatpush1.xpose.msra.mxu0 0.0
    %5879 = vmatprep.subr.mxu0 0.0
    %5880 = vmatpush1.xpose.msra.mxu0 0.0
    %5881 = vmatprep.subr.mxu0 0.0
    %5882 = vmatpush1.xpose.msra.mxu0 %v5849
    %5883 = vmatprep.subr.mxu0 0.0
    %5884 = vmatpush2.xpose.msra.mxu0 0.0
    %5885 = vmatprep.subr.mxu0 0.0
    %5886 = vmatpush2.xpose.msra.mxu0 0.0
    %5887 = vmatprep.subr.mxu0 0.0
    %5888 = vmatpush2.xpose.msra.mxu0 0.0
    %5889 = vmatprep.subr.mxu0 0.0
    %5890 = vmatpush2.xpose.msra.mxu0 0.0
    %5891 = vmatprep.subr.mxu0 0.0
    %5892 = vmatpush2.xpose.msra.mxu0 0.0
    %5893 = vmatprep.subr.mxu0 0.0
    %5894 = vmatpush2.xpose.msra.mxu0 0.0
    %5895 = vmatprep.subr.mxu0 0.0
    %5896 = vmatpush2.xpose.msra.mxu0 0.0
    %5897 = vmatprep.subr.mxu0 0.0
    %5898 = vmatpush2.xpose.msra.mxu0 0.0
    %5899 = vmatprep.subr.mxu0 0.0
    %5900 = vmatpush2.xpose.msra.mxu0 0.0
    %5901 = vmatprep.subr.mxu0 0.0
    %5902 = vmatpush2.xpose.msra.mxu0 0.0
    %5903 = vmatprep.subr.mxu0 0.0
    %5904 = vmatpush2.xpose.msra.mxu0 0.0
    %5905 = vmatprep.subr.mxu0 0.0
    %5906 = vmatpush2.xpose.msra.mxu0 0.0
    %5907 = vmatprep.subr.mxu0 0.0
    %5908 = vmatpush2.xpose.msra.mxu0 0.0
    %5909 = vmatprep.subr.mxu0 0.0
    %5910 = vmatpush2.xpose.msra.mxu0 0.0
    %5911 = vmatprep.subr.mxu0 0.0
    %5912 = vmatpush2.xpose.msra.mxu0 0.0
    %5913 = vmatprep.subr.mxu0 0.0
    %5914 = vmatpush2.xpose.msra.mxu0 0.0
    %5915 = vmatprep.mubr.f32.mxu0 0.0
    %5916 = vmatmul.mubr.f32.gmra.mxu0 %v5847
    %v5917 = vpop.f32.mrf.mxu0
    %v5918 = vadd.f32 0.0, %v5917
    %v5919 = vpop.f32.mrf.mxu0
    %5920 = vdwg.mxu0
    %v5921 = vsel %vm432, %v5918, -inf
    %5922 = vmax.xlane.f32.xlu0 %v5921
    %v5923 = vpop.xlane.xlu0 %5922
    %v5924 = vsub.f32 %v5918, %v5923
    %v5925 = vmul.f32 %v5924, 1.442695
    %v5926 = vpow.pop %v5925
    %v5927 = vsel %vm432, %v5926, 0.0
    %5928 = vadd.xlane.f32.xlu0 %v5927
    %v5929 = vpop.xlane.xlu0 %5928
    %v5930 = vrcp.pop %v5929
    %v5931 = vmul.f32 %v5926, %v5930
    %5932 = vrot.lane.b32.xlu0 %v5663, 56
    %v5933 = vpop.permute.xlu0 %5932
    %v5936 = vsel %vm432, %v5931, 0
    %5938 = vmatprep.subr.mxu0 0.0
    %5939 = vmatpush1.msra.mxu0 0.0
    %5940 = vmatprep.subr.mxu0 0.0
    %5941 = vmatpush1.msra.mxu0 0.0
    %5942 = vmatprep.subr.mxu0 0.0
    %5943 = vmatpush1.msra.mxu0 0.0
    %5944 = vmatprep.subr.mxu0 0.0
    %5945 = vmatpush1.msra.mxu0 0.0
    %5946 = vmatprep.subr.mxu0 0.0
    %5947 = vmatpush1.msra.mxu0 0.0
    %5948 = vmatprep.subr.mxu0 0.0
    %5949 = vmatpush1.msra.mxu0 0.0
    %5950 = vmatprep.subr.mxu0 0.0
    %5951 = vmatpush1.msra.mxu0 0.0
    %5952 = vmatprep.subr.mxu0 0.0
    %5953 = vmatpush1.msra.mxu0 0.0
    %5954 = vmatprep.subr.mxu0 0.0
    %5955 = vmatpush1.msra.mxu0 0.0
    %5956 = vmatprep.subr.mxu0 0.0
    %5957 = vmatpush1.msra.mxu0 0.0
    %5958 = vmatprep.subr.mxu0 0.0
    %5959 = vmatpush1.msra.mxu0 0.0
    %5960 = vmatprep.subr.mxu0 0.0
    %5961 = vmatpush1.msra.mxu0 0.0
    %5962 = vmatprep.subr.mxu0 0.0
    %5963 = vmatpush1.msra.mxu0 0.0
    %5964 = vmatprep.subr.mxu0 0.0
    %5965 = vmatpush1.msra.mxu0 0.0
    %5966 = vmatprep.subr.mxu0 0.0
    %5967 = vmatpush1.msra.mxu0 0.0
    %5968 = vmatprep.subr.mxu0 0.0
    %5969 = vmatpush1.msra.mxu0 %v5933
    %5970 = vmatprep.subr.mxu0 0.0
    %5971 = vmatpush2.msra.mxu0 0.0
    %5972 = vmatprep.subr.mxu0 0.0
    %5973 = vmatpush2.msra.mxu0 0.0
    %5974 = vmatprep.subr.mxu0 0.0
    %5975 = vmatpush2.msra.mxu0 0.0
    %5976 = vmatprep.subr.mxu0 0.0
    %5977 = vmatpush2.msra.mxu0 0.0
    %5978 = vmatprep.subr.mxu0 0.0
    %5979 = vmatpush2.msra.mxu0 0.0
    %5980 = vmatprep.subr.mxu0 0.0
    %5981 = vmatpush2.msra.mxu0 0.0
    %5982 = vmatprep.subr.mxu0 0.0
    %5983 = vmatpush2.msra.mxu0 0.0
    %5984 = vmatprep.subr.mxu0 0.0
    %5985 = vmatpush2.msra.mxu0 0.0
    %5986 = vmatprep.subr.mxu0 0.0
    %5987 = vmatpush2.msra.mxu0 0.0
    %5988 = vmatprep.subr.mxu0 0.0
    %5989 = vmatpush2.msra.mxu0 0.0
    %5990 = vmatprep.subr.mxu0 0.0
    %5991 = vmatpush2.msra.mxu0 0.0
    %5992 = vmatprep.subr.mxu0 0.0
    %5993 = vmatpush2.msra.mxu0 0.0
    %5994 = vmatprep.subr.mxu0 0.0
    %5995 = vmatpush2.msra.mxu0 0.0
    %5996 = vmatprep.subr.mxu0 0.0
    %5997 = vmatpush2.msra.mxu0 0.0
    %5998 = vmatprep.subr.mxu0 0.0
    %5999 = vmatpush2.msra.mxu0 0.0
    %6000 = vmatprep.subr.mxu0 0.0
    %6001 = vmatpush2.msra.mxu0 0.0
    %6002 = vmatprep.mubr.f32.mxu0 0.0
    %6003 = vmatmul.mubr.f32.gmra.mxu0 %v5936
    %v6004 = vpop.f32.mrf.mxu0
    %v6005 = vadd.f32 0.0, %v6004
    %v6006 = vpop.f32.mrf.mxu0
    %6007 = vdwg.mxu0
    %6008 = vrot.lane.b32.xlu0 %v5673, 112
    %v6009 = vpop.permute.xlu0 %6008
    %6010 = vrot.lane.b32.xlu0 %v5675, 80
    %v6011 = vpop.permute.xlu0 %6010
    %v6012 = vsel %vm432, %v6009, 0
    %v6014 = vsel %vm432, %v6011, 0
    %6016 = vmatprep.subr.mxu0 0.0
    %6017 = vmatpush1.xpose.msra.mxu0 0.0
    %6018 = vmatprep.subr.mxu0 0.0
    %6019 = vmatpush1.xpose.msra.mxu0 0.0
    %6020 = vmatprep.subr.mxu0 0.0
    %6021 = vmatpush1.xpose.msra.mxu0 0.0
    %6022 = vmatprep.subr.mxu0 0.0
    %6023 = vmatpush1.xpose.msra.mxu0 0.0
    %6024 = vmatprep.subr.mxu0 0.0
    %6025 = vmatpush1.xpose.msra.mxu0 0.0
    %6026 = vmatprep.subr.mxu0 0.0
    %6027 = vmatpush1.xpose.msra.mxu0 0.0
    %6028 = vmatprep.subr.mxu0 0.0
    %6029 = vmatpush1.xpose.msra.mxu0 0.0
    %6030 = vmatprep.subr.mxu0 0.0
    %6031 = vmatpush1.xpose.msra.mxu0 0.0
    %6032 = vmatprep.subr.mxu0 0.0
    %6033 = vmatpush1.xpose.msra.mxu0 0.0
    %6034 = vmatprep.subr.mxu0 0.0
    %6035 = vmatpush1.xpose.msra.mxu0 0.0
    %6036 = vmatprep.subr.mxu0 0.0
    %6037 = vmatpush1.xpose.msra.mxu0 0.0
    %6038 = vmatprep.subr.mxu0 0.0
    %6039 = vmatpush1.xpose.msra.mxu0 0.0
    %6040 = vmatprep.subr.mxu0 0.0
    %6041 = vmatpush1.xpose.msra.mxu0 0.0
    %6042 = vmatprep.subr.mxu0 0.0
    %6043 = vmatpush1.xpose.msra.mxu0 0.0
    %6044 = vmatprep.subr.mxu0 0.0
    %6045 = vmatpush1.xpose.msra.mxu0 0.0
    %6046 = vmatprep.subr.mxu0 0.0
    %6047 = vmatpush1.xpose.msra.mxu0 %v6014
    %6048 = vmatprep.subr.mxu0 0.0
    %6049 = vmatpush2.xpose.msra.mxu0 0.0
    %6050 = vmatprep.subr.mxu0 0.0
    %6051 = vmatpush2.xpose.msra.mxu0 0.0
    %6052 = vmatprep.subr.mxu0 0.0
    %6053 = vmatpush2.xpose.msra.mxu0 0.0
    %6054 = vmatprep.subr.mxu0 0.0
    %6055 = vmatpush2.xpose.msra.mxu0 0.0
    %6056 = vmatprep.subr.mxu0 0.0
    %6057 = vmatpush2.xpose.msra.mxu0 0.0
    %6058 = vmatprep.subr.mxu0 0.0
    %6059 = vmatpush2.xpose.msra.mxu0 0.0
    %6060 = vmatprep.subr.mxu0 0.0
    %6061 = vmatpush2.xpose.msra.mxu0 0.0
    %6062 = vmatprep.subr.mxu0 0.0
    %6063 = vmatpush2.xpose.msra.mxu0 0.0
    %6064 = vmatprep.subr.mxu0 0.0
    %6065 = vmatpush2.xpose.msra.mxu0 0.0
    %6066 = vmatprep.subr.mxu0 0.0
    %6067 = vmatpush2.xpose.msra.mxu0 0.0
    %6068 = vmatprep.subr.mxu0 0.0
    %6069 = vmatpush2.xpose.msra.mxu0 0.0
    %6070 = vmatprep.subr.mxu0 0.0
    %6071 = vmatpush2.xpose.msra.mxu0 0.0
    %6072 = vmatprep.subr.mxu0 0.0
    %6073 = vmatpush2.xpose.msra.mxu0 0.0
    %6074 = vmatprep.subr.mxu0 0.0
    %6075 = vmatpush2.xpose.msra.mxu0 0.0
    %6076 = vmatprep.subr.mxu0 0.0
    %6077 = vmatpush2.xpose.msra.mxu0 0.0
    %6078 = vmatprep.subr.mxu0 0.0
    %6079 = vmatpush2.xpose.msra.mxu0 0.0
    %6080 = vmatprep.mubr.f32.mxu0 0.0
    %6081 = vmatmul.mubr.f32.gmra.mxu0 %v6012
    %v6082 = vpop.f32.mrf.mxu0
    %v6083 = vadd.f32 0.0, %v6082
    %v6084 = vpop.f32.mrf.mxu0
    %6085 = vdwg.mxu0
    %v6086 = vsel %vm432, %v6083, -inf
    %6087 = vmax.xlane.f32.xlu0 %v6086
    %v6088 = vpop.xlane.xlu0 %6087
    %v6089 = vsub.f32 %v6083, %v6088
    %v6090 = vmul.f32 %v6089, 1.442695
    %v6091 = vpow.pop %v6090
    %v6092 = vsel %vm432, %v6091, 0.0
    %6093 = vadd.xlane.f32.xlu0 %v6092
    %v6094 = vpop.xlane.xlu0 %6093
    %v6095 = vrcp.pop %v6094
    %v6096 = vmul.f32 %v6091, %v6095
    %6097 = vrot.lane.b32.xlu0 %v5663, 48
    %v6098 = vpop.permute.xlu0 %6097
    %v6101 = vsel %vm432, %v6096, 0
    %6103 = vmatprep.subr.mxu0 0.0
    %6104 = vmatpush1.msra.mxu0 0.0
    %6105 = vmatprep.subr.mxu0 0.0
    %6106 = vmatpush1.msra.mxu0 0.0
    %6107 = vmatprep.subr.mxu0 0.0
    %6108 = vmatpush1.msra.mxu0 0.0
    %6109 = vmatprep.subr.mxu0 0.0
    %6110 = vmatpush1.msra.mxu0 0.0
    %6111 = vmatprep.subr.mxu0 0.0
    %6112 = vmatpush1.msra.mxu0 0.0
    %6113 = vmatprep.subr.mxu0 0.0
    %6114 = vmatpush1.msra.mxu0 0.0
    %6115 = vmatprep.subr.mxu0 0.0
    %6116 = vmatpush1.msra.mxu0 0.0
    %6117 = vmatprep.subr.mxu0 0.0
    %6118 = vmatpush1.msra.mxu0 0.0
    %6119 = vmatprep.subr.mxu0 0.0
    %6120 = vmatpush1.msra.mxu0 0.0
    %6121 = vmatprep.subr.mxu0 0.0
    %6122 = vmatpush1.msra.mxu0 0.0
    %6123 = vmatprep.subr.mxu0 0.0
    %6124 = vmatpush1.msra.mxu0 0.0
    %6125 = vmatprep.subr.mxu0 0.0
    %6126 = vmatpush1.msra.mxu0 0.0
    %6127 = vmatprep.subr.mxu0 0.0
    %6128 = vmatpush1.msra.mxu0 0.0
    %6129 = vmatprep.subr.mxu0 0.0
    %6130 = vmatpush1.msra.mxu0 0.0
    %6131 = vmatprep.subr.mxu0 0.0
    %6132 = vmatpush1.msra.mxu0 0.0
    %6133 = vmatprep.subr.mxu0 0.0
    %6134 = vmatpush1.msra.mxu0 %v6098
    %6135 = vmatprep.subr.mxu0 0.0
    %6136 = vmatpush2.msra.mxu0 0.0
    %6137 = vmatprep.subr.mxu0 0.0
    %6138 = vmatpush2.msra.mxu0 0.0
    %6139 = vmatprep.subr.mxu0 0.0
    %6140 = vmatpush2.msra.mxu0 0.0
    %6141 = vmatprep.subr.mxu0 0.0
    %6142 = vmatpush2.msra.mxu0 0.0
    %6143 = vmatprep.subr.mxu0 0.0
    %6144 = vmatpush2.msra.mxu0 0.0
    %6145 = vmatprep.subr.mxu0 0.0
    %6146 = vmatpush2.msra.mxu0 0.0
    %6147 = vmatprep.subr.mxu0 0.0
    %6148 = vmatpush2.msra.mxu0 0.0
    %6149 = vmatprep.subr.mxu0 0.0
    %6150 = vmatpush2.msra.mxu0 0.0
    %6151 = vmatprep.subr.mxu0 0.0
    %6152 = vmatpush2.msra.mxu0 0.0
    %6153 = vmatprep.subr.mxu0 0.0
    %6154 = vmatpush2.msra.mxu0 0.0
    %6155 = vmatprep.subr.mxu0 0.0
    %6156 = vmatpush2.msra.mxu0 0.0
    %6157 = vmatprep.subr.mxu0 0.0
    %6158 = vmatpush2.msra.mxu0 0.0
    %6159 = vmatprep.subr.mxu0 0.0
    %6160 = vmatpush2.msra.mxu0 0.0
    %6161 = vmatprep.subr.mxu0 0.0
    %6162 = vmatpush2.msra.mxu0 0.0
    %6163 = vmatprep.subr.mxu0 0.0
    %6164 = vmatpush2.msra.mxu0 0.0
    %6165 = vmatprep.subr.mxu0 0.0
    %6166 = vmatpush2.msra.mxu0 0.0
    %6167 = vmatprep.mubr.f32.mxu0 0.0
    %6168 = vmatmul.mubr.f32.gmra.mxu0 %v6101
    %v6169 = vpop.f32.mrf.mxu0
    %v6170 = vadd.f32 0.0, %v6169
    %v6171 = vpop.f32.mrf.mxu0
    %6172 = vdwg.mxu0
    %6173 = vrot.lane.b32.xlu0 %v5673, 104
    %v6174 = vpop.permute.xlu0 %6173
    %6175 = vrot.lane.b32.xlu0 %v5675, 72
    %v6176 = vpop.permute.xlu0 %6175
    %v6177 = vsel %vm432, %v6174, 0
    %v6179 = vsel %vm432, %v6176, 0
    %6181 = vmatprep.subr.mxu0 0.0
    %6182 = vmatpush1.xpose.msra.mxu0 0.0
    %6183 = vmatprep.subr.mxu0 0.0
    %6184 = vmatpush1.xpose.msra.mxu0 0.0
    %6185 = vmatprep.subr.mxu0 0.0
    %6186 = vmatpush1.xpose.msra.mxu0 0.0
    %6187 = vmatprep.subr.mxu0 0.0
    %6188 = vmatpush1.xpose.msra.mxu0 0.0
    %6189 = vmatprep.subr.mxu0 0.0
    %6190 = vmatpush1.xpose.msra.mxu0 0.0
    %6191 = vmatprep.subr.mxu0 0.0
    %6192 = vmatpush1.xpose.msra.mxu0 0.0
    %6193 = vmatprep.subr.mxu0 0.0
    %6194 = vmatpush1.xpose.msra.mxu0 0.0
    %6195 = vmatprep.subr.mxu0 0.0
    %6196 = vmatpush1.xpose.msra.mxu0 0.0
    %6197 = vmatprep.subr.mxu0 0.0
    %6198 = vmatpush1.xpose.msra.mxu0 0.0
    %6199 = vmatprep.subr.mxu0 0.0
    %6200 = vmatpush1.xpose.msra.mxu0 0.0
    %6201 = vmatprep.subr.mxu0 0.0
    %6202 = vmatpush1.xpose.msra.mxu0 0.0
    %6203 = vmatprep.subr.mxu0 0.0
    %6204 = vmatpush1.xpose.msra.mxu0 0.0
    %6205 = vmatprep.subr.mxu0 0.0
    %6206 = vmatpush1.xpose.msra.mxu0 0.0
    %6207 = vmatprep.subr.mxu0 0.0
    %6208 = vmatpush1.xpose.msra.mxu0 0.0
    %6209 = vmatprep.subr.mxu0 0.0
    %6210 = vmatpush1.xpose.msra.mxu0 0.0
    %6211 = vmatprep.subr.mxu0 0.0
    %6212 = vmatpush1.xpose.msra.mxu0 %v6179
    %6213 = vmatprep.subr.mxu0 0.0
    %6214 = vmatpush2.xpose.msra.mxu0 0.0
    %6215 = vmatprep.subr.mxu0 0.0
    %6216 = vmatpush2.xpose.msra.mxu0 0.0
    %6217 = vmatprep.subr.mxu0 0.0
    %6218 = vmatpush2.xpose.msra.mxu0 0.0
    %6219 = vmatprep.subr.mxu0 0.0
    %6220 = vmatpush2.xpose.msra.mxu0 0.0
    %6221 = vmatprep.subr.mxu0 0.0
    %6222 = vmatpush2.xpose.msra.mxu0 0.0
    %6223 = vmatprep.subr.mxu0 0.0
    %6224 = vmatpush2.xpose.msra.mxu0 0.0
    %6225 = vmatprep.subr.mxu0 0.0
    %6226 = vmatpush2.xpose.msra.mxu0 0.0
    %6227 = vmatprep.subr.mxu0 0.0
    %6228 = vmatpush2.xpose.msra.mxu0 0.0
    %6229 = vmatprep.subr.mxu0 0.0
    %6230 = vmatpush2.xpose.msra.mxu0 0.0
    %6231 = vmatprep.subr.mxu0 0.0
    %6232 = vmatpush2.xpose.msra.mxu0 0.0
    %6233 = vmatprep.subr.mxu0 0.0
    %6234 = vmatpush2.xpose.msra.mxu0 0.0
    %6235 = vmatprep.subr.mxu0 0.0
    %6236 = vmatpush2.xpose.msra.mxu0 0.0
    %6237 = vmatprep.subr.mxu0 0.0
    %6238 = vmatpush2.xpose.msra.mxu0 0.0
    %6239 = vmatprep.subr.mxu0 0.0
    %6240 = vmatpush2.xpose.msra.mxu0 0.0
    %6241 = vmatprep.subr.mxu0 0.0
    %6242 = vmatpush2.xpose.msra.mxu0 0.0
    %6243 = vmatprep.subr.mxu0 0.0
    %6244 = vmatpush2.xpose.msra.mxu0 0.0
    %6245 = vmatprep.mubr.f32.mxu0 0.0
    %6246 = vmatmul.mubr.f32.gmra.mxu0 %v6177
    %v6247 = vpop.f32.mrf.mxu0
    %v6248 = vadd.f32 0.0, %v6247
    %v6249 = vpop.f32.mrf.mxu0
    %6250 = vdwg.mxu0
    %v6251 = vsel %vm432, %v6248, -inf
    %6252 = vmax.xlane.f32.xlu0 %v6251
    %v6253 = vpop.xlane.xlu0 %6252
    %v6254 = vsub.f32 %v6248, %v6253
    %v6255 = vmul.f32 %v6254, 1.442695
    %v6256 = vpow.pop %v6255
    %v6257 = vsel %vm432, %v6256, 0.0
    %6258 = vadd.xlane.f32.xlu0 %v6257
    %v6259 = vpop.xlane.xlu0 %6258
    %v6260 = vrcp.pop %v6259
    %v6261 = vmul.f32 %v6256, %v6260
    %6262 = vrot.lane.b32.xlu0 %v5663, 40
    %v6263 = vpop.permute.xlu0 %6262
    %v6266 = vsel %vm432, %v6261, 0
    %6268 = vmatprep.subr.mxu0 0.0
    %6269 = vmatpush1.msra.mxu0 0.0
    %6270 = vmatprep.subr.mxu0 0.0
    %6271 = vmatpush1.msra.mxu0 0.0
    %6272 = vmatprep.subr.mxu0 0.0
    %6273 = vmatpush1.msra.mxu0 0.0
    %6274 = vmatprep.subr.mxu0 0.0
    %6275 = vmatpush1.msra.mxu0 0.0
    %6276 = vmatprep.subr.mxu0 0.0
    %6277 = vmatpush1.msra.mxu0 0.0
    %6278 = vmatprep.subr.mxu0 0.0
    %6279 = vmatpush1.msra.mxu0 0.0
    %6280 = vmatprep.subr.mxu0 0.0
    %6281 = vmatpush1.msra.mxu0 0.0
    %6282 = vmatprep.subr.mxu0 0.0
    %6283 = vmatpush1.msra.mxu0 0.0
    %6284 = vmatprep.subr.mxu0 0.0
    %6285 = vmatpush1.msra.mxu0 0.0
    %6286 = vmatprep.subr.mxu0 0.0
    %6287 = vmatpush1.msra.mxu0 0.0
    %6288 = vmatprep.subr.mxu0 0.0
    %6289 = vmatpush1.msra.mxu0 0.0
    %6290 = vmatprep.subr.mxu0 0.0
    %6291 = vmatpush1.msra.mxu0 0.0
    %6292 = vmatprep.subr.mxu0 0.0
    %6293 = vmatpush1.msra.mxu0 0.0
    %6294 = vmatprep.subr.mxu0 0.0
    %6295 = vmatpush1.msra.mxu0 0.0
    %6296 = vmatprep.subr.mxu0 0.0
    %6297 = vmatpush1.msra.mxu0 0.0
    %6298 = vmatprep.subr.mxu0 0.0
    %6299 = vmatpush1.msra.mxu0 %v6263
    %6300 = vmatprep.subr.mxu0 0.0
    %6301 = vmatpush2.msra.mxu0 0.0
    %6302 = vmatprep.subr.mxu0 0.0
    %6303 = vmatpush2.msra.mxu0 0.0
    %6304 = vmatprep.subr.mxu0 0.0
    %6305 = vmatpush2.msra.mxu0 0.0
    %6306 = vmatprep.subr.mxu0 0.0
    %6307 = vmatpush2.msra.mxu0 0.0
    %6308 = vmatprep.subr.mxu0 0.0
    %6309 = vmatpush2.msra.mxu0 0.0
    %6310 = vmatprep.subr.mxu0 0.0
    %6311 = vmatpush2.msra.mxu0 0.0
    %6312 = vmatprep.subr.mxu0 0.0
    %6313 = vmatpush2.msra.mxu0 0.0
    %6314 = vmatprep.subr.mxu0 0.0
    %6315 = vmatpush2.msra.mxu0 0.0
    %6316 = vmatprep.subr.mxu0 0.0
    %6317 = vmatpush2.msra.mxu0 0.0
    %6318 = vmatprep.subr.mxu0 0.0
    %6319 = vmatpush2.msra.mxu0 0.0
    %6320 = vmatprep.subr.mxu0 0.0
    %6321 = vmatpush2.msra.mxu0 0.0
    %6322 = vmatprep.subr.mxu0 0.0
    %6323 = vmatpush2.msra.mxu0 0.0
    %6324 = vmatprep.subr.mxu0 0.0
    %6325 = vmatpush2.msra.mxu0 0.0
    %6326 = vmatprep.subr.mxu0 0.0
    %6327 = vmatpush2.msra.mxu0 0.0
    %6328 = vmatprep.subr.mxu0 0.0
    %6329 = vmatpush2.msra.mxu0 0.0
    %6330 = vmatprep.subr.mxu0 0.0
    %6331 = vmatpush2.msra.mxu0 0.0
    %6332 = vmatprep.mubr.f32.mxu0 0.0
    %6333 = vmatmul.mubr.f32.gmra.mxu0 %v6266
    %v6334 = vpop.f32.mrf.mxu0
    %v6335 = vadd.f32 0.0, %v6334
    %v6336 = vpop.f32.mrf.mxu0
    %6337 = vdwg.mxu0
    %6339 = vrot.lane.b32.xlu0 %v6005, 8
    %v6340 = vpop.permute.xlu0 %6339
    %6343 = vrot.lane.b32.xlu0 %v6170, 16
    %v6344 = vpop.permute.xlu0 %6343
    %6347 = vrot.lane.b32.xlu0 %v6335, 24
    %v6348 = vpop.permute.xlu0 %6347
    %v6350 = vsel %vm432, %v5840, %v6340
    %v6351 = vsel %vm1104, %v6350, %v6344
    %v6352 = vsel %vm1106, %v6351, %v6348
    %6354 = vrot.lane.b32.xlu0 %v5676, 96
    %v6355 = vpop.permute.xlu0 %6354
    %v6357 = vsel %vm432, %v5674, 0
    %v6359 = vsel %vm432, %v6355, 0
    %6361 = vmatprep.subr.mxu0 0.0
    %6362 = vmatpush1.xpose.msra.mxu0 0.0
    %6363 = vmatprep.subr.mxu0 0.0
    %6364 = vmatpush1.xpose.msra.mxu0 0.0
    %6365 = vmatprep.subr.mxu0 0.0
    %6366 = vmatpush1.xpose.msra.mxu0 0.0
    %6367 = vmatprep.subr.mxu0 0.0
    %6368 = vmatpush1.xpose.msra.mxu0 0.0
    %6369 = vmatprep.subr.mxu0 0.0
    %6370 = vmatpush1.xpose.msra.mxu0 0.0
    %6371 = vmatprep.subr.mxu0 0.0
    %6372 = vmatpush1.xpose.msra.mxu0 0.0
    %6373 = vmatprep.subr.mxu0 0.0
    %6374 = vmatpush1.xpose.msra.mxu0 0.0
    %6375 = vmatprep.subr.mxu0 0.0
    %6376 = vmatpush1.xpose.msra.mxu0 0.0
    %6377 = vmatprep.subr.mxu0 0.0
    %6378 = vmatpush1.xpose.msra.mxu0 0.0
    %6379 = vmatprep.subr.mxu0 0.0
    %6380 = vmatpush1.xpose.msra.mxu0 0.0
    %6381 = vmatprep.subr.mxu0 0.0
    %6382 = vmatpush1.xpose.msra.mxu0 0.0
    %6383 = vmatprep.subr.mxu0 0.0
    %6384 = vmatpush1.xpose.msra.mxu0 0.0
    %6385 = vmatprep.subr.mxu0 0.0
    %6386 = vmatpush1.xpose.msra.mxu0 0.0
    %6387 = vmatprep.subr.mxu0 0.0
    %6388 = vmatpush1.xpose.msra.mxu0 0.0
    %6389 = vmatprep.subr.mxu0 0.0
    %6390 = vmatpush1.xpose.msra.mxu0 0.0
    %6391 = vmatprep.subr.mxu0 0.0
    %6392 = vmatpush1.xpose.msra.mxu0 %v6359
    %6393 = vmatprep.subr.mxu0 0.0
    %6394 = vmatpush2.xpose.msra.mxu0 0.0
    %6395 = vmatprep.subr.mxu0 0.0
    %6396 = vmatpush2.xpose.msra.mxu0 0.0
    %6397 = vmatprep.subr.mxu0 0.0
    %6398 = vmatpush2.xpose.msra.mxu0 0.0
    %6399 = vmatprep.subr.mxu0 0.0
    %6400 = vmatpush2.xpose.msra.mxu0 0.0
    %6401 = vmatprep.subr.mxu0 0.0
    %6402 = vmatpush2.xpose.msra.mxu0 0.0
    %6403 = vmatprep.subr.mxu0 0.0
    %6404 = vmatpush2.xpose.msra.mxu0 0.0
    %6405 = vmatprep.subr.mxu0 0.0
    %6406 = vmatpush2.xpose.msra.mxu0 0.0
    %6407 = vmatprep.subr.mxu0 0.0
    %6408 = vmatpush2.xpose.msra.mxu0 0.0
    %6409 = vmatprep.subr.mxu0 0.0
    %6410 = vmatpush2.xpose.msra.mxu0 0.0
    %6411 = vmatprep.subr.mxu0 0.0
    %6412 = vmatpush2.xpose.msra.mxu0 0.0
    %6413 = vmatprep.subr.mxu0 0.0
    %6414 = vmatpush2.xpose.msra.mxu0 0.0
    %6415 = vmatprep.subr.mxu0 0.0
    %6416 = vmatpush2.xpose.msra.mxu0 0.0
    %6417 = vmatprep.subr.mxu0 0.0
    %6418 = vmatpush2.xpose.msra.mxu0 0.0
    %6419 = vmatprep.subr.mxu0 0.0
    %6420 = vmatpush2.xpose.msra.mxu0 0.0
    %6421 = vmatprep.subr.mxu0 0.0
    %6422 = vmatpush2.xpose.msra.mxu0 0.0
    %6423 = vmatprep.subr.mxu0 0.0
    %6424 = vmatpush2.xpose.msra.mxu0 0.0
    %6425 = vmatprep.mubr.f32.mxu0 0.0
    %6426 = vmatmul.mubr.f32.gmra.mxu0 %v6357
    %v6427 = vpop.f32.mrf.mxu0
    %v6428 = vadd.f32 0.0, %v6427
    %v6429 = vpop.f32.mrf.mxu0
    %6430 = vdwg.mxu0
    %v6431 = vsel %vm432, %v6428, -inf
    %6432 = vmax.xlane.f32.xlu0 %v6431
    %v6433 = vpop.xlane.xlu0 %6432
    %v6434 = vsub.f32 %v6428, %v6433
    %v6435 = vmul.f32 %v6434, 1.442695
    %v6436 = vpow.pop %v6435
    %v6437 = vsel %vm432, %v6436, 0.0
    %6438 = vadd.xlane.f32.xlu0 %v6437
    %v6439 = vpop.xlane.xlu0 %6438
    %v6440 = vrcp.pop %v6439
    %v6441 = vmul.f32 %v6436, %v6440
    %6443 = vrot.lane.b32.xlu0 %v5668, 64
    %v6444 = vpop.permute.xlu0 %6443
    %v6447 = vsel %vm432, %v6441, 0
    %6449 = vmatprep.subr.mxu0 0.0
    %6450 = vmatpush1.msra.mxu0 0.0
    %6451 = vmatprep.subr.mxu0 0.0
    %6452 = vmatpush1.msra.mxu0 0.0
    %6453 = vmatprep.subr.mxu0 0.0
    %6454 = vmatpush1.msra.mxu0 0.0
    %6455 = vmatprep.subr.mxu0 0.0
    %6456 = vmatpush1.msra.mxu0 0.0
    %6457 = vmatprep.subr.mxu0 0.0
    %6458 = vmatpush1.msra.mxu0 0.0
    %6459 = vmatprep.subr.mxu0 0.0
    %6460 = vmatpush1.msra.mxu0 0.0
    %6461 = vmatprep.subr.mxu0 0.0
    %6462 = vmatpush1.msra.mxu0 0.0
    %6463 = vmatprep.subr.mxu0 0.0
    %6464 = vmatpush1.msra.mxu0 0.0
    %6465 = vmatprep.subr.mxu0 0.0
    %6466 = vmatpush1.msra.mxu0 0.0
    %6467 = vmatprep.subr.mxu0 0.0
    %6468 = vmatpush1.msra.mxu0 0.0
    %6469 = vmatprep.subr.mxu0 0.0
    %6470 = vmatpush1.msra.mxu0 0.0
    %6471 = vmatprep.subr.mxu0 0.0
    %6472 = vmatpush1.msra.mxu0 0.0
    %6473 = vmatprep.subr.mxu0 0.0
    %6474 = vmatpush1.msra.mxu0 0.0
    %6475 = vmatprep.subr.mxu0 0.0
    %6476 = vmatpush1.msra.mxu0 0.0
    %6477 = vmatprep.subr.mxu0 0.0
    %6478 = vmatpush1.msra.mxu0 0.0
    %6479 = vmatprep.subr.mxu0 0.0
    %6480 = vmatpush1.msra.mxu0 %v6444
    %6481 = vmatprep.subr.mxu0 0.0
    %6482 = vmatpush2.msra.mxu0 0.0
    %6483 = vmatprep.subr.mxu0 0.0
    %6484 = vmatpush2.msra.mxu0 0.0
    %6485 = vmatprep.subr.mxu0 0.0
    %6486 = vmatpush2.msra.mxu0 0.0
    %6487 = vmatprep.subr.mxu0 0.0
    %6488 = vmatpush2.msra.mxu0 0.0
    %6489 = vmatprep.subr.mxu0 0.0
    %6490 = vmatpush2.msra.mxu0 0.0
    %6491 = vmatprep.subr.mxu0 0.0
    %6492 = vmatpush2.msra.mxu0 0.0
    %6493 = vmatprep.subr.mxu0 0.0
    %6494 = vmatpush2.msra.mxu0 0.0
    %6495 = vmatprep.subr.mxu0 0.0
    %6496 = vmatpush2.msra.mxu0 0.0
    %6497 = vmatprep.subr.mxu0 0.0
    %6498 = vmatpush2.msra.mxu0 0.0
    %6499 = vmatprep.subr.mxu0 0.0
    %6500 = vmatpush2.msra.mxu0 0.0
    %6501 = vmatprep.subr.mxu0 0.0
    %6502 = vmatpush2.msra.mxu0 0.0
    %6503 = vmatprep.subr.mxu0 0.0
    %6504 = vmatpush2.msra.mxu0 0.0
    %6505 = vmatprep.subr.mxu0 0.0
    %6506 = vmatpush2.msra.mxu0 0.0
    %6507 = vmatprep.subr.mxu0 0.0
    %6508 = vmatpush2.msra.mxu0 0.0
    %6509 = vmatprep.subr.mxu0 0.0
    %6510 = vmatpush2.msra.mxu0 0.0
    %6511 = vmatprep.subr.mxu0 0.0
    %6512 = vmatpush2.msra.mxu0 0.0
    %6513 = vmatprep.mubr.f32.mxu0 0.0
    %6514 = vmatmul.mubr.f32.gmra.mxu0 %v6447
    %v6515 = vpop.f32.mrf.mxu0
    %v6516 = vadd.f32 0.0, %v6515
    %v6517 = vpop.f32.mrf.mxu0
    %6518 = vdwg.mxu0
    %6519 = vrot.lane.b32.xlu0 %v5674, 120
    %v6520 = vpop.permute.xlu0 %6519
    %6521 = vrot.lane.b32.xlu0 %v5676, 88
    %v6522 = vpop.permute.xlu0 %6521
    %v6523 = vsel %vm432, %v6520, 0
    %v6525 = vsel %vm432, %v6522, 0
    %6527 = vmatprep.subr.mxu0 0.0
    %6528 = vmatpush1.xpose.msra.mxu0 0.0
    %6529 = vmatprep.subr.mxu0 0.0
    %6530 = vmatpush1.xpose.msra.mxu0 0.0
    %6531 = vmatprep.subr.mxu0 0.0
    %6532 = vmatpush1.xpose.msra.mxu0 0.0
    %6533 = vmatprep.subr.mxu0 0.0
    %6534 = vmatpush1.xpose.msra.mxu0 0.0
    %6535 = vmatprep.subr.mxu0 0.0
    %6536 = vmatpush1.xpose.msra.mxu0 0.0
    %6537 = vmatprep.subr.mxu0 0.0
    %6538 = vmatpush1.xpose.msra.mxu0 0.0
    %6539 = vmatprep.subr.mxu0 0.0
    %6540 = vmatpush1.xpose.msra.mxu0 0.0
    %6541 = vmatprep.subr.mxu0 0.0
    %6542 = vmatpush1.xpose.msra.mxu0 0.0
    %6543 = vmatprep.subr.mxu0 0.0
    %6544 = vmatpush1.xpose.msra.mxu0 0.0
    %6545 = vmatprep.subr.mxu0 0.0
    %6546 = vmatpush1.xpose.msra.mxu0 0.0
    %6547 = vmatprep.subr.mxu0 0.0
    %6548 = vmatpush1.xpose.msra.mxu0 0.0
    %6549 = vmatprep.subr.mxu0 0.0
    %6550 = vmatpush1.xpose.msra.mxu0 0.0
    %6551 = vmatprep.subr.mxu0 0.0
    %6552 = vmatpush1.xpose.msra.mxu0 0.0
    %6553 = vmatprep.subr.mxu0 0.0
    %6554 = vmatpush1.xpose.msra.mxu0 0.0
    %6555 = vmatprep.subr.mxu0 0.0
    %6556 = vmatpush1.xpose.msra.mxu0 0.0
    %6557 = vmatprep.subr.mxu0 0.0
    %6558 = vmatpush1.xpose.msra.mxu0 %v6525
    %6559 = vmatprep.subr.mxu0 0.0
    %6560 = vmatpush2.xpose.msra.mxu0 0.0
    %6561 = vmatprep.subr.mxu0 0.0
    %6562 = vmatpush2.xpose.msra.mxu0 0.0
    %6563 = vmatprep.subr.mxu0 0.0
    %6564 = vmatpush2.xpose.msra.mxu0 0.0
    %6565 = vmatprep.subr.mxu0 0.0
    %6566 = vmatpush2.xpose.msra.mxu0 0.0
    %6567 = vmatprep.subr.mxu0 0.0
    %6568 = vmatpush2.xpose.msra.mxu0 0.0
    %6569 = vmatprep.subr.mxu0 0.0
    %6570 = vmatpush2.xpose.msra.mxu0 0.0
    %6571 = vmatprep.subr.mxu0 0.0
    %6572 = vmatpush2.xpose.msra.mxu0 0.0
    %6573 = vmatprep.subr.mxu0 0.0
    %6574 = vmatpush2.xpose.msra.mxu0 0.0
    %6575 = vmatprep.subr.mxu0 0.0
    %6576 = vmatpush2.xpose.msra.mxu0 0.0
    %6577 = vmatprep.subr.mxu0 0.0
    %6578 = vmatpush2.xpose.msra.mxu0 0.0
    %6579 = vmatprep.subr.mxu0 0.0
    %6580 = vmatpush2.xpose.msra.mxu0 0.0
    %6581 = vmatprep.subr.mxu0 0.0
    %6582 = vmatpush2.xpose.msra.mxu0 0.0
    %6583 = vmatprep.subr.mxu0 0.0
    %6584 = vmatpush2.xpose.msra.mxu0 0.0
    %6585 = vmatprep.subr.mxu0 0.0
    %6586 = vmatpush2.xpose.msra.mxu0 0.0
    %6587 = vmatprep.subr.mxu0 0.0
    %6588 = vmatpush2.xpose.msra.mxu0 0.0
    %6589 = vmatprep.subr.mxu0 0.0
    %6590 = vmatpush2.xpose.msra.mxu0 0.0
    %6591 = vmatprep.mubr.f32.mxu0 0.0
    %6592 = vmatmul.mubr.f32.gmra.mxu0 %v6523
    %v6593 = vpop.f32.mrf.mxu0
    %v6594 = vadd.f32 0.0, %v6593
    %v6595 = vpop.f32.mrf.mxu0
    %6596 = vdwg.mxu0
    %v6597 = vsel %vm432, %v6594, -inf
    %6598 = vmax.xlane.f32.xlu0 %v6597
    %v6599 = vpop.xlane.xlu0 %6598
    %v6600 = vsub.f32 %v6594, %v6599
    %v6601 = vmul.f32 %v6600, 1.442695
    %v6602 = vpow.pop %v6601
    %v6603 = vsel %vm432, %v6602, 0.0
    %6604 = vadd.xlane.f32.xlu0 %v6603
    %v6605 = vpop.xlane.xlu0 %6604
    %v6606 = vrcp.pop %v6605
    %v6607 = vmul.f32 %v6602, %v6606
    %6608 = vrot.lane.b32.xlu0 %v5668, 56
    %v6609 = vpop.permute.xlu0 %6608
    %v6612 = vsel %vm432, %v6607, 0
    %6614 = vmatprep.subr.mxu0 0.0
    %6615 = vmatpush1.msra.mxu0 0.0
    %6616 = vmatprep.subr.mxu0 0.0
    %6617 = vmatpush1.msra.mxu0 0.0
    %6618 = vmatprep.subr.mxu0 0.0
    %6619 = vmatpush1.msra.mxu0 0.0
    %6620 = vmatprep.subr.mxu0 0.0
    %6621 = vmatpush1.msra.mxu0 0.0
    %6622 = vmatprep.subr.mxu0 0.0
    %6623 = vmatpush1.msra.mxu0 0.0
    %6624 = vmatprep.subr.mxu0 0.0
    %6625 = vmatpush1.msra.mxu0 0.0
    %6626 = vmatprep.subr.mxu0 0.0
    %6627 = vmatpush1.msra.mxu0 0.0
    %6628 = vmatprep.subr.mxu0 0.0
    %6629 = vmatpush1.msra.mxu0 0.0
    %6630 = vmatprep.subr.mxu0 0.0
    %6631 = vmatpush1.msra.mxu0 0.0
    %6632 = vmatprep.subr.mxu0 0.0
    %6633 = vmatpush1.msra.mxu0 0.0
    %6634 = vmatprep.subr.mxu0 0.0
    %6635 = vmatpush1.msra.mxu0 0.0
    %6636 = vmatprep.subr.mxu0 0.0
    %6637 = vmatpush1.msra.mxu0 0.0
    %6638 = vmatprep.subr.mxu0 0.0
    %6639 = vmatpush1.msra.mxu0 0.0
    %6640 = vmatprep.subr.mxu0 0.0
    %6641 = vmatpush1.msra.mxu0 0.0
    %6642 = vmatprep.subr.mxu0 0.0
    %6643 = vmatpush1.msra.mxu0 0.0
    %6644 = vmatprep.subr.mxu0 0.0
    %6645 = vmatpush1.msra.mxu0 %v6609
    %6646 = vmatprep.subr.mxu0 0.0
    %6647 = vmatpush2.msra.mxu0 0.0
    %6648 = vmatprep.subr.mxu0 0.0
    %6649 = vmatpush2.msra.mxu0 0.0
    %6650 = vmatprep.subr.mxu0 0.0
    %6651 = vmatpush2.msra.mxu0 0.0
    %6652 = vmatprep.subr.mxu0 0.0
    %6653 = vmatpush2.msra.mxu0 0.0
    %6654 = vmatprep.subr.mxu0 0.0
    %6655 = vmatpush2.msra.mxu0 0.0
    %6656 = vmatprep.subr.mxu0 0.0
    %6657 = vmatpush2.msra.mxu0 0.0
    %6658 = vmatprep.subr.mxu0 0.0
    %6659 = vmatpush2.msra.mxu0 0.0
    %6660 = vmatprep.subr.mxu0 0.0
    %6661 = vmatpush2.msra.mxu0 0.0
    %6662 = vmatprep.subr.mxu0 0.0
    %6663 = vmatpush2.msra.mxu0 0.0
    %6664 = vmatprep.subr.mxu0 0.0
    %6665 = vmatpush2.msra.mxu0 0.0
    %6666 = vmatprep.subr.mxu0 0.0
    %6667 = vmatpush2.msra.mxu0 0.0
    %6668 = vmatprep.subr.mxu0 0.0
    %6669 = vmatpush2.msra.mxu0 0.0
    %6670 = vmatprep.subr.mxu0 0.0
    %6671 = vmatpush2.msra.mxu0 0.0
    %6672 = vmatprep.subr.mxu0 0.0
    %6673 = vmatpush2.msra.mxu0 0.0
    %6674 = vmatprep.subr.mxu0 0.0
    %6675 = vmatpush2.msra.mxu0 0.0
    %6676 = vmatprep.subr.mxu0 0.0
    %6677 = vmatpush2.msra.mxu0 0.0
    %6678 = vmatprep.mubr.f32.mxu0 0.0
    %6679 = vmatmul.mubr.f32.gmra.mxu0 %v6612
    %v6680 = vpop.f32.mrf.mxu0
    %v6681 = vadd.f32 0.0, %v6680
    %v6682 = vpop.f32.mrf.mxu0
    %6683 = vdwg.mxu0
    %6684 = vrot.lane.b32.xlu0 %v5674, 112
    %v6685 = vpop.permute.xlu0 %6684
    %6686 = vrot.lane.b32.xlu0 %v5676, 80
    %v6687 = vpop.permute.xlu0 %6686
    %v6688 = vsel %vm432, %v6685, 0
    %v6690 = vsel %vm432, %v6687, 0
    %6692 = vmatprep.subr.mxu0 0.0
    %6693 = vmatpush1.xpose.msra.mxu0 0.0
    %6694 = vmatprep.subr.mxu0 0.0
    %6695 = vmatpush1.xpose.msra.mxu0 0.0
    %6696 = vmatprep.subr.mxu0 0.0
    %6697 = vmatpush1.xpose.msra.mxu0 0.0
    %6698 = vmatprep.subr.mxu0 0.0
    %6699 = vmatpush1.xpose.msra.mxu0 0.0
    %6700 = vmatprep.subr.mxu0 0.0
    %6701 = vmatpush1.xpose.msra.mxu0 0.0
    %6702 = vmatprep.subr.mxu0 0.0
    %6703 = vmatpush1.xpose.msra.mxu0 0.0
    %6704 = vmatprep.subr.mxu0 0.0
    %6705 = vmatpush1.xpose.msra.mxu0 0.0
    %6706 = vmatprep.subr.mxu0 0.0
    %6707 = vmatpush1.xpose.msra.mxu0 0.0
    %6708 = vmatprep.subr.mxu0 0.0
    %6709 = vmatpush1.xpose.msra.mxu0 0.0
    %6710 = vmatprep.subr.mxu0 0.0
    %6711 = vmatpush1.xpose.msra.mxu0 0.0
    %6712 = vmatprep.subr.mxu0 0.0
    %6713 = vmatpush1.xpose.msra.mxu0 0.0
    %6714 = vmatprep.subr.mxu0 0.0
    %6715 = vmatpush1.xpose.msra.mxu0 0.0
    %6716 = vmatprep.subr.mxu0 0.0
    %6717 = vmatpush1.xpose.msra.mxu0 0.0
    %6718 = vmatprep.subr.mxu0 0.0
    %6719 = vmatpush1.xpose.msra.mxu0 0.0
    %6720 = vmatprep.subr.mxu0 0.0
    %6721 = vmatpush1.xpose.msra.mxu0 0.0
    %6722 = vmatprep.subr.mxu0 0.0
    %6723 = vmatpush1.xpose.msra.mxu0 %v6690
    %6724 = vmatprep.subr.mxu0 0.0
    %6725 = vmatpush2.xpose.msra.mxu0 0.0
    %6726 = vmatprep.subr.mxu0 0.0
    %6727 = vmatpush2.xpose.msra.mxu0 0.0
    %6728 = vmatprep.subr.mxu0 0.0
    %6729 = vmatpush2.xpose.msra.mxu0 0.0
    %6730 = vmatprep.subr.mxu0 0.0
    %6731 = vmatpush2.xpose.msra.mxu0 0.0
    %6732 = vmatprep.subr.mxu0 0.0
    %6733 = vmatpush2.xpose.msra.mxu0 0.0
    %6734 = vmatprep.subr.mxu0 0.0
    %6735 = vmatpush2.xpose.msra.mxu0 0.0
    %6736 = vmatprep.subr.mxu0 0.0
    %6737 = vmatpush2.xpose.msra.mxu0 0.0
    %6738 = vmatprep.subr.mxu0 0.0
    %6739 = vmatpush2.xpose.msra.mxu0 0.0
    %6740 = vmatprep.subr.mxu0 0.0
    %6741 = vmatpush2.xpose.msra.mxu0 0.0
    %6742 = vmatprep.subr.mxu0 0.0
    %6743 = vmatpush2.xpose.msra.mxu0 0.0
    %6744 = vmatprep.subr.mxu0 0.0
    %6745 = vmatpush2.xpose.msra.mxu0 0.0
    %6746 = vmatprep.subr.mxu0 0.0
    %6747 = vmatpush2.xpose.msra.mxu0 0.0
    %6748 = vmatprep.subr.mxu0 0.0
    %6749 = vmatpush2.xpose.msra.mxu0 0.0
    %6750 = vmatprep.subr.mxu0 0.0
    %6751 = vmatpush2.xpose.msra.mxu0 0.0
    %6752 = vmatprep.subr.mxu0 0.0
    %6753 = vmatpush2.xpose.msra.mxu0 0.0
    %6754 = vmatprep.subr.mxu0 0.0
    %6755 = vmatpush2.xpose.msra.mxu0 0.0
    %6756 = vmatprep.mubr.f32.mxu0 0.0
    %6757 = vmatmul.mubr.f32.gmra.mxu0 %v6688
    %v6758 = vpop.f32.mrf.mxu0
    %v6759 = vadd.f32 0.0, %v6758
    %v6760 = vpop.f32.mrf.mxu0
    %6761 = vdwg.mxu0
    %v6762 = vsel %vm432, %v6759, -inf
    %6763 = vmax.xlane.f32.xlu0 %v6762
    %v6764 = vpop.xlane.xlu0 %6763
    %v6765 = vsub.f32 %v6759, %v6764
    %v6766 = vmul.f32 %v6765, 1.442695
    %v6767 = vpow.pop %v6766
    %v6768 = vsel %vm432, %v6767, 0.0
    %6769 = vadd.xlane.f32.xlu0 %v6768
    %v6770 = vpop.xlane.xlu0 %6769
    %v6771 = vrcp.pop %v6770
    %v6772 = vmul.f32 %v6767, %v6771
    %6773 = vrot.lane.b32.xlu0 %v5668, 48
    %v6774 = vpop.permute.xlu0 %6773
    %v6777 = vsel %vm432, %v6772, 0
    %6779 = vmatprep.subr.mxu0 0.0
    %6780 = vmatpush1.msra.mxu0 0.0
    %6781 = vmatprep.subr.mxu0 0.0
    %6782 = vmatpush1.msra.mxu0 0.0
    %6783 = vmatprep.subr.mxu0 0.0
    %6784 = vmatpush1.msra.mxu0 0.0
    %6785 = vmatprep.subr.mxu0 0.0
    %6786 = vmatpush1.msra.mxu0 0.0
    %6787 = vmatprep.subr.mxu0 0.0
    %6788 = vmatpush1.msra.mxu0 0.0
    %6789 = vmatprep.subr.mxu0 0.0
    %6790 = vmatpush1.msra.mxu0 0.0
    %6791 = vmatprep.subr.mxu0 0.0
    %6792 = vmatpush1.msra.mxu0 0.0
    %6793 = vmatprep.subr.mxu0 0.0
    %6794 = vmatpush1.msra.mxu0 0.0
    %6795 = vmatprep.subr.mxu0 0.0
    %6796 = vmatpush1.msra.mxu0 0.0
    %6797 = vmatprep.subr.mxu0 0.0
    %6798 = vmatpush1.msra.mxu0 0.0
    %6799 = vmatprep.subr.mxu0 0.0
    %6800 = vmatpush1.msra.mxu0 0.0
    %6801 = vmatprep.subr.mxu0 0.0
    %6802 = vmatpush1.msra.mxu0 0.0
    %6803 = vmatprep.subr.mxu0 0.0
    %6804 = vmatpush1.msra.mxu0 0.0
    %6805 = vmatprep.subr.mxu0 0.0
    %6806 = vmatpush1.msra.mxu0 0.0
    %6807 = vmatprep.subr.mxu0 0.0
    %6808 = vmatpush1.msra.mxu0 0.0
    %6809 = vmatprep.subr.mxu0 0.0
    %6810 = vmatpush1.msra.mxu0 %v6774
    %6811 = vmatprep.subr.mxu0 0.0
    %6812 = vmatpush2.msra.mxu0 0.0
    %6813 = vmatprep.subr.mxu0 0.0
    %6814 = vmatpush2.msra.mxu0 0.0
    %6815 = vmatprep.subr.mxu0 0.0
    %6816 = vmatpush2.msra.mxu0 0.0
    %6817 = vmatprep.subr.mxu0 0.0
    %6818 = vmatpush2.msra.mxu0 0.0
    %6819 = vmatprep.subr.mxu0 0.0
    %6820 = vmatpush2.msra.mxu0 0.0
    %6821 = vmatprep.subr.mxu0 0.0
    %6822 = vmatpush2.msra.mxu0 0.0
    %6823 = vmatprep.subr.mxu0 0.0
    %6824 = vmatpush2.msra.mxu0 0.0
    %6825 = vmatprep.subr.mxu0 0.0
    %6826 = vmatpush2.msra.mxu0 0.0
    %6827 = vmatprep.subr.mxu0 0.0
    %6828 = vmatpush2.msra.mxu0 0.0
    %6829 = vmatprep.subr.mxu0 0.0
    %6830 = vmatpush2.msra.mxu0 0.0
    %6831 = vmatprep.subr.mxu0 0.0
    %6832 = vmatpush2.msra.mxu0 0.0
    %6833 = vmatprep.subr.mxu0 0.0
    %6834 = vmatpush2.msra.mxu0 0.0
    %6835 = vmatprep.subr.mxu0 0.0
    %6836 = vmatpush2.msra.mxu0 0.0
    %6837 = vmatprep.subr.mxu0 0.0
    %6838 = vmatpush2.msra.mxu0 0.0
    %6839 = vmatprep.subr.mxu0 0.0
    %6840 = vmatpush2.msra.mxu0 0.0
    %6841 = vmatprep.subr.mxu0 0.0
    %6842 = vmatpush2.msra.mxu0 0.0
    %6843 = vmatprep.mubr.f32.mxu0 0.0
    %6844 = vmatmul.mubr.f32.gmra.mxu0 %v6777
    %v6845 = vpop.f32.mrf.mxu0
    %v6846 = vadd.f32 0.0, %v6845
    %v6847 = vpop.f32.mrf.mxu0
    %6848 = vdwg.mxu0
    %6849 = vrot.lane.b32.xlu0 %v5674, 104
    %v6850 = vpop.permute.xlu0 %6849
    %6851 = vrot.lane.b32.xlu0 %v5676, 72
    %v6852 = vpop.permute.xlu0 %6851
    %v6853 = vsel %vm432, %v6850, 0
    %v6855 = vsel %vm432, %v6852, 0
    %6857 = vmatprep.subr.mxu0 0.0
    %6858 = vmatpush1.xpose.msra.mxu0 0.0
    %6859 = vmatprep.subr.mxu0 0.0
    %6860 = vmatpush1.xpose.msra.mxu0 0.0
    %6861 = vmatprep.subr.mxu0 0.0
    %6862 = vmatpush1.xpose.msra.mxu0 0.0
    %6863 = vmatprep.subr.mxu0 0.0
    %6864 = vmatpush1.xpose.msra.mxu0 0.0
    %6865 = vmatprep.subr.mxu0 0.0
    %6866 = vmatpush1.xpose.msra.mxu0 0.0
    %6867 = vmatprep.subr.mxu0 0.0
    %6868 = vmatpush1.xpose.msra.mxu0 0.0
    %6869 = vmatprep.subr.mxu0 0.0
    %6870 = vmatpush1.xpose.msra.mxu0 0.0
    %6871 = vmatprep.subr.mxu0 0.0
    %6872 = vmatpush1.xpose.msra.mxu0 0.0
    %6873 = vmatprep.subr.mxu0 0.0
    %6874 = vmatpush1.xpose.msra.mxu0 0.0
    %6875 = vmatprep.subr.mxu0 0.0
    %6876 = vmatpush1.xpose.msra.mxu0 0.0
    %6877 = vmatprep.subr.mxu0 0.0
    %6878 = vmatpush1.xpose.msra.mxu0 0.0
    %6879 = vmatprep.subr.mxu0 0.0
    %6880 = vmatpush1.xpose.msra.mxu0 0.0
    %6881 = vmatprep.subr.mxu0 0.0
    %6882 = vmatpush1.xpose.msra.mxu0 0.0
    %6883 = vmatprep.subr.mxu0 0.0
    %6884 = vmatpush1.xpose.msra.mxu0 0.0
    %6885 = vmatprep.subr.mxu0 0.0
    %6886 = vmatpush1.xpose.msra.mxu0 0.0
    %6887 = vmatprep.subr.mxu0 0.0
    %6888 = vmatpush1.xpose.msra.mxu0 %v6855
    %6889 = vmatprep.subr.mxu0 0.0
    %6890 = vmatpush2.xpose.msra.mxu0 0.0
    %6891 = vmatprep.subr.mxu0 0.0
    %6892 = vmatpush2.xpose.msra.mxu0 0.0
    %6893 = vmatprep.subr.mxu0 0.0
    %6894 = vmatpush2.xpose.msra.mxu0 0.0
    %6895 = vmatprep.subr.mxu0 0.0
    %6896 = vmatpush2.xpose.msra.mxu0 0.0
    %6897 = vmatprep.subr.mxu0 0.0
    %6898 = vmatpush2.xpose.msra.mxu0 0.0
    %6899 = vmatprep.subr.mxu0 0.0
    %6900 = vmatpush2.xpose.msra.mxu0 0.0
    %6901 = vmatprep.subr.mxu0 0.0
    %6902 = vmatpush2.xpose.msra.mxu0 0.0
    %6903 = vmatprep.subr.mxu0 0.0
    %6904 = vmatpush2.xpose.msra.mxu0 0.0
    %6905 = vmatprep.subr.mxu0 0.0
    %6906 = vmatpush2.xpose.msra.mxu0 0.0
    %6907 = vmatprep.subr.mxu0 0.0
    %6908 = vmatpush2.xpose.msra.mxu0 0.0
    %6909 = vmatprep.subr.mxu0 0.0
    %6910 = vmatpush2.xpose.msra.mxu0 0.0
    %6911 = vmatprep.subr.mxu0 0.0
    %6912 = vmatpush2.xpose.msra.mxu0 0.0
    %6913 = vmatprep.subr.mxu0 0.0
    %6914 = vmatpush2.xpose.msra.mxu0 0.0
    %6915 = vmatprep.subr.mxu0 0.0
    %6916 = vmatpush2.xpose.msra.mxu0 0.0
    %6917 = vmatprep.subr.mxu0 0.0
    %6918 = vmatpush2.xpose.msra.mxu0 0.0
    %6919 = vmatprep.subr.mxu0 0.0
    %6920 = vmatpush2.xpose.msra.mxu0 0.0
    %6921 = vmatprep.mubr.f32.mxu0 0.0
    %6922 = vmatmul.mubr.f32.gmra.mxu0 %v6853
    %v6923 = vpop.f32.mrf.mxu0
    %v6924 = vadd.f32 0.0, %v6923
    %v6925 = vpop.f32.mrf.mxu0
    %6926 = vdwg.mxu0
    %v6927 = vsel %vm432, %v6924, -inf
    %6928 = vmax.xlane.f32.xlu0 %v6927
    %v6929 = vpop.xlane.xlu0 %6928
    %v6930 = vsub.f32 %v6924, %v6929
    %v6931 = vmul.f32 %v6930, 1.442695
    %v6932 = vpow.pop %v6931
    %v6933 = vsel %vm432, %v6932, 0.0
    %6934 = vadd.xlane.f32.xlu0 %v6933
    %v6935 = vpop.xlane.xlu0 %6934
    %v6936 = vrcp.pop %v6935
    %v6937 = vmul.f32 %v6932, %v6936
    %6938 = vrot.lane.b32.xlu0 %v5668, 40
    %v6939 = vpop.permute.xlu0 %6938
    %v6942 = vsel %vm432, %v6937, 0
    %6944 = vmatprep.subr.mxu0 0.0
    %6945 = vmatpush1.msra.mxu0 0.0
    %6946 = vmatprep.subr.mxu0 0.0
    %6947 = vmatpush1.msra.mxu0 0.0
    %6948 = vmatprep.subr.mxu0 0.0
    %6949 = vmatpush1.msra.mxu0 0.0
    %6950 = vmatprep.subr.mxu0 0.0
    %6951 = vmatpush1.msra.mxu0 0.0
    %6952 = vmatprep.subr.mxu0 0.0
    %6953 = vmatpush1.msra.mxu0 0.0
    %6954 = vmatprep.subr.mxu0 0.0
    %6955 = vmatpush1.msra.mxu0 0.0
    %6956 = vmatprep.subr.mxu0 0.0
    %6957 = vmatpush1.msra.mxu0 0.0
    %6958 = vmatprep.subr.mxu0 0.0
    %6959 = vmatpush1.msra.mxu0 0.0
    %6960 = vmatprep.subr.mxu0 0.0
    %6961 = vmatpush1.msra.mxu0 0.0
    %6962 = vmatprep.subr.mxu0 0.0
    %6963 = vmatpush1.msra.mxu0 0.0
    %6964 = vmatprep.subr.mxu0 0.0
    %6965 = vmatpush1.msra.mxu0 0.0
    %6966 = vmatprep.subr.mxu0 0.0
    %6967 = vmatpush1.msra.mxu0 0.0
    %6968 = vmatprep.subr.mxu0 0.0
    %6969 = vmatpush1.msra.mxu0 0.0
    %6970 = vmatprep.subr.mxu0 0.0
    %6971 = vmatpush1.msra.mxu0 0.0
    %6972 = vmatprep.subr.mxu0 0.0
    %6973 = vmatpush1.msra.mxu0 0.0
    %6974 = vmatprep.subr.mxu0 0.0
    %6975 = vmatpush1.msra.mxu0 %v6939
    %6976 = vmatprep.subr.mxu0 0.0
    %6977 = vmatpush2.msra.mxu0 0.0
    %6978 = vmatprep.subr.mxu0 0.0
    %6979 = vmatpush2.msra.mxu0 0.0
    %6980 = vmatprep.subr.mxu0 0.0
    %6981 = vmatpush2.msra.mxu0 0.0
    %6982 = vmatprep.subr.mxu0 0.0
    %6983 = vmatpush2.msra.mxu0 0.0
    %6984 = vmatprep.subr.mxu0 0.0
    %6985 = vmatpush2.msra.mxu0 0.0
    %6986 = vmatprep.subr.mxu0 0.0
    %6987 = vmatpush2.msra.mxu0 0.0
    %6988 = vmatprep.subr.mxu0 0.0
    %6989 = vmatpush2.msra.mxu0 0.0
    %6990 = vmatprep.subr.mxu0 0.0
    %6991 = vmatpush2.msra.mxu0 0.0
    %6992 = vmatprep.subr.mxu0 0.0
    %6993 = vmatpush2.msra.mxu0 0.0
    %6994 = vmatprep.subr.mxu0 0.0
    %6995 = vmatpush2.msra.mxu0 0.0
    %6996 = vmatprep.subr.mxu0 0.0
    %6997 = vmatpush2.msra.mxu0 0.0
    %6998 = vmatprep.subr.mxu0 0.0
    %6999 = vmatpush2.msra.mxu0 0.0
    %7000 = vmatprep.subr.mxu0 0.0
    %7001 = vmatpush2.msra.mxu0 0.0
    %7002 = vmatprep.subr.mxu0 0.0
    %7003 = vmatpush2.msra.mxu0 0.0
    %7004 = vmatprep.subr.mxu0 0.0
    %7005 = vmatpush2.msra.mxu0 0.0
    %7006 = vmatprep.subr.mxu0 0.0
    %7007 = vmatpush2.msra.mxu0 0.0
    %7008 = vmatprep.mubr.f32.mxu0 0.0
    %7009 = vmatmul.mubr.f32.gmra.mxu0 %v6942
    %v7010 = vpop.f32.mrf.mxu0
    %v7011 = vadd.f32 0.0, %v7010
    %v7012 = vpop.f32.mrf.mxu0
    %7013 = vdwg.mxu0
    %7015 = vrot.lane.b32.xlu0 %v6681, 8
    %v7016 = vpop.permute.xlu0 %7015
    %7019 = vrot.lane.b32.xlu0 %v6846, 16
    %v7020 = vpop.permute.xlu0 %7019
    %7023 = vrot.lane.b32.xlu0 %v7011, 24
    %v7024 = vpop.permute.xlu0 %7023
    %v7026 = vsel %vm432, %v6516, %v7016
    %v7027 = vsel %vm1104, %v7026, %v7020
    %v7028 = vsel %vm1106, %v7027, %v7024
    %v7030 = vsel %vm229, %v6352, 0
    %v7033 = vsel %vm229, %v7028, 0
    %7035 = vmatprep.subr.mxu0 0.0
    %7036 = vmatpush1.msra.mxu0 0.0
    %7037 = vmatprep.subr.mxu0 0.0
    %7038 = vmatpush1.msra.mxu0 0.0
    %7039 = vmatprep.subr.mxu0 0.0
    %7040 = vmatpush1.msra.mxu0 0.0
    %7041 = vmatprep.subr.mxu0 0.0
    %7042 = vmatpush1.msra.mxu0 0.0
    %7043 = vmatprep.subr.mxu0 0.0
    %7044 = vmatpush1.msra.mxu0 0.0
    %7045 = vmatprep.subr.mxu0 0.0
    %7046 = vmatpush1.msra.mxu0 0.0
    %7047 = vmatprep.subr.mxu0 0.0
    %7048 = vmatpush1.msra.mxu0 0.0
    %7049 = vmatprep.subr.mxu0 0.0
    %7050 = vmatpush1.msra.mxu0 0.0
    %7051 = vmatprep.subr.mxu0 0.0
    %7052 = vmatpush1.msra.mxu0 0.0
    %7053 = vmatprep.subr.mxu0 0.0
    %7054 = vmatpush1.msra.mxu0 0.0
    %7055 = vmatprep.subr.mxu0 0.0
    %7056 = vmatpush1.msra.mxu0 0.0
    %7057 = vmatprep.subr.mxu0 0.0
    %7058 = vmatpush1.msra.mxu0 0.0
    %7059 = vmatprep.subr.mxu0 0.0
    %7060 = vmatpush1.msra.mxu0 %v77
    %7061 = vmatprep.subr.mxu0 0.0
    %7062 = vmatpush1.msra.mxu0 %v76
    %7063 = vmatprep.subr.mxu0 0.0
    %7064 = vmatpush1.msra.mxu0 %v75
    %7065 = vmatprep.subr.mxu0 0.0
    %7066 = vmatpush1.msra.mxu0 %v74
    %7067 = vmatprep.subr.mxu0 0.0
    %7068 = vmatpush2.msra.mxu0 0.0
    %7069 = vmatprep.subr.mxu0 0.0
    %7070 = vmatpush2.msra.mxu0 0.0
    %7071 = vmatprep.subr.mxu0 0.0
    %7072 = vmatpush2.msra.mxu0 0.0
    %7073 = vmatprep.subr.mxu0 0.0
    %7074 = vmatpush2.msra.mxu0 0.0
    %7075 = vmatprep.subr.mxu0 0.0
    %7076 = vmatpush2.msra.mxu0 0.0
    %7077 = vmatprep.subr.mxu0 0.0
    %7078 = vmatpush2.msra.mxu0 0.0
    %7079 = vmatprep.subr.mxu0 0.0
    %7080 = vmatpush2.msra.mxu0 0.0
    %7081 = vmatprep.subr.mxu0 0.0
    %7082 = vmatpush2.msra.mxu0 0.0
    %7083 = vmatprep.subr.mxu0 0.0
    %7084 = vmatpush2.msra.mxu0 0.0
    %7085 = vmatprep.subr.mxu0 0.0
    %7086 = vmatpush2.msra.mxu0 0.0
    %7087 = vmatprep.subr.mxu0 0.0
    %7088 = vmatpush2.msra.mxu0 0.0
    %7089 = vmatprep.subr.mxu0 0.0
    %7090 = vmatpush2.msra.mxu0 0.0
    %7091 = vmatprep.subr.mxu0 0.0
    %7092 = vmatpush2.msra.mxu0 0.0
    %7093 = vmatprep.subr.mxu0 0.0
    %7094 = vmatpush2.msra.mxu0 0.0
    %7095 = vmatprep.subr.mxu0 0.0
    %7096 = vmatpush2.msra.mxu0 0.0
    %7097 = vmatprep.subr.mxu0 0.0
    %7098 = vmatpush2.msra.mxu0 0.0
    %7099 = vmatprep.mubr.f32.mxu0 0.0
    %7100 = vmatmul.mubr.f32.gmra.mxu0 %v7030
    %v7101 = vpop.f32.mrf.mxu0
    %v7102 = vadd.f32 0.0, %v7101
    %v7103 = vpop.f32.mrf.mxu0
    %7104 = vmatprep.mubr.f32.mxu0 0.0
    %7105 = vmatmul.mubr.f32.gmra.mxu0 %v7033
    %v7106 = vpop.f32.mrf.mxu0
    %v7107 = vadd.f32 0.0, %v7106
    %v7108 = vpop.f32.mrf.mxu0
    %7109 = vdwg.mxu0
    %v7110 = vadd.f32 %v5558, %v7102
    %v7111 = vadd.f32 %v5559, %v7107
    %v7112 = vsel %vm229, %v7110, 0.0
    %7113 = vadd.xlane.f32.xlu0 %v7112
    %v7114 = vpop.xlane.xlu0 %7113
    %v7115 = vsel %vm229, %v7111, 0.0
    %7116 = vadd.xlane.f32.xlu0 %v7115
    %v7117 = vpop.xlane.xlu0 %7116
    %v7118 = vmul.f32 %v7114, %v317
    %v7119 = vmul.f32 %v7117, %v317
    %v7120 = vsub.f32 %v7110, %v7118
    %v7121 = vsub.f32 %v7111, %v7119
    %v7122 = vmul.f32 %v7120, %v7120
    %v7123 = vmul.f32 %v7121, %v7121
    %v7124 = vsel %vm229, %v7122, 0.0
    %7125 = vadd.xlane.f32.xlu0 %v7124
    %v7126 = vpop.xlane.xlu0 %7125
    %v7127 = vsel %vm229, %v7123, 0.0
    %7128 = vadd.xlane.f32.xlu0 %v7127
    %v7129 = vpop.xlane.xlu0 %7128
    %v7130 = vmul.f32 %v7126, %v317
    %v7131 = vmul.f32 %v7129, %v317
    %v7132 = vadd.f32 %v7130, 1e-05
    %v7133 = vadd.f32 %v7131, 1e-05
    %v7134 = vrsqrt.pop %v7132
    %v7135 = vrsqrt.pop %v7133
    %v7136 = vmul.f32 %v7120, %v7134
    %v7137 = vmul.f32 %v7121, %v7135
    %v7138 = vmul.f32 %v7136, %v123
    %v7139 = vmul.f32 %v7137, %v123
    %v7140 = vadd.f32 %v7138, %v130
    %v7141 = vadd.f32 %v7139, %v130
    %v7143 = vsel %vm229, %v7140, 0
    %v7146 = vsel %vm229, %v7141, 0
    %7148 = vmatprep.subr.mxu0 0.0
    %7149 = vmatpush1.msra.mxu0 0.0
    %7150 = vmatprep.subr.mxu0 0.0
    %7151 = vmatpush1.msra.mxu0 0.0
    %7152 = vmatprep.subr.mxu0 0.0
    %7153 = vmatpush1.msra.mxu0 0.0
    %7154 = vmatprep.subr.mxu0 0.0
    %7155 = vmatpush1.msra.mxu0 0.0
    %7156 = vmatprep.subr.mxu0 0.0
    %7157 = vmatpush1.msra.mxu0 0.0
    %7158 = vmatprep.subr.mxu0 0.0
    %7159 = vmatpush1.msra.mxu0 0.0
    %7160 = vmatprep.subr.mxu0 0.0
    %7161 = vmatpush1.msra.mxu0 0.0
    %7162 = vmatprep.subr.mxu0 0.0
    %7163 = vmatpush1.msra.mxu0 0.0
    %7164 = vmatprep.subr.mxu0 0.0
    %7165 = vmatpush1.msra.mxu0 0.0
    %7166 = vmatprep.subr.mxu0 0.0
    %7167 = vmatpush1.msra.mxu0 0.0
    %7168 = vmatprep.subr.mxu0 0.0
    %7169 = vmatpush1.msra.mxu0 0.0
    %7170 = vmatprep.subr.mxu0 0.0
    %7171 = vmatpush1.msra.mxu0 0.0
    %7172 = vmatprep.subr.mxu0 0.0
    %7173 = vmatpush1.msra.mxu0 %v81
    %7174 = vmatprep.subr.mxu0 0.0
    %7175 = vmatpush1.msra.mxu0 %v80
    %7176 = vmatprep.subr.mxu0 0.0
    %7177 = vmatpush1.msra.mxu0 %v79
    %7178 = vmatprep.subr.mxu0 0.0
    %7179 = vmatpush1.msra.mxu0 %v78
    %7180 = vmatprep.subr.mxu0 0.0
    %7181 = vmatpush2.msra.mxu0 0.0
    %7182 = vmatprep.subr.mxu0 0.0
    %7183 = vmatpush2.msra.mxu0 0.0
    %7184 = vmatprep.subr.mxu0 0.0
    %7185 = vmatpush2.msra.mxu0 0.0
    %7186 = vmatprep.subr.mxu0 0.0
    %7187 = vmatpush2.msra.mxu0 0.0
    %7188 = vmatprep.subr.mxu0 0.0
    %7189 = vmatpush2.msra.mxu0 0.0
    %7190 = vmatprep.subr.mxu0 0.0
    %7191 = vmatpush2.msra.mxu0 0.0
    %7192 = vmatprep.subr.mxu0 0.0
    %7193 = vmatpush2.msra.mxu0 0.0
    %7194 = vmatprep.subr.mxu0 0.0
    %7195 = vmatpush2.msra.mxu0 0.0
    %7196 = vmatprep.subr.mxu0 0.0
    %7197 = vmatpush2.msra.mxu0 0.0
    %7198 = vmatprep.subr.mxu0 0.0
    %7199 = vmatpush2.msra.mxu0 0.0
    %7200 = vmatprep.subr.mxu0 0.0
    %7201 = vmatpush2.msra.mxu0 0.0
    %7202 = vmatprep.subr.mxu0 0.0
    %7203 = vmatpush2.msra.mxu0 0.0
    %7204 = vmatprep.subr.mxu0 0.0
    %7205 = vmatpush2.msra.mxu0 0.0
    %7206 = vmatprep.subr.mxu0 0.0
    %7207 = vmatpush2.msra.mxu0 0.0
    %7208 = vmatprep.subr.mxu0 0.0
    %7209 = vmatpush2.msra.mxu0 0.0
    %7210 = vmatprep.subr.mxu0 0.0
    %7211 = vmatpush2.msra.mxu0 0.0
    %7212 = vmatprep.mubr.f32.mxu0 0.0
    %7213 = vmatmul.mubr.f32.gmra.mxu0 %v7143
    %v7214 = vpop.f32.mrf.mxu0
    %v7215 = vadd.f32 %v95, %v7214
    %v7216 = vpop.f32.mrf.mxu0
    %7217 = vmatprep.mubr.f32.mxu0 0.0
    %7218 = vmatmul.mubr.f32.gmra.mxu0 %v7146
    %v7219 = vpop.f32.mrf.mxu0
    %v7220 = vadd.f32 %v95, %v7219
    %v7221 = vpop.f32.mrf.mxu0
    %7222 = vdwg.mxu0
    %v7223 = vmax.f32 %v7215, 0.0
    %v7224 = vmax.f32 %v7220, 0.0
    %v7226 = vsel %vm1980, %v7223, 0
    %v7229 = vsel %vm1980, %v7224, 0
    %7231 = vmatprep.subr.mxu0 0.0
    %7232 = vmatpush1.msra.mxu0 0.0
    %7233 = vmatprep.subr.mxu0 0.0
    %7234 = vmatpush1.msra.mxu0 0.0
    %7235 = vmatprep.subr.mxu0 0.0
    %7236 = vmatpush1.msra.mxu0 0.0
    %7237 = vmatprep.subr.mxu0 0.0
    %7238 = vmatpush1.msra.mxu0 0.0
    %7239 = vmatprep.subr.mxu0 0.0
    %7240 = vmatpush1.msra.mxu0 0.0
    %7241 = vmatprep.subr.mxu0 0.0
    %7242 = vmatpush1.msra.mxu0 0.0
    %7243 = vmatprep.subr.mxu0 0.0
    %7244 = vmatpush1.msra.mxu0 0.0
    %7245 = vmatprep.subr.mxu0 0.0
    %7246 = vmatpush1.msra.mxu0 0.0
    %7247 = vmatprep.subr.mxu0 0.0
    %7248 = vmatpush1.msra.mxu0 %v89
    %7249 = vmatprep.subr.mxu0 0.0
    %7250 = vmatpush1.msra.mxu0 %v88
    %7251 = vmatprep.subr.mxu0 0.0
    %7252 = vmatpush1.msra.mxu0 %v87
    %7253 = vmatprep.subr.mxu0 0.0
    %7254 = vmatpush1.msra.mxu0 %v86
    %7255 = vmatprep.subr.mxu0 0.0
    %7256 = vmatpush1.msra.mxu0 %v85
    %7257 = vmatprep.subr.mxu0 0.0
    %7258 = vmatpush1.msra.mxu0 %v84
    %7259 = vmatprep.subr.mxu0 0.0
    %7260 = vmatpush1.msra.mxu0 %v83
    %7261 = vmatprep.subr.mxu0 0.0
    %7262 = vmatpush1.msra.mxu0 %v82
    %7263 = vmatprep.subr.mxu0 0.0
    %7264 = vmatpush2.msra.mxu0 0.0
    %7265 = vmatprep.subr.mxu0 0.0
    %7266 = vmatpush2.msra.mxu0 0.0
    %7267 = vmatprep.subr.mxu0 0.0
    %7268 = vmatpush2.msra.mxu0 0.0
    %7269 = vmatprep.subr.mxu0 0.0
    %7270 = vmatpush2.msra.mxu0 0.0
    %7271 = vmatprep.subr.mxu0 0.0
    %7272 = vmatpush2.msra.mxu0 0.0
    %7273 = vmatprep.subr.mxu0 0.0
    %7274 = vmatpush2.msra.mxu0 0.0
    %7275 = vmatprep.subr.mxu0 0.0
    %7276 = vmatpush2.msra.mxu0 0.0
    %7277 = vmatprep.subr.mxu0 0.0
    %7278 = vmatpush2.msra.mxu0 0.0
    %7279 = vmatprep.subr.mxu0 0.0
    %7280 = vmatpush2.msra.mxu0 0.0
    %7281 = vmatprep.subr.mxu0 0.0
    %7282 = vmatpush2.msra.mxu0 0.0
    %7283 = vmatprep.subr.mxu0 0.0
    %7284 = vmatpush2.msra.mxu0 0.0
    %7285 = vmatprep.subr.mxu0 0.0
    %7286 = vmatpush2.msra.mxu0 0.0
    %7287 = vmatprep.subr.mxu0 0.0
    %7288 = vmatpush2.msra.mxu0 0.0
    %7289 = vmatprep.subr.mxu0 0.0
    %7290 = vmatpush2.msra.mxu0 0.0
    %7291 = vmatprep.subr.mxu0 0.0
    %7292 = vmatpush2.msra.mxu0 0.0
    %7293 = vmatprep.subr.mxu0 0.0
    %7294 = vmatpush2.msra.mxu0 0.0
    %7295 = vmatprep.mubr.f32.mxu0 0.0
    %7296 = vmatmul.mubr.f32.gmra.mxu0 %v7226
    %v7297 = vpop.f32.mrf.mxu0
    %v7298 = vadd.f32 %v102, %v7297
    %v7299 = vpop.f32.mrf.mxu0
    %7300 = vmatprep.mubr.f32.mxu0 0.0
    %7301 = vmatmul.mubr.f32.gmra.mxu0 %v7229
    %v7302 = vpop.f32.mrf.mxu0
    %v7303 = vadd.f32 %v102, %v7302
    %v7304 = vpop.f32.mrf.mxu0
    %7305 = vdwg.mxu0
    %v7306 = vadd.f32 %v7110, %v7298
    %v7307 = vadd.f32 %v7111, %v7303
    %v7308 = vadd.f32 %v176, %v2062
    %v7309 = vadd.f32 %v191, %v2063
    %v7310 = vadd.f32 %v7308, %v3810
    %v7311 = vadd.f32 %v7309, %v3811
    %v7312 = vadd.f32 %v7310, %v5558
    %v7313 = vadd.f32 %v7311, %v5559
    %v7314 = vadd.f32 %v7312, %v7306
    %v7315 = vadd.f32 %v7313, %v7307
    %v7316 = vsel %vm229, %v7314, 0.0
    %7317 = vadd.xlane.f32.xlu0 %v7316
    %v7318 = vpop.xlane.xlu0 %7317
    %v7319 = vsel %vm229, %v7315, 0.0
    %7320 = vadd.xlane.f32.xlu0 %v7319
    %v7321 = vpop.xlane.xlu0 %7320
    %v7322 = vmul.f32 %v7318, %v317
    %v7323 = vmul.f32 %v7321, %v317
    %v7324 = vsub.f32 %v7314, %v7322
    %v7325 = vsub.f32 %v7315, %v7323
    %v7326 = vmul.f32 %v7324, %v7324
    %v7327 = vmul.f32 %v7325, %v7325
    %v7328 = vsel %vm229, %v7326, 0.0
    %7329 = vadd.xlane.f32.xlu0 %v7328
    %v7330 = vpop.xlane.xlu0 %7329
    %v7331 = vsel %vm229, %v7327, 0.0
    %7332 = vadd.xlane.f32.xlu0 %v7331
    %v7333 = vpop.xlane.xlu0 %7332
    %v7334 = vmul.f32 %v7330, %v317
    %v7335 = vmul.f32 %v7333, %v317
    %v7336 = vadd.f32 %v7334, 1e-05
    %v7337 = vadd.f32 %v7335, 1e-05
    %v7338 = vrsqrt.pop %v7336
    %v7339 = vrsqrt.pop %v7337
    %v7340 = vmul.f32 %v7324, %v7338
    %v7341 = vmul.f32 %v7325, %v7339
    %v7342 = vmul.f32 %v7340, %v109
    %v7343 = vmul.f32 %v7341, %v109
    %v7344 = vadd.f32 %v7342, %v116
    %v7345 = vadd.f32 %v7343, %v116
    %v7347 = vsel %vm229, %v7344, 0
    %v7350 = vsel %vm229, %v7345, 0
    %7352 = vmatprep.subr.mxu0 0.0
    %7353 = vmatpush1.msra.mxu0 0.0
    %7354 = vmatprep.subr.mxu0 0.0
    %7355 = vmatpush1.msra.mxu0 0.0
    %7356 = vmatprep.subr.mxu0 0.0
    %7357 = vmatpush1.msra.mxu0 0.0
    %7358 = vmatprep.subr.mxu0 0.0
    %7359 = vmatpush1.msra.mxu0 0.0
    %7360 = vmatprep.subr.mxu0 0.0
    %7361 = vmatpush1.msra.mxu0 0.0
    %7362 = vmatprep.subr.mxu0 0.0
    %7363 = vmatpush1.msra.mxu0 0.0
    %7364 = vmatprep.subr.mxu0 0.0
    %7365 = vmatpush1.msra.mxu0 0.0
    %7366 = vmatprep.subr.mxu0 0.0
    %7367 = vmatpush1.msra.mxu0 0.0
    %7368 = vmatprep.subr.mxu0 0.0
    %7369 = vmatpush1.msra.mxu0 0.0
    %7370 = vmatprep.subr.mxu0 0.0
    %7371 = vmatpush1.msra.mxu0 0.0
    %7372 = vmatprep.subr.mxu0 0.0
    %7373 = vmatpush1.msra.mxu0 0.0
    %7374 = vmatprep.subr.mxu0 0.0
    %7375 = vmatpush1.msra.mxu0 0.0
    %7376 = vmatprep.subr.mxu0 0.0
    %7377 = vmatpush1.msra.mxu0 %v73
    %7378 = vmatprep.subr.mxu0 0.0
    %7379 = vmatpush1.msra.mxu0 %v72
    %7380 = vmatprep.subr.mxu0 0.0
    %7381 = vmatpush1.msra.mxu0 %v71
    %7382 = vmatprep.subr.mxu0 0.0
    %7383 = vmatpush1.msra.mxu0 %v70
    %7384 = vmatprep.subr.mxu0 0.0
    %7385 = vmatpush2.msra.mxu0 0.0
    %7386 = vmatprep.subr.mxu0 0.0
    %7387 = vmatpush2.msra.mxu0 0.0
    %7388 = vmatprep.subr.mxu0 0.0
    %7389 = vmatpush2.msra.mxu0 0.0
    %7390 = vmatprep.subr.mxu0 0.0
    %7391 = vmatpush2.msra.mxu0 0.0
    %7392 = vmatprep.subr.mxu0 0.0
    %7393 = vmatpush2.msra.mxu0 0.0
    %7394 = vmatprep.subr.mxu0 0.0
    %7395 = vmatpush2.msra.mxu0 0.0
    %7396 = vmatprep.subr.mxu0 0.0
    %7397 = vmatpush2.msra.mxu0 0.0
    %7398 = vmatprep.subr.mxu0 0.0
    %7399 = vmatpush2.msra.mxu0 0.0
    %7400 = vmatprep.subr.mxu0 0.0
    %7401 = vmatpush2.msra.mxu0 0.0
    %7402 = vmatprep.subr.mxu0 0.0
    %7403 = vmatpush2.msra.mxu0 0.0
    %7404 = vmatprep.subr.mxu0 0.0
    %7405 = vmatpush2.msra.mxu0 0.0
    %7406 = vmatprep.subr.mxu0 0.0
    %7407 = vmatpush2.msra.mxu0 0.0
    %7408 = vmatprep.subr.mxu0 0.0
    %7409 = vmatpush2.msra.mxu0 0.0
    %7410 = vmatprep.subr.mxu0 0.0
    %7411 = vmatpush2.msra.mxu0 0.0
    %7412 = vmatprep.subr.mxu0 0.0
    %7413 = vmatpush2.msra.mxu0 0.0
    %7414 = vmatprep.subr.mxu0 0.0
    %7415 = vmatpush2.msra.mxu0 0.0
    %7416 = vmatprep.mubr.f32.mxu0 0.0
    %7417 = vmatmul.mubr.f32.gmra.mxu0 %v7347
    %v7418 = vpop.f32.mrf.mxu0
    %v7419 = vadd.f32 0.0, %v7418
    %v7420 = vpop.f32.mrf.mxu0
    %7421 = vmatprep.mubr.f32.mxu0 0.0
    %7422 = vmatmul.mubr.f32.gmra.mxu0 %v7350
    %v7423 = vpop.f32.mrf.mxu0
    %v7424 = vadd.f32 0.0, %v7423
    %v7425 = vpop.f32.mrf.mxu0
    %7426 = vdwg.mxu0
    %v7427 = vmul.f32 %v7419, 0.35355338
    %v7428 = vmul.f32 %v7424, 0.35355338
    %v7429 = vadd.f32 %v7427, %v309
    %v7430 = vadd.f32 %v7428, %v310
    %v7431 = vadd.f32 %v7419, %v301
    %v7432 = vadd.f32 %v7424, %v306
    %7434 = vrot.lane.b32.xlu0 %v7431, 96
    %v7435 = vpop.permute.xlu0 %7434
    %v7437 = vsel %vm432, %v7429, 0
    %v7439 = vsel %vm432, %v7435, 0
    %7441 = vmatprep.subr.mxu0 0.0
    %7442 = vmatpush1.xpose.msra.mxu0 0.0
    %7443 = vmatprep.subr.mxu0 0.0
    %7444 = vmatpush1.xpose.msra.mxu0 0.0
    %7445 = vmatprep.subr.mxu0 0.0
    %7446 = vmatpush1.xpose.msra.mxu0 0.0
    %7447 = vmatprep.subr.mxu0 0.0
    %7448 = vmatpush1.xpose.msra.mxu0 0.0
    %7449 = vmatprep.subr.mxu0 0.0
    %7450 = vmatpush1.xpose.msra.mxu0 0.0
    %7451 = vmatprep.subr.mxu0 0.0
    %7452 = vmatpush1.xpose.msra.mxu0 0.0
    %7453 = vmatprep.subr.mxu0 0.0
    %7454 = vmatpush1.xpose.msra.mxu0 0.0
    %7455 = vmatprep.subr.mxu0 0.0
    %7456 = vmatpush1.xpose.msra.mxu0 0.0
    %7457 = vmatprep.subr.mxu0 0.0
    %7458 = vmatpush1.xpose.msra.mxu0 0.0
    %7459 = vmatprep.subr.mxu0 0.0
    %7460 = vmatpush1.xpose.msra.mxu0 0.0
    %7461 = vmatprep.subr.mxu0 0.0
    %7462 = vmatpush1.xpose.msra.mxu0 0.0
    %7463 = vmatprep.subr.mxu0 0.0
    %7464 = vmatpush1.xpose.msra.mxu0 0.0
    %7465 = vmatprep.subr.mxu0 0.0
    %7466 = vmatpush1.xpose.msra.mxu0 0.0
    %7467 = vmatprep.subr.mxu0 0.0
    %7468 = vmatpush1.xpose.msra.mxu0 0.0
    %7469 = vmatprep.subr.mxu0 0.0
    %7470 = vmatpush1.xpose.msra.mxu0 0.0
    %7471 = vmatprep.subr.mxu0 0.0
    %7472 = vmatpush1.xpose.msra.mxu0 %v7439
    %7473 = vmatprep.subr.mxu0 0.0
    %7474 = vmatpush2.xpose.msra.mxu0 0.0
    %7475 = vmatprep.subr.mxu0 0.0
    %7476 = vmatpush2.xpose.msra.mxu0 0.0
    %7477 = vmatprep.subr.mxu0 0.0
    %7478 = vmatpush2.xpose.msra.mxu0 0.0
    %7479 = vmatprep.subr.mxu0 0.0
    %7480 = vmatpush2.xpose.msra.mxu0 0.0
    %7481 = vmatprep.subr.mxu0 0.0
    %7482 = vmatpush2.xpose.msra.mxu0 0.0
    %7483 = vmatprep.subr.mxu0 0.0
    %7484 = vmatpush2.xpose.msra.mxu0 0.0
    %7485 = vmatprep.subr.mxu0 0.0
    %7486 = vmatpush2.xpose.msra.mxu0 0.0
    %7487 = vmatprep.subr.mxu0 0.0
    %7488 = vmatpush2.xpose.msra.mxu0 0.0
    %7489 = vmatprep.subr.mxu0 0.0
    %7490 = vmatpush2.xpose.msra.mxu0 0.0
    %7491 = vmatprep.subr.mxu0 0.0
    %7492 = vmatpush2.xpose.msra.mxu0 0.0
    %7493 = vmatprep.subr.mxu0 0.0
    %7494 = vmatpush2.xpose.msra.mxu0 0.0
    %7495 = vmatprep.subr.mxu0 0.0
    %7496 = vmatpush2.xpose.msra.mxu0 0.0
    %7497 = vmatprep.subr.mxu0 0.0
    %7498 = vmatpush2.xpose.msra.mxu0 0.0
    %7499 = vmatprep.subr.mxu0 0.0
    %7500 = vmatpush2.xpose.msra.mxu0 0.0
    %7501 = vmatprep.subr.mxu0 0.0
    %7502 = vmatpush2.xpose.msra.mxu0 0.0
    %7503 = vmatprep.subr.mxu0 0.0
    %7504 = vmatpush2.xpose.msra.mxu0 0.0
    %7505 = vmatprep.mubr.f32.mxu0 0.0
    %7506 = vmatmul.mubr.f32.gmra.mxu0 %v7437
    %v7507 = vpop.f32.mrf.mxu0
    %v7508 = vadd.f32 0.0, %v7507
    %v7509 = vpop.f32.mrf.mxu0
    %7510 = vdwg.mxu0
    %v7511 = vsel %vm432, %v7508, -inf
    %7512 = vmax.xlane.f32.xlu0 %v7511
    %v7513 = vpop.xlane.xlu0 %7512
    %v7514 = vsub.f32 %v7508, %v7513
    %v7515 = vmul.f32 %v7514, 1.442695
    %v7516 = vpow.pop %v7515
    %v7517 = vsel %vm432, %v7516, 0.0
    %7518 = vadd.xlane.f32.xlu0 %v7517
    %v7519 = vpop.xlane.xlu0 %7518
    %v7520 = vrcp.pop %v7519
    %v7521 = vmul.f32 %v7516, %v7520
    %7523 = vrot.lane.b32.xlu0 %v7419, 64
    %v7524 = vpop.permute.xlu0 %7523
    %v7527 = vsel %vm432, %v7521, 0
    %7529 = vmatprep.subr.mxu0 0.0
    %7530 = vmatpush1.msra.mxu0 0.0
    %7531 = vmatprep.subr.mxu0 0.0
    %7532 = vmatpush1.msra.mxu0 0.0
    %7533 = vmatprep.subr.mxu0 0.0
    %7534 = vmatpush1.msra.mxu0 0.0
    %7535 = vmatprep.subr.mxu0 0.0
    %7536 = vmatpush1.msra.mxu0 0.0
    %7537 = vmatprep.subr.mxu0 0.0
    %7538 = vmatpush1.msra.mxu0 0.0
    %7539 = vmatprep.subr.mxu0 0.0
    %7540 = vmatpush1.msra.mxu0 0.0
    %7541 = vmatprep.subr.mxu0 0.0
    %7542 = vmatpush1.msra.mxu0 0.0
    %7543 = vmatprep.subr.mxu0 0.0
    %7544 = vmatpush1.msra.mxu0 0.0
    %7545 = vmatprep.subr.mxu0 0.0
    %7546 = vmatpush1.msra.mxu0 0.0
    %7547 = vmatprep.subr.mxu0 0.0
    %7548 = vmatpush1.msra.mxu0 0.0
    %7549 = vmatprep.subr.mxu0 0.0
    %7550 = vmatpush1.msra.mxu0 0.0
    %7551 = vmatprep.subr.mxu0 0.0
    %7552 = vmatpush1.msra.mxu0 0.0
    %7553 = vmatprep.subr.mxu0 0.0
    %7554 = vmatpush1.msra.mxu0 0.0
    %7555 = vmatprep.subr.mxu0 0.0
    %7556 = vmatpush1.msra.mxu0 0.0
    %7557 = vmatprep.subr.mxu0 0.0
    %7558 = vmatpush1.msra.mxu0 0.0
    %7559 = vmatprep.subr.mxu0 0.0
    %7560 = vmatpush1.msra.mxu0 %v7524
    %7561 = vmatprep.subr.mxu0 0.0
    %7562 = vmatpush2.msra.mxu0 0.0
    %7563 = vmatprep.subr.mxu0 0.0
    %7564 = vmatpush2.msra.mxu0 0.0
    %7565 = vmatprep.subr.mxu0 0.0
    %7566 = vmatpush2.msra.mxu0 0.0
    %7567 = vmatprep.subr.mxu0 0.0
    %7568 = vmatpush2.msra.mxu0 0.0
    %7569 = vmatprep.subr.mxu0 0.0
    %7570 = vmatpush2.msra.mxu0 0.0
    %7571 = vmatprep.subr.mxu0 0.0
    %7572 = vmatpush2.msra.mxu0 0.0
    %7573 = vmatprep.subr.mxu0 0.0
    %7574 = vmatpush2.msra.mxu0 0.0
    %7575 = vmatprep.subr.mxu0 0.0
    %7576 = vmatpush2.msra.mxu0 0.0
    %7577 = vmatprep.subr.mxu0 0.0
    %7578 = vmatpush2.msra.mxu0 0.0
    %7579 = vmatprep.subr.mxu0 0.0
    %7580 = vmatpush2.msra.mxu0 0.0
    %7581 = vmatprep.subr.mxu0 0.0
    %7582 = vmatpush2.msra.mxu0 0.0
    %7583 = vmatprep.subr.mxu0 0.0
    %7584 = vmatpush2.msra.mxu0 0.0
    %7585 = vmatprep.subr.mxu0 0.0
    %7586 = vmatpush2.msra.mxu0 0.0
    %7587 = vmatprep.subr.mxu0 0.0
    %7588 = vmatpush2.msra.mxu0 0.0
    %7589 = vmatprep.subr.mxu0 0.0
    %7590 = vmatpush2.msra.mxu0 0.0
    %7591 = vmatprep.subr.mxu0 0.0
    %7592 = vmatpush2.msra.mxu0 0.0
    %7593 = vmatprep.mubr.f32.mxu0 0.0
    %7594 = vmatmul.mubr.f32.gmra.mxu0 %v7527
    %v7595 = vpop.f32.mrf.mxu0
    %v7596 = vadd.f32 0.0, %v7595
    %v7597 = vpop.f32.mrf.mxu0
    %7598 = vdwg.mxu0
    %7599 = vrot.lane.b32.xlu0 %v7429, 120
    %v7600 = vpop.permute.xlu0 %7599
    %7601 = vrot.lane.b32.xlu0 %v7431, 88
    %v7602 = vpop.permute.xlu0 %7601
    %v7603 = vsel %vm432, %v7600, 0
    %v7605 = vsel %vm432, %v7602, 0
    %7607 = vmatprep.subr.mxu0 0.0
    %7608 = vmatpush1.xpose.msra.mxu0 0.0
    %7609 = vmatprep.subr.mxu0 0.0
    %7610 = vmatpush1.xpose.msra.mxu0 0.0
    %7611 = vmatprep.subr.mxu0 0.0
    %7612 = vmatpush1.xpose.msra.mxu0 0.0
    %7613 = vmatprep.subr.mxu0 0.0
    %7614 = vmatpush1.xpose.msra.mxu0 0.0
    %7615 = vmatprep.subr.mxu0 0.0
    %7616 = vmatpush1.xpose.msra.mxu0 0.0
    %7617 = vmatprep.subr.mxu0 0.0
    %7618 = vmatpush1.xpose.msra.mxu0 0.0
    %7619 = vmatprep.subr.mxu0 0.0
    %7620 = vmatpush1.xpose.msra.mxu0 0.0
    %7621 = vmatprep.subr.mxu0 0.0
    %7622 = vmatpush1.xpose.msra.mxu0 0.0
    %7623 = vmatprep.subr.mxu0 0.0
    %7624 = vmatpush1.xpose.msra.mxu0 0.0
    %7625 = vmatprep.subr.mxu0 0.0
    %7626 = vmatpush1.xpose.msra.mxu0 0.0
    %7627 = vmatprep.subr.mxu0 0.0
    %7628 = vmatpush1.xpose.msra.mxu0 0.0
    %7629 = vmatprep.subr.mxu0 0.0
    %7630 = vmatpush1.xpose.msra.mxu0 0.0
    %7631 = vmatprep.subr.mxu0 0.0
    %7632 = vmatpush1.xpose.msra.mxu0 0.0
    %7633 = vmatprep.subr.mxu0 0.0
    %7634 = vmatpush1.xpose.msra.mxu0 0.0
    %7635 = vmatprep.subr.mxu0 0.0
    %7636 = vmatpush1.xpose.msra.mxu0 0.0
    %7637 = vmatprep.subr.mxu0 0.0
    %7638 = vmatpush1.xpose.msra.mxu0 %v7605
    %7639 = vmatprep.subr.mxu0 0.0
    %7640 = vmatpush2.xpose.msra.mxu0 0.0
    %7641 = vmatprep.subr.mxu0 0.0
    %7642 = vmatpush2.xpose.msra.mxu0 0.0
    %7643 = vmatprep.subr.mxu0 0.0
    %7644 = vmatpush2.xpose.msra.mxu0 0.0
    %7645 = vmatprep.subr.mxu0 0.0
    %7646 = vmatpush2.xpose.msra.mxu0 0.0
    %7647 = vmatprep.subr.mxu0 0.0
    %7648 = vmatpush2.xpose.msra.mxu0 0.0
    %7649 = vmatprep.subr.mxu0 0.0
    %7650 = vmatpush2.xpose.msra.mxu0 0.0
    %7651 = vmatprep.subr.mxu0 0.0
    %7652 = vmatpush2.xpose.msra.mxu0 0.0
    %7653 = vmatprep.subr.mxu0 0.0
    %7654 = vmatpush2.xpose.msra.mxu0 0.0
    %7655 = vmatprep.subr.mxu0 0.0
    %7656 = vmatpush2.xpose.msra.mxu0 0.0
    %7657 = vmatprep.subr.mxu0 0.0
    %7658 = vmatpush2.xpose.msra.mxu0 0.0
    %7659 = vmatprep.subr.mxu0 0.0
    %7660 = vmatpush2.xpose.msra.mxu0 0.0
    %7661 = vmatprep.subr.mxu0 0.0
    %7662 = vmatpush2.xpose.msra.mxu0 0.0
    %7663 = vmatprep.subr.mxu0 0.0
    %7664 = vmatpush2.xpose.msra.mxu0 0.0
    %7665 = vmatprep.subr.mxu0 0.0
    %7666 = vmatpush2.xpose.msra.mxu0 0.0
    %7667 = vmatprep.subr.mxu0 0.0
    %7668 = vmatpush2.xpose.msra.mxu0 0.0
    %7669 = vmatprep.subr.mxu0 0.0
    %7670 = vmatpush2.xpose.msra.mxu0 0.0
    %7671 = vmatprep.mubr.f32.mxu0 0.0
    %7672 = vmatmul.mubr.f32.gmra.mxu0 %v7603
    %v7673 = vpop.f32.mrf.mxu0
    %v7674 = vadd.f32 0.0, %v7673
    %v7675 = vpop.f32.mrf.mxu0
    %7676 = vdwg.mxu0
    %v7677 = vsel %vm432, %v7674, -inf
    %7678 = vmax.xlane.f32.xlu0 %v7677
    %v7679 = vpop.xlane.xlu0 %7678
    %v7680 = vsub.f32 %v7674, %v7679
    %v7681 = vmul.f32 %v7680, 1.442695
    %v7682 = vpow.pop %v7681
    %v7683 = vsel %vm432, %v7682, 0.0
    %7684 = vadd.xlane.f32.xlu0 %v7683
    %v7685 = vpop.xlane.xlu0 %7684
    %v7686 = vrcp.pop %v7685
    %v7687 = vmul.f32 %v7682, %v7686
    %7688 = vrot.lane.b32.xlu0 %v7419, 56
    %v7689 = vpop.permute.xlu0 %7688
    %v7692 = vsel %vm432, %v7687, 0
    %7694 = vmatprep.subr.mxu0 0.0
    %7695 = vmatpush1.msra.mxu0 0.0
    %7696 = vmatprep.subr.mxu0 0.0
    %7697 = vmatpush1.msra.mxu0 0.0
    %7698 = vmatprep.subr.mxu0 0.0
    %7699 = vmatpush1.msra.mxu0 0.0
    %7700 = vmatprep.subr.mxu0 0.0
    %7701 = vmatpush1.msra.mxu0 0.0
    %7702 = vmatprep.subr.mxu0 0.0
    %7703 = vmatpush1.msra.mxu0 0.0
    %7704 = vmatprep.subr.mxu0 0.0
    %7705 = vmatpush1.msra.mxu0 0.0
    %7706 = vmatprep.subr.mxu0 0.0
    %7707 = vmatpush1.msra.mxu0 0.0
    %7708 = vmatprep.subr.mxu0 0.0
    %7709 = vmatpush1.msra.mxu0 0.0
    %7710 = vmatprep.subr.mxu0 0.0
    %7711 = vmatpush1.msra.mxu0 0.0
    %7712 = vmatprep.subr.mxu0 0.0
    %7713 = vmatpush1.msra.mxu0 0.0
    %7714 = vmatprep.subr.mxu0 0.0
    %7715 = vmatpush1.msra.mxu0 0.0
    %7716 = vmatprep.subr.mxu0 0.0
    %7717 = vmatpush1.msra.mxu0 0.0
    %7718 = vmatprep.subr.mxu0 0.0
    %7719 = vmatpush1.msra.mxu0 0.0
    %7720 = vmatprep.subr.mxu0 0.0
    %7721 = vmatpush1.msra.mxu0 0.0
    %7722 = vmatprep.subr.mxu0 0.0
    %7723 = vmatpush1.msra.mxu0 0.0
    %7724 = vmatprep.subr.mxu0 0.0
    %7725 = vmatpush1.msra.mxu0 %v7689
    %7726 = vmatprep.subr.mxu0 0.0
    %7727 = vmatpush2.msra.mxu0 0.0
    %7728 = vmatprep.subr.mxu0 0.0
    %7729 = vmatpush2.msra.mxu0 0.0
    %7730 = vmatprep.subr.mxu0 0.0
    %7731 = vmatpush2.msra.mxu0 0.0
    %7732 = vmatprep.subr.mxu0 0.0
    %7733 = vmatpush2.msra.mxu0 0.0
    %7734 = vmatprep.subr.mxu0 0.0
    %7735 = vmatpush2.msra.mxu0 0.0
    %7736 = vmatprep.subr.mxu0 0.0
    %7737 = vmatpush2.msra.mxu0 0.0
    %7738 = vmatprep.subr.mxu0 0.0
    %7739 = vmatpush2.msra.mxu0 0.0
    %7740 = vmatprep.subr.mxu0 0.0
    %7741 = vmatpush2.msra.mxu0 0.0
    %7742 = vmatprep.subr.mxu0 0.0
    %7743 = vmatpush2.msra.mxu0 0.0
    %7744 = vmatprep.subr.mxu0 0.0
    %7745 = vmatpush2.msra.mxu0 0.0
    %7746 = vmatprep.subr.mxu0 0.0
    %7747 = vmatpush2.msra.mxu0 0.0
    %7748 = vmatprep.subr.mxu0 0.0
    %7749 = vmatpush2.msra.mxu0 0.0
    %7750 = vmatprep.subr.mxu0 0.0
    %7751 = vmatpush2.msra.mxu0 0.0
    %7752 = vmatprep.subr.mxu0 0.0
    %7753 = vmatpush2.msra.mxu0 0.0
    %7754 = vmatprep.subr.mxu0 0.0
    %7755 = vmatpush2.msra.mxu0 0.0
    %7756 = vmatprep.subr.mxu0 0.0
    %7757 = vmatpush2.msra.mxu0 0.0
    %7758 = vmatprep.mubr.f32.mxu0 0.0
    %7759 = vmatmul.mubr.f32.gmra.mxu0 %v7692
    %v7760 = vpop.f32.mrf.mxu0
    %v7761 = vadd.f32 0.0, %v7760
    %v7762 = vpop.f32.mrf.mxu0
    %7763 = vdwg.mxu0
    %7764 = vrot.lane.b32.xlu0 %v7429, 112
    %v7765 = vpop.permute.xlu0 %7764
    %7766 = vrot.lane.b32.xlu0 %v7431, 80
    %v7767 = vpop.permute.xlu0 %7766
    %v7768 = vsel %vm432, %v7765, 0
    %v7770 = vsel %vm432, %v7767, 0
    %7772 = vmatprep.subr.mxu0 0.0
    %7773 = vmatpush1.xpose.msra.mxu0 0.0
    %7774 = vmatprep.subr.mxu0 0.0
    %7775 = vmatpush1.xpose.msra.mxu0 0.0
    %7776 = vmatprep.subr.mxu0 0.0
    %7777 = vmatpush1.xpose.msra.mxu0 0.0
    %7778 = vmatprep.subr.mxu0 0.0
    %7779 = vmatpush1.xpose.msra.mxu0 0.0
    %7780 = vmatprep.subr.mxu0 0.0
    %7781 = vmatpush1.xpose.msra.mxu0 0.0
    %7782 = vmatprep.subr.mxu0 0.0
    %7783 = vmatpush1.xpose.msra.mxu0 0.0
    %7784 = vmatprep.subr.mxu0 0.0
    %7785 = vmatpush1.xpose.msra.mxu0 0.0
    %7786 = vmatprep.subr.mxu0 0.0
    %7787 = vmatpush1.xpose.msra.mxu0 0.0
    %7788 = vmatprep.subr.mxu0 0.0
    %7789 = vmatpush1.xpose.msra.mxu0 0.0
    %7790 = vmatprep.subr.mxu0 0.0
    %7791 = vmatpush1.xpose.msra.mxu0 0.0
    %7792 = vmatprep.subr.mxu0 0.0
    %7793 = vmatpush1.xpose.msra.mxu0 0.0
    %7794 = vmatprep.subr.mxu0 0.0
    %7795 = vmatpush1.xpose.msra.mxu0 0.0
    %7796 = vmatprep.subr.mxu0 0.0
    %7797 = vmatpush1.xpose.msra.mxu0 0.0
    %7798 = vmatprep.subr.mxu0 0.0
    %7799 = vmatpush1.xpose.msra.mxu0 0.0
    %7800 = vmatprep.subr.mxu0 0.0
    %7801 = vmatpush1.xpose.msra.mxu0 0.0
    %7802 = vmatprep.subr.mxu0 0.0
    %7803 = vmatpush1.xpose.msra.mxu0 %v7770
    %7804 = vmatprep.subr.mxu0 0.0
    %7805 = vmatpush2.xpose.msra.mxu0 0.0
    %7806 = vmatprep.subr.mxu0 0.0
    %7807 = vmatpush2.xpose.msra.mxu0 0.0
    %7808 = vmatprep.subr.mxu0 0.0
    %7809 = vmatpush2.xpose.msra.mxu0 0.0
    %7810 = vmatprep.subr.mxu0 0.0
    %7811 = vmatpush2.xpose.msra.mxu0 0.0
    %7812 = vmatprep.subr.mxu0 0.0
    %7813 = vmatpush2.xpose.msra.mxu0 0.0
    %7814 = vmatprep.subr.mxu0 0.0
    %7815 = vmatpush2.xpose.msra.mxu0 0.0
    %7816 = vmatprep.subr.mxu0 0.0
    %7817 = vmatpush2.xpose.msra.mxu0 0.0
    %7818 = vmatprep.subr.mxu0 0.0
    %7819 = vmatpush2.xpose.msra.mxu0 0.0
    %7820 = vmatprep.subr.mxu0 0.0
    %7821 = vmatpush2.xpose.msra.mxu0 0.0
    %7822 = vmatprep.subr.mxu0 0.0
    %7823 = vmatpush2.xpose.msra.mxu0 0.0
    %7824 = vmatprep.subr.mxu0 0.0
    %7825 = vmatpush2.xpose.msra.mxu0 0.0
    %7826 = vmatprep.subr.mxu0 0.0
    %7827 = vmatpush2.xpose.msra.mxu0 0.0
    %7828 = vmatprep.subr.mxu0 0.0
    %7829 = vmatpush2.xpose.msra.mxu0 0.0
    %7830 = vmatprep.subr.mxu0 0.0
    %7831 = vmatpush2.xpose.msra.mxu0 0.0
    %7832 = vmatprep.subr.mxu0 0.0
    %7833 = vmatpush2.xpose.msra.mxu0 0.0
    %7834 = vmatprep.subr.mxu0 0.0
    %7835 = vmatpush2.xpose.msra.mxu0 0.0
    %7836 = vmatprep.mubr.f32.mxu0 0.0
    %7837 = vmatmul.mubr.f32.gmra.mxu0 %v7768
    %v7838 = vpop.f32.mrf.mxu0
    %v7839 = vadd.f32 0.0, %v7838
    %v7840 = vpop.f32.mrf.mxu0
    %7841 = vdwg.mxu0
    %v7842 = vsel %vm432, %v7839, -inf
    %7843 = vmax.xlane.f32.xlu0 %v7842
    %v7844 = vpop.xlane.xlu0 %7843
    %v7845 = vsub.f32 %v7839, %v7844
    %v7846 = vmul.f32 %v7845, 1.442695
    %v7847 = vpow.pop %v7846
    %v7848 = vsel %vm432, %v7847, 0.0
    %7849 = vadd.xlane.f32.xlu0 %v7848
    %v7850 = vpop.xlane.xlu0 %7849
    %v7851 = vrcp.pop %v7850
    %v7852 = vmul.f32 %v7847, %v7851
    %7853 = vrot.lane.b32.xlu0 %v7419, 48
    %v7854 = vpop.permute.xlu0 %7853
    %v7857 = vsel %vm432, %v7852, 0
    %7859 = vmatprep.subr.mxu0 0.0
    %7860 = vmatpush1.msra.mxu0 0.0
    %7861 = vmatprep.subr.mxu0 0.0
    %7862 = vmatpush1.msra.mxu0 0.0
    %7863 = vmatprep.subr.mxu0 0.0
    %7864 = vmatpush1.msra.mxu0 0.0
    %7865 = vmatprep.subr.mxu0 0.0
    %7866 = vmatpush1.msra.mxu0 0.0
    %7867 = vmatprep.subr.mxu0 0.0
    %7868 = vmatpush1.msra.mxu0 0.0
    %7869 = vmatprep.subr.mxu0 0.0
    %7870 = vmatpush1.msra.mxu0 0.0
    %7871 = vmatprep.subr.mxu0 0.0
    %7872 = vmatpush1.msra.mxu0 0.0
    %7873 = vmatprep.subr.mxu0 0.0
    %7874 = vmatpush1.msra.mxu0 0.0
    %7875 = vmatprep.subr.mxu0 0.0
    %7876 = vmatpush1.msra.mxu0 0.0
    %7877 = vmatprep.subr.mxu0 0.0
    %7878 = vmatpush1.msra.mxu0 0.0
    %7879 = vmatprep.subr.mxu0 0.0
    %7880 = vmatpush1.msra.mxu0 0.0
    %7881 = vmatprep.subr.mxu0 0.0
    %7882 = vmatpush1.msra.mxu0 0.0
    %7883 = vmatprep.subr.mxu0 0.0
    %7884 = vmatpush1.msra.mxu0 0.0
    %7885 = vmatprep.subr.mxu0 0.0
    %7886 = vmatpush1.msra.mxu0 0.0
    %7887 = vmatprep.subr.mxu0 0.0
    %7888 = vmatpush1.msra.mxu0 0.0
    %7889 = vmatprep.subr.mxu0 0.0
    %7890 = vmatpush1.msra.mxu0 %v7854
    %7891 = vmatprep.subr.mxu0 0.0
    %7892 = vmatpush2.msra.mxu0 0.0
    %7893 = vmatprep.subr.mxu0 0.0
    %7894 = vmatpush2.msra.mxu0 0.0
    %7895 = vmatprep.subr.mxu0 0.0
    %7896 = vmatpush2.msra.mxu0 0.0
    %7897 = vmatprep.subr.mxu0 0.0
    %7898 = vmatpush2.msra.mxu0 0.0
    %7899 = vmatprep.subr.mxu0 0.0
    %7900 = vmatpush2.msra.mxu0 0.0
    %7901 = vmatprep.subr.mxu0 0.0
    %7902 = vmatpush2.msra.mxu0 0.0
    %7903 = vmatprep.subr.mxu0 0.0
    %7904 = vmatpush2.msra.mxu0 0.0
    %7905 = vmatprep.subr.mxu0 0.0
    %7906 = vmatpush2.msra.mxu0 0.0
    %7907 = vmatprep.subr.mxu0 0.0
    %7908 = vmatpush2.msra.mxu0 0.0
    %7909 = vmatprep.subr.mxu0 0.0
    %7910 = vmatpush2.msra.mxu0 0.0
    %7911 = vmatprep.subr.mxu0 0.0
    %7912 = vmatpush2.msra.mxu0 0.0
    %7913 = vmatprep.subr.mxu0 0.0
    %7914 = vmatpush2.msra.mxu0 0.0
    %7915 = vmatprep.subr.mxu0 0.0
    %7916 = vmatpush2.msra.mxu0 0.0
    %7917 = vmatprep.subr.mxu0 0.0
    %7918 = vmatpush2.msra.mxu0 0.0
    %7919 = vmatprep.subr.mxu0 0.0
    %7920 = vmatpush2.msra.mxu0 0.0
    %7921 = vmatprep.subr.mxu0 0.0
    %7922 = vmatpush2.msra.mxu0 0.0
    %7923 = vmatprep.mubr.f32.mxu0 0.0
    %7924 = vmatmul.mubr.f32.gmra.mxu0 %v7857
    %v7925 = vpop.f32.mrf.mxu0
    %v7926 = vadd.f32 0.0, %v7925
    %v7927 = vpop.f32.mrf.mxu0
    %7928 = vdwg.mxu0
    %7929 = vrot.lane.b32.xlu0 %v7429, 104
    %v7930 = vpop.permute.xlu0 %7929
    %7931 = vrot.lane.b32.xlu0 %v7431, 72
    %v7932 = vpop.permute.xlu0 %7931
    %v7933 = vsel %vm432, %v7930, 0
    %v7935 = vsel %vm432, %v7932, 0
    %7937 = vmatprep.subr.mxu0 0.0
    %7938 = vmatpush1.xpose.msra.mxu0 0.0
    %7939 = vmatprep.subr.mxu0 0.0
    %7940 = vmatpush1.xpose.msra.mxu0 0.0
    %7941 = vmatprep.subr.mxu0 0.0
    %7942 = vmatpush1.xpose.msra.mxu0 0.0
    %7943 = vmatprep.subr.mxu0 0.0
    %7944 = vmatpush1.xpose.msra.mxu0 0.0
    %7945 = vmatprep.subr.mxu0 0.0
    %7946 = vmatpush1.xpose.msra.mxu0 0.0
    %7947 = vmatprep.subr.mxu0 0.0
    %7948 = vmatpush1.xpose.msra.mxu0 0.0
    %7949 = vmatprep.subr.mxu0 0.0
    %7950 = vmatpush1.xpose.msra.mxu0 0.0
    %7951 = vmatprep.subr.mxu0 0.0
    %7952 = vmatpush1.xpose.msra.mxu0 0.0
    %7953 = vmatprep.subr.mxu0 0.0
    %7954 = vmatpush1.xpose.msra.mxu0 0.0
    %7955 = vmatprep.subr.mxu0 0.0
    %7956 = vmatpush1.xpose.msra.mxu0 0.0
    %7957 = vmatprep.subr.mxu0 0.0
    %7958 = vmatpush1.xpose.msra.mxu0 0.0
    %7959 = vmatprep.subr.mxu0 0.0
    %7960 = vmatpush1.xpose.msra.mxu0 0.0
    %7961 = vmatprep.subr.mxu0 0.0
    %7962 = vmatpush1.xpose.msra.mxu0 0.0
    %7963 = vmatprep.subr.mxu0 0.0
    %7964 = vmatpush1.xpose.msra.mxu0 0.0
    %7965 = vmatprep.subr.mxu0 0.0
    %7966 = vmatpush1.xpose.msra.mxu0 0.0
    %7967 = vmatprep.subr.mxu0 0.0
    %7968 = vmatpush1.xpose.msra.mxu0 %v7935
    %7969 = vmatprep.subr.mxu0 0.0
    %7970 = vmatpush2.xpose.msra.mxu0 0.0
    %7971 = vmatprep.subr.mxu0 0.0
    %7972 = vmatpush2.xpose.msra.mxu0 0.0
    %7973 = vmatprep.subr.mxu0 0.0
    %7974 = vmatpush2.xpose.msra.mxu0 0.0
    %7975 = vmatprep.subr.mxu0 0.0
    %7976 = vmatpush2.xpose.msra.mxu0 0.0
    %7977 = vmatprep.subr.mxu0 0.0
    %7978 = vmatpush2.xpose.msra.mxu0 0.0
    %7979 = vmatprep.subr.mxu0 0.0
    %7980 = vmatpush2.xpose.msra.mxu0 0.0
    %7981 = vmatprep.subr.mxu0 0.0
    %7982 = vmatpush2.xpose.msra.mxu0 0.0
    %7983 = vmatprep.subr.mxu0 0.0
    %7984 = vmatpush2.xpose.msra.mxu0 0.0
    %7985 = vmatprep.subr.mxu0 0.0
    %7986 = vmatpush2.xpose.msra.mxu0 0.0
    %7987 = vmatprep.subr.mxu0 0.0
    %7988 = vmatpush2.xpose.msra.mxu0 0.0
    %7989 = vmatprep.subr.mxu0 0.0
    %7990 = vmatpush2.xpose.msra.mxu0 0.0
    %7991 = vmatprep.subr.mxu0 0.0
    %7992 = vmatpush2.xpose.msra.mxu0 0.0
    %7993 = vmatprep.subr.mxu0 0.0
    %7994 = vmatpush2.xpose.msra.mxu0 0.0
    %7995 = vmatprep.subr.mxu0 0.0
    %7996 = vmatpush2.xpose.msra.mxu0 0.0
    %7997 = vmatprep.subr.mxu0 0.0
    %7998 = vmatpush2.xpose.msra.mxu0 0.0
    %7999 = vmatprep.subr.mxu0 0.0
    %8000 = vmatpush2.xpose.msra.mxu0 0.0
    %8001 = vmatprep.mubr.f32.mxu0 0.0
    %8002 = vmatmul.mubr.f32.gmra.mxu0 %v7933
    %v8003 = vpop.f32.mrf.mxu0
    %v8004 = vadd.f32 0.0, %v8003
    %v8005 = vpop.f32.mrf.mxu0
    %8006 = vdwg.mxu0
    %v8007 = vsel %vm432, %v8004, -inf
    %8008 = vmax.xlane.f32.xlu0 %v8007
    %v8009 = vpop.xlane.xlu0 %8008
    %v8010 = vsub.f32 %v8004, %v8009
    %v8011 = vmul.f32 %v8010, 1.442695
    %v8012 = vpow.pop %v8011
    %v8013 = vsel %vm432, %v8012, 0.0
    %8014 = vadd.xlane.f32.xlu0 %v8013
    %v8015 = vpop.xlane.xlu0 %8014
    %v8016 = vrcp.pop %v8015
    %v8017 = vmul.f32 %v8012, %v8016
    %8018 = vrot.lane.b32.xlu0 %v7419, 40
    %v8019 = vpop.permute.xlu0 %8018
    %v8022 = vsel %vm432, %v8017, 0
    %8024 = vmatprep.subr.mxu0 0.0
    %8025 = vmatpush1.msra.mxu0 0.0
    %8026 = vmatprep.subr.mxu0 0.0
    %8027 = vmatpush1.msra.mxu0 0.0
    %8028 = vmatprep.subr.mxu0 0.0
    %8029 = vmatpush1.msra.mxu0 0.0
    %8030 = vmatprep.subr.mxu0 0.0
    %8031 = vmatpush1.msra.mxu0 0.0
    %8032 = vmatprep.subr.mxu0 0.0
    %8033 = vmatpush1.msra.mxu0 0.0
    %8034 = vmatprep.subr.mxu0 0.0
    %8035 = vmatpush1.msra.mxu0 0.0
    %8036 = vmatprep.subr.mxu0 0.0
    %8037 = vmatpush1.msra.mxu0 0.0
    %8038 = vmatprep.subr.mxu0 0.0
    %8039 = vmatpush1.msra.mxu0 0.0
    %8040 = vmatprep.subr.mxu0 0.0
    %8041 = vmatpush1.msra.mxu0 0.0
    %8042 = vmatprep.subr.mxu0 0.0
    %8043 = vmatpush1.msra.mxu0 0.0
    %8044 = vmatprep.subr.mxu0 0.0
    %8045 = vmatpush1.msra.mxu0 0.0
    %8046 = vmatprep.subr.mxu0 0.0
    %8047 = vmatpush1.msra.mxu0 0.0
    %8048 = vmatprep.subr.mxu0 0.0
    %8049 = vmatpush1.msra.mxu0 0.0
    %8050 = vmatprep.subr.mxu0 0.0
    %8051 = vmatpush1.msra.mxu0 0.0
    %8052 = vmatprep.subr.mxu0 0.0
    %8053 = vmatpush1.msra.mxu0 0.0
    %8054 = vmatprep.subr.mxu0 0.0
    %8055 = vmatpush1.msra.mxu0 %v8019
    %8056 = vmatprep.subr.mxu0 0.0
    %8057 = vmatpush2.msra.mxu0 0.0
    %8058 = vmatprep.subr.mxu0 0.0
    %8059 = vmatpush2.msra.mxu0 0.0
    %8060 = vmatprep.subr.mxu0 0.0
    %8061 = vmatpush2.msra.mxu0 0.0
    %8062 = vmatprep.subr.mxu0 0.0
    %8063 = vmatpush2.msra.mxu0 0.0
    %8064 = vmatprep.subr.mxu0 0.0
    %8065 = vmatpush2.msra.mxu0 0.0
    %8066 = vmatprep.subr.mxu0 0.0
    %8067 = vmatpush2.msra.mxu0 0.0
    %8068 = vmatprep.subr.mxu0 0.0
    %8069 = vmatpush2.msra.mxu0 0.0
    %8070 = vmatprep.subr.mxu0 0.0
    %8071 = vmatpush2.msra.mxu0 0.0
    %8072 = vmatprep.subr.mxu0 0.0
    %8073 = vmatpush2.msra.mxu0 0.0
    %8074 = vmatprep.subr.mxu0 0.0
    %8075 = vmatpush2.msra.mxu0 0.0
    %8076 = vmatprep.subr.mxu0 0.0
    %8077 = vmatpush2.msra.mxu0 0.0
    %8078 = vmatprep.subr.mxu0 0.0
    %8079 = vmatpush2.msra.mxu0 0.0
    %8080 = vmatprep.subr.mxu0 0.0
    %8081 = vmatpush2.msra.mxu0 0.0
    %8082 = vmatprep.subr.mxu0 0.0
    %8083 = vmatpush2.msra.mxu0 0.0
    %8084 = vmatprep.subr.mxu0 0.0
    %8085 = vmatpush2.msra.mxu0 0.0
    %8086 = vmatprep.subr.mxu0 0.0
    %8087 = vmatpush2.msra.mxu0 0.0
    %8088 = vmatprep.mubr.f32.mxu0 0.0
    %8089 = vmatmul.mubr.f32.gmra.mxu0 %v8022
    %v8090 = vpop.f32.mrf.mxu0
    %v8091 = vadd.f32 0.0, %v8090
    %v8092 = vpop.f32.mrf.mxu0
    %8093 = vdwg.mxu0
    %8095 = vrot.lane.b32.xlu0 %v7761, 8
    %v8096 = vpop.permute.xlu0 %8095
    %8099 = vrot.lane.b32.xlu0 %v7926, 16
    %v8100 = vpop.permute.xlu0 %8099
    %8103 = vrot.lane.b32.xlu0 %v8091, 24
    %v8104 = vpop.permute.xlu0 %8103
    %v8106 = vsel %vm432, %v7596, %v8096
    %v8107 = vsel %vm1104, %v8106, %v8100
    %v8108 = vsel %vm1106, %v8107, %v8104
    %8110 = vrot.lane.b32.xlu0 %v7432, 96
    %v8111 = vpop.permute.xlu0 %8110
    %v8113 = vsel %vm432, %v7430, 0
    %v8115 = vsel %vm432, %v8111, 0
    %8117 = vmatprep.subr.mxu0 0.0
    %8118 = vmatpush1.xpose.msra.mxu0 0.0
    %8119 = vmatprep.subr.mxu0 0.0
    %8120 = vmatpush1.xpose.msra.mxu0 0.0
    %8121 = vmatprep.subr.mxu0 0.0
    %8122 = vmatpush1.xpose.msra.mxu0 0.0
    %8123 = vmatprep.subr.mxu0 0.0
    %8124 = vmatpush1.xpose.msra.mxu0 0.0
    %8125 = vmatprep.subr.mxu0 0.0
    %8126 = vmatpush1.xpose.msra.mxu0 0.0
    %8127 = vmatprep.subr.mxu0 0.0
    %8128 = vmatpush1.xpose.msra.mxu0 0.0
    %8129 = vmatprep.subr.mxu0 0.0
    %8130 = vmatpush1.xpose.msra.mxu0 0.0
    %8131 = vmatprep.subr.mxu0 0.0
    %8132 = vmatpush1.xpose.msra.mxu0 0.0
    %8133 = vmatprep.subr.mxu0 0.0
    %8134 = vmatpush1.xpose.msra.mxu0 0.0
    %8135 = vmatprep.subr.mxu0 0.0
    %8136 = vmatpush1.xpose.msra.mxu0 0.0
    %8137 = vmatprep.subr.mxu0 0.0
    %8138 = vmatpush1.xpose.msra.mxu0 0.0
    %8139 = vmatprep.subr.mxu0 0.0
    %8140 = vmatpush1.xpose.msra.mxu0 0.0
    %8141 = vmatprep.subr.mxu0 0.0
    %8142 = vmatpush1.xpose.msra.mxu0 0.0
    %8143 = vmatprep.subr.mxu0 0.0
    %8144 = vmatpush1.xpose.msra.mxu0 0.0
    %8145 = vmatprep.subr.mxu0 0.0
    %8146 = vmatpush1.xpose.msra.mxu0 0.0
    %8147 = vmatprep.subr.mxu0 0.0
    %8148 = vmatpush1.xpose.msra.mxu0 %v8115
    %8149 = vmatprep.subr.mxu0 0.0
    %8150 = vmatpush2.xpose.msra.mxu0 0.0
    %8151 = vmatprep.subr.mxu0 0.0
    %8152 = vmatpush2.xpose.msra.mxu0 0.0
    %8153 = vmatprep.subr.mxu0 0.0
    %8154 = vmatpush2.xpose.msra.mxu0 0.0
    %8155 = vmatprep.subr.mxu0 0.0
    %8156 = vmatpush2.xpose.msra.mxu0 0.0
    %8157 = vmatprep.subr.mxu0 0.0
    %8158 = vmatpush2.xpose.msra.mxu0 0.0
    %8159 = vmatprep.subr.mxu0 0.0
    %8160 = vmatpush2.xpose.msra.mxu0 0.0
    %8161 = vmatprep.subr.mxu0 0.0
    %8162 = vmatpush2.xpose.msra.mxu0 0.0
    %8163 = vmatprep.subr.mxu0 0.0
    %8164 = vmatpush2.xpose.msra.mxu0 0.0
    %8165 = vmatprep.subr.mxu0 0.0
    %8166 = vmatpush2.xpose.msra.mxu0 0.0
    %8167 = vmatprep.subr.mxu0 0.0
    %8168 = vmatpush2.xpose.msra.mxu0 0.0
    %8169 = vmatprep.subr.mxu0 0.0
    %8170 = vmatpush2.xpose.msra.mxu0 0.0
    %8171 = vmatprep.subr.mxu0 0.0
    %8172 = vmatpush2.xpose.msra.mxu0 0.0
    %8173 = vmatprep.subr.mxu0 0.0
    %8174 = vmatpush2.xpose.msra.mxu0 0.0
    %8175 = vmatprep.subr.mxu0 0.0
    %8176 = vmatpush2.xpose.msra.mxu0 0.0
    %8177 = vmatprep.subr.mxu0 0.0
    %8178 = vmatpush2.xpose.msra.mxu0 0.0
    %8179 = vmatprep.subr.mxu0 0.0
    %8180 = vmatpush2.xpose.msra.mxu0 0.0
    %8181 = vmatprep.mubr.f32.mxu0 0.0
    %8182 = vmatmul.mubr.f32.gmra.mxu0 %v8113
    %v8183 = vpop.f32.mrf.mxu0
    %v8184 = vadd.f32 0.0, %v8183
    %v8185 = vpop.f32.mrf.mxu0
    %8186 = vdwg.mxu0
    %v8187 = vsel %vm432, %v8184, -inf
    %8188 = vmax.xlane.f32.xlu0 %v8187
    %v8189 = vpop.xlane.xlu0 %8188
    %v8190 = vsub.f32 %v8184, %v8189
    %v8191 = vmul.f32 %v8190, 1.442695
    %v8192 = vpow.pop %v8191
    %v8193 = vsel %vm432, %v8192, 0.0
    %8194 = vadd.xlane.f32.xlu0 %v8193
    %v8195 = vpop.xlane.xlu0 %8194
    %v8196 = vrcp.pop %v8195
    %v8197 = vmul.f32 %v8192, %v8196
    %8199 = vrot.lane.b32.xlu0 %v7424, 64
    %v8200 = vpop.permute.xlu0 %8199
    %v8203 = vsel %vm432, %v8197, 0
    %8205 = vmatprep.subr.mxu0 0.0
    %8206 = vmatpush1.msra.mxu0 0.0
    %8207 = vmatprep.subr.mxu0 0.0
    %8208 = vmatpush1.msra.mxu0 0.0
    %8209 = vmatprep.subr.mxu0 0.0
    %8210 = vmatpush1.msra.mxu0 0.0
    %8211 = vmatprep.subr.mxu0 0.0
    %8212 = vmatpush1.msra.mxu0 0.0
    %8213 = vmatprep.subr.mxu0 0.0
    %8214 = vmatpush1.msra.mxu0 0.0
    %8215 = vmatprep.subr.mxu0 0.0
    %8216 = vmatpush1.msra.mxu0 0.0
    %8217 = vmatprep.subr.mxu0 0.0
    %8218 = vmatpush1.msra.mxu0 0.0
    %8219 = vmatprep.subr.mxu0 0.0
    %8220 = vmatpush1.msra.mxu0 0.0
    %8221 = vmatprep.subr.mxu0 0.0
    %8222 = vmatpush1.msra.mxu0 0.0
    %8223 = vmatprep.subr.mxu0 0.0
    %8224 = vmatpush1.msra.mxu0 0.0
    %8225 = vmatprep.subr.mxu0 0.0
    %8226 = vmatpush1.msra.mxu0 0.0
    %8227 = vmatprep.subr.mxu0 0.0
    %8228 = vmatpush1.msra.mxu0 0.0
    %8229 = vmatprep.subr.mxu0 0.0
    %8230 = vmatpush1.msra.mxu0 0.0
    %8231 = vmatprep.subr.mxu0 0.0
    %8232 = vmatpush1.msra.mxu0 0.0
    %8233 = vmatprep.subr.mxu0 0.0
    %8234 = vmatpush1.msra.mxu0 0.0
    %8235 = vmatprep.subr.mxu0 0.0
    %8236 = vmatpush1.msra.mxu0 %v8200
    %8237 = vmatprep.subr.mxu0 0.0
    %8238 = vmatpush2.msra.mxu0 0.0
    %8239 = vmatprep.subr.mxu0 0.0
    %8240 = vmatpush2.msra.mxu0 0.0
    %8241 = vmatprep.subr.mxu0 0.0
    %8242 = vmatpush2.msra.mxu0 0.0
    %8243 = vmatprep.subr.mxu0 0.0
    %8244 = vmatpush2.msra.mxu0 0.0
    %8245 = vmatprep.subr.mxu0 0.0
    %8246 = vmatpush2.msra.mxu0 0.0
    %8247 = vmatprep.subr.mxu0 0.0
    %8248 = vmatpush2.msra.mxu0 0.0
    %8249 = vmatprep.subr.mxu0 0.0
    %8250 = vmatpush2.msra.mxu0 0.0
    %8251 = vmatprep.subr.mxu0 0.0
    %8252 = vmatpush2.msra.mxu0 0.0
    %8253 = vmatprep.subr.mxu0 0.0
    %8254 = vmatpush2.msra.mxu0 0.0
    %8255 = vmatprep.subr.mxu0 0.0
    %8256 = vmatpush2.msra.mxu0 0.0
    %8257 = vmatprep.subr.mxu0 0.0
    %8258 = vmatpush2.msra.mxu0 0.0
    %8259 = vmatprep.subr.mxu0 0.0
    %8260 = vmatpush2.msra.mxu0 0.0
    %8261 = vmatprep.subr.mxu0 0.0
    %8262 = vmatpush2.msra.mxu0 0.0
    %8263 = vmatprep.subr.mxu0 0.0
    %8264 = vmatpush2.msra.mxu0 0.0
    %8265 = vmatprep.subr.mxu0 0.0
    %8266 = vmatpush2.msra.mxu0 0.0
    %8267 = vmatprep.subr.mxu0 0.0
    %8268 = vmatpush2.msra.mxu0 0.0
    %8269 = vmatprep.mubr.f32.mxu0 0.0
    %8270 = vmatmul.mubr.f32.gmra.mxu0 %v8203
    %v8271 = vpop.f32.mrf.mxu0
    %v8272 = vadd.f32 0.0, %v8271
    %v8273 = vpop.f32.mrf.mxu0
    %8274 = vdwg.mxu0
    %8275 = vrot.lane.b32.xlu0 %v7430, 120
    %v8276 = vpop.permute.xlu0 %8275
    %8277 = vrot.lane.b32.xlu0 %v7432, 88
    %v8278 = vpop.permute.xlu0 %8277
    %v8279 = vsel %vm432, %v8276, 0
    %v8281 = vsel %vm432, %v8278, 0
    %8283 = vmatprep.subr.mxu0 0.0
    %8284 = vmatpush1.xpose.msra.mxu0 0.0
    %8285 = vmatprep.subr.mxu0 0.0
    %8286 = vmatpush1.xpose.msra.mxu0 0.0
    %8287 = vmatprep.subr.mxu0 0.0
    %8288 = vmatpush1.xpose.msra.mxu0 0.0
    %8289 = vmatprep.subr.mxu0 0.0
    %8290 = vmatpush1.xpose.msra.mxu0 0.0
    %8291 = vmatprep.subr.mxu0 0.0
    %8292 = vmatpush1.xpose.msra.mxu0 0.0
    %8293 = vmatprep.subr.mxu0 0.0
    %8294 = vmatpush1.xpose.msra.mxu0 0.0
    %8295 = vmatprep.subr.mxu0 0.0
    %8296 = vmatpush1.xpose.msra.mxu0 0.0
    %8297 = vmatprep.subr.mxu0 0.0
    %8298 = vmatpush1.xpose.msra.mxu0 0.0
    %8299 = vmatprep.subr.mxu0 0.0
    %8300 = vmatpush1.xpose.msra.mxu0 0.0
    %8301 = vmatprep.subr.mxu0 0.0
    %8302 = vmatpush1.xpose.msra.mxu0 0.0
    %8303 = vmatprep.subr.mxu0 0.0
    %8304 = vmatpush1.xpose.msra.mxu0 0.0
    %8305 = vmatprep.subr.mxu0 0.0
    %8306 = vmatpush1.xpose.msra.mxu0 0.0
    %8307 = vmatprep.subr.mxu0 0.0
    %8308 = vmatpush1.xpose.msra.mxu0 0.0
    %8309 = vmatprep.subr.mxu0 0.0
    %8310 = vmatpush1.xpose.msra.mxu0 0.0
    %8311 = vmatprep.subr.mxu0 0.0
    %8312 = vmatpush1.xpose.msra.mxu0 0.0
    %8313 = vmatprep.subr.mxu0 0.0
    %8314 = vmatpush1.xpose.msra.mxu0 %v8281
    %8315 = vmatprep.subr.mxu0 0.0
    %8316 = vmatpush2.xpose.msra.mxu0 0.0
    %8317 = vmatprep.subr.mxu0 0.0
    %8318 = vmatpush2.xpose.msra.mxu0 0.0
    %8319 = vmatprep.subr.mxu0 0.0
    %8320 = vmatpush2.xpose.msra.mxu0 0.0
    %8321 = vmatprep.subr.mxu0 0.0
    %8322 = vmatpush2.xpose.msra.mxu0 0.0
    %8323 = vmatprep.subr.mxu0 0.0
    %8324 = vmatpush2.xpose.msra.mxu0 0.0
    %8325 = vmatprep.subr.mxu0 0.0
    %8326 = vmatpush2.xpose.msra.mxu0 0.0
    %8327 = vmatprep.subr.mxu0 0.0
    %8328 = vmatpush2.xpose.msra.mxu0 0.0
    %8329 = vmatprep.subr.mxu0 0.0
    %8330 = vmatpush2.xpose.msra.mxu0 0.0
    %8331 = vmatprep.subr.mxu0 0.0
    %8332 = vmatpush2.xpose.msra.mxu0 0.0
    %8333 = vmatprep.subr.mxu0 0.0
    %8334 = vmatpush2.xpose.msra.mxu0 0.0
    %8335 = vmatprep.subr.mxu0 0.0
    %8336 = vmatpush2.xpose.msra.mxu0 0.0
    %8337 = vmatprep.subr.mxu0 0.0
    %8338 = vmatpush2.xpose.msra.mxu0 0.0
    %8339 = vmatprep.subr.mxu0 0.0
    %8340 = vmatpush2.xpose.msra.mxu0 0.0
    %8341 = vmatprep.subr.mxu0 0.0
    %8342 = vmatpush2.xpose.msra.mxu0 0.0
    %8343 = vmatprep.subr.mxu0 0.0
    %8344 = vmatpush2.xpose.msra.mxu0 0.0
    %8345 = vmatprep.subr.mxu0 0.0
    %8346 = vmatpush2.xpose.msra.mxu0 0.0
    %8347 = vmatprep.mubr.f32.mxu0 0.0
    %8348 = vmatmul.mubr.f32.gmra.mxu0 %v8279
    %v8349 = vpop.f32.mrf.mxu0
    %v8350 = vadd.f32 0.0, %v8349
    %v8351 = vpop.f32.mrf.mxu0
    %8352 = vdwg.mxu0
    %v8353 = vsel %vm432, %v8350, -inf
    %8354 = vmax.xlane.f32.xlu0 %v8353
    %v8355 = vpop.xlane.xlu0 %8354
    %v8356 = vsub.f32 %v8350, %v8355
    %v8357 = vmul.f32 %v8356, 1.442695
    %v8358 = vpow.pop %v8357
    %v8359 = vsel %vm432, %v8358, 0.0
    %8360 = vadd.xlane.f32.xlu0 %v8359
    %v8361 = vpop.xlane.xlu0 %8360
    %v8362 = vrcp.pop %v8361
    %v8363 = vmul.f32 %v8358, %v8362
    %8364 = vrot.lane.b32.xlu0 %v7424, 56
    %v8365 = vpop.permute.xlu0 %8364
    %v8368 = vsel %vm432, %v8363, 0
    %8370 = vmatprep.subr.mxu0 0.0
    %8371 = vmatpush1.msra.mxu0 0.0
    %8372 = vmatprep.subr.mxu0 0.0
    %8373 = vmatpush1.msra.mxu0 0.0
    %8374 = vmatprep.subr.mxu0 0.0
    %8375 = vmatpush1.msra.mxu0 0.0
    %8376 = vmatprep.subr.mxu0 0.0
    %8377 = vmatpush1.msra.mxu0 0.0
    %8378 = vmatprep.subr.mxu0 0.0
    %8379 = vmatpush1.msra.mxu0 0.0
    %8380 = vmatprep.subr.mxu0 0.0
    %8381 = vmatpush1.msra.mxu0 0.0
    %8382 = vmatprep.subr.mxu0 0.0
    %8383 = vmatpush1.msra.mxu0 0.0
    %8384 = vmatprep.subr.mxu0 0.0
    %8385 = vmatpush1.msra.mxu0 0.0
    %8386 = vmatprep.subr.mxu0 0.0
    %8387 = vmatpush1.msra.mxu0 0.0
    %8388 = vmatprep.subr.mxu0 0.0
    %8389 = vmatpush1.msra.mxu0 0.0
    %8390 = vmatprep.subr.mxu0 0.0
    %8391 = vmatpush1.msra.mxu0 0.0
    %8392 = vmatprep.subr.mxu0 0.0
    %8393 = vmatpush1.msra.mxu0 0.0
    %8394 = vmatprep.subr.mxu0 0.0
    %8395 = vmatpush1.msra.mxu0 0.0
    %8396 = vmatprep.subr.mxu0 0.0
    %8397 = vmatpush1.msra.mxu0 0.0
    %8398 = vmatprep.subr.mxu0 0.0
    %8399 = vmatpush1.msra.mxu0 0.0
    %8400 = vmatprep.subr.mxu0 0.0
    %8401 = vmatpush1.msra.mxu0 %v8365
    %8402 = vmatprep.subr.mxu0 0.0
    %8403 = vmatpush2.msra.mxu0 0.0
    %8404 = vmatprep.subr.mxu0 0.0
    %8405 = vmatpush2.msra.mxu0 0.0
    %8406 = vmatprep.subr.mxu0 0.0
    %8407 = vmatpush2.msra.mxu0 0.0
    %8408 = vmatprep.subr.mxu0 0.0
    %8409 = vmatpush2.msra.mxu0 0.0
    %8410 = vmatprep.subr.mxu0 0.0
    %8411 = vmatpush2.msra.mxu0 0.0
    %8412 = vmatprep.subr.mxu0 0.0
    %8413 = vmatpush2.msra.mxu0 0.0
    %8414 = vmatprep.subr.mxu0 0.0
    %8415 = vmatpush2.msra.mxu0 0.0
    %8416 = vmatprep.subr.mxu0 0.0
    %8417 = vmatpush2.msra.mxu0 0.0
    %8418 = vmatprep.subr.mxu0 0.0
    %8419 = vmatpush2.msra.mxu0 0.0
    %8420 = vmatprep.subr.mxu0 0.0
    %8421 = vmatpush2.msra.mxu0 0.0
    %8422 = vmatprep.subr.mxu0 0.0
    %8423 = vmatpush2.msra.mxu0 0.0
    %8424 = vmatprep.subr.mxu0 0.0
    %8425 = vmatpush2.msra.mxu0 0.0
    %8426 = vmatprep.subr.mxu0 0.0
    %8427 = vmatpush2.msra.mxu0 0.0
    %8428 = vmatprep.subr.mxu0 0.0
    %8429 = vmatpush2.msra.mxu0 0.0
    %8430 = vmatprep.subr.mxu0 0.0
    %8431 = vmatpush2.msra.mxu0 0.0
    %8432 = vmatprep.subr.mxu0 0.0
    %8433 = vmatpush2.msra.mxu0 0.0
    %8434 = vmatprep.mubr.f32.mxu0 0.0
    %8435 = vmatmul.mubr.f32.gmra.mxu0 %v8368
    %v8436 = vpop.f32.mrf.mxu0
    %v8437 = vadd.f32 0.0, %v8436
    %v8438 = vpop.f32.mrf.mxu0
    %8439 = vdwg.mxu0
    %8440 = vrot.lane.b32.xlu0 %v7430, 112
    %v8441 = vpop.permute.xlu0 %8440
    %8442 = vrot.lane.b32.xlu0 %v7432, 80
    %v8443 = vpop.permute.xlu0 %8442
    %v8444 = vsel %vm432, %v8441, 0
    %v8446 = vsel %vm432, %v8443, 0
    %8448 = vmatprep.subr.mxu0 0.0
    %8449 = vmatpush1.xpose.msra.mxu0 0.0
    %8450 = vmatprep.subr.mxu0 0.0
    %8451 = vmatpush1.xpose.msra.mxu0 0.0
    %8452 = vmatprep.subr.mxu0 0.0
    %8453 = vmatpush1.xpose.msra.mxu0 0.0
    %8454 = vmatprep.subr.mxu0 0.0
    %8455 = vmatpush1.xpose.msra.mxu0 0.0
    %8456 = vmatprep.subr.mxu0 0.0
    %8457 = vmatpush1.xpose.msra.mxu0 0.0
    %8458 = vmatprep.subr.mxu0 0.0
    %8459 = vmatpush1.xpose.msra.mxu0 0.0
    %8460 = vmatprep.subr.mxu0 0.0
    %8461 = vmatpush1.xpose.msra.mxu0 0.0
    %8462 = vmatprep.subr.mxu0 0.0
    %8463 = vmatpush1.xpose.msra.mxu0 0.0
    %8464 = vmatprep.subr.mxu0 0.0
    %8465 = vmatpush1.xpose.msra.mxu0 0.0
    %8466 = vmatprep.subr.mxu0 0.0
    %8467 = vmatpush1.xpose.msra.mxu0 0.0
    %8468 = vmatprep.subr.mxu0 0.0
    %8469 = vmatpush1.xpose.msra.mxu0 0.0
    %8470 = vmatprep.subr.mxu0 0.0
    %8471 = vmatpush1.xpose.msra.mxu0 0.0
    %8472 = vmatprep.subr.mxu0 0.0
    %8473 = vmatpush1.xpose.msra.mxu0 0.0
    %8474 = vmatprep.subr.mxu0 0.0
    %8475 = vmatpush1.xpose.msra.mxu0 0.0
    %8476 = vmatprep.subr.mxu0 0.0
    %8477 = vmatpush1.xpose.msra.mxu0 0.0
    %8478 = vmatprep.subr.mxu0 0.0
    %8479 = vmatpush1.xpose.msra.mxu0 %v8446
    %8480 = vmatprep.subr.mxu0 0.0
    %8481 = vmatpush2.xpose.msra.mxu0 0.0
    %8482 = vmatprep.subr.mxu0 0.0
    %8483 = vmatpush2.xpose.msra.mxu0 0.0
    %8484 = vmatprep.subr.mxu0 0.0
    %8485 = vmatpush2.xpose.msra.mxu0 0.0
    %8486 = vmatprep.subr.mxu0 0.0
    %8487 = vmatpush2.xpose.msra.mxu0 0.0
    %8488 = vmatprep.subr.mxu0 0.0
    %8489 = vmatpush2.xpose.msra.mxu0 0.0
    %8490 = vmatprep.subr.mxu0 0.0
    %8491 = vmatpush2.xpose.msra.mxu0 0.0
    %8492 = vmatprep.subr.mxu0 0.0
    %8493 = vmatpush2.xpose.msra.mxu0 0.0
    %8494 = vmatprep.subr.mxu0 0.0
    %8495 = vmatpush2.xpose.msra.mxu0 0.0
    %8496 = vmatprep.subr.mxu0 0.0
    %8497 = vmatpush2.xpose.msra.mxu0 0.0
    %8498 = vmatprep.subr.mxu0 0.0
    %8499 = vmatpush2.xpose.msra.mxu0 0.0
    %8500 = vmatprep.subr.mxu0 0.0
    %8501 = vmatpush2.xpose.msra.mxu0 0.0
    %8502 = vmatprep.subr.mxu0 0.0
    %8503 = vmatpush2.xpose.msra.mxu0 0.0
    %8504 = vmatprep.subr.mxu0 0.0
    %8505 = vmatpush2.xpose.msra.mxu0 0.0
    %8506 = vmatprep.subr.mxu0 0.0
    %8507 = vmatpush2.xpose.msra.mxu0 0.0
    %8508 = vmatprep.subr.mxu0 0.0
    %8509 = vmatpush2.xpose.msra.mxu0 0.0
    %8510 = vmatprep.subr.mxu0 0.0
    %8511 = vmatpush2.xpose.msra.mxu0 0.0
    %8512 = vmatprep.mubr.f32.mxu0 0.0
    %8513 = vmatmul.mubr.f32.gmra.mxu0 %v8444
    %v8514 = vpop.f32.mrf.mxu0
    %v8515 = vadd.f32 0.0, %v8514
    %v8516 = vpop.f32.mrf.mxu0
    %8517 = vdwg.mxu0
    %v8518 = vsel %vm432, %v8515, -inf
    %8519 = vmax.xlane.f32.xlu0 %v8518
    %v8520 = vpop.xlane.xlu0 %8519
    %v8521 = vsub.f32 %v8515, %v8520
    %v8522 = vmul.f32 %v8521, 1.442695
    %v8523 = vpow.pop %v8522
    %v8524 = vsel %vm432, %v8523, 0.0
    %8525 = vadd.xlane.f32.xlu0 %v8524
    %v8526 = vpop.xlane.xlu0 %8525
    %v8527 = vrcp.pop %v8526
    %v8528 = vmul.f32 %v8523, %v8527
    %8529 = vrot.lane.b32.xlu0 %v7424, 48
    %v8530 = vpop.permute.xlu0 %8529
    %v8533 = vsel %vm432, %v8528, 0
    %8535 = vmatprep.subr.mxu0 0.0
    %8536 = vmatpush1.msra.mxu0 0.0
    %8537 = vmatprep.subr.mxu0 0.0
    %8538 = vmatpush1.msra.mxu0 0.0
    %8539 = vmatprep.subr.mxu0 0.0
    %8540 = vmatpush1.msra.mxu0 0.0
    %8541 = vmatprep.subr.mxu0 0.0
    %8542 = vmatpush1.msra.mxu0 0.0
    %8543 = vmatprep.subr.mxu0 0.0
    %8544 = vmatpush1.msra.mxu0 0.0
    %8545 = vmatprep.subr.mxu0 0.0
    %8546 = vmatpush1.msra.mxu0 0.0
    %8547 = vmatprep.subr.mxu0 0.0
    %8548 = vmatpush1.msra.mxu0 0.0
    %8549 = vmatprep.subr.mxu0 0.0
    %8550 = vmatpush1.msra.mxu0 0.0
    %8551 = vmatprep.subr.mxu0 0.0
    %8552 = vmatpush1.msra.mxu0 0.0
    %8553 = vmatprep.subr.mxu0 0.0
    %8554 = vmatpush1.msra.mxu0 0.0
    %8555 = vmatprep.subr.mxu0 0.0
    %8556 = vmatpush1.msra.mxu0 0.0
    %8557 = vmatprep.subr.mxu0 0.0
    %8558 = vmatpush1.msra.mxu0 0.0
    %8559 = vmatprep.subr.mxu0 0.0
    %8560 = vmatpush1.msra.mxu0 0.0
    %8561 = vmatprep.subr.mxu0 0.0
    %8562 = vmatpush1.msra.mxu0 0.0
    %8563 = vmatprep.subr.mxu0 0.0
    %8564 = vmatpush1.msra.mxu0 0.0
    %8565 = vmatprep.subr.mxu0 0.0
    %8566 = vmatpush1.msra.mxu0 %v8530
    %8567 = vmatprep.subr.mxu0 0.0
    %8568 = vmatpush2.msra.mxu0 0.0
    %8569 = vmatprep.subr.mxu0 0.0
    %8570 = vmatpush2.msra.mxu0 0.0
    %8571 = vmatprep.subr.mxu0 0.0
    %8572 = vmatpush2.msra.mxu0 0.0
    %8573 = vmatprep.subr.mxu0 0.0
    %8574 = vmatpush2.msra.mxu0 0.0
    %8575 = vmatprep.subr.mxu0 0.0
    %8576 = vmatpush2.msra.mxu0 0.0
    %8577 = vmatprep.subr.mxu0 0.0
    %8578 = vmatpush2.msra.mxu0 0.0
    %8579 = vmatprep.subr.mxu0 0.0
    %8580 = vmatpush2.msra.mxu0 0.0
    %8581 = vmatprep.subr.mxu0 0.0
    %8582 = vmatpush2.msra.mxu0 0.0
    %8583 = vmatprep.subr.mxu0 0.0
    %8584 = vmatpush2.msra.mxu0 0.0
    %8585 = vmatprep.subr.mxu0 0.0
    %8586 = vmatpush2.msra.mxu0 0.0
    %8587 = vmatprep.subr.mxu0 0.0
    %8588 = vmatpush2.msra.mxu0 0.0
    %8589 = vmatprep.subr.mxu0 0.0
    %8590 = vmatpush2.msra.mxu0 0.0
    %8591 = vmatprep.subr.mxu0 0.0
    %8592 = vmatpush2.msra.mxu0 0.0
    %8593 = vmatprep.subr.mxu0 0.0
    %8594 = vmatpush2.msra.mxu0 0.0
    %8595 = vmatprep.subr.mxu0 0.0
    %8596 = vmatpush2.msra.mxu0 0.0
    %8597 = vmatprep.subr.mxu0 0.0
    %8598 = vmatpush2.msra.mxu0 0.0
    %8599 = vmatprep.mubr.f32.mxu0 0.0
    %8600 = vmatmul.mubr.f32.gmra.mxu0 %v8533
    %v8601 = vpop.f32.mrf.mxu0
    %v8602 = vadd.f32 0.0, %v8601
    %v8603 = vpop.f32.mrf.mxu0
    %8604 = vdwg.mxu0
    %8605 = vrot.lane.b32.xlu0 %v7430, 104
    %v8606 = vpop.permute.xlu0 %8605
    %8607 = vrot.lane.b32.xlu0 %v7432, 72
    %v8608 = vpop.permute.xlu0 %8607
    %v8609 = vsel %vm432, %v8606, 0
    %v8611 = vsel %vm432, %v8608, 0
    %8613 = vmatprep.subr.mxu0 0.0
    %8614 = vmatpush1.xpose.msra.mxu0 0.0
    %8615 = vmatprep.subr.mxu0 0.0
    %8616 = vmatpush1.xpose.msra.mxu0 0.0
    %8617 = vmatprep.subr.mxu0 0.0
    %8618 = vmatpush1.xpose.msra.mxu0 0.0
    %8619 = vmatprep.subr.mxu0 0.0
    %8620 = vmatpush1.xpose.msra.mxu0 0.0
    %8621 = vmatprep.subr.mxu0 0.0
    %8622 = vmatpush1.xpose.msra.mxu0 0.0
    %8623 = vmatprep.subr.mxu0 0.0
    %8624 = vmatpush1.xpose.msra.mxu0 0.0
    %8625 = vmatprep.subr.mxu0 0.0
    %8626 = vmatpush1.xpose.msra.mxu0 0.0
    %8627 = vmatprep.subr.mxu0 0.0
    %8628 = vmatpush1.xpose.msra.mxu0 0.0
    %8629 = vmatprep.subr.mxu0 0.0
    %8630 = vmatpush1.xpose.msra.mxu0 0.0
    %8631 = vmatprep.subr.mxu0 0.0
    %8632 = vmatpush1.xpose.msra.mxu0 0.0
    %8633 = vmatprep.subr.mxu0 0.0
    %8634 = vmatpush1.xpose.msra.mxu0 0.0
    %8635 = vmatprep.subr.mxu0 0.0
    %8636 = vmatpush1.xpose.msra.mxu0 0.0
    %8637 = vmatprep.subr.mxu0 0.0
    %8638 = vmatpush1.xpose.msra.mxu0 0.0
    %8639 = vmatprep.subr.mxu0 0.0
    %8640 = vmatpush1.xpose.msra.mxu0 0.0
    %8641 = vmatprep.subr.mxu0 0.0
    %8642 = vmatpush1.xpose.msra.mxu0 0.0
    %8643 = vmatprep.subr.mxu0 0.0
    %8644 = vmatpush1.xpose.msra.mxu0 %v8611
    %8645 = vmatprep.subr.mxu0 0.0
    %8646 = vmatpush2.xpose.msra.mxu0 0.0
    %8647 = vmatprep.subr.mxu0 0.0
    %8648 = vmatpush2.xpose.msra.mxu0 0.0
    %8649 = vmatprep.subr.mxu0 0.0
    %8650 = vmatpush2.xpose.msra.mxu0 0.0
    %8651 = vmatprep.subr.mxu0 0.0
    %8652 = vmatpush2.xpose.msra.mxu0 0.0
    %8653 = vmatprep.subr.mxu0 0.0
    %8654 = vmatpush2.xpose.msra.mxu0 0.0
    %8655 = vmatprep.subr.mxu0 0.0
    %8656 = vmatpush2.xpose.msra.mxu0 0.0
    %8657 = vmatprep.subr.mxu0 0.0
    %8658 = vmatpush2.xpose.msra.mxu0 0.0
    %8659 = vmatprep.subr.mxu0 0.0
    %8660 = vmatpush2.xpose.msra.mxu0 0.0
    %8661 = vmatprep.subr.mxu0 0.0
    %8662 = vmatpush2.xpose.msra.mxu0 0.0
    %8663 = vmatprep.subr.mxu0 0.0
    %8664 = vmatpush2.xpose.msra.mxu0 0.0
    %8665 = vmatprep.subr.mxu0 0.0
    %8666 = vmatpush2.xpose.msra.mxu0 0.0
    %8667 = vmatprep.subr.mxu0 0.0
    %8668 = vmatpush2.xpose.msra.mxu0 0.0
    %8669 = vmatprep.subr.mxu0 0.0
    %8670 = vmatpush2.xpose.msra.mxu0 0.0
    %8671 = vmatprep.subr.mxu0 0.0
    %8672 = vmatpush2.xpose.msra.mxu0 0.0
    %8673 = vmatprep.subr.mxu0 0.0
    %8674 = vmatpush2.xpose.msra.mxu0 0.0
    %8675 = vmatprep.subr.mxu0 0.0
    %8676 = vmatpush2.xpose.msra.mxu0 0.0
    %8677 = vmatprep.mubr.f32.mxu0 0.0
    %8678 = vmatmul.mubr.f32.gmra.mxu0 %v8609
    %v8679 = vpop.f32.mrf.mxu0
    %v8680 = vadd.f32 0.0, %v8679
    %v8681 = vpop.f32.mrf.mxu0
    %8682 = vdwg.mxu0
    %v8683 = vsel %vm432, %v8680, -inf
    %8684 = vmax.xlane.f32.xlu0 %v8683
    %v8685 = vpop.xlane.xlu0 %8684
    %v8686 = vsub.f32 %v8680, %v8685
    %v8687 = vmul.f32 %v8686, 1.442695
    %v8688 = vpow.pop %v8687
    %v8689 = vsel %vm432, %v8688, 0.0
    %8690 = vadd.xlane.f32.xlu0 %v8689
    %v8691 = vpop.xlane.xlu0 %8690
    %v8692 = vrcp.pop %v8691
    %v8693 = vmul.f32 %v8688, %v8692
    %8694 = vrot.lane.b32.xlu0 %v7424, 40
    %v8695 = vpop.permute.xlu0 %8694
    %v8698 = vsel %vm432, %v8693, 0
    %8700 = vmatprep.subr.mxu0 0.0
    %8701 = vmatpush1.msra.mxu0 0.0
    %8702 = vmatprep.subr.mxu0 0.0
    %8703 = vmatpush1.msra.mxu0 0.0
    %8704 = vmatprep.subr.mxu0 0.0
    %8705 = vmatpush1.msra.mxu0 0.0
    %8706 = vmatprep.subr.mxu0 0.0
    %8707 = vmatpush1.msra.mxu0 0.0
    %8708 = vmatprep.subr.mxu0 0.0
    %8709 = vmatpush1.msra.mxu0 0.0
    %8710 = vmatprep.subr.mxu0 0.0
    %8711 = vmatpush1.msra.mxu0 0.0
    %8712 = vmatprep.subr.mxu0 0.0
    %8713 = vmatpush1.msra.mxu0 0.0
    %8714 = vmatprep.subr.mxu0 0.0
    %8715 = vmatpush1.msra.mxu0 0.0
    %8716 = vmatprep.subr.mxu0 0.0
    %8717 = vmatpush1.msra.mxu0 0.0
    %8718 = vmatprep.subr.mxu0 0.0
    %8719 = vmatpush1.msra.mxu0 0.0
    %8720 = vmatprep.subr.mxu0 0.0
    %8721 = vmatpush1.msra.mxu0 0.0
    %8722 = vmatprep.subr.mxu0 0.0
    %8723 = vmatpush1.msra.mxu0 0.0
    %8724 = vmatprep.subr.mxu0 0.0
    %8725 = vmatpush1.msra.mxu0 0.0
    %8726 = vmatprep.subr.mxu0 0.0
    %8727 = vmatpush1.msra.mxu0 0.0
    %8728 = vmatprep.subr.mxu0 0.0
    %8729 = vmatpush1.msra.mxu0 0.0
    %8730 = vmatprep.subr.mxu0 0.0
    %8731 = vmatpush1.msra.mxu0 %v8695
    %8732 = vmatprep.subr.mxu0 0.0
    %8733 = vmatpush2.msra.mxu0 0.0
    %8734 = vmatprep.subr.mxu0 0.0
    %8735 = vmatpush2.msra.mxu0 0.0
    %8736 = vmatprep.subr.mxu0 0.0
    %8737 = vmatpush2.msra.mxu0 0.0
    %8738 = vmatprep.subr.mxu0 0.0
    %8739 = vmatpush2.msra.mxu0 0.0
    %8740 = vmatprep.subr.mxu0 0.0
    %8741 = vmatpush2.msra.mxu0 0.0
    %8742 = vmatprep.subr.mxu0 0.0
    %8743 = vmatpush2.msra.mxu0 0.0
    %8744 = vmatprep.subr.mxu0 0.0
    %8745 = vmatpush2.msra.mxu0 0.0
    %8746 = vmatprep.subr.mxu0 0.0
    %8747 = vmatpush2.msra.mxu0 0.0
    %8748 = vmatprep.subr.mxu0 0.0
    %8749 = vmatpush2.msra.mxu0 0.0
    %8750 = vmatprep.subr.mxu0 0.0
    %8751 = vmatpush2.msra.mxu0 0.0
    %8752 = vmatprep.subr.mxu0 0.0
    %8753 = vmatpush2.msra.mxu0 0.0
    %8754 = vmatprep.subr.mxu0 0.0
    %8755 = vmatpush2.msra.mxu0 0.0
    %8756 = vmatprep.subr.mxu0 0.0
    %8757 = vmatpush2.msra.mxu0 0.0
    %8758 = vmatprep.subr.mxu0 0.0
    %8759 = vmatpush2.msra.mxu0 0.0
    %8760 = vmatprep.subr.mxu0 0.0
    %8761 = vmatpush2.msra.mxu0 0.0
    %8762 = vmatprep.subr.mxu0 0.0
    %8763 = vmatpush2.msra.mxu0 0.0
    %8764 = vmatprep.mubr.f32.mxu0 0.0
    %8765 = vmatmul.mubr.f32.gmra.mxu0 %v8698
    %v8766 = vpop.f32.mrf.mxu0
    %v8767 = vadd.f32 0.0, %v8766
    %v8768 = vpop.f32.mrf.mxu0
    %8769 = vdwg.mxu0
    %8771 = vrot.lane.b32.xlu0 %v8437, 8
    %v8772 = vpop.permute.xlu0 %8771
    %8775 = vrot.lane.b32.xlu0 %v8602, 16
    %v8776 = vpop.permute.xlu0 %8775
    %8779 = vrot.lane.b32.xlu0 %v8767, 24
    %v8780 = vpop.permute.xlu0 %8779
    %v8782 = vsel %vm432, %v8272, %v8772
    %v8783 = vsel %vm1104, %v8782, %v8776
    %v8784 = vsel %vm1106, %v8783, %v8780
    %v8786 = vsel %vm229, %v8108, 0
    %v8789 = vsel %vm229, %v8784, 0
    %8791 = vmatprep.subr.mxu0 0.0
    %8792 = vmatpush1.msra.mxu0 0.0
    %8793 = vmatprep.subr.mxu0 0.0
    %8794 = vmatpush1.msra.mxu0 0.0
    %8795 = vmatprep.subr.mxu0 0.0
    %8796 = vmatpush1.msra.mxu0 0.0
    %8797 = vmatprep.subr.mxu0 0.0
    %8798 = vmatpush1.msra.mxu0 0.0
    %8799 = vmatprep.subr.mxu0 0.0
    %8800 = vmatpush1.msra.mxu0 0.0
    %8801 = vmatprep.subr.mxu0 0.0
    %8802 = vmatpush1.msra.mxu0 0.0
    %8803 = vmatprep.subr.mxu0 0.0
    %8804 = vmatpush1.msra.mxu0 0.0
    %8805 = vmatprep.subr.mxu0 0.0
    %8806 = vmatpush1.msra.mxu0 0.0
    %8807 = vmatprep.subr.mxu0 0.0
    %8808 = vmatpush1.msra.mxu0 0.0
    %8809 = vmatprep.subr.mxu0 0.0
    %8810 = vmatpush1.msra.mxu0 0.0
    %8811 = vmatprep.subr.mxu0 0.0
    %8812 = vmatpush1.msra.mxu0 0.0
    %8813 = vmatprep.subr.mxu0 0.0
    %8814 = vmatpush1.msra.mxu0 0.0
    %8815 = vmatprep.subr.mxu0 0.0
    %8816 = vmatpush1.msra.mxu0 %v77
    %8817 = vmatprep.subr.mxu0 0.0
    %8818 = vmatpush1.msra.mxu0 %v76
    %8819 = vmatprep.subr.mxu0 0.0
    %8820 = vmatpush1.msra.mxu0 %v75
    %8821 = vmatprep.subr.mxu0 0.0
    %8822 = vmatpush1.msra.mxu0 %v74
    %8823 = vmatprep.subr.mxu0 0.0
    %8824 = vmatpush2.msra.mxu0 0.0
    %8825 = vmatprep.subr.mxu0 0.0
    %8826 = vmatpush2.msra.mxu0 0.0
    %8827 = vmatprep.subr.mxu0 0.0
    %8828 = vmatpush2.msra.mxu0 0.0
    %8829 = vmatprep.subr.mxu0 0.0
    %8830 = vmatpush2.msra.mxu0 0.0
    %8831 = vmatprep.subr.mxu0 0.0
    %8832 = vmatpush2.msra.mxu0 0.0
    %8833 = vmatprep.subr.mxu0 0.0
    %8834 = vmatpush2.msra.mxu0 0.0
    %8835 = vmatprep.subr.mxu0 0.0
    %8836 = vmatpush2.msra.mxu0 0.0
    %8837 = vmatprep.subr.mxu0 0.0
    %8838 = vmatpush2.msra.mxu0 0.0
    %8839 = vmatprep.subr.mxu0 0.0
    %8840 = vmatpush2.msra.mxu0 0.0
    %8841 = vmatprep.subr.mxu0 0.0
    %8842 = vmatpush2.msra.mxu0 0.0
    %8843 = vmatprep.subr.mxu0 0.0
    %8844 = vmatpush2.msra.mxu0 0.0
    %8845 = vmatprep.subr.mxu0 0.0
    %8846 = vmatpush2.msra.mxu0 0.0
    %8847 = vmatprep.subr.mxu0 0.0
    %8848 = vmatpush2.msra.mxu0 0.0
    %8849 = vmatprep.subr.mxu0 0.0
    %8850 = vmatpush2.msra.mxu0 0.0
    %8851 = vmatprep.subr.mxu0 0.0
    %8852 = vmatpush2.msra.mxu0 0.0
    %8853 = vmatprep.subr.mxu0 0.0
    %8854 = vmatpush2.msra.mxu0 0.0
    %8855 = vmatprep.mubr.f32.mxu0 0.0
    %8856 = vmatmul.mubr.f32.gmra.mxu0 %v8786
    %v8857 = vpop.f32.mrf.mxu0
    %v8858 = vadd.f32 0.0, %v8857
    %v8859 = vpop.f32.mrf.mxu0
    %8860 = vmatprep.mubr.f32.mxu0 0.0
    %8861 = vmatmul.mubr.f32.gmra.mxu0 %v8789
    %v8862 = vpop.f32.mrf.mxu0
    %v8863 = vadd.f32 0.0, %v8862
    %v8864 = vpop.f32.mrf.mxu0
    %8865 = vdwg.mxu0
    %v8866 = vadd.f32 %v7314, %v8858
    %v8867 = vadd.f32 %v7315, %v8863
    %v8868 = vsel %vm229, %v8866, 0.0
    %8869 = vadd.xlane.f32.xlu0 %v8868
    %v8870 = vpop.xlane.xlu0 %8869
    %v8871 = vsel %vm229, %v8867, 0.0
    %8872 = vadd.xlane.f32.xlu0 %v8871
    %v8873 = vpop.xlane.xlu0 %8872
    %v8874 = vmul.f32 %v8870, %v317
    %v8875 = vmul.f32 %v8873, %v317
    %v8876 = vsub.f32 %v8866, %v8874
    %v8877 = vsub.f32 %v8867, %v8875
    %v8878 = vmul.f32 %v8876, %v8876
    %v8879 = vmul.f32 %v8877, %v8877
    %v8880 = vsel %vm229, %v8878, 0.0
    %8881 = vadd.xlane.f32.xlu0 %v8880
    %v8882 = vpop.xlane.xlu0 %8881
    %v8883 = vsel %vm229, %v8879, 0.0
    %8884 = vadd.xlane.f32.xlu0 %v8883
    %v8885 = vpop.xlane.xlu0 %8884
    %v8886 = vmul.f32 %v8882, %v317
    %v8887 = vmul.f32 %v8885, %v317
    %v8888 = vadd.f32 %v8886, 1e-05
    %v8889 = vadd.f32 %v8887, 1e-05
    %v8890 = vrsqrt.pop %v8888
    %v8891 = vrsqrt.pop %v8889
    %v8892 = vmul.f32 %v8876, %v8890
    %v8893 = vmul.f32 %v8877, %v8891
    %v8894 = vmul.f32 %v8892, %v123
    %v8895 = vmul.f32 %v8893, %v123
    %v8896 = vadd.f32 %v8894, %v130
    %v8897 = vadd.f32 %v8895, %v130
    %v8899 = vsel %vm229, %v8896, 0
    %v8902 = vsel %vm229, %v8897, 0
    %8904 = vmatprep.subr.mxu0 0.0
    %8905 = vmatpush1.msra.mxu0 0.0
    %8906 = vmatprep.subr.mxu0 0.0
    %8907 = vmatpush1.msra.mxu0 0.0
    %8908 = vmatprep.subr.mxu0 0.0
    %8909 = vmatpush1.msra.mxu0 0.0
    %8910 = vmatprep.subr.mxu0 0.0
    %8911 = vmatpush1.msra.mxu0 0.0
    %8912 = vmatprep.subr.mxu0 0.0
    %8913 = vmatpush1.msra.mxu0 0.0
    %8914 = vmatprep.subr.mxu0 0.0
    %8915 = vmatpush1.msra.mxu0 0.0
    %8916 = vmatprep.subr.mxu0 0.0
    %8917 = vmatpush1.msra.mxu0 0.0
    %8918 = vmatprep.subr.mxu0 0.0
    %8919 = vmatpush1.msra.mxu0 0.0
    %8920 = vmatprep.subr.mxu0 0.0
    %8921 = vmatpush1.msra.mxu0 0.0
    %8922 = vmatprep.subr.mxu0 0.0
    %8923 = vmatpush1.msra.mxu0 0.0
    %8924 = vmatprep.subr.mxu0 0.0
    %8925 = vmatpush1.msra.mxu0 0.0
    %8926 = vmatprep.subr.mxu0 0.0
    %8927 = vmatpush1.msra.mxu0 0.0
    %8928 = vmatprep.subr.mxu0 0.0
    %8929 = vmatpush1.msra.mxu0 %v81
    %8930 = vmatprep.subr.mxu0 0.0
    %8931 = vmatpush1.msra.mxu0 %v80
    %8932 = vmatprep.subr.mxu0 0.0
    %8933 = vmatpush1.msra.mxu0 %v79
    %8934 = vmatprep.subr.mxu0 0.0
    %8935 = vmatpush1.msra.mxu0 %v78
    %8936 = vmatprep.subr.mxu0 0.0
    %8937 = vmatpush2.msra.mxu0 0.0
    %8938 = vmatprep.subr.mxu0 0.0
    %8939 = vmatpush2.msra.mxu0 0.0
    %8940 = vmatprep.subr.mxu0 0.0
    %8941 = vmatpush2.msra.mxu0 0.0
    %8942 = vmatprep.subr.mxu0 0.0
    %8943 = vmatpush2.msra.mxu0 0.0
    %8944 = vmatprep.subr.mxu0 0.0
    %8945 = vmatpush2.msra.mxu0 0.0
    %8946 = vmatprep.subr.mxu0 0.0
    %8947 = vmatpush2.msra.mxu0 0.0
    %8948 = vmatprep.subr.mxu0 0.0
    %8949 = vmatpush2.msra.mxu0 0.0
    %8950 = vmatprep.subr.mxu0 0.0
    %8951 = vmatpush2.msra.mxu0 0.0
    %8952 = vmatprep.subr.mxu0 0.0
    %8953 = vmatpush2.msra.mxu0 0.0
    %8954 = vmatprep.subr.mxu0 0.0
    %8955 = vmatpush2.msra.mxu0 0.0
    %8956 = vmatprep.subr.mxu0 0.0
    %8957 = vmatpush2.msra.mxu0 0.0
    %8958 = vmatprep.subr.mxu0 0.0
    %8959 = vmatpush2.msra.mxu0 0.0
    %8960 = vmatprep.subr.mxu0 0.0
    %8961 = vmatpush2.msra.mxu0 0.0
    %8962 = vmatprep.subr.mxu0 0.0
    %8963 = vmatpush2.msra.mxu0 0.0
    %8964 = vmatprep.subr.mxu0 0.0
    %8965 = vmatpush2.msra.mxu0 0.0
    %8966 = vmatprep.subr.mxu0 0.0
    %8967 = vmatpush2.msra.mxu0 0.0
    %8968 = vmatprep.mubr.f32.mxu0 0.0
    %8969 = vmatmul.mubr.f32.gmra.mxu0 %v8899
    %v8970 = vpop.f32.mrf.mxu0
    %v8971 = vadd.f32 %v95, %v8970
    %v8972 = vpop.f32.mrf.mxu0
    %8973 = vmatprep.mubr.f32.mxu0 0.0
    %8974 = vmatmul.mubr.f32.gmra.mxu0 %v8902
    %v8975 = vpop.f32.mrf.mxu0
    %v8976 = vadd.f32 %v95, %v8975
    %v8977 = vpop.f32.mrf.mxu0
    %8978 = vdwg.mxu0
    %v8979 = vmax.f32 %v8971, 0.0
    %v8980 = vmax.f32 %v8976, 0.0
    %v8982 = vsel %vm1980, %v8979, 0
    %v8985 = vsel %vm1980, %v8980, 0
    %8987 = vmatprep.subr.mxu0 0.0
    %8988 = vmatpush1.msra.mxu0 0.0
    %8989 = vmatprep.subr.mxu0 0.0
    %8990 = vmatpush1.msra.mxu0 0.0
    %8991 = vmatprep.subr.mxu0 0.0
    %8992 = vmatpush1.msra.mxu0 0.0
    %8993 = vmatprep.subr.mxu0 0.0
    %8994 = vmatpush1.msra.mxu0 0.0
    %8995 = vmatprep.subr.mxu0 0.0
    %8996 = vmatpush1.msra.mxu0 0.0
    %8997 = vmatprep.subr.mxu0 0.0
    %8998 = vmatpush1.msra.mxu0 0.0
    %8999 = vmatprep.subr.mxu0 0.0
    %9000 = vmatpush1.msra.mxu0 0.0
    %9001 = vmatprep.subr.mxu0 0.0
    %9002 = vmatpush1.msra.mxu0 0.0
    %9003 = vmatprep.subr.mxu0 0.0
    %9004 = vmatpush1.msra.mxu0 %v89
    %9005 = vmatprep.subr.mxu0 0.0
    %9006 = vmatpush1.msra.mxu0 %v88
    %9007 = vmatprep.subr.mxu0 0.0
    %9008 = vmatpush1.msra.mxu0 %v87
    %9009 = vmatprep.subr.mxu0 0.0
    %9010 = vmatpush1.msra.mxu0 %v86
    %9011 = vmatprep.subr.mxu0 0.0
    %9012 = vmatpush1.msra.mxu0 %v85
    %9013 = vmatprep.subr.mxu0 0.0
    %9014 = vmatpush1.msra.mxu0 %v84
    %9015 = vmatprep.subr.mxu0 0.0
    %9016 = vmatpush1.msra.mxu0 %v83
    %9017 = vmatprep.subr.mxu0 0.0
    %9018 = vmatpush1.msra.mxu0 %v82
    %9019 = vmatprep.subr.mxu0 0.0
    %9020 = vmatpush2.msra.mxu0 0.0
    %9021 = vmatprep.subr.mxu0 0.0
    %9022 = vmatpush2.msra.mxu0 0.0
    %9023 = vmatprep.subr.mxu0 0.0
    %9024 = vmatpush2.msra.mxu0 0.0
    %9025 = vmatprep.subr.mxu0 0.0
    %9026 = vmatpush2.msra.mxu0 0.0
    %9027 = vmatprep.subr.mxu0 0.0
    %9028 = vmatpush2.msra.mxu0 0.0
    %9029 = vmatprep.subr.mxu0 0.0
    %9030 = vmatpush2.msra.mxu0 0.0
    %9031 = vmatprep.subr.mxu0 0.0
    %9032 = vmatpush2.msra.mxu0 0.0
    %9033 = vmatprep.subr.mxu0 0.0
    %9034 = vmatpush2.msra.mxu0 0.0
    %9035 = vmatprep.subr.mxu0 0.0
    %9036 = vmatpush2.msra.mxu0 0.0
    %9037 = vmatprep.subr.mxu0 0.0
    %9038 = vmatpush2.msra.mxu0 0.0
    %9039 = vmatprep.subr.mxu0 0.0
    %9040 = vmatpush2.msra.mxu0 0.0
    %9041 = vmatprep.subr.mxu0 0.0
    %9042 = vmatpush2.msra.mxu0 0.0
    %9043 = vmatprep.subr.mxu0 0.0
    %9044 = vmatpush2.msra.mxu0 0.0
    %9045 = vmatprep.subr.mxu0 0.0
    %9046 = vmatpush2.msra.mxu0 0.0
    %9047 = vmatprep.subr.mxu0 0.0
    %9048 = vmatpush2.msra.mxu0 0.0
    %9049 = vmatprep.subr.mxu0 0.0
    %9050 = vmatpush2.msra.mxu0 0.0
    %9051 = vmatprep.mubr.f32.mxu0 0.0
    %9052 = vmatmul.mubr.f32.gmra.mxu0 %v8982
    %v9053 = vpop.f32.mrf.mxu0
    %v9054 = vadd.f32 %v102, %v9053
    %v9055 = vpop.f32.mrf.mxu0
    %9056 = vmatprep.mubr.f32.mxu0 0.0
    %9057 = vmatmul.mubr.f32.gmra.mxu0 %v8985
    %v9058 = vpop.f32.mrf.mxu0
    %v9059 = vadd.f32 %v102, %v9058
    %v9060 = vpop.f32.mrf.mxu0
    %9061 = vdwg.mxu0
    %v9062 = vadd.f32 %v8866, %v9054
    %v9063 = vadd.f32 %v8867, %v9059
    %v9065 = vcombine.high %v9062, %v9062
    %v9067 = vunpack.c.l.s4 1966171168
    %v9068 = vunpack.c.0.s8 %v9067
    %v9069 = vlaneseq
    %v9070 = vshrl.u32 %v9069, 7
    %v9071 = vsub.s32 %v9068, %v9070
    %v9072 = vrot.slane %v9062, %v9071
    %v9074 = vunpack.c.l.s4 1966171168
    %v9075 = vunpack.c.0.s8 %v9074
    %v9076 = vlaneseq
    %v9077 = vshrl.u32 %v9076, 7
    %v9078 = vsub.s32 %v9075, %v9077
    %v9079 = vrot.slane %v9065, %v9078
    %v9080 = vcombine.high %v9072, %v9072
    %v9081 = vcombine.high %v9079, %v9079
    %v9083 = vunpack.c.l.s4 1966171168
    %v9084 = vunpack.c.0.s8 %v9083
    %v9085 = vlaneseq
    %v9086 = vshrl.u32 %v9085, 7
    %v9087 = vsub.s32 %v9084, %v9086
    %v9088 = vrot.slane %v9072, %v9087
    %v9090 = vunpack.c.l.s4 1966171168
    %v9091 = vunpack.c.0.s8 %v9090
    %v9092 = vlaneseq
    %v9093 = vshrl.u32 %v9092, 7
    %v9094 = vsub.s32 %v9091, %v9093
    %v9095 = vrot.slane %v9079, %v9094
    %v9097 = vunpack.c.l.s4 1966171168
    %v9098 = vunpack.c.0.s8 %v9097
    %v9099 = vlaneseq
    %v9100 = vshrl.u32 %v9099, 7
    %v9101 = vsub.s32 %v9098, %v9100
    %v9102 = vrot.slane %v9080, %v9101
    %v9104 = vunpack.c.l.s4 1966171168
    %v9105 = vunpack.c.0.s8 %v9104
    %v9106 = vlaneseq
    %v9107 = vshrl.u32 %v9106, 7
    %v9108 = vsub.s32 %v9105, %v9107
    %v9109 = vrot.slane %v9081, %v9108
    %v9110 = vcombine.high %v9088, %v9088
    %v9111 = vcombine.high %v9095, %v9095
    %v9112 = vcombine.high %v9102, %v9102
    %v9113 = vcombine.high %v9109, %v9109
    %vm9122 = vcmask 253952
    %9123 = vst.msk [vmem:[#allocation7] sm:$0x1] %vm9122, %v9088
    %9124 = vst.msk [vmem:[#allocation7 + $0x2] sm:$0x1] %vm9122, %v9102
    %9125 = vst.msk [vmem:[#allocation7 + $0x4] sm:$0x1] %vm9122, %v9110
    %9126 = vst.msk [vmem:[#allocation7 + $0x6] sm:$0x1] %vm9122, %v9112
    %9127 = vst.msk [vmem:[#allocation7 + $0x8] sm:$0x1] %vm9122, %v9095
    %9128 = vst.msk [vmem:[#allocation7 + $0xa] sm:$0x1] %vm9122, %v9109
    %9129 = vst.msk [vmem:[#allocation7 + $0xc] sm:$0x1] %vm9122, %v9111
    %9130 = vst.msk [vmem:[#allocation7 + $0xe] sm:$0x1] %vm9122, %v9113
    %v9132 = vcombine.high %v9063, %v9063
    %v9134 = vunpack.c.l.s4 1966171168
    %v9135 = vunpack.c.0.s8 %v9134
    %v9136 = vlaneseq
    %v9137 = vshrl.u32 %v9136, 7
    %v9138 = vsub.s32 %v9135, %v9137
    %v9139 = vrot.slane %v9063, %v9138
    %v9141 = vunpack.c.l.s4 1966171168
    %v9142 = vunpack.c.0.s8 %v9141
    %v9143 = vlaneseq
    %v9144 = vshrl.u32 %v9143, 7
    %v9145 = vsub.s32 %v9142, %v9144
    %v9146 = vrot.slane %v9132, %v9145
    %v9147 = vcombine.high %v9139, %v9139
    %v9148 = vcombine.high %v9146, %v9146
    %v9150 = vunpack.c.l.s4 1966171168
    %v9151 = vunpack.c.0.s8 %v9150
    %v9152 = vlaneseq
    %v9153 = vshrl.u32 %v9152, 7
    %v9154 = vsub.s32 %v9151, %v9153
    %v9155 = vrot.slane %v9139, %v9154
    %v9157 = vunpack.c.l.s4 1966171168
    %v9158 = vunpack.c.0.s8 %v9157
    %v9159 = vlaneseq
    %v9160 = vshrl.u32 %v9159, 7
    %v9161 = vsub.s32 %v9158, %v9160
    %v9162 = vrot.slane %v9146, %v9161
    %v9164 = vunpack.c.l.s4 1966171168
    %v9165 = vunpack.c.0.s8 %v9164
    %v9166 = vlaneseq
    %v9167 = vshrl.u32 %v9166, 7
    %v9168 = vsub.s32 %v9165, %v9167
    %v9169 = vrot.slane %v9147, %v9168
    %v9171 = vunpack.c.l.s4 1966171168
    %v9172 = vunpack.c.0.s8 %v9171
    %v9173 = vlaneseq
    %v9174 = vshrl.u32 %v9173, 7
    %v9175 = vsub.s32 %v9172, %v9174
    %v9176 = vrot.slane %v9148, %v9175
    %v9177 = vcombine.high %v9155, %v9155
    %v9178 = vcombine.high %v9162, %v9162
    %v9179 = vcombine.high %v9169, %v9169
    %v9180 = vcombine.high %v9176, %v9176
    %9189 = vst.msk [vmem:[#allocation7 + $0x1] sm:$0x1] %vm9122, %v9155
    %9190 = vst.msk [vmem:[#allocation7 + $0x3] sm:$0x1] %vm9122, %v9169
    %9191 = vst.msk [vmem:[#allocation7 + $0x5] sm:$0x1] %vm9122, %v9177
    %9192 = vst.msk [vmem:[#allocation7 + $0x7] sm:$0x1] %vm9122, %v9179
    %9193 = vst.msk [vmem:[#allocation7 + $0x9] sm:$0x1] %vm9122, %v9162
    %9194 = vst.msk [vmem:[#allocation7 + $0xb] sm:$0x1] %vm9122, %v9176
    %9195 = vst.msk [vmem:[#allocation7 + $0xd] sm:$0x1] %vm9122, %v9178
    %9196 = vst.msk [vmem:[#allocation7 + $0xf] sm:$0x1] %vm9122, %v9180
    // Predicated region
    $region58: #{tpu_custom_call.1} parent=1 // pred_check
      _
    $region59: #{tpu_custom_call.1} parent=1 // pred_check_branch
      %9198 = sbr.rel (0) target = $region61
    $region60: #{tpu_custom_call.1} parent=1 // pred_region
      %s9200 = ssub.s32 256, 256
      %9201 = vsyncadd [#allocation4], %s9200
      %s9202 = sshll.u32 [#allocation7], 4
      %s9203 = int_to_ptr.vmem [resolvable:$true] %s9202
      %9208 = dma.vmem_to_hbm [thread:$0]  %s9203, 256, %s12, [#allocation4], 32, 32, 2
    $region61: #{tpu_custom_call.1} parent=1 // pred_fallthru
      _
    // Predicated region
    $region62: #{tpu_custom_call.1} parent=1 // pred_check
      _
    $region63: #{tpu_custom_call.1} parent=1 // pred_check_branch
      %9210 = sbr.rel (0) target = $region65
    $region64: #{tpu_custom_call.1} parent=1 // pred_region
      %9211 = dma.done [#allocation4], 256
    $region65: #{tpu_custom_call.1} parent=1 // pred_fallthru
      _
    %9212 = vsyncpa [#allocation3], 1
    %9213 = vsyncpa [#allocation6], 1
    %9214 = vsyncpa [#allocation4], 1

</llo_original>
